<compile_context>
chip_gen: v7x
topology: tpu7x:2x2x1
jax: 0.10.0
libtpu: 0.0.40
codegen_flags: <defaults>
</compile_context>

<pallas_src>
import functools

import jax
import jax.numpy as jnp
from jax.experimental import pallas as pl
from jax.experimental.pallas import tpu as pltpu


C = 128                     # channel width of every hidden conv layer
HALO = 16                   # zero halo rows each side of an activation (bf16 aligned)
SEG = HALO + 128 + HALO     # abuf rows reserved per sample (160)

# Row offsets of each conv weight inside the packed weight arrays (row = k*128 + cin).
OFF_W1B, OFF_W2A, OFF_W2B = 0, 640, 1536                    # inside `wearly` (2176 rows)
OFF_W3A, OFF_W3B, OFF_W4A, OFF_W4B = 0, 896, 1536, 2432     # inside `wlate`  (3072 rows)
ROWS_EARLY, ROWS_LATE = 2176, 3072


# ----------------------------------------------------------------------------
# Fused forward kernel (single invocation, whole batch stacked along M)
# ----------------------------------------------------------------------------
def _oracle_kernel(x_ref,        # (B*128, 16) f32  first-layer im2col
                   w1a,          # (16, 128)   bf16
                   wearly,       # (2176, 128) bf16  w1b|w2a|w2b
                   wlate_hbm,    # (3072, 128) bf16  w3a|w3b|w4a|w4b    (HBM / ANY)
                   bconv,        # (8, 128)    f32   conv biases
                   wf1_hbm,      # (1024, 256) bf16                     (HBM / ANY)
                   bf1,          # (1, 256)    f32
                   wf2,          # (256, 128)  bf16
                   bf2,          # (1, 128)    f32
                   wo,           # (128, NC)   bf16
                   bo,           # (1, NC)     f32
                   o_ref,        # (B, NC)     f32
                   abuf,         # (B*SEG, 128) bf16  padded activations
                   cbuf,         # (B*128, 896) bf16  im2col slab
                   ybuf,         # (B*128, 128) f32   pre-pool staging
                   fbuf,         # (>=8, 1024)  f32   fc1 flatten staging
                   wl_v,         # (3072, 128) bf16   VMEM copy of wlate
                   wf1_v,        # (1024, 256) bf16   VMEM copy of wf1
                   sems,         # (2,) DMA semaphores
                   *, B):
    f32, bf16 = jnp.float32, jnp.bfloat16

    # Kick off late-weight DMAs; they complete under block1/block2 compute.
    cp_late = pltpu.make_async_copy(wlate_hbm, wl_v, sems.at[0])
    cp_late.start()
    cp_f1 = pltpu.make_async_copy(wf1_hbm, wf1_v, sems.at[1])
    cp_f1.start()

    zhalo = jnp.zeros((HALO, C), bf16)
    for s in range(B):                       # left halo: zero once, never rewritten
        abuf[s * SEG:s * SEG + HALO, :] = zhalo

    def store_act(y, L):
        yb = y.astype(bf16)                  # pack to bf16 once per layer
        for s in range(B):
            abuf[s * SEG + HALO:s * SEG + HALO + L, :] = yb[s * L:(s + 1) * L, :]
            abuf[s * SEG + HALO + L:s * SEG + HALO + L + HALO, :] = zhalo

    def conv128(wref, woff, bidx, L, K, pad):
        # "Same" Conv1d, Cin = Cout = 128, on the stacked batch: one MXU push.
        assert pad < HALO and (K - 1 - pad) < HALO    # halo covers every tap read
        base = HALO - pad
        for s in range(B):
            src = s * SEG + base
            dst = s * L
            for k in range(K):               # sublane-shifted bf16 tap copies
                cbuf[dst:dst + L, k * C:(k + 1) * C] = abuf[src + k:src + k + L, :]
        y = jnp.dot(cbuf[0:B * L, 0:K * C], wref[woff:woff + K * C, :],
                    preferred_element_type=f32)        # (B*L, 128) f32
        return jnp.maximum(y + bconv[bidx:bidx + 1, :], 0.0)

    def pool_store(y, L):
        # MaxPool1d(2, 2) via strided sublane reads, result stored as next activation.
        half = L // 2
        ybuf[0:B * L, :] = y
        for s in range(B):
            p = jnp.maximum(ybuf[pl.ds(s * L, half, 2), :],
                            ybuf[pl.ds(s * L + 1, half, 2), :])
            abuf[s * SEG + HALO:s * SEG + HALO + half, :] = p.astype(bf16)
            abuf[s * SEG + HALO + half:s * SEG + HALO + half + HALO, :] = zhalo

    # ---- block1 ----
    # Conv1d(2 -> 128, 7, pad=3) + ReLU: one matmul on the wrapper-built im2col.
    y = jnp.dot(x_ref[...].astype(bf16), w1a[...], preferred_element_type=f32)
    y = jnp.maximum(y + bconv[0:1, :], 0.0)
    store_act(y, 128)
    pool_store(conv128(wearly, OFF_W1B, 1, 128, 5, 2), 128)      # -> L = 64

    # ---- block2 ----
    store_act(conv128(wearly, OFF_W2A, 2, 64, 7, 3), 64)
    pool_store(conv128(wearly, OFF_W2B, 3, 64, 5, 2), 64)        # -> L = 32

    cp_late.wait()                           # block3/4 weights now resident in VMEM

    # ---- block3 ----
    store_act(conv128(wl_v, OFF_W3A, 4, 32, 7, 3), 32)
    pool_store(conv128(wl_v, OFF_W3B, 5, 32, 5, 2), 32)          # -> L = 16

    # ---- block4 ----
    store_act(conv128(wl_v, OFF_W4A, 6, 16, 7, 3), 16)
    y = conv128(wl_v, OFF_W4B, 7, 16, 5, 2)                      # (B*16, 128) pre-pool

    # ---- final max-pool fused with the fc1 flatten (NLC order: col = l*128 + c) ----
    ybuf[0:B * 16, :] = y
    for s in range(B):
        for l in range(8):
            r = s * 16 + 2 * l
            fbuf[s:s + 1, l * C:(l + 1) * C] = jnp.maximum(ybuf[r:r + 1, :],
                                                           ybuf[r + 1:r + 2, :])

    cp_f1.wait()                             # fc1 weight now resident in VMEM

    # ---- MLP head (Dropout == identity at inference) ----
    z1 = jnp.dot(fbuf[0:B, :].astype(bf16), wf1_v[...], preferred_element_type=f32)
    z1 = jnp.maximum(z1 + bf1[...], 0.0)                          # (B, 256)
    z2 = jnp.dot(z1.astype(bf16), wf2[...], preferred_element_type=f32)
    z2 = jnp.maximum(z2 + bf2[...], 0.0)                          # (B, 128)
    logits = jnp.dot(z2.astype(bf16), wo[...], preferred_element_type=f32) + bo[...]
    m = jnp.max(logits, axis=-1, keepdims=True)
    e = jnp.exp(logits - m)
    o_ref[...] = (e / jnp.sum(e, axis=-1, keepdims=True)).astype(o_ref.dtype)


# ----------------------------------------------------------------------------
# Wrapper
# ----------------------------------------------------------------------------
def oracle_forward(params, x_ncw):
    """x_ncw: (B, 2, 128) float32, PyTorch NCW layout. Returns (B, num_classes)."""
    B, Cin, L = x_ncw.shape
    assert (Cin, L) == (2, 128), "ORACLE expects 2-channel, length-128 input"
    num_classes = params["wo"].shape[1]

    # First-layer im2col (tiny): col = k*2 + cin, value = zero-padded x[t + k - 3, cin].
    x = jnp.transpose(x_ncw, (0, 2, 1)).astype(jnp.float32)       # (B, 128, 2) NLC
    xp = jnp.pad(x, ((0, 0), (3, 3), (0, 0)))                      # (B, 134, 2)
    x_i2c = jnp.concatenate([xp[:, k:k + 128, :] for k in range(7)], axis=-1)
    x_i2c = jnp.pad(x_i2c, ((0, 0), (0, 0), (0, 2)))               # (B, 128, 16)
    x_i2c = x_i2c.reshape(B * 128, 16)

    vmem = lambda: pl.BlockSpec(memory_space=pltpu.MemorySpace.VMEM)
    hbm = lambda: pl.BlockSpec(memory_space=pl.ANY)

    out = pl.pallas_call(
        functools.partial(_oracle_kernel, B=B),
        out_shape=jax.ShapeDtypeStruct((B, num_classes), jnp.float32),
        in_specs=[vmem(),   # x_i2c
                  vmem(),   # w1a
                  vmem(),   # wearly
                  hbm(),    # wlate  (DMA'd in-kernel, overlapped with compute)
                  vmem(),   # bconv
                  hbm(),    # wf1    (DMA'd in-kernel, overlapped with compute)
                  vmem(),   # bf1
                  vmem(),   # wf2
                  vmem(),   # bf2
                  vmem(),   # wo
                  vmem()],  # bo
        out_specs=vmem(),
        scratch_shapes=[
            pltpu.VMEM((B * SEG, C), jnp.bfloat16),        # abuf: padded activations
            pltpu.VMEM((B * 128, 7 * C), jnp.bfloat16),    # cbuf: im2col slab
            pltpu.VMEM((B * 128, C), jnp.float32),         # ybuf: pre-pool staging
            pltpu.VMEM((max(8, B), 8 * C), jnp.float32),   # fbuf: fc1 flatten staging
            pltpu.VMEM((ROWS_LATE, C), jnp.bfloat16),      # wl_v: block3/4 weights
            pltpu.VMEM((8 * C, 256), jnp.bfloat16),        # wf1_v
            pltpu.SemaphoreType.DMA((2,)),                 # DMA completion semaphores
        ],
    )(x_i2c, params["w1a"], params["wearly"], params["wlate"], params["bconv"],
      params["wf1"], params["bf1"], params["wf2"], params["bf2"],
      params["wo"], params["bo"])
    return out


# ----------------------------------------------------------------------------
# Parameter init (PyTorch-default-like uniform(-1/sqrt(fan_in), +1/sqrt(fan_in)))
# ----------------------------------------------------------------------------
def _uniform(key, shape, bound):
    return jax.random.uniform(key, shape, jnp.float32, -bound, bound)


def init_oracle_params(key, num_classes=3):
    ks = iter(jax.random.split(key, 24))
    p = {}

    # conv1a: Conv1d(2, 128, 7, pad=3) repacked as (16, 128), row = k*2 + cin
    # (rows 14, 15 are zero padding of the contraction dim).
    bnd = 1.0 / (2 * 7) ** 0.5
    w1a = _uniform(next(ks), (14, C), bnd)
    p["w1a"] = jnp.pad(w1a, ((0, 2), (0, 0))).astype(jnp.bfloat16)
    biases = [_uniform(next(ks), (1, C), bnd)]

    # remaining convs: (K*128, 128) bf16, row = k*128 + cin (= PyTorch W[cout,cin,k].T)
    def conv_w(kw, K):
        bound = 1.0 / (C * K) ** 0.5
        return _uniform(kw, (K * C, C), bound).astype(jnp.bfloat16), bound

    early, late = [], []
    for dst, K in ((early, 5), (early, 7), (early, 5),            # w1b, w2a, w2b
                   (late, 7), (late, 5), (late, 7), (late, 5)):   # w3a, w3b, w4a, w4b
        w, bound = conv_w(next(ks), K)
        dst.append(w)
        biases.append(_uniform(next(ks), (1, C), bound))
    p["wearly"] = jnp.concatenate(early, axis=0)     # (2176, 128) bf16
    p["wlate"] = jnp.concatenate(late, axis=0)       # (3072, 128) bf16
    p["bconv"] = jnp.concatenate(biases, axis=0)     # (8, 128)   f32

    # fc1: initialized in PyTorch flatten order (row = c*8 + l), permuted once to the
    # kernel's NLC flatten order (row = l*128 + c) so no in-kernel transpose is needed.
    bnd = 1.0 / (C * 8) ** 0.5
    w_pt = _uniform(next(ks), (C * 8, 256), bnd)
    p["wf1"] = (w_pt.reshape(C, 8, 256).transpose(1, 0, 2)
                .reshape(C * 8, 256).astype(jnp.bfloat16))
    p["bf1"] = _uniform(next(ks), (1, 256), bnd)

    bnd = 1.0 / 256 ** 0.5
    p["wf2"] = _uniform(next(ks), (256, C), bnd).astype(jnp.bfloat16)
    p["bf2"] = _uniform(next(ks), (1, C), bnd)

    bnd = 1.0 / C ** 0.5
    p["wo"] = _uniform(next(ks), (C, num_classes), bnd).astype(jnp.bfloat16)
    p["bo"] = _uniform(next(ks), (1, num_classes), bnd)
    return p


if __name__ == "__main__":
    key = jax.random.PRNGKey(0)
    pkey, xkey = jax.random.split(key)

    num_classes = 3
    params = init_oracle_params(pkey, num_classes=num_classes)

    # Input: batch=2, channels=2 (I/Q), length=128 (so 128 / 2^4 = 8 positions for fc1).
    x = jax.random.normal(xkey, (2, 2, 128), dtype=jnp.float32)

    fwd = jax.jit(oracle_forward)
    out = jax.block_until_ready(fwd(params, x))

    assert out.shape == (2, num_classes)
    assert bool(jnp.all(jnp.isfinite(out)))
    assert bool(jnp.allclose(jnp.sum(out, axis=1), 1.0, atol=1e-4))
    print("KERNEL_OK")
</pallas_src>

<mosaic_0001>
module attributes {stable_mosaic.version = 11 : i64} {
  func.func @_oracle_kernel(%arg0: memref<256x16xf32, #tpu.memory_space<vmem>>, %arg1: memref<16x128xbf16, #tpu.memory_space<vmem>>, %arg2: memref<2176x128xbf16, #tpu.memory_space<vmem>>, %arg3: memref<3072x128xbf16, #tpu.memory_space<any>>, %arg4: memref<8x128xf32, #tpu.memory_space<vmem>>, %arg5: memref<1024x256xbf16, #tpu.memory_space<any>>, %arg6: memref<1x256xf32, #tpu.memory_space<vmem>>, %arg7: memref<256x128xbf16, #tpu.memory_space<vmem>>, %arg8: memref<1x128xf32, #tpu.memory_space<vmem>>, %arg9: memref<128x3xbf16, #tpu.memory_space<vmem>>, %arg10: memref<1x3xf32, #tpu.memory_space<vmem>>, %arg11: memref<2x3xf32, #tpu.memory_space<vmem>>, %arg12: memref<320x128xbf16, #tpu.memory_space<vmem>>, %arg13: memref<256x896xbf16, #tpu.memory_space<vmem>>, %arg14: memref<256x128xf32, #tpu.memory_space<vmem>>, %arg15: memref<8x1024xf32, #tpu.memory_space<vmem>>, %arg16: memref<3072x128xbf16, #tpu.memory_space<vmem>>, %arg17: memref<1024x256xbf16, #tpu.memory_space<vmem>>, %arg18: memref<2x!tpu.dma_semaphore, #tpu.memory_space<semaphore_mem>>) attributes {dimension_semantics = [], scalar_prefetch = 0 : i64, scratch_operands = 7 : i64, tpu.core_type = #tpu.core_type<tc>} {
    %c0_i32 = arith.constant 0 : i32
    %0 = tpu.memref_slice %arg18[%c0_i32] : memref<2x!tpu.dma_semaphore, #tpu.memory_space<semaphore_mem>> -> memref<1x!tpu.dma_semaphore, #tpu.memory_space<semaphore_mem>>
    %1 = tpu.memref_squeeze %0 : memref<1x!tpu.dma_semaphore, #tpu.memory_space<semaphore_mem>> -> memref<!tpu.dma_semaphore, #tpu.memory_space<semaphore_mem>>
    tpu.enqueue_dma source(%arg3 : memref<3072x128xbf16, #tpu.memory_space<any>>) target(%arg16 : memref<3072x128xbf16, #tpu.memory_space<vmem>>) target_semaphore(%1 : memref<!tpu.dma_semaphore, #tpu.memory_space<semaphore_mem>>)
    %c1_i32 = arith.constant 1 : i32
    %2 = tpu.memref_slice %arg18[%c1_i32] : memref<2x!tpu.dma_semaphore, #tpu.memory_space<semaphore_mem>> -> memref<1x!tpu.dma_semaphore, #tpu.memory_space<semaphore_mem>>
    %3 = tpu.memref_squeeze %2 : memref<1x!tpu.dma_semaphore, #tpu.memory_space<semaphore_mem>> -> memref<!tpu.dma_semaphore, #tpu.memory_space<semaphore_mem>>
    tpu.enqueue_dma source(%arg5 : memref<1024x256xbf16, #tpu.memory_space<any>>) target(%arg17 : memref<1024x256xbf16, #tpu.memory_space<vmem>>) target_semaphore(%3 : memref<!tpu.dma_semaphore, #tpu.memory_space<semaphore_mem>>)
    %cst = arith.constant 0.000000e+00 : bf16
    %4 = vector.broadcast %cst : bf16 to vector<16x128xbf16>
    %c0 = arith.constant 0 : index
    %c0_0 = arith.constant 0 : index
    %5 = vector.load %arg12[%c0, %c0_0] : memref<320x128xbf16, #tpu.memory_space<vmem>>, vector<16x128xbf16>
    tpu.vector_store %arg12[%c0, %c0_0], %4 {strides = array<i32>} : memref<320x128xbf16, #tpu.memory_space<vmem>>, vector<16x128xbf16>,
    %c160 = arith.constant 160 : index
    %c0_1 = arith.constant 0 : index
    %6 = vector.load %arg12[%c160, %c0_1] : memref<320x128xbf16, #tpu.memory_space<vmem>>, vector<16x128xbf16>
    tpu.vector_store %arg12[%c160, %c0_1], %4 {strides = array<i32>} : memref<320x128xbf16, #tpu.memory_space<vmem>>, vector<16x128xbf16>,
    %c0_2 = arith.constant 0 : index
    %c0_3 = arith.constant 0 : index
    %7 = vector.load %arg0[%c0_2, %c0_3] : memref<256x16xf32, #tpu.memory_space<vmem>>, vector<256x16xf32>
    %8 = arith.truncf %7 : vector<256x16xf32> to vector<256x16xbf16>
    %c0_4 = arith.constant 0 : index
    %c0_5 = arith.constant 0 : index
    %9 = vector.load %arg1[%c0_4, %c0_5] : memref<16x128xbf16, #tpu.memory_space<vmem>>, vector<16x128xbf16>
    %cst_6 = arith.constant dense<0.000000e+00> : vector<256x128xf32>
    %10 = tpu.matmul %8, %9, %cst_6 {dimension_numbers = #tpu.dot_dimension_numbers<[1], [0], [0], [1], [0, 0, 1, 1], [], []>} : vector<256x16xbf16>, vector<16x128xbf16>, vector<256x128xf32> -> vector<256x128xf32>
    %c0_7 = arith.constant 0 : index
    %c0_8 = arith.constant 0 : index
    %11 = vector.load %arg4[%c0_7, %c0_8] : memref<8x128xf32, #tpu.memory_space<vmem>>, vector<1x128xf32>
    %12 = vector.broadcast %11 : vector<1x128xf32> to vector<256x128xf32>
    %13 = arith.addf %10, %12 : vector<256x128xf32>
    %cst_9 = arith.constant 0.000000e+00 : f32
    %14 = vector.broadcast %cst_9 : f32 to vector<256x128xf32>
    %15 = arith.maximumf %13, %14 : vector<256x128xf32>
    %16 = arith.truncf %15 : vector<256x128xf32> to vector<256x128xbf16>
    %17 = vector.extract_strided_slice %16 {offsets = [0, 0], sizes = [128, 128], strides = [1, 1]} : vector<256x128xbf16> to vector<128x128xbf16>
    %c16 = arith.constant 16 : index
    %c0_10 = arith.constant 0 : index
    %18 = vector.load %arg12[%c16, %c0_10] : memref<320x128xbf16, #tpu.memory_space<vmem>>, vector<128x128xbf16>
    tpu.vector_store %arg12[%c16, %c0_10], %17 {strides = array<i32>} : memref<320x128xbf16, #tpu.memory_space<vmem>>, vector<128x128xbf16>,
    %c144 = arith.constant 144 : index
    %c0_11 = arith.constant 0 : index
    %19 = vector.load %arg12[%c144, %c0_11] : memref<320x128xbf16, #tpu.memory_space<vmem>>, vector<16x128xbf16>
    tpu.vector_store %arg12[%c144, %c0_11], %4 {strides = array<i32>} : memref<320x128xbf16, #tpu.memory_space<vmem>>, vector<16x128xbf16>,
    %20 = vector.extract_strided_slice %16 {offsets = [128, 0], sizes = [128, 128], strides = [1, 1]} : vector<256x128xbf16> to vector<128x128xbf16>
    %c176 = arith.constant 176 : index
    %c0_12 = arith.constant 0 : index
    %21 = vector.load %arg12[%c176, %c0_12] : memref<320x128xbf16, #tpu.memory_space<vmem>>, vector<128x128xbf16>
    tpu.vector_store %arg12[%c176, %c0_12], %20 {strides = array<i32>} : memref<320x128xbf16, #tpu.memory_space<vmem>>, vector<128x128xbf16>,
    %c304 = arith.constant 304 : index
    %c0_13 = arith.constant 0 : index
    %22 = vector.load %arg12[%c304, %c0_13] : memref<320x128xbf16, #tpu.memory_space<vmem>>, vector<16x128xbf16>
    tpu.vector_store %arg12[%c304, %c0_13], %4 {strides = array<i32>} : memref<320x128xbf16, #tpu.memory_space<vmem>>, vector<16x128xbf16>,
    %c14 = arith.constant 14 : index
    %c0_14 = arith.constant 0 : index
    %23 = vector.load %arg12[%c14, %c0_14] : memref<320x128xbf16, #tpu.memory_space<vmem>>, vector<128x128xbf16>
    %c0_15 = arith.constant 0 : index
    %c0_16 = arith.constant 0 : index
    %24 = vector.load %arg13[%c0_15, %c0_16] : memref<256x896xbf16, #tpu.memory_space<vmem>>, vector<128x128xbf16>
    tpu.vector_store %arg13[%c0_15, %c0_16], %23 {strides = array<i32>} : memref<256x896xbf16, #tpu.memory_space<vmem>>, vector<128x128xbf16>,
    %c15 = arith.constant 15 : index
    %c0_17 = arith.constant 0 : index
    %25 = vector.load %arg12[%c15, %c0_17] : memref<320x128xbf16, #tpu.memory_space<vmem>>, vector<128x128xbf16>
    %c0_18 = arith.constant 0 : index
    %c128 = arith.constant 128 : index
    %26 = vector.load %arg13[%c0_18, %c128] : memref<256x896xbf16, #tpu.memory_space<vmem>>, vector<128x128xbf16>
    tpu.vector_store %arg13[%c0_18, %c128], %25 {strides = array<i32>} : memref<256x896xbf16, #tpu.memory_space<vmem>>, vector<128x128xbf16>,
    %c16_19 = arith.constant 16 : index
    %c0_20 = arith.constant 0 : index
    %27 = vector.load %arg12[%c16_19, %c0_20] : memref<320x128xbf16, #tpu.memory_space<vmem>>, vector<128x128xbf16>
    %c0_21 = arith.constant 0 : index
    %c256 = arith.constant 256 : index
    %28 = vector.load %arg13[%c0_21, %c256] : memref<256x896xbf16, #tpu.memory_space<vmem>>, vector<128x128xbf16>
    tpu.vector_store %arg13[%c0_21, %c256], %27 {strides = array<i32>} : memref<256x896xbf16, #tpu.memory_space<vmem>>, vector<128x128xbf16>,
    %c17 = arith.constant 17 : index
    %c0_22 = arith.constant 0 : index
    %29 = vector.load %arg12[%c17, %c0_22] : memref<320x128xbf16, #tpu.memory_space<vmem>>, vector<128x128xbf16>
    %c0_23 = arith.constant 0 : index
    %c384 = arith.constant 384 : index
    %30 = vector.load %arg13[%c0_23, %c384] : memref<256x896xbf16, #tpu.memory_space<vmem>>, vector<128x128xbf16>
    tpu.vector_store %arg13[%c0_23, %c384], %29 {strides = array<i32>} : memref<256x896xbf16, #tpu.memory_space<vmem>>, vector<128x128xbf16>,
    %c18 = arith.constant 18 : index
    %c0_24 = arith.constant 0 : index
    %31 = vector.load %arg12[%c18, %c0_24] : memref<320x128xbf16, #tpu.memory_space<vmem>>, vector<128x128xbf16>
    %c0_25 = arith.constant 0 : index
    %c512 = arith.constant 512 : index
    %32 = vector.load %arg13[%c0_25, %c512] : memref<256x896xbf16, #tpu.memory_space<vmem>>, vector<128x128xbf16>
    tpu.vector_store %arg13[%c0_25, %c512], %31 {strides = array<i32>} : memref<256x896xbf16, #tpu.memory_space<vmem>>, vector<128x128xbf16>,
    %c174 = arith.constant 174 : index
    %c0_26 = arith.constant 0 : index
    %33 = vector.load %arg12[%c174, %c0_26] : memref<320x128xbf16, #tpu.memory_space<vmem>>, vector<128x128xbf16>
    %c128_27 = arith.constant 128 : index
    %c0_28 = arith.constant 0 : index
    %34 = vector.load %arg13[%c128_27, %c0_28] : memref<256x896xbf16, #tpu.memory_space<vmem>>, vector<128x128xbf16>
    tpu.vector_store %arg13[%c128_27, %c0_28], %33 {strides = array<i32>} : memref<256x896xbf16, #tpu.memory_space<vmem>>, vector<128x128xbf16>,
    %c175 = arith.constant 175 : index
    %c0_29 = arith.constant 0 : index
    %35 = vector.load %arg12[%c175, %c0_29] : memref<320x128xbf16, #tpu.memory_space<vmem>>, vector<128x128xbf16>
    %c128_30 = arith.constant 128 : index
    %c128_31 = arith.constant 128 : index
    %36 = vector.load %arg13[%c128_30, %c128_31] : memref<256x896xbf16, #tpu.memory_space<vmem>>, vector<128x128xbf16>
    tpu.vector_store %arg13[%c128_30, %c128_31], %35 {strides = array<i32>} : memref<256x896xbf16, #tpu.memory_space<vmem>>, vector<128x128xbf16>,
    %c176_32 = arith.constant 176 : index
    %c0_33 = arith.constant 0 : index
    %37 = vector.load %arg12[%c176_32, %c0_33] : memref<320x128xbf16, #tpu.memory_space<vmem>>, vector<128x128xbf16>
    %c128_34 = arith.constant 128 : index
    %c256_35 = arith.constant 256 : index
    %38 = vector.load %arg13[%c128_34, %c256_35] : memref<256x896xbf16, #tpu.memory_space<vmem>>, vector<128x128xbf16>
    tpu.vector_store %arg13[%c128_34, %c256_35], %37 {strides = array<i32>} : memref<256x896xbf16, #tpu.memory_space<vmem>>, vector<128x128xbf16>,
    %c177 = arith.constant 177 : index
    %c0_36 = arith.constant 0 : index
    %39 = vector.load %arg12[%c177, %c0_36] : memref<320x128xbf16, #tpu.memory_space<vmem>>, vector<128x128xbf16>
    %c128_37 = arith.constant 128 : index
    %c384_38 = arith.constant 384 : index
    %40 = vector.load %arg13[%c128_37, %c384_38] : memref<256x896xbf16, #tpu.memory_space<vmem>>, vector<128x128xbf16>
    tpu.vector_store %arg13[%c128_37, %c384_38], %39 {strides = array<i32>} : memref<256x896xbf16, #tpu.memory_space<vmem>>, vector<128x128xbf16>,
    %c178 = arith.constant 178 : index
    %c0_39 = arith.constant 0 : index
    %41 = vector.load %arg12[%c178, %c0_39] : memref<320x128xbf16, #tpu.memory_space<vmem>>, vector<128x128xbf16>
    %c128_40 = arith.constant 128 : index
    %c512_41 = arith.constant 512 : index
    %42 = vector.load %arg13[%c128_40, %c512_41] : memref<256x896xbf16, #tpu.memory_space<vmem>>, vector<128x128xbf16>
    tpu.vector_store %arg13[%c128_40, %c512_41], %41 {strides = array<i32>} : memref<256x896xbf16, #tpu.memory_space<vmem>>, vector<128x128xbf16>,
    %c0_42 = arith.constant 0 : index
    %c0_43 = arith.constant 0 : index
    %43 = vector.load %arg13[%c0_42, %c0_43] : memref<256x896xbf16, #tpu.memory_space<vmem>>, vector<256x640xbf16>
    %c0_44 = arith.constant 0 : index
    %c0_45 = arith.constant 0 : index
    %44 = vector.load %arg2[%c0_44, %c0_45] : memref<2176x128xbf16, #tpu.memory_space<vmem>>, vector<640x128xbf16>
    %cst_46 = arith.constant dense<0.000000e+00> : vector<256x128xf32>
    %45 = tpu.matmul %43, %44, %cst_46 {dimension_numbers = #tpu.dot_dimension_numbers<[1], [0], [0], [1], [0, 0, 1, 1], [], []>} : vector<256x640xbf16>, vector<640x128xbf16>, vector<256x128xf32> -> vector<256x128xf32>
    %c1 = arith.constant 1 : index
    %c0_47 = arith.constant 0 : index
    %46 = vector.load %arg4[%c1, %c0_47] : memref<8x128xf32, #tpu.memory_space<vmem>>, vector<1x128xf32>
    %47 = vector.broadcast %46 : vector<1x128xf32> to vector<256x128xf32>
    %48 = arith.addf %45, %47 : vector<256x128xf32>
    %cst_48 = arith.constant 0.000000e+00 : f32
    %49 = vector.broadcast %cst_48 : f32 to vector<256x128xf32>
    %50 = arith.maximumf %48, %49 : vector<256x128xf32>
    %c0_49 = arith.constant 0 : index
    %c0_50 = arith.constant 0 : index
    %51 = vector.load %arg14[%c0_49, %c0_50] : memref<256x128xf32, #tpu.memory_space<vmem>>, vector<256x128xf32>
    tpu.vector_store %arg14[%c0_49, %c0_50], %50 {strides = array<i32>} : memref<256x128xf32, #tpu.memory_space<vmem>>, vector<256x128xf32>,
    %c0_51 = arith.constant 0 : index
    %c0_52 = arith.constant 0 : index
    %52 = tpu.strided_load %arg14[%c0_51, %c0_52] {strides = array<i32: 2, 1>} : memref<256x128xf32, #tpu.memory_space<vmem>>, vector<64x128xf32>
    %c1_53 = arith.constant 1 : index
    %c0_54 = arith.constant 0 : index
    %53 = tpu.strided_load %arg14[%c1_53, %c0_54] {strides = array<i32: 2, 1>} : memref<256x128xf32, #tpu.memory_space<vmem>>, vector<64x128xf32>
    %54 = arith.maximumf %52, %53 : vector<64x128xf32>
    %55 = arith.truncf %54 : vector<64x128xf32> to vector<64x128xbf16>
    %c16_55 = arith.constant 16 : index
    %c0_56 = arith.constant 0 : index
    %56 = vector.load %arg12[%c16_55, %c0_56] : memref<320x128xbf16, #tpu.memory_space<vmem>>, vector<64x128xbf16>
    tpu.vector_store %arg12[%c16_55, %c0_56], %55 {strides = array<i32>} : memref<320x128xbf16, #tpu.memory_space<vmem>>, vector<64x128xbf16>,
    %c80 = arith.constant 80 : index
    %c0_57 = arith.constant 0 : index
    %57 = vector.load %arg12[%c80, %c0_57] : memref<320x128xbf16, #tpu.memory_space<vmem>>, vector<16x128xbf16>
    tpu.vector_store %arg12[%c80, %c0_57], %4 {strides = array<i32>} : memref<320x128xbf16, #tpu.memory_space<vmem>>, vector<16x128xbf16>,
    %c128_58 = arith.constant 128 : index
    %c0_59 = arith.constant 0 : index
    %58 = tpu.strided_load %arg14[%c128_58, %c0_59] {strides = array<i32: 2, 1>} : memref<256x128xf32, #tpu.memory_space<vmem>>, vector<64x128xf32>
    %c129 = arith.constant 129 : index
    %c0_60 = arith.constant 0 : index
    %59 = tpu.strided_load %arg14[%c129, %c0_60] {strides = array<i32: 2, 1>} : memref<256x128xf32, #tpu.memory_space<vmem>>, vector<64x128xf32>
    %60 = arith.maximumf %58, %59 : vector<64x128xf32>
    %61 = arith.truncf %60 : vector<64x128xf32> to vector<64x128xbf16>
    %c176_61 = arith.constant 176 : index
    %c0_62 = arith.constant 0 : index
    %62 = vector.load %arg12[%c176_61, %c0_62] : memref<320x128xbf16, #tpu.memory_space<vmem>>, vector<64x128xbf16>
    tpu.vector_store %arg12[%c176_61, %c0_62], %61 {strides = array<i32>} : memref<320x128xbf16, #tpu.memory_space<vmem>>, vector<64x128xbf16>,
    %c240 = arith.constant 240 : index
    %c0_63 = arith.constant 0 : index
    %63 = vector.load %arg12[%c240, %c0_63] : memref<320x128xbf16, #tpu.memory_space<vmem>>, vector<16x128xbf16>
    tpu.vector_store %arg12[%c240, %c0_63], %4 {strides = array<i32>} : memref<320x128xbf16, #tpu.memory_space<vmem>>, vector<16x128xbf16>,
    %c13 = arith.constant 13 : index
    %c0_64 = arith.constant 0 : index
    %64 = vector.load %arg12[%c13, %c0_64] : memref<320x128xbf16, #tpu.memory_space<vmem>>, vector<64x128xbf16>
    %c0_65 = arith.constant 0 : index
    %c0_66 = arith.constant 0 : index
    %65 = vector.load %arg13[%c0_65, %c0_66] : memref<256x896xbf16, #tpu.memory_space<vmem>>, vector<64x128xbf16>
    tpu.vector_store %arg13[%c0_65, %c0_66], %64 {strides = array<i32>} : memref<256x896xbf16, #tpu.memory_space<vmem>>, vector<64x128xbf16>,
    %c14_67 = arith.constant 14 : index
    %c0_68 = arith.constant 0 : index
    %66 = vector.load %arg12[%c14_67, %c0_68] : memref<320x128xbf16, #tpu.memory_space<vmem>>, vector<64x128xbf16>
    %c0_69 = arith.constant 0 : index
    %c128_70 = arith.constant 128 : index
    %67 = vector.load %arg13[%c0_69, %c128_70] : memref<256x896xbf16, #tpu.memory_space<vmem>>, vector<64x128xbf16>
    tpu.vector_store %arg13[%c0_69, %c128_70], %66 {strides = array<i32>} : memref<256x896xbf16, #tpu.memory_space<vmem>>, vector<64x128xbf16>,
    %c15_71 = arith.constant 15 : index
    %c0_72 = arith.constant 0 : index
    %68 = vector.load %arg12[%c15_71, %c0_72] : memref<320x128xbf16, #tpu.memory_space<vmem>>, vector<64x128xbf16>
    %c0_73 = arith.constant 0 : index
    %c256_74 = arith.constant 256 : index
    %69 = vector.load %arg13[%c0_73, %c256_74] : memref<256x896xbf16, #tpu.memory_space<vmem>>, vector<64x128xbf16>
    tpu.vector_store %arg13[%c0_73, %c256_74], %68 {strides = array<i32>} : memref<256x896xbf16, #tpu.memory_space<vmem>>, vector<64x128xbf16>,
    %c16_75 = arith.constant 16 : index
    %c0_76 = arith.constant 0 : index
    %70 = vector.load %arg12[%c16_75, %c0_76] : memref<320x128xbf16, #tpu.memory_space<vmem>>, vector<64x128xbf16>
    %c0_77 = arith.constant 0 : index
    %c384_78 = arith.constant 384 : index
    %71 = vector.load %arg13[%c0_77, %c384_78] : memref<256x896xbf16, #tpu.memory_space<vmem>>, vector<64x128xbf16>
    tpu.vector_store %arg13[%c0_77, %c384_78], %70 {strides = array<i32>} : memref<256x896xbf16, #tpu.memory_space<vmem>>, vector<64x128xbf16>,
    %c17_79 = arith.constant 17 : index
    %c0_80 = arith.constant 0 : index
    %72 = vector.load %arg12[%c17_79, %c0_80] : memref<320x128xbf16, #tpu.memory_space<vmem>>, vector<64x128xbf16>
    %c0_81 = arith.constant 0 : index
    %c512_82 = arith.constant 512 : index
    %73 = vector.load %arg13[%c0_81, %c512_82] : memref<256x896xbf16, #tpu.memory_space<vmem>>, vector<64x128xbf16>
    tpu.vector_store %arg13[%c0_81, %c512_82], %72 {strides = array<i32>} : memref<256x896xbf16, #tpu.memory_space<vmem>>, vector<64x128xbf16>,
    %c18_83 = arith.constant 18 : index
    %c0_84 = arith.constant 0 : index
    %74 = vector.load %arg12[%c18_83, %c0_84] : memref<320x128xbf16, #tpu.memory_space<vmem>>, vector<64x128xbf16>
    %c0_85 = arith.constant 0 : index
    %c640 = arith.constant 640 : index
    %75 = vector.load %arg13[%c0_85, %c640] : memref<256x896xbf16, #tpu.memory_space<vmem>>, vector<64x128xbf16>
    tpu.vector_store %arg13[%c0_85, %c640], %74 {strides = array<i32>} : memref<256x896xbf16, #tpu.memory_space<vmem>>, vector<64x128xbf16>,
    %c19 = arith.constant 19 : index
    %c0_86 = arith.constant 0 : index
    %76 = vector.load %arg12[%c19, %c0_86] : memref<320x128xbf16, #tpu.memory_space<vmem>>, vector<64x128xbf16>
    %c0_87 = arith.constant 0 : index
    %c768 = arith.constant 768 : index
    %77 = vector.load %arg13[%c0_87, %c768] : memref<256x896xbf16, #tpu.memory_space<vmem>>, vector<64x128xbf16>
    tpu.vector_store %arg13[%c0_87, %c768], %76 {strides = array<i32>} : memref<256x896xbf16, #tpu.memory_space<vmem>>, vector<64x128xbf16>,
    %c173 = arith.constant 173 : index
    %c0_88 = arith.constant 0 : index
    %78 = vector.load %arg12[%c173, %c0_88] : memref<320x128xbf16, #tpu.memory_space<vmem>>, vector<64x128xbf16>
    %c64 = arith.constant 64 : index
    %c0_89 = arith.constant 0 : index
    %79 = vector.load %arg13[%c64, %c0_89] : memref<256x896xbf16, #tpu.memory_space<vmem>>, vector<64x128xbf16>
    tpu.vector_store %arg13[%c64, %c0_89], %78 {strides = array<i32>} : memref<256x896xbf16, #tpu.memory_space<vmem>>, vector<64x128xbf16>,
    %c174_90 = arith.constant 174 : index
    %c0_91 = arith.constant 0 : index
    %80 = vector.load %arg12[%c174_90, %c0_91] : memref<320x128xbf16, #tpu.memory_space<vmem>>, vector<64x128xbf16>
    %c64_92 = arith.constant 64 : index
    %c128_93 = arith.constant 128 : index
    %81 = vector.load %arg13[%c64_92, %c128_93] : memref<256x896xbf16, #tpu.memory_space<vmem>>, vector<64x128xbf16>
    tpu.vector_store %arg13[%c64_92, %c128_93], %80 {strides = array<i32>} : memref<256x896xbf16, #tpu.memory_space<vmem>>, vector<64x128xbf16>,
    %c175_94 = arith.constant 175 : index
    %c0_95 = arith.constant 0 : index
    %82 = vector.load %arg12[%c175_94, %c0_95] : memref<320x128xbf16, #tpu.memory_space<vmem>>, vector<64x128xbf16>
    %c64_96 = arith.constant 64 : index
    %c256_97 = arith.constant 256 : index
    %83 = vector.load %arg13[%c64_96, %c256_97] : memref<256x896xbf16, #tpu.memory_space<vmem>>, vector<64x128xbf16>
    tpu.vector_store %arg13[%c64_96, %c256_97], %82 {strides = array<i32>} : memref<256x896xbf16, #tpu.memory_space<vmem>>, vector<64x128xbf16>,
    %c176_98 = arith.constant 176 : index
    %c0_99 = arith.constant 0 : index
    %84 = vector.load %arg12[%c176_98, %c0_99] : memref<320x128xbf16, #tpu.memory_space<vmem>>, vector<64x128xbf16>
    %c64_100 = arith.constant 64 : index
    %c384_101 = arith.constant 384 : index
    %85 = vector.load %arg13[%c64_100, %c384_101] : memref<256x896xbf16, #tpu.memory_space<vmem>>, vector<64x128xbf16>
    tpu.vector_store %arg13[%c64_100, %c384_101], %84 {strides = array<i32>} : memref<256x896xbf16, #tpu.memory_space<vmem>>, vector<64x128xbf16>,
    %c177_102 = arith.constant 177 : index
    %c0_103 = arith.constant 0 : index
    %86 = vector.load %arg12[%c177_102, %c0_103] : memref<320x128xbf16, #tpu.memory_space<vmem>>, vector<64x128xbf16>
    %c64_104 = arith.constant 64 : index
    %c512_105 = arith.constant 512 : index
    %87 = vector.load %arg13[%c64_104, %c512_105] : memref<256x896xbf16, #tpu.memory_space<vmem>>, vector<64x128xbf16>
    tpu.vector_store %arg13[%c64_104, %c512_105], %86 {strides = array<i32>} : memref<256x896xbf16, #tpu.memory_space<vmem>>, vector<64x128xbf16>,
    %c178_106 = arith.constant 178 : index
    %c0_107 = arith.constant 0 : index
    %88 = vector.load %arg12[%c178_106, %c0_107] : memref<320x128xbf16, #tpu.memory_space<vmem>>, vector<64x128xbf16>
    %c64_108 = arith.constant 64 : index
    %c640_109 = arith.constant 640 : index
    %89 = vector.load %arg13[%c64_108, %c640_109] : memref<256x896xbf16, #tpu.memory_space<vmem>>, vector<64x128xbf16>
    tpu.vector_store %arg13[%c64_108, %c640_109], %88 {strides = array<i32>} : memref<256x896xbf16, #tpu.memory_space<vmem>>, vector<64x128xbf16>,
    %c179 = arith.constant 179 : index
    %c0_110 = arith.constant 0 : index
    %90 = vector.load %arg12[%c179, %c0_110] : memref<320x128xbf16, #tpu.memory_space<vmem>>, vector<64x128xbf16>
    %c64_111 = arith.constant 64 : index
    %c768_112 = arith.constant 768 : index
    %91 = vector.load %arg13[%c64_111, %c768_112] : memref<256x896xbf16, #tpu.memory_space<vmem>>, vector<64x128xbf16>
    tpu.vector_store %arg13[%c64_111, %c768_112], %90 {strides = array<i32>} : memref<256x896xbf16, #tpu.memory_space<vmem>>, vector<64x128xbf16>,
    %c0_113 = arith.constant 0 : index
    %c0_114 = arith.constant 0 : index
    %92 = vector.load %arg13[%c0_113, %c0_114] : memref<256x896xbf16, #tpu.memory_space<vmem>>, vector<128x896xbf16>
    %c640_115 = arith.constant 640 : index
    %c0_116 = arith.constant 0 : index
    %93 = vector.load %arg2[%c640_115, %c0_116] : memref<2176x128xbf16, #tpu.memory_space<vmem>>, vector<896x128xbf16>
    %cst_117 = arith.constant dense<0.000000e+00> : vector<128x128xf32>
    %94 = tpu.matmul %92, %93, %cst_117 {dimension_numbers = #tpu.dot_dimension_numbers<[1], [0], [0], [1], [0, 0, 1, 1], [], []>} : vector<128x896xbf16>, vector<896x128xbf16>, vector<128x128xf32> -> vector<128x128xf32>
    %c2 = arith.constant 2 : index
    %c0_118 = arith.constant 0 : index
    %95 = vector.load %arg4[%c2, %c0_118] : memref<8x128xf32, #tpu.memory_space<vmem>>, vector<1x128xf32>
    %96 = vector.broadcast %95 : vector<1x128xf32> to vector<128x128xf32>
    %97 = arith.addf %94, %96 : vector<128x128xf32>
    %cst_119 = arith.constant 0.000000e+00 : f32
    %98 = vector.broadcast %cst_119 : f32 to vector<128x128xf32>
    %99 = arith.maximumf %97, %98 : vector<128x128xf32>
    %100 = arith.truncf %99 : vector<128x128xf32> to vector<128x128xbf16>
    %101 = vector.extract_strided_slice %100 {offsets = [0, 0], sizes = [64, 128], strides = [1, 1]} : vector<128x128xbf16> to vector<64x128xbf16>
    %c16_120 = arith.constant 16 : index
    %c0_121 = arith.constant 0 : index
    %102 = vector.load %arg12[%c16_120, %c0_121] : memref<320x128xbf16, #tpu.memory_space<vmem>>, vector<64x128xbf16>
    tpu.vector_store %arg12[%c16_120, %c0_121], %101 {strides = array<i32>} : memref<320x128xbf16, #tpu.memory_space<vmem>>, vector<64x128xbf16>,
    %c80_122 = arith.constant 80 : index
    %c0_123 = arith.constant 0 : index
    %103 = vector.load %arg12[%c80_122, %c0_123] : memref<320x128xbf16, #tpu.memory_space<vmem>>, vector<16x128xbf16>
    tpu.vector_store %arg12[%c80_122, %c0_123], %4 {strides = array<i32>} : memref<320x128xbf16, #tpu.memory_space<vmem>>, vector<16x128xbf16>,
    %104 = vector.extract_strided_slice %100 {offsets = [64, 0], sizes = [64, 128], strides = [1, 1]} : vector<128x128xbf16> to vector<64x128xbf16>
    %c176_124 = arith.constant 176 : index
    %c0_125 = arith.constant 0 : index
    %105 = vector.load %arg12[%c176_124, %c0_125] : memref<320x128xbf16, #tpu.memory_space<vmem>>, vector<64x128xbf16>
    tpu.vector_store %arg12[%c176_124, %c0_125], %104 {strides = array<i32>} : memref<320x128xbf16, #tpu.memory_space<vmem>>, vector<64x128xbf16>,
    %c240_126 = arith.constant 240 : index
    %c0_127 = arith.constant 0 : index
    %106 = vector.load %arg12[%c240_126, %c0_127] : memref<320x128xbf16, #tpu.memory_space<vmem>>, vector<16x128xbf16>
    tpu.vector_store %arg12[%c240_126, %c0_127], %4 {strides = array<i32>} : memref<320x128xbf16, #tpu.memory_space<vmem>>, vector<16x128xbf16>,
    %c14_128 = arith.constant 14 : index
    %c0_129 = arith.constant 0 : index
    %107 = vector.load %arg12[%c14_128, %c0_129] : memref<320x128xbf16, #tpu.memory_space<vmem>>, vector<64x128xbf16>
    %c0_130 = arith.constant 0 : index
    %c0_131 = arith.constant 0 : index
    %108 = vector.load %arg13[%c0_130, %c0_131] : memref<256x896xbf16, #tpu.memory_space<vmem>>, vector<64x128xbf16>
    tpu.vector_store %arg13[%c0_130, %c0_131], %107 {strides = array<i32>} : memref<256x896xbf16, #tpu.memory_space<vmem>>, vector<64x128xbf16>,
    %c15_132 = arith.constant 15 : index
    %c0_133 = arith.constant 0 : index
    %109 = vector.load %arg12[%c15_132, %c0_133] : memref<320x128xbf16, #tpu.memory_space<vmem>>, vector<64x128xbf16>
    %c0_134 = arith.constant 0 : index
    %c128_135 = arith.constant 128 : index
    %110 = vector.load %arg13[%c0_134, %c128_135] : memref<256x896xbf16, #tpu.memory_space<vmem>>, vector<64x128xbf16>
    tpu.vector_store %arg13[%c0_134, %c128_135], %109 {strides = array<i32>} : memref<256x896xbf16, #tpu.memory_space<vmem>>, vector<64x128xbf16>,
    %c16_136 = arith.constant 16 : index
    %c0_137 = arith.constant 0 : index
    %111 = vector.load %arg12[%c16_136, %c0_137] : memref<320x128xbf16, #tpu.memory_space<vmem>>, vector<64x128xbf16>
    %c0_138 = arith.constant 0 : index
    %c256_139 = arith.constant 256 : index
    %112 = vector.load %arg13[%c0_138, %c256_139] : memref<256x896xbf16, #tpu.memory_space<vmem>>, vector<64x128xbf16>
    tpu.vector_store %arg13[%c0_138, %c256_139], %111 {strides = array<i32>} : memref<256x896xbf16, #tpu.memory_space<vmem>>, vector<64x128xbf16>,
    %c17_140 = arith.constant 17 : index
    %c0_141 = arith.constant 0 : index
    %113 = vector.load %arg12[%c17_140, %c0_141] : memref<320x128xbf16, #tpu.memory_space<vmem>>, vector<64x128xbf16>
    %c0_142 = arith.constant 0 : index
    %c384_143 = arith.constant 384 : index
    %114 = vector.load %arg13[%c0_142, %c384_143] : memref<256x896xbf16, #tpu.memory_space<vmem>>, vector<64x128xbf16>
    tpu.vector_store %arg13[%c0_142, %c384_143], %113 {strides = array<i32>} : memref<256x896xbf16, #tpu.memory_space<vmem>>, vector<64x128xbf16>,
    %c18_144 = arith.constant 18 : index
    %c0_145 = arith.constant 0 : index
    %115 = vector.load %arg12[%c18_144, %c0_145] : memref<320x128xbf16, #tpu.memory_space<vmem>>, vector<64x128xbf16>
    %c0_146 = arith.constant 0 : index
    %c512_147 = arith.constant 512 : index
    %116 = vector.load %arg13[%c0_146, %c512_147] : memref<256x896xbf16, #tpu.memory_space<vmem>>, vector<64x128xbf16>
    tpu.vector_store %arg13[%c0_146, %c512_147], %115 {strides = array<i32>} : memref<256x896xbf16, #tpu.memory_space<vmem>>, vector<64x128xbf16>,
    %c174_148 = arith.constant 174 : index
    %c0_149 = arith.constant 0 : index
    %117 = vector.load %arg12[%c174_148, %c0_149] : memref<320x128xbf16, #tpu.memory_space<vmem>>, vector<64x128xbf16>
    %c64_150 = arith.constant 64 : index
    %c0_151 = arith.constant 0 : index
    %118 = vector.load %arg13[%c64_150, %c0_151] : memref<256x896xbf16, #tpu.memory_space<vmem>>, vector<64x128xbf16>
    tpu.vector_store %arg13[%c64_150, %c0_151], %117 {strides = array<i32>} : memref<256x896xbf16, #tpu.memory_space<vmem>>, vector<64x128xbf16>,
    %c175_152 = arith.constant 175 : index
    %c0_153 = arith.constant 0 : index
    %119 = vector.load %arg12[%c175_152, %c0_153] : memref<320x128xbf16, #tpu.memory_space<vmem>>, vector<64x128xbf16>
    %c64_154 = arith.constant 64 : index
    %c128_155 = arith.constant 128 : index
    %120 = vector.load %arg13[%c64_154, %c128_155] : memref<256x896xbf16, #tpu.memory_space<vmem>>, vector<64x128xbf16>
    tpu.vector_store %arg13[%c64_154, %c128_155], %119 {strides = array<i32>} : memref<256x896xbf16, #tpu.memory_space<vmem>>, vector<64x128xbf16>,
    %c176_156 = arith.constant 176 : index
    %c0_157 = arith.constant 0 : index
    %121 = vector.load %arg12[%c176_156, %c0_157] : memref<320x128xbf16, #tpu.memory_space<vmem>>, vector<64x128xbf16>
    %c64_158 = arith.constant 64 : index
    %c256_159 = arith.constant 256 : index
    %122 = vector.load %arg13[%c64_158, %c256_159] : memref<256x896xbf16, #tpu.memory_space<vmem>>, vector<64x128xbf16>
    tpu.vector_store %arg13[%c64_158, %c256_159], %121 {strides = array<i32>} : memref<256x896xbf16, #tpu.memory_space<vmem>>, vector<64x128xbf16>,
    %c177_160 = arith.constant 177 : index
    %c0_161 = arith.constant 0 : index
    %123 = vector.load %arg12[%c177_160, %c0_161] : memref<320x128xbf16, #tpu.memory_space<vmem>>, vector<64x128xbf16>
    %c64_162 = arith.constant 64 : index
    %c384_163 = arith.constant 384 : index
    %124 = vector.load %arg13[%c64_162, %c384_163] : memref<256x896xbf16, #tpu.memory_space<vmem>>, vector<64x128xbf16>
    tpu.vector_store %arg13[%c64_162, %c384_163], %123 {strides = array<i32>} : memref<256x896xbf16, #tpu.memory_space<vmem>>, vector<64x128xbf16>,
    %c178_164 = arith.constant 178 : index
    %c0_165 = arith.constant 0 : index
    %125 = vector.load %arg12[%c178_164, %c0_165] : memref<320x128xbf16, #tpu.memory_space<vmem>>, vector<64x128xbf16>
    %c64_166 = arith.constant 64 : index
    %c512_167 = arith.constant 512 : index
    %126 = vector.load %arg13[%c64_166, %c512_167] : memref<256x896xbf16, #tpu.memory_space<vmem>>, vector<64x128xbf16>
    tpu.vector_store %arg13[%c64_166, %c512_167], %125 {strides = array<i32>} : memref<256x896xbf16, #tpu.memory_space<vmem>>, vector<64x128xbf16>,
    %c0_168 = arith.constant 0 : index
    %c0_169 = arith.constant 0 : index
    %127 = vector.load %arg13[%c0_168, %c0_169] : memref<256x896xbf16, #tpu.memory_space<vmem>>, vector<128x640xbf16>
    %c1536 = arith.constant 1536 : index
    %c0_170 = arith.constant 0 : index
    %128 = vector.load %arg2[%c1536, %c0_170] : memref<2176x128xbf16, #tpu.memory_space<vmem>>, vector<640x128xbf16>
    %cst_171 = arith.constant dense<0.000000e+00> : vector<128x128xf32>
    %129 = tpu.matmul %127, %128, %cst_171 {dimension_numbers = #tpu.dot_dimension_numbers<[1], [0], [0], [1], [0, 0, 1, 1], [], []>} : vector<128x640xbf16>, vector<640x128xbf16>, vector<128x128xf32> -> vector<128x128xf32>
    %c3 = arith.constant 3 : index
    %c0_172 = arith.constant 0 : index
    %130 = vector.load %arg4[%c3, %c0_172] : memref<8x128xf32, #tpu.memory_space<vmem>>, vector<1x128xf32>
    %131 = vector.broadcast %130 : vector<1x128xf32> to vector<128x128xf32>
    %132 = arith.addf %129, %131 : vector<128x128xf32>
    %cst_173 = arith.constant 0.000000e+00 : f32
    %133 = vector.broadcast %cst_173 : f32 to vector<128x128xf32>
    %134 = arith.maximumf %132, %133 : vector<128x128xf32>
    %c0_174 = arith.constant 0 : index
    %c0_175 = arith.constant 0 : index
    %135 = vector.load %arg14[%c0_174, %c0_175] : memref<256x128xf32, #tpu.memory_space<vmem>>, vector<128x128xf32>
    tpu.vector_store %arg14[%c0_174, %c0_175], %134 {strides = array<i32>} : memref<256x128xf32, #tpu.memory_space<vmem>>, vector<128x128xf32>,
    %c0_176 = arith.constant 0 : index
    %c0_177 = arith.constant 0 : index
    %136 = tpu.strided_load %arg14[%c0_176, %c0_177] {strides = array<i32: 2, 1>} : memref<256x128xf32, #tpu.memory_space<vmem>>, vector<32x128xf32>
    %c1_178 = arith.constant 1 : index
    %c0_179 = arith.constant 0 : index
    %137 = tpu.strided_load %arg14[%c1_178, %c0_179] {strides = array<i32: 2, 1>} : memref<256x128xf32, #tpu.memory_space<vmem>>, vector<32x128xf32>
    %138 = arith.maximumf %136, %137 : vector<32x128xf32>
    %139 = arith.truncf %138 : vector<32x128xf32> to vector<32x128xbf16>
    %c16_180 = arith.constant 16 : index
    %c0_181 = arith.constant 0 : index
    %140 = vector.load %arg12[%c16_180, %c0_181] : memref<320x128xbf16, #tpu.memory_space<vmem>>, vector<32x128xbf16>
    tpu.vector_store %arg12[%c16_180, %c0_181], %139 {strides = array<i32>} : memref<320x128xbf16, #tpu.memory_space<vmem>>, vector<32x128xbf16>,
    %c48 = arith.constant 48 : index
    %c0_182 = arith.constant 0 : index
    %141 = vector.load %arg12[%c48, %c0_182] : memref<320x128xbf16, #tpu.memory_space<vmem>>, vector<16x128xbf16>
    tpu.vector_store %arg12[%c48, %c0_182], %4 {strides = array<i32>} : memref<320x128xbf16, #tpu.memory_space<vmem>>, vector<16x128xbf16>,
    %c64_183 = arith.constant 64 : index
    %c0_184 = arith.constant 0 : index
    %142 = tpu.strided_load %arg14[%c64_183, %c0_184] {strides = array<i32: 2, 1>} : memref<256x128xf32, #tpu.memory_space<vmem>>, vector<32x128xf32>
    %c65 = arith.constant 65 : index
    %c0_185 = arith.constant 0 : index
    %143 = tpu.strided_load %arg14[%c65, %c0_185] {strides = array<i32: 2, 1>} : memref<256x128xf32, #tpu.memory_space<vmem>>, vector<32x128xf32>
    %144 = arith.maximumf %142, %143 : vector<32x128xf32>
    %145 = arith.truncf %144 : vector<32x128xf32> to vector<32x128xbf16>
    %c176_186 = arith.constant 176 : index
    %c0_187 = arith.constant 0 : index
    %146 = vector.load %arg12[%c176_186, %c0_187] : memref<320x128xbf16, #tpu.memory_space<vmem>>, vector<32x128xbf16>
    tpu.vector_store %arg12[%c176_186, %c0_187], %145 {strides = array<i32>} : memref<320x128xbf16, #tpu.memory_space<vmem>>, vector<32x128xbf16>,
    %c208 = arith.constant 208 : index
    %c0_188 = arith.constant 0 : index
    %147 = vector.load %arg12[%c208, %c0_188] : memref<320x128xbf16, #tpu.memory_space<vmem>>, vector<16x128xbf16>
    tpu.vector_store %arg12[%c208, %c0_188], %4 {strides = array<i32>} : memref<320x128xbf16, #tpu.memory_space<vmem>>, vector<16x128xbf16>,
    %c0_i32_189 = arith.constant 0 : i32
    %148 = tpu.memref_slice %arg18[%c0_i32_189] : memref<2x!tpu.dma_semaphore, #tpu.memory_space<semaphore_mem>> -> memref<1x!tpu.dma_semaphore, #tpu.memory_space<semaphore_mem>>
    %149 = tpu.memref_squeeze %148 : memref<1x!tpu.dma_semaphore, #tpu.memory_space<semaphore_mem>> -> memref<!tpu.dma_semaphore, #tpu.memory_space<semaphore_mem>>
    tpu.wait_dma2 semaphore(%149 : memref<!tpu.dma_semaphore, #tpu.memory_space<semaphore_mem>>) src(%arg3 : memref<3072x128xbf16, #tpu.memory_space<any>>) dst(%arg16 : memref<3072x128xbf16, #tpu.memory_space<vmem>>)
    %c13_190 = arith.constant 13 : index
    %c0_191 = arith.constant 0 : index
    %150 = vector.load %arg12[%c13_190, %c0_191] : memref<320x128xbf16, #tpu.memory_space<vmem>>, vector<32x128xbf16>
    %c0_192 = arith.constant 0 : index
    %c0_193 = arith.constant 0 : index
    %151 = vector.load %arg13[%c0_192, %c0_193] : memref<256x896xbf16, #tpu.memory_space<vmem>>, vector<32x128xbf16>
    tpu.vector_store %arg13[%c0_192, %c0_193], %150 {strides = array<i32>} : memref<256x896xbf16, #tpu.memory_space<vmem>>, vector<32x128xbf16>,
    %c14_194 = arith.constant 14 : index
    %c0_195 = arith.constant 0 : index
    %152 = vector.load %arg12[%c14_194, %c0_195] : memref<320x128xbf16, #tpu.memory_space<vmem>>, vector<32x128xbf16>
    %c0_196 = arith.constant 0 : index
    %c128_197 = arith.constant 128 : index
    %153 = vector.load %arg13[%c0_196, %c128_197] : memref<256x896xbf16, #tpu.memory_space<vmem>>, vector<32x128xbf16>
    tpu.vector_store %arg13[%c0_196, %c128_197], %152 {strides = array<i32>} : memref<256x896xbf16, #tpu.memory_space<vmem>>, vector<32x128xbf16>,
    %c15_198 = arith.constant 15 : index
    %c0_199 = arith.constant 0 : index
    %154 = vector.load %arg12[%c15_198, %c0_199] : memref<320x128xbf16, #tpu.memory_space<vmem>>, vector<32x128xbf16>
    %c0_200 = arith.constant 0 : index
    %c256_201 = arith.constant 256 : index
    %155 = vector.load %arg13[%c0_200, %c256_201] : memref<256x896xbf16, #tpu.memory_space<vmem>>, vector<32x128xbf16>
    tpu.vector_store %arg13[%c0_200, %c256_201], %154 {strides = array<i32>} : memref<256x896xbf16, #tpu.memory_space<vmem>>, vector<32x128xbf16>,
    %c16_202 = arith.constant 16 : index
    %c0_203 = arith.constant 0 : index
    %156 = vector.load %arg12[%c16_202, %c0_203] : memref<320x128xbf16, #tpu.memory_space<vmem>>, vector<32x128xbf16>
    %c0_204 = arith.constant 0 : index
    %c384_205 = arith.constant 384 : index
    %157 = vector.load %arg13[%c0_204, %c384_205] : memref<256x896xbf16, #tpu.memory_space<vmem>>, vector<32x128xbf16>
    tpu.vector_store %arg13[%c0_204, %c384_205], %156 {strides = array<i32>} : memref<256x896xbf16, #tpu.memory_space<vmem>>, vector<32x128xbf16>,
    %c17_206 = arith.constant 17 : index
    %c0_207 = arith.constant 0 : index
    %158 = vector.load %arg12[%c17_206, %c0_207] : memref<320x128xbf16, #tpu.memory_space<vmem>>, vector<32x128xbf16>
    %c0_208 = arith.constant 0 : index
    %c512_209 = arith.constant 512 : index
    %159 = vector.load %arg13[%c0_208, %c512_209] : memref<256x896xbf16, #tpu.memory_space<vmem>>, vector<32x128xbf16>
    tpu.vector_store %arg13[%c0_208, %c512_209], %158 {strides = array<i32>} : memref<256x896xbf16, #tpu.memory_space<vmem>>, vector<32x128xbf16>,
    %c18_210 = arith.constant 18 : index
    %c0_211 = arith.constant 0 : index
    %160 = vector.load %arg12[%c18_210, %c0_211] : memref<320x128xbf16, #tpu.memory_space<vmem>>, vector<32x128xbf16>
    %c0_212 = arith.constant 0 : index
    %c640_213 = arith.constant 640 : index
    %161 = vector.load %arg13[%c0_212, %c640_213] : memref<256x896xbf16, #tpu.memory_space<vmem>>, vector<32x128xbf16>
    tpu.vector_store %arg13[%c0_212, %c640_213], %160 {strides = array<i32>} : memref<256x896xbf16, #tpu.memory_space<vmem>>, vector<32x128xbf16>,
    %c19_214 = arith.constant 19 : index
    %c0_215 = arith.constant 0 : index
    %162 = vector.load %arg12[%c19_214, %c0_215] : memref<320x128xbf16, #tpu.memory_space<vmem>>, vector<32x128xbf16>
    %c0_216 = arith.constant 0 : index
    %c768_217 = arith.constant 768 : index
    %163 = vector.load %arg13[%c0_216, %c768_217] : memref<256x896xbf16, #tpu.memory_space<vmem>>, vector<32x128xbf16>
    tpu.vector_store %arg13[%c0_216, %c768_217], %162 {strides = array<i32>} : memref<256x896xbf16, #tpu.memory_space<vmem>>, vector<32x128xbf16>,
    %c173_218 = arith.constant 173 : index
    %c0_219 = arith.constant 0 : index
    %164 = vector.load %arg12[%c173_218, %c0_219] : memref<320x128xbf16, #tpu.memory_space<vmem>>, vector<32x128xbf16>
    %c32 = arith.constant 32 : index
    %c0_220 = arith.constant 0 : index
    %165 = vector.load %arg13[%c32, %c0_220] : memref<256x896xbf16, #tpu.memory_space<vmem>>, vector<32x128xbf16>
    tpu.vector_store %arg13[%c32, %c0_220], %164 {strides = array<i32>} : memref<256x896xbf16, #tpu.memory_space<vmem>>, vector<32x128xbf16>,
    %c174_221 = arith.constant 174 : index
    %c0_222 = arith.constant 0 : index
    %166 = vector.load %arg12[%c174_221, %c0_222] : memref<320x128xbf16, #tpu.memory_space<vmem>>, vector<32x128xbf16>
    %c32_223 = arith.constant 32 : index
    %c128_224 = arith.constant 128 : index
    %167 = vector.load %arg13[%c32_223, %c128_224] : memref<256x896xbf16, #tpu.memory_space<vmem>>, vector<32x128xbf16>
    tpu.vector_store %arg13[%c32_223, %c128_224], %166 {strides = array<i32>} : memref<256x896xbf16, #tpu.memory_space<vmem>>, vector<32x128xbf16>,
    %c175_225 = arith.constant 175 : index
    %c0_226 = arith.constant 0 : index
    %168 = vector.load %arg12[%c175_225, %c0_226] : memref<320x128xbf16, #tpu.memory_space<vmem>>, vector<32x128xbf16>
    %c32_227 = arith.constant 32 : index
    %c256_228 = arith.constant 256 : index
    %169 = vector.load %arg13[%c32_227, %c256_228] : memref<256x896xbf16, #tpu.memory_space<vmem>>, vector<32x128xbf16>
    tpu.vector_store %arg13[%c32_227, %c256_228], %168 {strides = array<i32>} : memref<256x896xbf16, #tpu.memory_space<vmem>>, vector<32x128xbf16>,
    %c176_229 = arith.constant 176 : index
    %c0_230 = arith.constant 0 : index
    %170 = vector.load %arg12[%c176_229, %c0_230] : memref<320x128xbf16, #tpu.memory_space<vmem>>, vector<32x128xbf16>
    %c32_231 = arith.constant 32 : index
    %c384_232 = arith.constant 384 : index
    %171 = vector.load %arg13[%c32_231, %c384_232] : memref<256x896xbf16, #tpu.memory_space<vmem>>, vector<32x128xbf16>
    tpu.vector_store %arg13[%c32_231, %c384_232], %170 {strides = array<i32>} : memref<256x896xbf16, #tpu.memory_space<vmem>>, vector<32x128xbf16>,
    %c177_233 = arith.constant 177 : index
    %c0_234 = arith.constant 0 : index
    %172 = vector.load %arg12[%c177_233, %c0_234] : memref<320x128xbf16, #tpu.memory_space<vmem>>, vector<32x128xbf16>
    %c32_235 = arith.constant 32 : index
    %c512_236 = arith.constant 512 : index
    %173 = vector.load %arg13[%c32_235, %c512_236] : memref<256x896xbf16, #tpu.memory_space<vmem>>, vector<32x128xbf16>
    tpu.vector_store %arg13[%c32_235, %c512_236], %172 {strides = array<i32>} : memref<256x896xbf16, #tpu.memory_space<vmem>>, vector<32x128xbf16>,
    %c178_237 = arith.constant 178 : index
    %c0_238 = arith.constant 0 : index
    %174 = vector.load %arg12[%c178_237, %c0_238] : memref<320x128xbf16, #tpu.memory_space<vmem>>, vector<32x128xbf16>
    %c32_239 = arith.constant 32 : index
    %c640_240 = arith.constant 640 : index
    %175 = vector.load %arg13[%c32_239, %c640_240] : memref<256x896xbf16, #tpu.memory_space<vmem>>, vector<32x128xbf16>
    tpu.vector_store %arg13[%c32_239, %c640_240], %174 {strides = array<i32>} : memref<256x896xbf16, #tpu.memory_space<vmem>>, vector<32x128xbf16>,
    %c179_241 = arith.constant 179 : index
    %c0_242 = arith.constant 0 : index
    %176 = vector.load %arg12[%c179_241, %c0_242] : memref<320x128xbf16, #tpu.memory_space<vmem>>, vector<32x128xbf16>
    %c32_243 = arith.constant 32 : index
    %c768_244 = arith.constant 768 : index
    %177 = vector.load %arg13[%c32_243, %c768_244] : memref<256x896xbf16, #tpu.memory_space<vmem>>, vector<32x128xbf16>
    tpu.vector_store %arg13[%c32_243, %c768_244], %176 {strides = array<i32>} : memref<256x896xbf16, #tpu.memory_space<vmem>>, vector<32x128xbf16>,
    %c0_245 = arith.constant 0 : index
    %c0_246 = arith.constant 0 : index
    %178 = vector.load %arg13[%c0_245, %c0_246] : memref<256x896xbf16, #tpu.memory_space<vmem>>, vector<64x896xbf16>
    %c0_247 = arith.constant 0 : index
    %c0_248 = arith.constant 0 : index
    %179 = vector.load %arg16[%c0_247, %c0_248] : memref<3072x128xbf16, #tpu.memory_space<vmem>>, vector<896x128xbf16>
    %cst_249 = arith.constant dense<0.000000e+00> : vector<64x128xf32>
    %180 = tpu.matmul %178, %179, %cst_249 {dimension_numbers = #tpu.dot_dimension_numbers<[1], [0], [0], [1], [0, 0, 1, 1], [], []>} : vector<64x896xbf16>, vector<896x128xbf16>, vector<64x128xf32> -> vector<64x128xf32>
    %c4 = arith.constant 4 : index
    %c0_250 = arith.constant 0 : index
    %181 = vector.load %arg4[%c4, %c0_250] : memref<8x128xf32, #tpu.memory_space<vmem>>, vector<1x128xf32>
    %182 = vector.broadcast %181 : vector<1x128xf32> to vector<64x128xf32>
    %183 = arith.addf %180, %182 : vector<64x128xf32>
    %cst_251 = arith.constant 0.000000e+00 : f32
    %184 = vector.broadcast %cst_251 : f32 to vector<64x128xf32>
    %185 = arith.maximumf %183, %184 : vector<64x128xf32>
    %186 = arith.truncf %185 : vector<64x128xf32> to vector<64x128xbf16>
    %187 = vector.extract_strided_slice %186 {offsets = [0, 0], sizes = [32, 128], strides = [1, 1]} : vector<64x128xbf16> to vector<32x128xbf16>
    %c16_252 = arith.constant 16 : index
    %c0_253 = arith.constant 0 : index
    %188 = vector.load %arg12[%c16_252, %c0_253] : memref<320x128xbf16, #tpu.memory_space<vmem>>, vector<32x128xbf16>
    tpu.vector_store %arg12[%c16_252, %c0_253], %187 {strides = array<i32>} : memref<320x128xbf16, #tpu.memory_space<vmem>>, vector<32x128xbf16>,
    %c48_254 = arith.constant 48 : index
    %c0_255 = arith.constant 0 : index
    %189 = vector.load %arg12[%c48_254, %c0_255] : memref<320x128xbf16, #tpu.memory_space<vmem>>, vector<16x128xbf16>
    tpu.vector_store %arg12[%c48_254, %c0_255], %4 {strides = array<i32>} : memref<320x128xbf16, #tpu.memory_space<vmem>>, vector<16x128xbf16>,
    %190 = vector.extract_strided_slice %186 {offsets = [32, 0], sizes = [32, 128], strides = [1, 1]} : vector<64x128xbf16> to vector<32x128xbf16>
    %c176_256 = arith.constant 176 : index
    %c0_257 = arith.constant 0 : index
    %191 = vector.load %arg12[%c176_256, %c0_257] : memref<320x128xbf16, #tpu.memory_space<vmem>>, vector<32x128xbf16>
    tpu.vector_store %arg12[%c176_256, %c0_257], %190 {strides = array<i32>} : memref<320x128xbf16, #tpu.memory_space<vmem>>, vector<32x128xbf16>,
    %c208_258 = arith.constant 208 : index
    %c0_259 = arith.constant 0 : index
    %192 = vector.load %arg12[%c208_258, %c0_259] : memref<320x128xbf16, #tpu.memory_space<vmem>>, vector<16x128xbf16>
    tpu.vector_store %arg12[%c208_258, %c0_259], %4 {strides = array<i32>} : memref<320x128xbf16, #tpu.memory_space<vmem>>, vector<16x128xbf16>,
    %c14_260 = arith.constant 14 : index
    %c0_261 = arith.constant 0 : index
    %193 = vector.load %arg12[%c14_260, %c0_261] : memref<320x128xbf16, #tpu.memory_space<vmem>>, vector<32x128xbf16>
    %c0_262 = arith.constant 0 : index
    %c0_263 = arith.constant 0 : index
    %194 = vector.load %arg13[%c0_262, %c0_263] : memref<256x896xbf16, #tpu.memory_space<vmem>>, vector<32x128xbf16>
    tpu.vector_store %arg13[%c0_262, %c0_263], %193 {strides = array<i32>} : memref<256x896xbf16, #tpu.memory_space<vmem>>, vector<32x128xbf16>,
    %c15_264 = arith.constant 15 : index
    %c0_265 = arith.constant 0 : index
    %195 = vector.load %arg12[%c15_264, %c0_265] : memref<320x128xbf16, #tpu.memory_space<vmem>>, vector<32x128xbf16>
    %c0_266 = arith.constant 0 : index
    %c128_267 = arith.constant 128 : index
    %196 = vector.load %arg13[%c0_266, %c128_267] : memref<256x896xbf16, #tpu.memory_space<vmem>>, vector<32x128xbf16>
    tpu.vector_store %arg13[%c0_266, %c128_267], %195 {strides = array<i32>} : memref<256x896xbf16, #tpu.memory_space<vmem>>, vector<32x128xbf16>,
    %c16_268 = arith.constant 16 : index
    %c0_269 = arith.constant 0 : index
    %197 = vector.load %arg12[%c16_268, %c0_269] : memref<320x128xbf16, #tpu.memory_space<vmem>>, vector<32x128xbf16>
    %c0_270 = arith.constant 0 : index
    %c256_271 = arith.constant 256 : index
    %198 = vector.load %arg13[%c0_270, %c256_271] : memref<256x896xbf16, #tpu.memory_space<vmem>>, vector<32x128xbf16>
    tpu.vector_store %arg13[%c0_270, %c256_271], %197 {strides = array<i32>} : memref<256x896xbf16, #tpu.memory_space<vmem>>, vector<32x128xbf16>,
    %c17_272 = arith.constant 17 : index
    %c0_273 = arith.constant 0 : index
    %199 = vector.load %arg12[%c17_272, %c0_273] : memref<320x128xbf16, #tpu.memory_space<vmem>>, vector<32x128xbf16>
    %c0_274 = arith.constant 0 : index
    %c384_275 = arith.constant 384 : index
    %200 = vector.load %arg13[%c0_274, %c384_275] : memref<256x896xbf16, #tpu.memory_space<vmem>>, vector<32x128xbf16>
    tpu.vector_store %arg13[%c0_274, %c384_275], %199 {strides = array<i32>} : memref<256x896xbf16, #tpu.memory_space<vmem>>, vector<32x128xbf16>,
    %c18_276 = arith.constant 18 : index
    %c0_277 = arith.constant 0 : index
    %201 = vector.load %arg12[%c18_276, %c0_277] : memref<320x128xbf16, #tpu.memory_space<vmem>>, vector<32x128xbf16>
    %c0_278 = arith.constant 0 : index
    %c512_279 = arith.constant 512 : index
    %202 = vector.load %arg13[%c0_278, %c512_279] : memref<256x896xbf16, #tpu.memory_space<vmem>>, vector<32x128xbf16>
    tpu.vector_store %arg13[%c0_278, %c512_279], %201 {strides = array<i32>} : memref<256x896xbf16, #tpu.memory_space<vmem>>, vector<32x128xbf16>,
    %c174_280 = arith.constant 174 : index
    %c0_281 = arith.constant 0 : index
    %203 = vector.load %arg12[%c174_280, %c0_281] : memref<320x128xbf16, #tpu.memory_space<vmem>>, vector<32x128xbf16>
    %c32_282 = arith.constant 32 : index
    %c0_283 = arith.constant 0 : index
    %204 = vector.load %arg13[%c32_282, %c0_283] : memref<256x896xbf16, #tpu.memory_space<vmem>>, vector<32x128xbf16>
    tpu.vector_store %arg13[%c32_282, %c0_283], %203 {strides = array<i32>} : memref<256x896xbf16, #tpu.memory_space<vmem>>, vector<32x128xbf16>,
    %c175_284 = arith.constant 175 : index
    %c0_285 = arith.constant 0 : index
    %205 = vector.load %arg12[%c175_284, %c0_285] : memref<320x128xbf16, #tpu.memory_space<vmem>>, vector<32x128xbf16>
    %c32_286 = arith.constant 32 : index
    %c128_287 = arith.constant 128 : index
    %206 = vector.load %arg13[%c32_286, %c128_287] : memref<256x896xbf16, #tpu.memory_space<vmem>>, vector<32x128xbf16>
    tpu.vector_store %arg13[%c32_286, %c128_287], %205 {strides = array<i32>} : memref<256x896xbf16, #tpu.memory_space<vmem>>, vector<32x128xbf16>,
    %c176_288 = arith.constant 176 : index
    %c0_289 = arith.constant 0 : index
    %207 = vector.load %arg12[%c176_288, %c0_289] : memref<320x128xbf16, #tpu.memory_space<vmem>>, vector<32x128xbf16>
    %c32_290 = arith.constant 32 : index
    %c256_291 = arith.constant 256 : index
    %208 = vector.load %arg13[%c32_290, %c256_291] : memref<256x896xbf16, #tpu.memory_space<vmem>>, vector<32x128xbf16>
    tpu.vector_store %arg13[%c32_290, %c256_291], %207 {strides = array<i32>} : memref<256x896xbf16, #tpu.memory_space<vmem>>, vector<32x128xbf16>,
    %c177_292 = arith.constant 177 : index
    %c0_293 = arith.constant 0 : index
    %209 = vector.load %arg12[%c177_292, %c0_293] : memref<320x128xbf16, #tpu.memory_space<vmem>>, vector<32x128xbf16>
    %c32_294 = arith.constant 32 : index
    %c384_295 = arith.constant 384 : index
    %210 = vector.load %arg13[%c32_294, %c384_295] : memref<256x896xbf16, #tpu.memory_space<vmem>>, vector<32x128xbf16>
    tpu.vector_store %arg13[%c32_294, %c384_295], %209 {strides = array<i32>} : memref<256x896xbf16, #tpu.memory_space<vmem>>, vector<32x128xbf16>,
    %c178_296 = arith.constant 178 : index
    %c0_297 = arith.constant 0 : index
    %211 = vector.load %arg12[%c178_296, %c0_297] : memref<320x128xbf16, #tpu.memory_space<vmem>>, vector<32x128xbf16>
    %c32_298 = arith.constant 32 : index
    %c512_299 = arith.constant 512 : index
    %212 = vector.load %arg13[%c32_298, %c512_299] : memref<256x896xbf16, #tpu.memory_space<vmem>>, vector<32x128xbf16>
    tpu.vector_store %arg13[%c32_298, %c512_299], %211 {strides = array<i32>} : memref<256x896xbf16, #tpu.memory_space<vmem>>, vector<32x128xbf16>,
    %c0_300 = arith.constant 0 : index
    %c0_301 = arith.constant 0 : index
    %213 = vector.load %arg13[%c0_300, %c0_301] : memref<256x896xbf16, #tpu.memory_space<vmem>>, vector<64x640xbf16>
    %c896 = arith.constant 896 : index
    %c0_302 = arith.constant 0 : index
    %214 = vector.load %arg16[%c896, %c0_302] : memref<3072x128xbf16, #tpu.memory_space<vmem>>, vector<640x128xbf16>
    %cst_303 = arith.constant dense<0.000000e+00> : vector<64x128xf32>
    %215 = tpu.matmul %213, %214, %cst_303 {dimension_numbers = #tpu.dot_dimension_numbers<[1], [0], [0], [1], [0, 0, 1, 1], [], []>} : vector<64x640xbf16>, vector<640x128xbf16>, vector<64x128xf32> -> vector<64x128xf32>
    %c5 = arith.constant 5 : index
    %c0_304 = arith.constant 0 : index
    %216 = vector.load %arg4[%c5, %c0_304] : memref<8x128xf32, #tpu.memory_space<vmem>>, vector<1x128xf32>
    %217 = vector.broadcast %216 : vector<1x128xf32> to vector<64x128xf32>
    %218 = arith.addf %215, %217 : vector<64x128xf32>
    %cst_305 = arith.constant 0.000000e+00 : f32
    %219 = vector.broadcast %cst_305 : f32 to vector<64x128xf32>
    %220 = arith.maximumf %218, %219 : vector<64x128xf32>
    %c0_306 = arith.constant 0 : index
    %c0_307 = arith.constant 0 : index
    %221 = vector.load %arg14[%c0_306, %c0_307] : memref<256x128xf32, #tpu.memory_space<vmem>>, vector<64x128xf32>
    tpu.vector_store %arg14[%c0_306, %c0_307], %220 {strides = array<i32>} : memref<256x128xf32, #tpu.memory_space<vmem>>, vector<64x128xf32>,
    %c0_308 = arith.constant 0 : index
    %c0_309 = arith.constant 0 : index
    %222 = tpu.strided_load %arg14[%c0_308, %c0_309] {strides = array<i32: 2, 1>} : memref<256x128xf32, #tpu.memory_space<vmem>>, vector<16x128xf32>
    %c1_310 = arith.constant 1 : index
    %c0_311 = arith.constant 0 : index
    %223 = tpu.strided_load %arg14[%c1_310, %c0_311] {strides = array<i32: 2, 1>} : memref<256x128xf32, #tpu.memory_space<vmem>>, vector<16x128xf32>
    %224 = arith.maximumf %222, %223 : vector<16x128xf32>
    %225 = arith.truncf %224 : vector<16x128xf32> to vector<16x128xbf16>
    %c16_312 = arith.constant 16 : index
    %c0_313 = arith.constant 0 : index
    %226 = vector.load %arg12[%c16_312, %c0_313] : memref<320x128xbf16, #tpu.memory_space<vmem>>, vector<16x128xbf16>
    tpu.vector_store %arg12[%c16_312, %c0_313], %225 {strides = array<i32>} : memref<320x128xbf16, #tpu.memory_space<vmem>>, vector<16x128xbf16>,
    %c32_314 = arith.constant 32 : index
    %c0_315 = arith.constant 0 : index
    %227 = vector.load %arg12[%c32_314, %c0_315] : memref<320x128xbf16, #tpu.memory_space<vmem>>, vector<16x128xbf16>
    tpu.vector_store %arg12[%c32_314, %c0_315], %4 {strides = array<i32>} : memref<320x128xbf16, #tpu.memory_space<vmem>>, vector<16x128xbf16>,
    %c32_316 = arith.constant 32 : index
    %c0_317 = arith.constant 0 : index
    %228 = tpu.strided_load %arg14[%c32_316, %c0_317] {strides = array<i32: 2, 1>} : memref<256x128xf32, #tpu.memory_space<vmem>>, vector<16x128xf32>
    %c33 = arith.constant 33 : index
    %c0_318 = arith.constant 0 : index
    %229 = tpu.strided_load %arg14[%c33, %c0_318] {strides = array<i32: 2, 1>} : memref<256x128xf32, #tpu.memory_space<vmem>>, vector<16x128xf32>
    %230 = arith.maximumf %228, %229 : vector<16x128xf32>
    %231 = arith.truncf %230 : vector<16x128xf32> to vector<16x128xbf16>
    %c176_319 = arith.constant 176 : index
    %c0_320 = arith.constant 0 : index
    %232 = vector.load %arg12[%c176_319, %c0_320] : memref<320x128xbf16, #tpu.memory_space<vmem>>, vector<16x128xbf16>
    tpu.vector_store %arg12[%c176_319, %c0_320], %231 {strides = array<i32>} : memref<320x128xbf16, #tpu.memory_space<vmem>>, vector<16x128xbf16>,
    %c192 = arith.constant 192 : index
    %c0_321 = arith.constant 0 : index
    %233 = vector.load %arg12[%c192, %c0_321] : memref<320x128xbf16, #tpu.memory_space<vmem>>, vector<16x128xbf16>
    tpu.vector_store %arg12[%c192, %c0_321], %4 {strides = array<i32>} : memref<320x128xbf16, #tpu.memory_space<vmem>>, vector<16x128xbf16>,
    %c13_322 = arith.constant 13 : index
    %c0_323 = arith.constant 0 : index
    %234 = vector.load %arg12[%c13_322, %c0_323] : memref<320x128xbf16, #tpu.memory_space<vmem>>, vector<16x128xbf16>
    %c0_324 = arith.constant 0 : index
    %c0_325 = arith.constant 0 : index
    %235 = vector.load %arg13[%c0_324, %c0_325] : memref<256x896xbf16, #tpu.memory_space<vmem>>, vector<16x128xbf16>
    tpu.vector_store %arg13[%c0_324, %c0_325], %234 {strides = array<i32>} : memref<256x896xbf16, #tpu.memory_space<vmem>>, vector<16x128xbf16>,
    %c14_326 = arith.constant 14 : index
    %c0_327 = arith.constant 0 : index
    %236 = vector.load %arg12[%c14_326, %c0_327] : memref<320x128xbf16, #tpu.memory_space<vmem>>, vector<16x128xbf16>
    %c0_328 = arith.constant 0 : index
    %c128_329 = arith.constant 128 : index
    %237 = vector.load %arg13[%c0_328, %c128_329] : memref<256x896xbf16, #tpu.memory_space<vmem>>, vector<16x128xbf16>
    tpu.vector_store %arg13[%c0_328, %c128_329], %236 {strides = array<i32>} : memref<256x896xbf16, #tpu.memory_space<vmem>>, vector<16x128xbf16>,
    %c15_330 = arith.constant 15 : index
    %c0_331 = arith.constant 0 : index
    %238 = vector.load %arg12[%c15_330, %c0_331] : memref<320x128xbf16, #tpu.memory_space<vmem>>, vector<16x128xbf16>
    %c0_332 = arith.constant 0 : index
    %c256_333 = arith.constant 256 : index
    %239 = vector.load %arg13[%c0_332, %c256_333] : memref<256x896xbf16, #tpu.memory_space<vmem>>, vector<16x128xbf16>
    tpu.vector_store %arg13[%c0_332, %c256_333], %238 {strides = array<i32>} : memref<256x896xbf16, #tpu.memory_space<vmem>>, vector<16x128xbf16>,
    %c16_334 = arith.constant 16 : index
    %c0_335 = arith.constant 0 : index
    %240 = vector.load %arg12[%c16_334, %c0_335] : memref<320x128xbf16, #tpu.memory_space<vmem>>, vector<16x128xbf16>
    %c0_336 = arith.constant 0 : index
    %c384_337 = arith.constant 384 : index
    %241 = vector.load %arg13[%c0_336, %c384_337] : memref<256x896xbf16, #tpu.memory_space<vmem>>, vector<16x128xbf16>
    tpu.vector_store %arg13[%c0_336, %c384_337], %240 {strides = array<i32>} : memref<256x896xbf16, #tpu.memory_space<vmem>>, vector<16x128xbf16>,
    %c17_338 = arith.constant 17 : index
    %c0_339 = arith.constant 0 : index
    %242 = vector.load %arg12[%c17_338, %c0_339] : memref<320x128xbf16, #tpu.memory_space<vmem>>, vector<16x128xbf16>
    %c0_340 = arith.constant 0 : index
    %c512_341 = arith.constant 512 : index
    %243 = vector.load %arg13[%c0_340, %c512_341] : memref<256x896xbf16, #tpu.memory_space<vmem>>, vector<16x128xbf16>
    tpu.vector_store %arg13[%c0_340, %c512_341], %242 {strides = array<i32>} : memref<256x896xbf16, #tpu.memory_space<vmem>>, vector<16x128xbf16>,
    %c18_342 = arith.constant 18 : index
    %c0_343 = arith.constant 0 : index
    %244 = vector.load %arg12[%c18_342, %c0_343] : memref<320x128xbf16, #tpu.memory_space<vmem>>, vector<16x128xbf16>
    %c0_344 = arith.constant 0 : index
    %c640_345 = arith.constant 640 : index
    %245 = vector.load %arg13[%c0_344, %c640_345] : memref<256x896xbf16, #tpu.memory_space<vmem>>, vector<16x128xbf16>
    tpu.vector_store %arg13[%c0_344, %c640_345], %244 {strides = array<i32>} : memref<256x896xbf16, #tpu.memory_space<vmem>>, vector<16x128xbf16>,
    %c19_346 = arith.constant 19 : index
    %c0_347 = arith.constant 0 : index
    %246 = vector.load %arg12[%c19_346, %c0_347] : memref<320x128xbf16, #tpu.memory_space<vmem>>, vector<16x128xbf16>
    %c0_348 = arith.constant 0 : index
    %c768_349 = arith.constant 768 : index
    %247 = vector.load %arg13[%c0_348, %c768_349] : memref<256x896xbf16, #tpu.memory_space<vmem>>, vector<16x128xbf16>
    tpu.vector_store %arg13[%c0_348, %c768_349], %246 {strides = array<i32>} : memref<256x896xbf16, #tpu.memory_space<vmem>>, vector<16x128xbf16>,
    %c173_350 = arith.constant 173 : index
    %c0_351 = arith.constant 0 : index
    %248 = vector.load %arg12[%c173_350, %c0_351] : memref<320x128xbf16, #tpu.memory_space<vmem>>, vector<16x128xbf16>
    %c16_352 = arith.constant 16 : index
    %c0_353 = arith.constant 0 : index
    %249 = vector.load %arg13[%c16_352, %c0_353] : memref<256x896xbf16, #tpu.memory_space<vmem>>, vector<16x128xbf16>
    tpu.vector_store %arg13[%c16_352, %c0_353], %248 {strides = array<i32>} : memref<256x896xbf16, #tpu.memory_space<vmem>>, vector<16x128xbf16>,
    %c174_354 = arith.constant 174 : index
    %c0_355 = arith.constant 0 : index
    %250 = vector.load %arg12[%c174_354, %c0_355] : memref<320x128xbf16, #tpu.memory_space<vmem>>, vector<16x128xbf16>
    %c16_356 = arith.constant 16 : index
    %c128_357 = arith.constant 128 : index
    %251 = vector.load %arg13[%c16_356, %c128_357] : memref<256x896xbf16, #tpu.memory_space<vmem>>, vector<16x128xbf16>
    tpu.vector_store %arg13[%c16_356, %c128_357], %250 {strides = array<i32>} : memref<256x896xbf16, #tpu.memory_space<vmem>>, vector<16x128xbf16>,
    %c175_358 = arith.constant 175 : index
    %c0_359 = arith.constant 0 : index
    %252 = vector.load %arg12[%c175_358, %c0_359] : memref<320x128xbf16, #tpu.memory_space<vmem>>, vector<16x128xbf16>
    %c16_360 = arith.constant 16 : index
    %c256_361 = arith.constant 256 : index
    %253 = vector.load %arg13[%c16_360, %c256_361] : memref<256x896xbf16, #tpu.memory_space<vmem>>, vector<16x128xbf16>
    tpu.vector_store %arg13[%c16_360, %c256_361], %252 {strides = array<i32>} : memref<256x896xbf16, #tpu.memory_space<vmem>>, vector<16x128xbf16>,
    %c176_362 = arith.constant 176 : index
    %c0_363 = arith.constant 0 : index
    %254 = vector.load %arg12[%c176_362, %c0_363] : memref<320x128xbf16, #tpu.memory_space<vmem>>, vector<16x128xbf16>
    %c16_364 = arith.constant 16 : index
    %c384_365 = arith.constant 384 : index
    %255 = vector.load %arg13[%c16_364, %c384_365] : memref<256x896xbf16, #tpu.memory_space<vmem>>, vector<16x128xbf16>
    tpu.vector_store %arg13[%c16_364, %c384_365], %254 {strides = array<i32>} : memref<256x896xbf16, #tpu.memory_space<vmem>>, vector<16x128xbf16>,
    %c177_366 = arith.constant 177 : index
    %c0_367 = arith.constant 0 : index
    %256 = vector.load %arg12[%c177_366, %c0_367] : memref<320x128xbf16, #tpu.memory_space<vmem>>, vector<16x128xbf16>
    %c16_368 = arith.constant 16 : index
    %c512_369 = arith.constant 512 : index
    %257 = vector.load %arg13[%c16_368, %c512_369] : memref<256x896xbf16, #tpu.memory_space<vmem>>, vector<16x128xbf16>
    tpu.vector_store %arg13[%c16_368, %c512_369], %256 {strides = array<i32>} : memref<256x896xbf16, #tpu.memory_space<vmem>>, vector<16x128xbf16>,
    %c178_370 = arith.constant 178 : index
    %c0_371 = arith.constant 0 : index
    %258 = vector.load %arg12[%c178_370, %c0_371] : memref<320x128xbf16, #tpu.memory_space<vmem>>, vector<16x128xbf16>
    %c16_372 = arith.constant 16 : index
    %c640_373 = arith.constant 640 : index
    %259 = vector.load %arg13[%c16_372, %c640_373] : memref<256x896xbf16, #tpu.memory_space<vmem>>, vector<16x128xbf16>
    tpu.vector_store %arg13[%c16_372, %c640_373], %258 {strides = array<i32>} : memref<256x896xbf16, #tpu.memory_space<vmem>>, vector<16x128xbf16>,
    %c179_374 = arith.constant 179 : index
    %c0_375 = arith.constant 0 : index
    %260 = vector.load %arg12[%c179_374, %c0_375] : memref<320x128xbf16, #tpu.memory_space<vmem>>, vector<16x128xbf16>
    %c16_376 = arith.constant 16 : index
    %c768_377 = arith.constant 768 : index
    %261 = vector.load %arg13[%c16_376, %c768_377] : memref<256x896xbf16, #tpu.memory_space<vmem>>, vector<16x128xbf16>
    tpu.vector_store %arg13[%c16_376, %c768_377], %260 {strides = array<i32>} : memref<256x896xbf16, #tpu.memory_space<vmem>>, vector<16x128xbf16>,
    %c0_378 = arith.constant 0 : index
    %c0_379 = arith.constant 0 : index
    %262 = vector.load %arg13[%c0_378, %c0_379] : memref<256x896xbf16, #tpu.memory_space<vmem>>, vector<32x896xbf16>
    %c1536_380 = arith.constant 1536 : index
    %c0_381 = arith.constant 0 : index
    %263 = vector.load %arg16[%c1536_380, %c0_381] : memref<3072x128xbf16, #tpu.memory_space<vmem>>, vector<896x128xbf16>
    %cst_382 = arith.constant dense<0.000000e+00> : vector<32x128xf32>
    %264 = tpu.matmul %262, %263, %cst_382 {dimension_numbers = #tpu.dot_dimension_numbers<[1], [0], [0], [1], [0, 0, 1, 1], [], []>} : vector<32x896xbf16>, vector<896x128xbf16>, vector<32x128xf32> -> vector<32x128xf32>
    %c6 = arith.constant 6 : index
    %c0_383 = arith.constant 0 : index
    %265 = vector.load %arg4[%c6, %c0_383] : memref<8x128xf32, #tpu.memory_space<vmem>>, vector<1x128xf32>
    %266 = vector.broadcast %265 : vector<1x128xf32> to vector<32x128xf32>
    %267 = arith.addf %264, %266 : vector<32x128xf32>
    %cst_384 = arith.constant 0.000000e+00 : f32
    %268 = vector.broadcast %cst_384 : f32 to vector<32x128xf32>
    %269 = arith.maximumf %267, %268 : vector<32x128xf32>
    %270 = arith.truncf %269 : vector<32x128xf32> to vector<32x128xbf16>
    %271 = vector.extract_strided_slice %270 {offsets = [0, 0], sizes = [16, 128], strides = [1, 1]} : vector<32x128xbf16> to vector<16x128xbf16>
    %c16_385 = arith.constant 16 : index
    %c0_386 = arith.constant 0 : index
    %272 = vector.load %arg12[%c16_385, %c0_386] : memref<320x128xbf16, #tpu.memory_space<vmem>>, vector<16x128xbf16>
    tpu.vector_store %arg12[%c16_385, %c0_386], %271 {strides = array<i32>} : memref<320x128xbf16, #tpu.memory_space<vmem>>, vector<16x128xbf16>,
    %c32_387 = arith.constant 32 : index
    %c0_388 = arith.constant 0 : index
    %273 = vector.load %arg12[%c32_387, %c0_388] : memref<320x128xbf16, #tpu.memory_space<vmem>>, vector<16x128xbf16>
    tpu.vector_store %arg12[%c32_387, %c0_388], %4 {strides = array<i32>} : memref<320x128xbf16, #tpu.memory_space<vmem>>, vector<16x128xbf16>,
    %274 = vector.extract_strided_slice %270 {offsets = [16, 0], sizes = [16, 128], strides = [1, 1]} : vector<32x128xbf16> to vector<16x128xbf16>
    %c176_389 = arith.constant 176 : index
    %c0_390 = arith.constant 0 : index
    %275 = vector.load %arg12[%c176_389, %c0_390] : memref<320x128xbf16, #tpu.memory_space<vmem>>, vector<16x128xbf16>
    tpu.vector_store %arg12[%c176_389, %c0_390], %274 {strides = array<i32>} : memref<320x128xbf16, #tpu.memory_space<vmem>>, vector<16x128xbf16>,
    %c192_391 = arith.constant 192 : index
    %c0_392 = arith.constant 0 : index
    %276 = vector.load %arg12[%c192_391, %c0_392] : memref<320x128xbf16, #tpu.memory_space<vmem>>, vector<16x128xbf16>
    tpu.vector_store %arg12[%c192_391, %c0_392], %4 {strides = array<i32>} : memref<320x128xbf16, #tpu.memory_space<vmem>>, vector<16x128xbf16>,
    %c14_393 = arith.constant 14 : index
    %c0_394 = arith.constant 0 : index
    %277 = vector.load %arg12[%c14_393, %c0_394] : memref<320x128xbf16, #tpu.memory_space<vmem>>, vector<16x128xbf16>
    %c0_395 = arith.constant 0 : index
    %c0_396 = arith.constant 0 : index
    %278 = vector.load %arg13[%c0_395, %c0_396] : memref<256x896xbf16, #tpu.memory_space<vmem>>, vector<16x128xbf16>
    tpu.vector_store %arg13[%c0_395, %c0_396], %277 {strides = array<i32>} : memref<256x896xbf16, #tpu.memory_space<vmem>>, vector<16x128xbf16>,
    %c15_397 = arith.constant 15 : index
    %c0_398 = arith.constant 0 : index
    %279 = vector.load %arg12[%c15_397, %c0_398] : memref<320x128xbf16, #tpu.memory_space<vmem>>, vector<16x128xbf16>
    %c0_399 = arith.constant 0 : index
    %c128_400 = arith.constant 128 : index
    %280 = vector.load %arg13[%c0_399, %c128_400] : memref<256x896xbf16, #tpu.memory_space<vmem>>, vector<16x128xbf16>
    tpu.vector_store %arg13[%c0_399, %c128_400], %279 {strides = array<i32>} : memref<256x896xbf16, #tpu.memory_space<vmem>>, vector<16x128xbf16>,
    %c16_401 = arith.constant 16 : index
    %c0_402 = arith.constant 0 : index
    %281 = vector.load %arg12[%c16_401, %c0_402] : memref<320x128xbf16, #tpu.memory_space<vmem>>, vector<16x128xbf16>
    %c0_403 = arith.constant 0 : index
    %c256_404 = arith.constant 256 : index
    %282 = vector.load %arg13[%c0_403, %c256_404] : memref<256x896xbf16, #tpu.memory_space<vmem>>, vector<16x128xbf16>
    tpu.vector_store %arg13[%c0_403, %c256_404], %281 {strides = array<i32>} : memref<256x896xbf16, #tpu.memory_space<vmem>>, vector<16x128xbf16>,
    %c17_405 = arith.constant 17 : index
    %c0_406 = arith.constant 0 : index
    %283 = vector.load %arg12[%c17_405, %c0_406] : memref<320x128xbf16, #tpu.memory_space<vmem>>, vector<16x128xbf16>
    %c0_407 = arith.constant 0 : index
    %c384_408 = arith.constant 384 : index
    %284 = vector.load %arg13[%c0_407, %c384_408] : memref<256x896xbf16, #tpu.memory_space<vmem>>, vector<16x128xbf16>
    tpu.vector_store %arg13[%c0_407, %c384_408], %283 {strides = array<i32>} : memref<256x896xbf16, #tpu.memory_space<vmem>>, vector<16x128xbf16>,
    %c18_409 = arith.constant 18 : index
    %c0_410 = arith.constant 0 : index
    %285 = vector.load %arg12[%c18_409, %c0_410] : memref<320x128xbf16, #tpu.memory_space<vmem>>, vector<16x128xbf16>
    %c0_411 = arith.constant 0 : index
    %c512_412 = arith.constant 512 : index
    %286 = vector.load %arg13[%c0_411, %c512_412] : memref<256x896xbf16, #tpu.memory_space<vmem>>, vector<16x128xbf16>
    tpu.vector_store %arg13[%c0_411, %c512_412], %285 {strides = array<i32>} : memref<256x896xbf16, #tpu.memory_space<vmem>>, vector<16x128xbf16>,
    %c174_413 = arith.constant 174 : index
    %c0_414 = arith.constant 0 : index
    %287 = vector.load %arg12[%c174_413, %c0_414] : memref<320x128xbf16, #tpu.memory_space<vmem>>, vector<16x128xbf16>
    %c16_415 = arith.constant 16 : index
    %c0_416 = arith.constant 0 : index
    %288 = vector.load %arg13[%c16_415, %c0_416] : memref<256x896xbf16, #tpu.memory_space<vmem>>, vector<16x128xbf16>
    tpu.vector_store %arg13[%c16_415, %c0_416], %287 {strides = array<i32>} : memref<256x896xbf16, #tpu.memory_space<vmem>>, vector<16x128xbf16>,
    %c175_417 = arith.constant 175 : index
    %c0_418 = arith.constant 0 : index
    %289 = vector.load %arg12[%c175_417, %c0_418] : memref<320x128xbf16, #tpu.memory_space<vmem>>, vector<16x128xbf16>
    %c16_419 = arith.constant 16 : index
    %c128_420 = arith.constant 128 : index
    %290 = vector.load %arg13[%c16_419, %c128_420] : memref<256x896xbf16, #tpu.memory_space<vmem>>, vector<16x128xbf16>
    tpu.vector_store %arg13[%c16_419, %c128_420], %289 {strides = array<i32>} : memref<256x896xbf16, #tpu.memory_space<vmem>>, vector<16x128xbf16>,
    %c176_421 = arith.constant 176 : index
    %c0_422 = arith.constant 0 : index
    %291 = vector.load %arg12[%c176_421, %c0_422] : memref<320x128xbf16, #tpu.memory_space<vmem>>, vector<16x128xbf16>
    %c16_423 = arith.constant 16 : index
    %c256_424 = arith.constant 256 : index
    %292 = vector.load %arg13[%c16_423, %c256_424] : memref<256x896xbf16, #tpu.memory_space<vmem>>, vector<16x128xbf16>
    tpu.vector_store %arg13[%c16_423, %c256_424], %291 {strides = array<i32>} : memref<256x896xbf16, #tpu.memory_space<vmem>>, vector<16x128xbf16>,
    %c177_425 = arith.constant 177 : index
    %c0_426 = arith.constant 0 : index
    %293 = vector.load %arg12[%c177_425, %c0_426] : memref<320x128xbf16, #tpu.memory_space<vmem>>, vector<16x128xbf16>
    %c16_427 = arith.constant 16 : index
    %c384_428 = arith.constant 384 : index
    %294 = vector.load %arg13[%c16_427, %c384_428] : memref<256x896xbf16, #tpu.memory_space<vmem>>, vector<16x128xbf16>
    tpu.vector_store %arg13[%c16_427, %c384_428], %293 {strides = array<i32>} : memref<256x896xbf16, #tpu.memory_space<vmem>>, vector<16x128xbf16>,
    %c178_429 = arith.constant 178 : index
    %c0_430 = arith.constant 0 : index
    %295 = vector.load %arg12[%c178_429, %c0_430] : memref<320x128xbf16, #tpu.memory_space<vmem>>, vector<16x128xbf16>
    %c16_431 = arith.constant 16 : index
    %c512_432 = arith.constant 512 : index
    %296 = vector.load %arg13[%c16_431, %c512_432] : memref<256x896xbf16, #tpu.memory_space<vmem>>, vector<16x128xbf16>
    tpu.vector_store %arg13[%c16_431, %c512_432], %295 {strides = array<i32>} : memref<256x896xbf16, #tpu.memory_space<vmem>>, vector<16x128xbf16>,
    %c0_433 = arith.constant 0 : index
    %c0_434 = arith.constant 0 : index
    %297 = vector.load %arg13[%c0_433, %c0_434] : memref<256x896xbf16, #tpu.memory_space<vmem>>, vector<32x640xbf16>
    %c2432 = arith.constant 2432 : index
    %c0_435 = arith.constant 0 : index
    %298 = vector.load %arg16[%c2432, %c0_435] : memref<3072x128xbf16, #tpu.memory_space<vmem>>, vector<640x128xbf16>
    %cst_436 = arith.constant dense<0.000000e+00> : vector<32x128xf32>
    %299 = tpu.matmul %297, %298, %cst_436 {dimension_numbers = #tpu.dot_dimension_numbers<[1], [0], [0], [1], [0, 0, 1, 1], [], []>} : vector<32x640xbf16>, vector<640x128xbf16>, vector<32x128xf32> -> vector<32x128xf32>
    %c7 = arith.constant 7 : index
    %c0_437 = arith.constant 0 : index
    %300 = vector.load %arg4[%c7, %c0_437] : memref<8x128xf32, #tpu.memory_space<vmem>>, vector<1x128xf32>
    %301 = vector.broadcast %300 : vector<1x128xf32> to vector<32x128xf32>
    %302 = arith.addf %299, %301 : vector<32x128xf32>
    %cst_438 = arith.constant 0.000000e+00 : f32
    %303 = vector.broadcast %cst_438 : f32 to vector<32x128xf32>
    %304 = arith.maximumf %302, %303 : vector<32x128xf32>
    %c0_439 = arith.constant 0 : index
    %c0_440 = arith.constant 0 : index
    %305 = vector.load %arg14[%c0_439, %c0_440] : memref<256x128xf32, #tpu.memory_space<vmem>>, vector<32x128xf32>
    tpu.vector_store %arg14[%c0_439, %c0_440], %304 {strides = array<i32>} : memref<256x128xf32, #tpu.memory_space<vmem>>, vector<32x128xf32>,
    %c0_441 = arith.constant 0 : index
    %c0_442 = arith.constant 0 : index
    %306 = vector.load %arg14[%c0_441, %c0_442] : memref<256x128xf32, #tpu.memory_space<vmem>>, vector<1x128xf32>
    %c1_443 = arith.constant 1 : index
    %c0_444 = arith.constant 0 : index
    %307 = vector.load %arg14[%c1_443, %c0_444] : memref<256x128xf32, #tpu.memory_space<vmem>>, vector<1x128xf32>
    %308 = arith.maximumf %306, %307 : vector<1x128xf32>
    %c0_445 = arith.constant 0 : index
    %c0_446 = arith.constant 0 : index
    %309 = vector.load %arg15[%c0_445, %c0_446] : memref<8x1024xf32, #tpu.memory_space<vmem>>, vector<1x128xf32>
    tpu.vector_store %arg15[%c0_445, %c0_446], %308 {strides = array<i32>} : memref<8x1024xf32, #tpu.memory_space<vmem>>, vector<1x128xf32>,
    %c2_447 = arith.constant 2 : index
    %c0_448 = arith.constant 0 : index
    %310 = vector.load %arg14[%c2_447, %c0_448] : memref<256x128xf32, #tpu.memory_space<vmem>>, vector<1x128xf32>
    %c3_449 = arith.constant 3 : index
    %c0_450 = arith.constant 0 : index
    %311 = vector.load %arg14[%c3_449, %c0_450] : memref<256x128xf32, #tpu.memory_space<vmem>>, vector<1x128xf32>
    %312 = arith.maximumf %310, %311 : vector<1x128xf32>
    %c0_451 = arith.constant 0 : index
    %c128_452 = arith.constant 128 : index
    %313 = vector.load %arg15[%c0_451, %c128_452] : memref<8x1024xf32, #tpu.memory_space<vmem>>, vector<1x128xf32>
    tpu.vector_store %arg15[%c0_451, %c128_452], %312 {strides = array<i32>} : memref<8x1024xf32, #tpu.memory_space<vmem>>, vector<1x128xf32>,
    %c4_453 = arith.constant 4 : index
    %c0_454 = arith.constant 0 : index
    %314 = vector.load %arg14[%c4_453, %c0_454] : memref<256x128xf32, #tpu.memory_space<vmem>>, vector<1x128xf32>
    %c5_455 = arith.constant 5 : index
    %c0_456 = arith.constant 0 : index
    %315 = vector.load %arg14[%c5_455, %c0_456] : memref<256x128xf32, #tpu.memory_space<vmem>>, vector<1x128xf32>
    %316 = arith.maximumf %314, %315 : vector<1x128xf32>
    %c0_457 = arith.constant 0 : index
    %c256_458 = arith.constant 256 : index
    %317 = vector.load %arg15[%c0_457, %c256_458] : memref<8x1024xf32, #tpu.memory_space<vmem>>, vector<1x128xf32>
    tpu.vector_store %arg15[%c0_457, %c256_458], %316 {strides = array<i32>} : memref<8x1024xf32, #tpu.memory_space<vmem>>, vector<1x128xf32>,
    %c6_459 = arith.constant 6 : index
    %c0_460 = arith.constant 0 : index
    %318 = vector.load %arg14[%c6_459, %c0_460] : memref<256x128xf32, #tpu.memory_space<vmem>>, vector<1x128xf32>
    %c7_461 = arith.constant 7 : index
    %c0_462 = arith.constant 0 : index
    %319 = vector.load %arg14[%c7_461, %c0_462] : memref<256x128xf32, #tpu.memory_space<vmem>>, vector<1x128xf32>
    %320 = arith.maximumf %318, %319 : vector<1x128xf32>
    %c0_463 = arith.constant 0 : index
    %c384_464 = arith.constant 384 : index
    %321 = vector.load %arg15[%c0_463, %c384_464] : memref<8x1024xf32, #tpu.memory_space<vmem>>, vector<1x128xf32>
    tpu.vector_store %arg15[%c0_463, %c384_464], %320 {strides = array<i32>} : memref<8x1024xf32, #tpu.memory_space<vmem>>, vector<1x128xf32>,
    %c8 = arith.constant 8 : index
    %c0_465 = arith.constant 0 : index
    %322 = vector.load %arg14[%c8, %c0_465] : memref<256x128xf32, #tpu.memory_space<vmem>>, vector<1x128xf32>
    %c9 = arith.constant 9 : index
    %c0_466 = arith.constant 0 : index
    %323 = vector.load %arg14[%c9, %c0_466] : memref<256x128xf32, #tpu.memory_space<vmem>>, vector<1x128xf32>
    %324 = arith.maximumf %322, %323 : vector<1x128xf32>
    %c0_467 = arith.constant 0 : index
    %c512_468 = arith.constant 512 : index
    %325 = vector.load %arg15[%c0_467, %c512_468] : memref<8x1024xf32, #tpu.memory_space<vmem>>, vector<1x128xf32>
    tpu.vector_store %arg15[%c0_467, %c512_468], %324 {strides = array<i32>} : memref<8x1024xf32, #tpu.memory_space<vmem>>, vector<1x128xf32>,
    %c10 = arith.constant 10 : index
    %c0_469 = arith.constant 0 : index
    %326 = vector.load %arg14[%c10, %c0_469] : memref<256x128xf32, #tpu.memory_space<vmem>>, vector<1x128xf32>
    %c11 = arith.constant 11 : index
    %c0_470 = arith.constant 0 : index
    %327 = vector.load %arg14[%c11, %c0_470] : memref<256x128xf32, #tpu.memory_space<vmem>>, vector<1x128xf32>
    %328 = arith.maximumf %326, %327 : vector<1x128xf32>
    %c0_471 = arith.constant 0 : index
    %c640_472 = arith.constant 640 : index
    %329 = vector.load %arg15[%c0_471, %c640_472] : memref<8x1024xf32, #tpu.memory_space<vmem>>, vector<1x128xf32>
    tpu.vector_store %arg15[%c0_471, %c640_472], %328 {strides = array<i32>} : memref<8x1024xf32, #tpu.memory_space<vmem>>, vector<1x128xf32>,
    %c12 = arith.constant 12 : index
    %c0_473 = arith.constant 0 : index
    %330 = vector.load %arg14[%c12, %c0_473] : memref<256x128xf32, #tpu.memory_space<vmem>>, vector<1x128xf32>
    %c13_474 = arith.constant 13 : index
    %c0_475 = arith.constant 0 : index
    %331 = vector.load %arg14[%c13_474, %c0_475] : memref<256x128xf32, #tpu.memory_space<vmem>>, vector<1x128xf32>
    %332 = arith.maximumf %330, %331 : vector<1x128xf32>
    %c0_476 = arith.constant 0 : index
    %c768_477 = arith.constant 768 : index
    %333 = vector.load %arg15[%c0_476, %c768_477] : memref<8x1024xf32, #tpu.memory_space<vmem>>, vector<1x128xf32>
    tpu.vector_store %arg15[%c0_476, %c768_477], %332 {strides = array<i32>} : memref<8x1024xf32, #tpu.memory_space<vmem>>, vector<1x128xf32>,
    %c14_478 = arith.constant 14 : index
    %c0_479 = arith.constant 0 : index
    %334 = vector.load %arg14[%c14_478, %c0_479] : memref<256x128xf32, #tpu.memory_space<vmem>>, vector<1x128xf32>
    %c15_480 = arith.constant 15 : index
    %c0_481 = arith.constant 0 : index
    %335 = vector.load %arg14[%c15_480, %c0_481] : memref<256x128xf32, #tpu.memory_space<vmem>>, vector<1x128xf32>
    %336 = arith.maximumf %334, %335 : vector<1x128xf32>
    %c0_482 = arith.constant 0 : index
    %c896_483 = arith.constant 896 : index
    %337 = vector.load %arg15[%c0_482, %c896_483] : memref<8x1024xf32, #tpu.memory_space<vmem>>, vector<1x128xf32>
    tpu.vector_store %arg15[%c0_482, %c896_483], %336 {strides = array<i32>} : memref<8x1024xf32, #tpu.memory_space<vmem>>, vector<1x128xf32>,
    %c16_484 = arith.constant 16 : index
    %c0_485 = arith.constant 0 : index
    %338 = vector.load %arg14[%c16_484, %c0_485] : memref<256x128xf32, #tpu.memory_space<vmem>>, vector<1x128xf32>
    %c17_486 = arith.constant 17 : index
    %c0_487 = arith.constant 0 : index
    %339 = vector.load %arg14[%c17_486, %c0_487] : memref<256x128xf32, #tpu.memory_space<vmem>>, vector<1x128xf32>
    %340 = arith.maximumf %338, %339 : vector<1x128xf32>
    %c1_488 = arith.constant 1 : index
    %c0_489 = arith.constant 0 : index
    %341 = vector.load %arg15[%c1_488, %c0_489] : memref<8x1024xf32, #tpu.memory_space<vmem>>, vector<1x128xf32>
    tpu.vector_store %arg15[%c1_488, %c0_489], %340 {strides = array<i32>} : memref<8x1024xf32, #tpu.memory_space<vmem>>, vector<1x128xf32>,
    %c18_490 = arith.constant 18 : index
    %c0_491 = arith.constant 0 : index
    %342 = vector.load %arg14[%c18_490, %c0_491] : memref<256x128xf32, #tpu.memory_space<vmem>>, vector<1x128xf32>
    %c19_492 = arith.constant 19 : index
    %c0_493 = arith.constant 0 : index
    %343 = vector.load %arg14[%c19_492, %c0_493] : memref<256x128xf32, #tpu.memory_space<vmem>>, vector<1x128xf32>
    %344 = arith.maximumf %342, %343 : vector<1x128xf32>
    %c1_494 = arith.constant 1 : index
    %c128_495 = arith.constant 128 : index
    %345 = vector.load %arg15[%c1_494, %c128_495] : memref<8x1024xf32, #tpu.memory_space<vmem>>, vector<1x128xf32>
    tpu.vector_store %arg15[%c1_494, %c128_495], %344 {strides = array<i32>} : memref<8x1024xf32, #tpu.memory_space<vmem>>, vector<1x128xf32>,
    %c20 = arith.constant 20 : index
    %c0_496 = arith.constant 0 : index
    %346 = vector.load %arg14[%c20, %c0_496] : memref<256x128xf32, #tpu.memory_space<vmem>>, vector<1x128xf32>
    %c21 = arith.constant 21 : index
    %c0_497 = arith.constant 0 : index
    %347 = vector.load %arg14[%c21, %c0_497] : memref<256x128xf32, #tpu.memory_space<vmem>>, vector<1x128xf32>
    %348 = arith.maximumf %346, %347 : vector<1x128xf32>
    %c1_498 = arith.constant 1 : index
    %c256_499 = arith.constant 256 : index
    %349 = vector.load %arg15[%c1_498, %c256_499] : memref<8x1024xf32, #tpu.memory_space<vmem>>, vector<1x128xf32>
    tpu.vector_store %arg15[%c1_498, %c256_499], %348 {strides = array<i32>} : memref<8x1024xf32, #tpu.memory_space<vmem>>, vector<1x128xf32>,
    %c22 = arith.constant 22 : index
    %c0_500 = arith.constant 0 : index
    %350 = vector.load %arg14[%c22, %c0_500] : memref<256x128xf32, #tpu.memory_space<vmem>>, vector<1x128xf32>
    %c23 = arith.constant 23 : index
    %c0_501 = arith.constant 0 : index
    %351 = vector.load %arg14[%c23, %c0_501] : memref<256x128xf32, #tpu.memory_space<vmem>>, vector<1x128xf32>
    %352 = arith.maximumf %350, %351 : vector<1x128xf32>
    %c1_502 = arith.constant 1 : index
    %c384_503 = arith.constant 384 : index
    %353 = vector.load %arg15[%c1_502, %c384_503] : memref<8x1024xf32, #tpu.memory_space<vmem>>, vector<1x128xf32>
    tpu.vector_store %arg15[%c1_502, %c384_503], %352 {strides = array<i32>} : memref<8x1024xf32, #tpu.memory_space<vmem>>, vector<1x128xf32>,
    %c24 = arith.constant 24 : index
    %c0_504 = arith.constant 0 : index
    %354 = vector.load %arg14[%c24, %c0_504] : memref<256x128xf32, #tpu.memory_space<vmem>>, vector<1x128xf32>
    %c25 = arith.constant 25 : index
    %c0_505 = arith.constant 0 : index
    %355 = vector.load %arg14[%c25, %c0_505] : memref<256x128xf32, #tpu.memory_space<vmem>>, vector<1x128xf32>
    %356 = arith.maximumf %354, %355 : vector<1x128xf32>
    %c1_506 = arith.constant 1 : index
    %c512_507 = arith.constant 512 : index
    %357 = vector.load %arg15[%c1_506, %c512_507] : memref<8x1024xf32, #tpu.memory_space<vmem>>, vector<1x128xf32>
    tpu.vector_store %arg15[%c1_506, %c512_507], %356 {strides = array<i32>} : memref<8x1024xf32, #tpu.memory_space<vmem>>, vector<1x128xf32>,
    %c26 = arith.constant 26 : index
    %c0_508 = arith.constant 0 : index
    %358 = vector.load %arg14[%c26, %c0_508] : memref<256x128xf32, #tpu.memory_space<vmem>>, vector<1x128xf32>
    %c27 = arith.constant 27 : index
    %c0_509 = arith.constant 0 : index
    %359 = vector.load %arg14[%c27, %c0_509] : memref<256x128xf32, #tpu.memory_space<vmem>>, vector<1x128xf32>
    %360 = arith.maximumf %358, %359 : vector<1x128xf32>
    %c1_510 = arith.constant 1 : index
    %c640_511 = arith.constant 640 : index
    %361 = vector.load %arg15[%c1_510, %c640_511] : memref<8x1024xf32, #tpu.memory_space<vmem>>, vector<1x128xf32>
    tpu.vector_store %arg15[%c1_510, %c640_511], %360 {strides = array<i32>} : memref<8x1024xf32, #tpu.memory_space<vmem>>, vector<1x128xf32>,
    %c28 = arith.constant 28 : index
    %c0_512 = arith.constant 0 : index
    %362 = vector.load %arg14[%c28, %c0_512] : memref<256x128xf32, #tpu.memory_space<vmem>>, vector<1x128xf32>
    %c29 = arith.constant 29 : index
    %c0_513 = arith.constant 0 : index
    %363 = vector.load %arg14[%c29, %c0_513] : memref<256x128xf32, #tpu.memory_space<vmem>>, vector<1x128xf32>
    %364 = arith.maximumf %362, %363 : vector<1x128xf32>
    %c1_514 = arith.constant 1 : index
    %c768_515 = arith.constant 768 : index
    %365 = vector.load %arg15[%c1_514, %c768_515] : memref<8x1024xf32, #tpu.memory_space<vmem>>, vector<1x128xf32>
    tpu.vector_store %arg15[%c1_514, %c768_515], %364 {strides = array<i32>} : memref<8x1024xf32, #tpu.memory_space<vmem>>, vector<1x128xf32>,
    %c30 = arith.constant 30 : index
    %c0_516 = arith.constant 0 : index
    %366 = vector.load %arg14[%c30, %c0_516] : memref<256x128xf32, #tpu.memory_space<vmem>>, vector<1x128xf32>
    %c31 = arith.constant 31 : index
    %c0_517 = arith.constant 0 : index
    %367 = vector.load %arg14[%c31, %c0_517] : memref<256x128xf32, #tpu.memory_space<vmem>>, vector<1x128xf32>
    %368 = arith.maximumf %366, %367 : vector<1x128xf32>
    %c1_518 = arith.constant 1 : index
    %c896_519 = arith.constant 896 : index
    %369 = vector.load %arg15[%c1_518, %c896_519] : memref<8x1024xf32, #tpu.memory_space<vmem>>, vector<1x128xf32>
    tpu.vector_store %arg15[%c1_518, %c896_519], %368 {strides = array<i32>} : memref<8x1024xf32, #tpu.memory_space<vmem>>, vector<1x128xf32>,
    %c1_i32_520 = arith.constant 1 : i32
    %370 = tpu.memref_slice %arg18[%c1_i32_520] : memref<2x!tpu.dma_semaphore, #tpu.memory_space<semaphore_mem>> -> memref<1x!tpu.dma_semaphore, #tpu.memory_space<semaphore_mem>>
    %371 = tpu.memref_squeeze %370 : memref<1x!tpu.dma_semaphore, #tpu.memory_space<semaphore_mem>> -> memref<!tpu.dma_semaphore, #tpu.memory_space<semaphore_mem>>
    tpu.wait_dma2 semaphore(%371 : memref<!tpu.dma_semaphore, #tpu.memory_space<semaphore_mem>>) src(%arg5 : memref<1024x256xbf16, #tpu.memory_space<any>>) dst(%arg17 : memref<1024x256xbf16, #tpu.memory_space<vmem>>)
    %c0_521 = arith.constant 0 : index
    %c0_522 = arith.constant 0 : index
    %372 = vector.load %arg15[%c0_521, %c0_522] : memref<8x1024xf32, #tpu.memory_space<vmem>>, vector<2x1024xf32>
    %373 = arith.truncf %372 : vector<2x1024xf32> to vector<2x1024xbf16>
    %c0_523 = arith.constant 0 : index
    %c0_524 = arith.constant 0 : index
    %374 = vector.load %arg17[%c0_523, %c0_524] : memref<1024x256xbf16, #tpu.memory_space<vmem>>, vector<1024x256xbf16>
    %cst_525 = arith.constant dense<0.000000e+00> : vector<2x256xf32>
    %375 = tpu.matmul %373, %374, %cst_525 {dimension_numbers = #tpu.dot_dimension_numbers<[1], [0], [0], [1], [0, 0, 1, 1], [], []>} : vector<2x1024xbf16>, vector<1024x256xbf16>, vector<2x256xf32> -> vector<2x256xf32>
    %c0_526 = arith.constant 0 : index
    %c0_527 = arith.constant 0 : index
    %376 = vector.load %arg6[%c0_526, %c0_527] : memref<1x256xf32, #tpu.memory_space<vmem>>, vector<1x256xf32>
    %377 = vector.broadcast %376 : vector<1x256xf32> to vector<2x256xf32>
    %378 = arith.addf %375, %377 : vector<2x256xf32>
    %cst_528 = arith.constant 0.000000e+00 : f32
    %379 = vector.broadcast %cst_528 : f32 to vector<2x256xf32>
    %380 = arith.maximumf %378, %379 : vector<2x256xf32>
    %381 = arith.truncf %380 : vector<2x256xf32> to vector<2x256xbf16>
    %c0_529 = arith.constant 0 : index
    %c0_530 = arith.constant 0 : index
    %382 = vector.load %arg7[%c0_529, %c0_530] : memref<256x128xbf16, #tpu.memory_space<vmem>>, vector<256x128xbf16>
    %cst_531 = arith.constant dense<0.000000e+00> : vector<2x128xf32>
    %383 = tpu.matmul %381, %382, %cst_531 {dimension_numbers = #tpu.dot_dimension_numbers<[1], [0], [0], [1], [0, 0, 1, 1], [], []>} : vector<2x256xbf16>, vector<256x128xbf16>, vector<2x128xf32> -> vector<2x128xf32>
    %c0_532 = arith.constant 0 : index
    %c0_533 = arith.constant 0 : index
    %384 = vector.load %arg8[%c0_532, %c0_533] : memref<1x128xf32, #tpu.memory_space<vmem>>, vector<1x128xf32>
    %385 = vector.broadcast %384 : vector<1x128xf32> to vector<2x128xf32>
    %386 = arith.addf %383, %385 : vector<2x128xf32>
    %cst_534 = arith.constant 0.000000e+00 : f32
    %387 = vector.broadcast %cst_534 : f32 to vector<2x128xf32>
    %388 = arith.maximumf %386, %387 : vector<2x128xf32>
    %389 = arith.truncf %388 : vector<2x128xf32> to vector<2x128xbf16>
    %c0_535 = arith.constant 0 : index
    %c0_536 = arith.constant 0 : index
    %390 = vector.load %arg9[%c0_535, %c0_536] : memref<128x3xbf16, #tpu.memory_space<vmem>>, vector<128x3xbf16>
    %cst_537 = arith.constant dense<0.000000e+00> : vector<2x3xf32>
    %391 = tpu.matmul %389, %390, %cst_537 {dimension_numbers = #tpu.dot_dimension_numbers<[1], [0], [0], [1], [0, 0, 1, 1], [], []>} : vector<2x128xbf16>, vector<128x3xbf16>, vector<2x3xf32> -> vector<2x3xf32>
    %c0_538 = arith.constant 0 : index
    %c0_539 = arith.constant 0 : index
    %392 = vector.load %arg10[%c0_538, %c0_539] : memref<1x3xf32, #tpu.memory_space<vmem>>, vector<1x3xf32>
    %393 = vector.broadcast %392 : vector<1x3xf32> to vector<2x3xf32>
    %394 = arith.addf %391, %393 : vector<2x3xf32>
    %cst_540 = arith.constant dense<0xFF800000> : vector<2xf32>
    %395 = vector.multi_reduction <maximumf>, %394, %cst_540 [1] : vector<2x3xf32> to vector<2xf32>
    %396 = vector.shape_cast %395 : vector<2xf32> to vector<2x1xf32>
    %397 = vector.broadcast %396 : vector<2x1xf32> to vector<2x3xf32>
    %398 = arith.subf %394, %397 : vector<2x3xf32>
    %399 = math.exp %398 : vector<2x3xf32>
    %cst_541 = arith.constant dense<0.000000e+00> : vector<2xf32>
    %400 = vector.multi_reduction <add>, %399, %cst_541 [1] : vector<2x3xf32> to vector<2xf32>
    %401 = vector.shape_cast %400 : vector<2xf32> to vector<2x1xf32>
    %402 = vector.broadcast %401 : vector<2x1xf32> to vector<2x3xf32>
    %403 = arith.divf %399, %402 : vector<2x3xf32>
    %c0_542 = arith.constant 0 : index
    %c0_543 = arith.constant 0 : index
    %404 = vector.load %arg11[%c0_542, %c0_543] : memref<2x3xf32, #tpu.memory_space<vmem>>, vector<2x3xf32>
    tpu.vector_store %arg11[%c0_542, %c0_543], %403 {strides = array<i32>} : memref<2x3xf32, #tpu.memory_space<vmem>>, vector<2x3xf32>,
    return
  }
}

</mosaic_0001>

<llo_original>
// kernel: oracle_forward.1
$region0: #{oracle_forward.1}
  #allocation0 [shape = 'u32[]', space=smem, size = 0x4, offset = 0x4, fixed_abs, tag = 'smem constant byte address 0x4 - core index']
  #allocation1 [shape = 'u32[144,128]{1,0:T(1,128)}', space=vmem, size = 0x12000, scoped, tag = 'internal scratch']
  #allocation2 [shape = 'bf16[320,128]{1,0:T(16,128)(2,1)}', space=vmem, size = 0x14000, scoped, tag = 'scratch operand']
  #allocation3 [shape = 'bf16[256,896]{1,0:T(16,128)(2,1)}', space=vmem, size = 0x70000, scoped, tag = 'scratch operand']
  #allocation4 [shape = 'f32[256,128]{1,0:T(8,128)}', space=vmem, size = 0x20000, scoped, tag = 'scratch operand']
  #allocation5 [shape = 'f32[8,1024]{1,0:T(8,128)}', space=vmem, size = 0x8000, scoped, tag = 'scratch operand']
  #allocation6 [shape = 'bf16[3072,128]{1,0:T(16,128)(2,1)}', space=vmem, size = 0xc0000, scoped, tag = 'scratch operand']
  #allocation7 [shape = 'bf16[1024,256]{1,0:T(16,128)(2,1)}', space=vmem, size = 0x80000, scoped, tag = 'scratch operand']
  #allocation8 [shape = 's32[2]{0}', space=sflag, size = 0x8, scoped, tag = 'scratch operand']
  #allocation13 [shape = 's32[]', space=sflag, size = 0x4, offset = 0, fixed_abs, tag = 'sflag constant byte address 0x0 - dummy sync flag']
  #allocation14 [shape = 's32[]', space=sflag, size = 0x4, offset = 0, fixed_abs, tag = 'sflag constant byte address 0x0 - dummy sync flag']
  #allocation15 [shape = 'u32[]', space=smem, size = 0x4, offset = 0x44, fixed_abs, tag = 'smem constant byte address 0x44 - assertion arg 0']
  #allocation16 [shape = 'u32[]', space=smem, size = 0x4, offset = 0x48, fixed_abs, tag = 'smem constant byte address 0x48 - assertion arg 1']
  #allocation17 [shape = 's32[]', space=sflag, size = 0x4, offset = 0, fixed_abs, tag = 'sflag constant byte address 0x0 - dummy sync flag']
  %s0 = inlined_call_operand.vmem [shape: f32[256,16], index: 0, kind: input, shape index: {}]
  %s1 = inlined_call_operand.vmem [shape: bf16[16,128], index: 1, kind: input, shape index: {}]
  %s2 = inlined_call_operand.hbm [shape: bf16[2176,128], index: 2, kind: input, shape index: {}]
  %s3 = inlined_call_operand.hbm [shape: bf16[3072,128], index: 3, kind: input, shape index: {}]
  %s4 = inlined_call_operand.vmem [shape: f32[8,128], index: 4, kind: input, shape index: {}]
  %s5 = inlined_call_operand.hbm [shape: bf16[1024,256], index: 5, kind: input, shape index: {}]
  %s6 = inlined_call_operand.vmem [shape: f32[1,256], index: 6, kind: input, shape index: {}]
  %s7 = inlined_call_operand.vmem [shape: bf16[256,128], index: 7, kind: input, shape index: {}]
  %s8 = inlined_call_operand.vmem [shape: f32[1,128], index: 8, kind: input, shape index: {}]
  %s9 = inlined_call_operand.vmem [shape: bf16[128,3], index: 9, kind: input, shape index: {}]
  %s10 = inlined_call_operand.vmem [shape: f32[1,3], index: 10, kind: input, shape index: {}]
  %s11 = inlined_call_operand.hbm [shape: f32[2,3], index: 11, kind: output, shape index: {}]
  %s12 = sld [smem:[#allocation0]]
  $region54: #{oracle_forward.1} parent=0
    _
  %s14 = ssub.s32 1, %s12
  %s15 = scalar_select 0, %s14, %s12
  $region1: #{oracle_forward.1} parent=0
    #allocation9 [shape = 'u8[557056]{0}', space=vmem, size = 0x88000, scoped, tag = 'input window, operand 2, single buffered']
    #allocation10 [shape = 's32[1]{0}', space=sflag, size = 0x4, scoped, tag = 'scoped memory for oracle_forward.1']
    #allocation11 [shape = 's32[1]{0}', space=sflag, size = 0x4, scoped, tag = 'scoped memory for oracle_forward.1']
    #allocation12 [shape = 'u8[1024]{0}', space=vmem, size = 0x400, scoped, tag = 'output window, operand 0, single buffered']
    #allocation18 [shape = 'u32[9]{0}', space=smem, size = 0x24, scoped, tag = 'DMA stride descriptor']
    %16 = vsyncpa [#allocation10], 0
    %17 = vsyncpa [#allocation11], 0
    // Predicated region
    $region2: #{oracle_forward.1} parent=1 // pred_check
      _
    $region3: #{oracle_forward.1} parent=1 // pred_check_branch
      %19 = sbr.rel (0) target = $region5
    $region4: #{oracle_forward.1} parent=1 // pred_region
      _
    $region5: #{oracle_forward.1} parent=1 // pred_fallthru
      _
    // Predicated region
    $region6: #{oracle_forward.1} parent=1 // pred_check
      _
    $region7: #{oracle_forward.1} parent=1 // pred_check_branch
      %21 = sbr.rel (0) target = $region9
    $region8: #{oracle_forward.1} parent=1 // pred_region
      _
    $region9: #{oracle_forward.1} parent=1 // pred_fallthru
      _
    // Predicated region
    $region10: #{oracle_forward.1} parent=1 // pred_check
      _
    $region11: #{oracle_forward.1} parent=1 // pred_check_branch
      %23 = sbr.rel (0) target = $region13
    $region12: #{oracle_forward.1} parent=1 // pred_region
      %s25 = ssub.s32 17408, 17408
      %26 = vsyncadd [#allocation10], %s25
      %s27 = sshll.u32 [#allocation9], 4
      %s28 = int_to_ptr.vmem [resolvable:$true] %s27
      %33 = dma.hbm_to_vmem [thread:$0]  %s2, 17408, %s28, [#allocation10], 64, 64, 4
    $region13: #{oracle_forward.1} parent=1 // pred_fallthru
      _
    // Predicated region
    $region14: #{oracle_forward.1} parent=1 // pred_check
      _
    $region15: #{oracle_forward.1} parent=1 // pred_check_branch
      %35 = sbr.rel (0) target = $region17
    $region16: #{oracle_forward.1} parent=1 // pred_region
      _
    $region17: #{oracle_forward.1} parent=1 // pred_fallthru
      _
    // Predicated region
    $region18: #{oracle_forward.1} parent=1 // pred_check
      _
    $region19: #{oracle_forward.1} parent=1 // pred_check_branch
      %37 = sbr.rel (0) target = $region21
    $region20: #{oracle_forward.1} parent=1 // pred_region
      _
    $region21: #{oracle_forward.1} parent=1 // pred_fallthru
      _
    // Predicated region
    $region22: #{oracle_forward.1} parent=1 // pred_check
      _
    $region23: #{oracle_forward.1} parent=1 // pred_check_branch
      %39 = sbr.rel (0) target = $region25
    $region24: #{oracle_forward.1} parent=1 // pred_region
      _
    $region25: #{oracle_forward.1} parent=1 // pred_fallthru
      _
    // Predicated region
    $region26: #{oracle_forward.1} parent=1 // pred_check
      _
    $region27: #{oracle_forward.1} parent=1 // pred_check_branch
      %41 = sbr.rel (0) target = $region29
    $region28: #{oracle_forward.1} parent=1 // pred_region
      _
    $region29: #{oracle_forward.1} parent=1 // pred_fallthru
      _
    // Predicated region
    $region30: #{oracle_forward.1} parent=1 // pred_check
      _
    $region31: #{oracle_forward.1} parent=1 // pred_check_branch
      %43 = sbr.rel (0) target = $region33
    $region32: #{oracle_forward.1} parent=1 // pred_region
      _
    $region33: #{oracle_forward.1} parent=1 // pred_fallthru
      _
    // Predicated region
    $region34: #{oracle_forward.1} parent=1 // pred_check
      _
    $region35: #{oracle_forward.1} parent=1 // pred_check_branch
      %45 = sbr.rel (0) target = $region37
    $region36: #{oracle_forward.1} parent=1 // pred_region
      _
    $region37: #{oracle_forward.1} parent=1 // pred_fallthru
      _
    // Predicated region
    $region38: #{oracle_forward.1} parent=1 // pred_check
      _
    $region39: #{oracle_forward.1} parent=1 // pred_check_branch
      %47 = sbr.rel (0) target = $region41
    $region40: #{oracle_forward.1} parent=1 // pred_region
      %48 = dma.done [#allocation10], 17408
    $region41: #{oracle_forward.1} parent=1 // pred_fallthru
      _
    // Predicated region
    $region42: #{oracle_forward.1} parent=1 // pred_check
      _
    $region43: #{oracle_forward.1} parent=1 // pred_check_branch
      %51 = sbr.rel target = $region45
    $region44: #{oracle_forward.1} parent=1 // pred_region
      %52 = sst [smem:[#allocation15]] [#allocation14]
      %53 = sst [smem:[#allocation16]] [#allocation13]
    $region45: #{oracle_forward.1} parent=1 // pred_fallthru
      _
    %55 = shalt.err (0)
    %s57 = sshll.u32 [#allocation6], 4
    %s58 = int_to_ptr.vmem [resolvable:$true] %s57
    %60 = dma.hbm_to_vmem [thread:$0]  %s3, 24576, %s58, [#allocation8]
    %s61 = scalar_lea.sflag [#allocation8], 1
    %s63 = sshll.u32 1, 14
    %s64 = sxor.u32 4294967295, %s63
    %s66 = sld [smem:[#allocation0]]
    %s67 = sadd.s32 2, %s66
    %s69 = sshll.u32 7, 26
    %s70 = sxor.u32 4294967295, %s69
    %s71 = sand.u32 0, %s70
    %s72 = sshll.u32 %s67, 26
    %s73 = sor.u32 %s71, %s72
    %s74 = sshll.u32 [#allocation7], 4
    %s75 = int_to_ptr.vmem [resolvable:$true] %s74
    %78 = sst [smem:[#allocation18]] 256
    %s79 = scalar_lea.smem [#allocation18], 1
    %80 = sst [smem:[%s79]] 256
    %s81 = scalar_lea.smem [#allocation18], 2
    %82 = sst [smem:[%s81]] 2
    %s83 = scalar_lea.smem [#allocation18], 3
    %84 = sst [smem:[%s83]] 64
    %s85 = scalar_lea.smem [#allocation18], 4
    %86 = sst [smem:[%s85]] 128
    %s87 = scalar_lea.smem [#allocation18], 5
    %88 = sst [smem:[%s87]] 2
    %s89 = scalar_lea.smem [#allocation18], 6
    %90 = sst [smem:[%s89]] 128
    %s91 = scalar_lea.smem [#allocation18], 7
    %92 = sst [smem:[%s91]] 64
    %s93 = scalar_lea.smem [#allocation18], 8
    %94 = sst [smem:[%s93]] 4
    %96 = dma.general %s5, 16384, %s75, %s61, [#allocation17], [#allocation18], %s73, 0
    %97 = vst [vmem:[#allocation2] sm:$0xff] 0
    %98 = vst [vmem:[#allocation2 + $0x50] sm:$0xff] 0
    %v99 = vld [vmem:[%s0] sm:$0xff]
    %v100 = vld [vmem:[%s0 + $0x8] sm:$0xff]
    %v101 = vld [vmem:[%s0 + $0x10] sm:$0xff]
    %v102 = vld [vmem:[%s0 + $0x18] sm:$0xff]
    %v103 = vld [vmem:[%s0 + $0x20] sm:$0xff]
    %v104 = vld [vmem:[%s0 + $0x28] sm:$0xff]
    %v105 = vld [vmem:[%s0 + $0x30] sm:$0xff]
    %v106 = vld [vmem:[%s0 + $0x38] sm:$0xff]
    %v107 = vld [vmem:[%s0 + $0x40] sm:$0xff]
    %v108 = vld [vmem:[%s0 + $0x48] sm:$0xff]
    %v109 = vld [vmem:[%s0 + $0x50] sm:$0xff]
    %v110 = vld [vmem:[%s0 + $0x58] sm:$0xff]
    %v111 = vld [vmem:[%s0 + $0x60] sm:$0xff]
    %v112 = vld [vmem:[%s0 + $0x68] sm:$0xff]
    %v113 = vld [vmem:[%s0 + $0x70] sm:$0xff]
    %v114 = vld [vmem:[%s0 + $0x78] sm:$0xff]
    %v115 = vld [vmem:[%s0 + $0x80] sm:$0xff]
    %v116 = vld [vmem:[%s0 + $0x88] sm:$0xff]
    %v117 = vld [vmem:[%s0 + $0x90] sm:$0xff]
    %v118 = vld [vmem:[%s0 + $0x98] sm:$0xff]
    %v119 = vld [vmem:[%s0 + $0xa0] sm:$0xff]
    %v120 = vld [vmem:[%s0 + $0xa8] sm:$0xff]
    %v121 = vld [vmem:[%s0 + $0xb0] sm:$0xff]
    %v122 = vld [vmem:[%s0 + $0xb8] sm:$0xff]
    %v123 = vld [vmem:[%s0 + $0xc0] sm:$0xff]
    %v124 = vld [vmem:[%s0 + $0xc8] sm:$0xff]
    %v125 = vld [vmem:[%s0 + $0xd0] sm:$0xff]
    %v126 = vld [vmem:[%s0 + $0xd8] sm:$0xff]
    %v127 = vld [vmem:[%s0 + $0xe0] sm:$0xff]
    %v128 = vld [vmem:[%s0 + $0xe8] sm:$0xff]
    %v129 = vld [vmem:[%s0 + $0xf0] sm:$0xff]
    %v130 = vld [vmem:[%s0 + $0xf8] sm:$0xff]
    %v131 = vpack.c.bf16 %v100, %v99
    %v132 = vpack.c.bf16 %v102, %v101
    %v133 = vpack.c.bf16 %v104, %v103
    %v134 = vpack.c.bf16 %v106, %v105
    %v135 = vpack.c.bf16 %v108, %v107
    %v136 = vpack.c.bf16 %v110, %v109
    %v137 = vpack.c.bf16 %v112, %v111
    %v138 = vpack.c.bf16 %v114, %v113
    %v139 = vpack.c.bf16 %v116, %v115
    %v140 = vpack.c.bf16 %v118, %v117
    %v141 = vpack.c.bf16 %v120, %v119
    %v142 = vpack.c.bf16 %v122, %v121
    %v143 = vpack.c.bf16 %v124, %v123
    %v144 = vpack.c.bf16 %v126, %v125
    %v145 = vpack.c.bf16 %v128, %v127
    %v146 = vpack.c.bf16 %v130, %v129
    %v147 = vld [vmem:[%s1] sm:$0xf]
    %v148 = vld [vmem:[%s1 + $0x4] sm:$0xf]
    %v149 = vld [vmem:[%s4] sm:$0x1]
    %v150 = vlaneseq
    %v151 = vshrl.u32 %v150, 7
    %v152 = vsub.s32 0, %v151
    %v153 = vrot.slane %v149, %v152
    %v156 = vunpack.c.l.b16 %v147
    %v157 = vunpack.c.l.b16 %v148
    %v158 = vpack.c.b16 %v157, %v156
    %vm160 = vcmask 130048
    %v162 = vsel %vm160, %v131, 0
    %v165 = vsel %vm160, %v132, 0
    %v168 = vsel %vm160, %v133, 0
    %v171 = vsel %vm160, %v134, 0
    %v174 = vsel %vm160, %v135, 0
    %v177 = vsel %vm160, %v136, 0
    %v180 = vsel %vm160, %v137, 0
    %v183 = vsel %vm160, %v138, 0
    %v186 = vsel %vm160, %v139, 0
    %v189 = vsel %vm160, %v140, 0
    %v192 = vsel %vm160, %v141, 0
    %v195 = vsel %vm160, %v142, 0
    %v198 = vsel %vm160, %v143, 0
    %v201 = vsel %vm160, %v144, 0
    %v204 = vsel %vm160, %v145, 0
    %v207 = vsel %vm160, %v146, 0
    %209 = vmatprep.subr.bf16.mxu0 0
    %210 = vmatpush1.bf16.msra.mxu0 %v158
    %211 = vmatprep.subr.bf16.mxu0 0
    %212 = vmatpush1.bf16.msra.mxu0 0
    %213 = vmatprep.subr.bf16.mxu0 0
    %214 = vmatpush1.bf16.msra.mxu0 0
    %215 = vmatprep.subr.bf16.mxu0 0
    %216 = vmatpush1.bf16.msra.mxu0 0
    %217 = vmatprep.subr.bf16.mxu0 0
    %218 = vmatpush1.bf16.msra.mxu0 0
    %219 = vmatprep.subr.bf16.mxu0 0
    %220 = vmatpush1.bf16.msra.mxu0 0
    %221 = vmatprep.subr.bf16.mxu0 0
    %222 = vmatpush1.bf16.msra.mxu0 0
    %223 = vmatprep.subr.bf16.mxu0 0
    %224 = vmatpush1.bf16.msra.mxu0 0
    %225 = vmatprep.subr.bf16.mxu0 0
    %226 = vmatpush1.bf16.msra.mxu0 0
    %227 = vmatprep.subr.bf16.mxu0 0
    %228 = vmatpush1.bf16.msra.mxu0 0
    %229 = vmatprep.subr.bf16.mxu0 0
    %230 = vmatpush1.bf16.msra.mxu0 0
    %231 = vmatprep.subr.bf16.mxu0 0
    %232 = vmatpush1.bf16.msra.mxu0 0
    %233 = vmatprep.subr.bf16.mxu0 0
    %234 = vmatpush1.bf16.msra.mxu0 0
    %235 = vmatprep.subr.bf16.mxu0 0
    %236 = vmatpush1.bf16.msra.mxu0 0
    %237 = vmatprep.subr.bf16.mxu0 0
    %238 = vmatpush1.bf16.msra.mxu0 0
    %239 = vmatprep.subr.bf16.mxu0 0
    %240 = vmatpush1.bf16.msra.mxu0 0
    %241 = vmatprep.mubr.bf16.mxu0 0
    %242 = vmatmul.mubr.bf16.gmra.mrb[0].mxu0 %v162
    %v243 = vpop.f32.mrb[0].mxu0
    %v244 = vadd.f32 %v153, %v243
    %v245 = vpop.f32.mrb[0].mxu0
    %v246 = vpop.f32.mrb[0].mxu0
    %v247 = vadd.f32 %v153, %v246
    %v248 = vpop.f32.mrb[0].mxu0
    %249 = vmatprep.mubr.bf16.mxu0 0
    %250 = vmatmul.mubr.bf16.gmra.mrb[0].mxu0 %v165
    %v251 = vpop.f32.mrb[0].mxu0
    %v252 = vadd.f32 %v153, %v251
    %v253 = vpop.f32.mrb[0].mxu0
    %v254 = vpop.f32.mrb[0].mxu0
    %v255 = vadd.f32 %v153, %v254
    %v256 = vpop.f32.mrb[0].mxu0
    %257 = vmatprep.mubr.bf16.mxu0 0
    %258 = vmatmul.mubr.bf16.gmra.mrb[0].mxu0 %v168
    %v259 = vpop.f32.mrb[0].mxu0
    %v260 = vadd.f32 %v153, %v259
    %v261 = vpop.f32.mrb[0].mxu0
    %v262 = vpop.f32.mrb[0].mxu0
    %v263 = vadd.f32 %v153, %v262
    %v264 = vpop.f32.mrb[0].mxu0
    %265 = vmatprep.mubr.bf16.mxu0 0
    %266 = vmatmul.mubr.bf16.gmra.mrb[0].mxu0 %v171
    %v267 = vpop.f32.mrb[0].mxu0
    %v268 = vadd.f32 %v153, %v267
    %v269 = vpop.f32.mrb[0].mxu0
    %v270 = vpop.f32.mrb[0].mxu0
    %v271 = vadd.f32 %v153, %v270
    %v272 = vpop.f32.mrb[0].mxu0
    %273 = vmatprep.mubr.bf16.mxu0 0
    %274 = vmatmul.mubr.bf16.gmra.mrb[0].mxu0 %v174
    %v275 = vpop.f32.mrb[0].mxu0
    %v276 = vadd.f32 %v153, %v275
    %v277 = vpop.f32.mrb[0].mxu0
    %v278 = vpop.f32.mrb[0].mxu0
    %v279 = vadd.f32 %v153, %v278
    %v280 = vpop.f32.mrb[0].mxu0
    %281 = vmatprep.mubr.bf16.mxu0 0
    %282 = vmatmul.mubr.bf16.gmra.mrb[0].mxu0 %v177
    %v283 = vpop.f32.mrb[0].mxu0
    %v284 = vadd.f32 %v153, %v283
    %v285 = vpop.f32.mrb[0].mxu0
    %v286 = vpop.f32.mrb[0].mxu0
    %v287 = vadd.f32 %v153, %v286
    %v288 = vpop.f32.mrb[0].mxu0
    %289 = vmatprep.mubr.bf16.mxu0 0
    %290 = vmatmul.mubr.bf16.gmra.mrb[0].mxu0 %v180
    %v291 = vpop.f32.mrb[0].mxu0
    %v292 = vadd.f32 %v153, %v291
    %v293 = vpop.f32.mrb[0].mxu0
    %v294 = vpop.f32.mrb[0].mxu0
    %v295 = vadd.f32 %v153, %v294
    %v296 = vpop.f32.mrb[0].mxu0
    %297 = vmatprep.mubr.bf16.mxu0 0
    %298 = vmatmul.mubr.bf16.gmra.mrb[0].mxu0 %v183
    %v299 = vpop.f32.mrb[0].mxu0
    %v300 = vadd.f32 %v153, %v299
    %v301 = vpop.f32.mrb[0].mxu0
    %v302 = vpop.f32.mrb[0].mxu0
    %v303 = vadd.f32 %v153, %v302
    %v304 = vpop.f32.mrb[0].mxu0
    %305 = vmatprep.mubr.bf16.mxu0 0
    %306 = vmatmul.mubr.bf16.gmra.mrb[0].mxu0 %v186
    %v307 = vpop.f32.mrb[0].mxu0
    %v308 = vadd.f32 %v153, %v307
    %v309 = vpop.f32.mrb[0].mxu0
    %v310 = vpop.f32.mrb[0].mxu0
    %v311 = vadd.f32 %v153, %v310
    %v312 = vpop.f32.mrb[0].mxu0
    %313 = vmatprep.mubr.bf16.mxu0 0
    %314 = vmatmul.mubr.bf16.gmra.mrb[0].mxu0 %v189
    %v315 = vpop.f32.mrb[0].mxu0
    %v316 = vadd.f32 %v153, %v315
    %v317 = vpop.f32.mrb[0].mxu0
    %v318 = vpop.f32.mrb[0].mxu0
    %v319 = vadd.f32 %v153, %v318
    %v320 = vpop.f32.mrb[0].mxu0
    %321 = vmatprep.mubr.bf16.mxu0 0
    %322 = vmatmul.mubr.bf16.gmra.mrb[0].mxu0 %v192
    %v323 = vpop.f32.mrb[0].mxu0
    %v324 = vadd.f32 %v153, %v323
    %v325 = vpop.f32.mrb[0].mxu0
    %v326 = vpop.f32.mrb[0].mxu0
    %v327 = vadd.f32 %v153, %v326
    %v328 = vpop.f32.mrb[0].mxu0
    %329 = vmatprep.mubr.bf16.mxu0 0
    %330 = vmatmul.mubr.bf16.gmra.mrb[0].mxu0 %v195
    %v331 = vpop.f32.mrb[0].mxu0
    %v332 = vadd.f32 %v153, %v331
    %v333 = vpop.f32.mrb[0].mxu0
    %v334 = vpop.f32.mrb[0].mxu0
    %v335 = vadd.f32 %v153, %v334
    %v336 = vpop.f32.mrb[0].mxu0
    %337 = vmatprep.mubr.bf16.mxu0 0
    %338 = vmatmul.mubr.bf16.gmra.mrb[0].mxu0 %v198
    %v339 = vpop.f32.mrb[0].mxu0
    %v340 = vadd.f32 %v153, %v339
    %v341 = vpop.f32.mrb[0].mxu0
    %v342 = vpop.f32.mrb[0].mxu0
    %v343 = vadd.f32 %v153, %v342
    %v344 = vpop.f32.mrb[0].mxu0
    %345 = vmatprep.mubr.bf16.mxu0 0
    %346 = vmatmul.mubr.bf16.gmra.mrb[0].mxu0 %v201
    %v347 = vpop.f32.mrb[0].mxu0
    %v348 = vadd.f32 %v153, %v347
    %v349 = vpop.f32.mrb[0].mxu0
    %v350 = vpop.f32.mrb[0].mxu0
    %v351 = vadd.f32 %v153, %v350
    %v352 = vpop.f32.mrb[0].mxu0
    %353 = vmatprep.mubr.bf16.mxu0 0
    %354 = vmatmul.mubr.bf16.gmra.mrb[0].mxu0 %v204
    %v355 = vpop.f32.mrb[0].mxu0
    %v356 = vadd.f32 %v153, %v355
    %v357 = vpop.f32.mrb[0].mxu0
    %v358 = vpop.f32.mrb[0].mxu0
    %v359 = vadd.f32 %v153, %v358
    %v360 = vpop.f32.mrb[0].mxu0
    %361 = vmatprep.mubr.bf16.mxu0 0
    %362 = vmatmul.mubr.bf16.gmra.mrb[0].mxu0 %v207
    %v363 = vpop.f32.mrb[0].mxu0
    %v364 = vadd.f32 %v153, %v363
    %v365 = vpop.f32.mrb[0].mxu0
    %v366 = vpop.f32.mrb[0].mxu0
    %v367 = vadd.f32 %v153, %v366
    %v368 = vpop.f32.mrb[0].mxu0
    %369 = vdwg.mxu0
    %v370 = vmax.f32 %v244, 0.0
    %v371 = vmax.f32 %v247, 0.0
    %v372 = vmax.f32 %v252, 0.0
    %v373 = vmax.f32 %v255, 0.0
    %v374 = vmax.f32 %v260, 0.0
    %v375 = vmax.f32 %v263, 0.0
    %v376 = vmax.f32 %v268, 0.0
    %v377 = vmax.f32 %v271, 0.0
    %v378 = vmax.f32 %v276, 0.0
    %v379 = vmax.f32 %v279, 0.0
    %v380 = vmax.f32 %v284, 0.0
    %v381 = vmax.f32 %v287, 0.0
    %v382 = vmax.f32 %v292, 0.0
    %v383 = vmax.f32 %v295, 0.0
    %v384 = vmax.f32 %v300, 0.0
    %v385 = vmax.f32 %v303, 0.0
    %v386 = vmax.f32 %v308, 0.0
    %v387 = vmax.f32 %v311, 0.0
    %v388 = vmax.f32 %v316, 0.0
    %v389 = vmax.f32 %v319, 0.0
    %v390 = vmax.f32 %v324, 0.0
    %v391 = vmax.f32 %v327, 0.0
    %v392 = vmax.f32 %v332, 0.0
    %v393 = vmax.f32 %v335, 0.0
    %v394 = vmax.f32 %v340, 0.0
    %v395 = vmax.f32 %v343, 0.0
    %v396 = vmax.f32 %v348, 0.0
    %v397 = vmax.f32 %v351, 0.0
    %v398 = vmax.f32 %v356, 0.0
    %v399 = vmax.f32 %v359, 0.0
    %v400 = vmax.f32 %v364, 0.0
    %v401 = vmax.f32 %v367, 0.0
    %v402 = vpack.c.bf16 %v371, %v370
    %v403 = vpack.c.bf16 %v373, %v372
    %v404 = vpack.c.bf16 %v375, %v374
    %v405 = vpack.c.bf16 %v377, %v376
    %v406 = vpack.c.bf16 %v379, %v378
    %v407 = vpack.c.bf16 %v381, %v380
    %v408 = vpack.c.bf16 %v383, %v382
    %v409 = vpack.c.bf16 %v385, %v384
    %v410 = vpack.c.bf16 %v387, %v386
    %v411 = vpack.c.bf16 %v389, %v388
    %v412 = vpack.c.bf16 %v391, %v390
    %v413 = vpack.c.bf16 %v393, %v392
    %v414 = vpack.c.bf16 %v395, %v394
    %v415 = vpack.c.bf16 %v397, %v396
    %v416 = vpack.c.bf16 %v399, %v398
    %v417 = vpack.c.bf16 %v401, %v400
    %418 = vst [vmem:[#allocation2 + $0x8] sm:$0xff] %v402
    %419 = vst [vmem:[#allocation2 + $0x10] sm:$0xff] %v403
    %420 = vst [vmem:[#allocation2 + $0x18] sm:$0xff] %v404
    %421 = vst [vmem:[#allocation2 + $0x20] sm:$0xff] %v405
    %422 = vst [vmem:[#allocation2 + $0x28] sm:$0xff] %v406
    %423 = vst [vmem:[#allocation2 + $0x30] sm:$0xff] %v407
    %424 = vst [vmem:[#allocation2 + $0x38] sm:$0xff] %v408
    %425 = vst [vmem:[#allocation2 + $0x40] sm:$0xff] %v409
    %426 = vst [vmem:[#allocation2 + $0x48] sm:$0xff] 0
    %427 = vst [vmem:[#allocation2 + $0x58] sm:$0xff] %v410
    %428 = vst [vmem:[#allocation2 + $0x60] sm:$0xff] %v411
    %429 = vst [vmem:[#allocation2 + $0x68] sm:$0xff] %v412
    %430 = vst [vmem:[#allocation2 + $0x70] sm:$0xff] %v413
    %431 = vst [vmem:[#allocation2 + $0x78] sm:$0xff] %v414
    %432 = vst [vmem:[#allocation2 + $0x80] sm:$0xff] %v415
    %433 = vst [vmem:[#allocation2 + $0x88] sm:$0xff] %v416
    %434 = vst [vmem:[#allocation2 + $0x90] sm:$0xff] %v417
    %435 = vst [vmem:[#allocation2 + $0x98] sm:$0xff] 0
    %v436 = vld [vmem:[#allocation2] sm:$0x80]
    %v437 = vld [vmem:[#allocation2 + $0x8] sm:$0xff]
    %v438 = vld [vmem:[#allocation2 + $0x10] sm:$0xff]
    %v439 = vld [vmem:[#allocation2 + $0x18] sm:$0xff]
    %v440 = vld [vmem:[#allocation2 + $0x20] sm:$0xff]
    %v441 = vld [vmem:[#allocation2 + $0x28] sm:$0xff]
    %v442 = vld [vmem:[#allocation2 + $0x30] sm:$0xff]
    %v443 = vld [vmem:[#allocation2 + $0x38] sm:$0xff]
    %v444 = vld [vmem:[#allocation2 + $0x40] sm:$0x7f]
    %vm454 = vcmask 1040384
    %v455 = vrot.slane %v436, 7
    %v456 = vrot.slane %v437, 7
    %v457 = vsel %vm454, %v455, %v456
    %v458 = vrot.slane %v438, 7
    %v459 = vsel %vm454, %v456, %v458
    %v460 = vrot.slane %v439, 7
    %v461 = vsel %vm454, %v458, %v460
    %v462 = vrot.slane %v440, 7
    %v463 = vsel %vm454, %v460, %v462
    %v464 = vrot.slane %v441, 7
    %v465 = vsel %vm454, %v462, %v464
    %v466 = vrot.slane %v442, 7
    %v467 = vsel %vm454, %v464, %v466
    %v468 = vrot.slane %v443, 7
    %v469 = vsel %vm454, %v466, %v468
    %v470 = vrot.slane %v444, 7
    %v471 = vsel %vm454, %v468, %v470
    %480 = vst [vmem:[#allocation3] sm:$0xff] %v457
    %481 = vst [vmem:[#allocation3 + $0x38] sm:$0xff] %v459
    %482 = vst [vmem:[#allocation3 + $0x70] sm:$0xff] %v461
    %483 = vst [vmem:[#allocation3 + $0xa8] sm:$0xff] %v463
    %484 = vst [vmem:[#allocation3 + $0xe0] sm:$0xff] %v465
    %485 = vst [vmem:[#allocation3 + $0x118] sm:$0xff] %v467
    %486 = vst [vmem:[#allocation3 + $0x150] sm:$0xff] %v469
    %487 = vst [vmem:[#allocation3 + $0x188] sm:$0xff] %v471
    %v488 = vld [vmem:[#allocation2] sm:$0x80]
    %v489 = vld [vmem:[#allocation2 + $0x8] sm:$0xff]
    %v490 = vld [vmem:[#allocation2 + $0x10] sm:$0xff]
    %v491 = vld [vmem:[#allocation2 + $0x18] sm:$0xff]
    %v492 = vld [vmem:[#allocation2 + $0x20] sm:$0xff]
    %v493 = vld [vmem:[#allocation2 + $0x28] sm:$0xff]
    %v494 = vld [vmem:[#allocation2 + $0x30] sm:$0xff]
    %v495 = vld [vmem:[#allocation2 + $0x38] sm:$0xff]
    %v496 = vld [vmem:[#allocation2 + $0x40] sm:$0xff]
    %vm497 = vsmask.f32 256
    %v499 = vshrl.u32 %v488, 16
    %v501 = vrot.slane %v499, 7
    %v503 = vshrl.u32 %v489, 16
    %v505 = vrot.slane %v503, 7
    %v506 = vshll.u32 %v489, 16
    %v508 = vor.u32 %v505, %v506
    %v509 = vsel %vm497, %v501, %v508
    %v511 = vshrl.u32 %v490, 16
    %v513 = vrot.slane %v511, 7
    %v514 = vshll.u32 %v490, 16
    %v516 = vor.u32 %v513, %v514
    %v517 = vsel %vm497, %v505, %v516
    %v519 = vshrl.u32 %v491, 16
    %v521 = vrot.slane %v519, 7
    %v522 = vshll.u32 %v491, 16
    %v524 = vor.u32 %v521, %v522
    %v525 = vsel %vm497, %v513, %v524
    %v527 = vshrl.u32 %v492, 16
    %v529 = vrot.slane %v527, 7
    %v530 = vshll.u32 %v492, 16
    %v532 = vor.u32 %v529, %v530
    %v533 = vsel %vm497, %v521, %v532
    %v535 = vshrl.u32 %v493, 16
    %v537 = vrot.slane %v535, 7
    %v538 = vshll.u32 %v493, 16
    %v540 = vor.u32 %v537, %v538
    %v541 = vsel %vm497, %v529, %v540
    %v543 = vshrl.u32 %v494, 16
    %v545 = vrot.slane %v543, 7
    %v546 = vshll.u32 %v494, 16
    %v548 = vor.u32 %v545, %v546
    %v549 = vsel %vm497, %v537, %v548
    %v551 = vshrl.u32 %v495, 16
    %v553 = vrot.slane %v551, 7
    %v554 = vshll.u32 %v495, 16
    %v556 = vor.u32 %v553, %v554
    %v557 = vsel %vm497, %v545, %v556
    %v559 = vshrl.u32 %v496, 16
    %v561 = vrot.slane %v559, 7
    %v562 = vshll.u32 %v496, 16
    %v564 = vor.u32 %v561, %v562
    %v565 = vsel %vm497, %v553, %v564
    %574 = vst [vmem:[#allocation3 + $0x8] sm:$0xff] %v509
    %575 = vst [vmem:[#allocation3 + $0x40] sm:$0xff] %v517
    %576 = vst [vmem:[#allocation3 + $0x78] sm:$0xff] %v525
    %577 = vst [vmem:[#allocation3 + $0xb0] sm:$0xff] %v533
    %578 = vst [vmem:[#allocation3 + $0xe8] sm:$0xff] %v541
    %579 = vst [vmem:[#allocation3 + $0x120] sm:$0xff] %v549
    %580 = vst [vmem:[#allocation3 + $0x158] sm:$0xff] %v557
    %581 = vst [vmem:[#allocation3 + $0x190] sm:$0xff] %v565
    %v582 = vld [vmem:[#allocation2 + $0x8] sm:$0xff]
    %v583 = vld [vmem:[#allocation2 + $0x10] sm:$0xff]
    %v584 = vld [vmem:[#allocation2 + $0x18] sm:$0xff]
    %v585 = vld [vmem:[#allocation2 + $0x20] sm:$0xff]
    %v586 = vld [vmem:[#allocation2 + $0x28] sm:$0xff]
    %v587 = vld [vmem:[#allocation2 + $0x30] sm:$0xff]
    %v588 = vld [vmem:[#allocation2 + $0x38] sm:$0xff]
    %v589 = vld [vmem:[#allocation2 + $0x40] sm:$0xff]
    %590 = vst [vmem:[#allocation3 + $0x10] sm:$0xff] %v582
    %591 = vst [vmem:[#allocation3 + $0x48] sm:$0xff] %v583
    %592 = vst [vmem:[#allocation3 + $0x80] sm:$0xff] %v584
    %593 = vst [vmem:[#allocation3 + $0xb8] sm:$0xff] %v585
    %594 = vst [vmem:[#allocation3 + $0xf0] sm:$0xff] %v586
    %595 = vst [vmem:[#allocation3 + $0x128] sm:$0xff] %v587
    %596 = vst [vmem:[#allocation3 + $0x160] sm:$0xff] %v588
    %597 = vst [vmem:[#allocation3 + $0x198] sm:$0xff] %v589
    %v598 = vld [vmem:[#allocation2 + $0x8] sm:$0xff]
    %v599 = vld [vmem:[#allocation2 + $0x10] sm:$0xff]
    %v600 = vld [vmem:[#allocation2 + $0x18] sm:$0xff]
    %v601 = vld [vmem:[#allocation2 + $0x20] sm:$0xff]
    %v602 = vld [vmem:[#allocation2 + $0x28] sm:$0xff]
    %v603 = vld [vmem:[#allocation2 + $0x30] sm:$0xff]
    %v604 = vld [vmem:[#allocation2 + $0x38] sm:$0xff]
    %v605 = vld [vmem:[#allocation2 + $0x40] sm:$0xff]
    %v606 = vld [vmem:[#allocation2 + $0x48] sm:$0x1]
    %vm607 = vsmask.f32 7424
    %v609 = vshrl.u32 %v598, 16
    %v611 = vshll.u32 %v598, 16
    %v613 = vrot.slane %v611, 1
    %v614 = vor.u32 %v609, %v613
    %v616 = vshll.u32 %v599, 16
    %v618 = vrot.slane %v616, 1
    %v619 = vsel %vm607, %v614, %v618
    %v620 = vshrl.u32 %v599, 16
    %v622 = vor.u32 %v620, %v618
    %v624 = vshll.u32 %v600, 16
    %v626 = vrot.slane %v624, 1
    %v627 = vsel %vm607, %v622, %v626
    %v628 = vshrl.u32 %v600, 16
    %v630 = vor.u32 %v628, %v626
    %v632 = vshll.u32 %v601, 16
    %v634 = vrot.slane %v632, 1
    %v635 = vsel %vm607, %v630, %v634
    %v636 = vshrl.u32 %v601, 16
    %v638 = vor.u32 %v636, %v634
    %v640 = vshll.u32 %v602, 16
    %v642 = vrot.slane %v640, 1
    %v643 = vsel %vm607, %v638, %v642
    %v644 = vshrl.u32 %v602, 16
    %v646 = vor.u32 %v644, %v642
    %v648 = vshll.u32 %v603, 16
    %v650 = vrot.slane %v648, 1
    %v651 = vsel %vm607, %v646, %v650
    %v652 = vshrl.u32 %v603, 16
    %v654 = vor.u32 %v652, %v650
    %v656 = vshll.u32 %v604, 16
    %v658 = vrot.slane %v656, 1
    %v659 = vsel %vm607, %v654, %v658
    %v660 = vshrl.u32 %v604, 16
    %v662 = vor.u32 %v660, %v658
    %v664 = vshll.u32 %v605, 16
    %v666 = vrot.slane %v664, 1
    %v667 = vsel %vm607, %v662, %v666
    %v668 = vshrl.u32 %v605, 16
    %v670 = vor.u32 %v668, %v666
    %v672 = vshll.u32 %v606, 16
    %v674 = vrot.slane %v672, 1
    %v675 = vsel %vm607, %v670, %v674
    %684 = vst [vmem:[#allocation3 + $0x18] sm:$0xff] %v619
    %685 = vst [vmem:[#allocation3 + $0x50] sm:$0xff] %v627
    %686 = vst [vmem:[#allocation3 + $0x88] sm:$0xff] %v635
    %687 = vst [vmem:[#allocation3 + $0xc0] sm:$0xff] %v643
    %688 = vst [vmem:[#allocation3 + $0xf8] sm:$0xff] %v651
    %689 = vst [vmem:[#allocation3 + $0x130] sm:$0xff] %v659
    %690 = vst [vmem:[#allocation3 + $0x168] sm:$0xff] %v667
    %691 = vst [vmem:[#allocation3 + $0x1a0] sm:$0xff] %v675
    %v692 = vld [vmem:[#allocation2 + $0x8] sm:$0xfe]
    %v693 = vld [vmem:[#allocation2 + $0x10] sm:$0xff]
    %v694 = vld [vmem:[#allocation2 + $0x18] sm:$0xff]
    %v695 = vld [vmem:[#allocation2 + $0x20] sm:$0xff]
    %v696 = vld [vmem:[#allocation2 + $0x28] sm:$0xff]
    %v697 = vld [vmem:[#allocation2 + $0x30] sm:$0xff]
    %v698 = vld [vmem:[#allocation2 + $0x38] sm:$0xff]
    %v699 = vld [vmem:[#allocation2 + $0x40] sm:$0xff]
    %v700 = vld [vmem:[#allocation2 + $0x48] sm:$0x1]
    %vm710 = vcmask 1046528
    %v711 = vrot.slane %v692, 1
    %v712 = vrot.slane %v693, 1
    %v713 = vsel %vm710, %v711, %v712
    %v714 = vrot.slane %v694, 1
    %v715 = vsel %vm710, %v712, %v714
    %v716 = vrot.slane %v695, 1
    %v717 = vsel %vm710, %v714, %v716
    %v718 = vrot.slane %v696, 1
    %v719 = vsel %vm710, %v716, %v718
    %v720 = vrot.slane %v697, 1
    %v721 = vsel %vm710, %v718, %v720
    %v722 = vrot.slane %v698, 1
    %v723 = vsel %vm710, %v720, %v722
    %v724 = vrot.slane %v699, 1
    %v725 = vsel %vm710, %v722, %v724
    %v726 = vrot.slane %v700, 1
    %v727 = vsel %vm710, %v724, %v726
    %736 = vst [vmem:[#allocation3 + $0x20] sm:$0xff] %v713
    %737 = vst [vmem:[#allocation3 + $0x58] sm:$0xff] %v715
    %738 = vst [vmem:[#allocation3 + $0x90] sm:$0xff] %v717
    %739 = vst [vmem:[#allocation3 + $0xc8] sm:$0xff] %v719
    %740 = vst [vmem:[#allocation3 + $0x100] sm:$0xff] %v721
    %741 = vst [vmem:[#allocation3 + $0x138] sm:$0xff] %v723
    %742 = vst [vmem:[#allocation3 + $0x170] sm:$0xff] %v725
    %743 = vst [vmem:[#allocation3 + $0x1a8] sm:$0xff] %v727
    %v744 = vld [vmem:[#allocation2 + $0x50] sm:$0x80]
    %v745 = vld [vmem:[#allocation2 + $0x58] sm:$0xff]
    %v746 = vld [vmem:[#allocation2 + $0x60] sm:$0xff]
    %v747 = vld [vmem:[#allocation2 + $0x68] sm:$0xff]
    %v748 = vld [vmem:[#allocation2 + $0x70] sm:$0xff]
    %v749 = vld [vmem:[#allocation2 + $0x78] sm:$0xff]
    %v750 = vld [vmem:[#allocation2 + $0x80] sm:$0xff]
    %v751 = vld [vmem:[#allocation2 + $0x88] sm:$0xff]
    %v752 = vld [vmem:[#allocation2 + $0x90] sm:$0x7f]
    %v762 = vrot.slane %v744, 7
    %v763 = vrot.slane %v745, 7
    %v764 = vsel %vm454, %v762, %v763
    %v765 = vrot.slane %v746, 7
    %v766 = vsel %vm454, %v763, %v765
    %v767 = vrot.slane %v747, 7
    %v768 = vsel %vm454, %v765, %v767
    %v769 = vrot.slane %v748, 7
    %v770 = vsel %vm454, %v767, %v769
    %v771 = vrot.slane %v749, 7
    %v772 = vsel %vm454, %v769, %v771
    %v773 = vrot.slane %v750, 7
    %v774 = vsel %vm454, %v771, %v773
    %v775 = vrot.slane %v751, 7
    %v776 = vsel %vm454, %v773, %v775
    %v777 = vrot.slane %v752, 7
    %v778 = vsel %vm454, %v775, %v777
    %787 = vst [vmem:[#allocation3 + $0x1c0] sm:$0xff] %v764
    %788 = vst [vmem:[#allocation3 + $0x1f8] sm:$0xff] %v766
    %789 = vst [vmem:[#allocation3 + $0x230] sm:$0xff] %v768
    %790 = vst [vmem:[#allocation3 + $0x268] sm:$0xff] %v770
    %791 = vst [vmem:[#allocation3 + $0x2a0] sm:$0xff] %v772
    %792 = vst [vmem:[#allocation3 + $0x2d8] sm:$0xff] %v774
    %793 = vst [vmem:[#allocation3 + $0x310] sm:$0xff] %v776
    %794 = vst [vmem:[#allocation3 + $0x348] sm:$0xff] %v778
    %v795 = vld [vmem:[#allocation2 + $0x50] sm:$0x80]
    %v796 = vld [vmem:[#allocation2 + $0x58] sm:$0xff]
    %v797 = vld [vmem:[#allocation2 + $0x60] sm:$0xff]
    %v798 = vld [vmem:[#allocation2 + $0x68] sm:$0xff]
    %v799 = vld [vmem:[#allocation2 + $0x70] sm:$0xff]
    %v800 = vld [vmem:[#allocation2 + $0x78] sm:$0xff]
    %v801 = vld [vmem:[#allocation2 + $0x80] sm:$0xff]
    %v802 = vld [vmem:[#allocation2 + $0x88] sm:$0xff]
    %v803 = vld [vmem:[#allocation2 + $0x90] sm:$0xff]
    %v805 = vshrl.u32 %v795, 16
    %v807 = vrot.slane %v805, 7
    %v809 = vshrl.u32 %v796, 16
    %v811 = vrot.slane %v809, 7
    %v812 = vshll.u32 %v796, 16
    %v814 = vor.u32 %v811, %v812
    %v815 = vsel %vm497, %v807, %v814
    %v817 = vshrl.u32 %v797, 16
    %v819 = vrot.slane %v817, 7
    %v820 = vshll.u32 %v797, 16
    %v822 = vor.u32 %v819, %v820
    %v823 = vsel %vm497, %v811, %v822
    %v825 = vshrl.u32 %v798, 16
    %v827 = vrot.slane %v825, 7
    %v828 = vshll.u32 %v798, 16
    %v830 = vor.u32 %v827, %v828
    %v831 = vsel %vm497, %v819, %v830
    %v833 = vshrl.u32 %v799, 16
    %v835 = vrot.slane %v833, 7
    %v836 = vshll.u32 %v799, 16
    %v838 = vor.u32 %v835, %v836
    %v839 = vsel %vm497, %v827, %v838
    %v841 = vshrl.u32 %v800, 16
    %v843 = vrot.slane %v841, 7
    %v844 = vshll.u32 %v800, 16
    %v846 = vor.u32 %v843, %v844
    %v847 = vsel %vm497, %v835, %v846
    %v849 = vshrl.u32 %v801, 16
    %v851 = vrot.slane %v849, 7
    %v852 = vshll.u32 %v801, 16
    %v854 = vor.u32 %v851, %v852
    %v855 = vsel %vm497, %v843, %v854
    %v857 = vshrl.u32 %v802, 16
    %v859 = vrot.slane %v857, 7
    %v860 = vshll.u32 %v802, 16
    %v862 = vor.u32 %v859, %v860
    %v863 = vsel %vm497, %v851, %v862
    %v865 = vshrl.u32 %v803, 16
    %v867 = vrot.slane %v865, 7
    %v868 = vshll.u32 %v803, 16
    %v870 = vor.u32 %v867, %v868
    %v871 = vsel %vm497, %v859, %v870
    %880 = vst [vmem:[#allocation3 + $0x1c8] sm:$0xff] %v815
    %881 = vst [vmem:[#allocation3 + $0x200] sm:$0xff] %v823
    %882 = vst [vmem:[#allocation3 + $0x238] sm:$0xff] %v831
    %883 = vst [vmem:[#allocation3 + $0x270] sm:$0xff] %v839
    %884 = vst [vmem:[#allocation3 + $0x2a8] sm:$0xff] %v847
    %885 = vst [vmem:[#allocation3 + $0x2e0] sm:$0xff] %v855
    %886 = vst [vmem:[#allocation3 + $0x318] sm:$0xff] %v863
    %887 = vst [vmem:[#allocation3 + $0x350] sm:$0xff] %v871
    %v888 = vld [vmem:[#allocation2 + $0x58] sm:$0xff]
    %v889 = vld [vmem:[#allocation2 + $0x60] sm:$0xff]
    %v890 = vld [vmem:[#allocation2 + $0x68] sm:$0xff]
    %v891 = vld [vmem:[#allocation2 + $0x70] sm:$0xff]
    %v892 = vld [vmem:[#allocation2 + $0x78] sm:$0xff]
    %v893 = vld [vmem:[#allocation2 + $0x80] sm:$0xff]
    %v894 = vld [vmem:[#allocation2 + $0x88] sm:$0xff]
    %v895 = vld [vmem:[#allocation2 + $0x90] sm:$0xff]
    %896 = vst [vmem:[#allocation3 + $0x1d0] sm:$0xff] %v888
    %897 = vst [vmem:[#allocation3 + $0x208] sm:$0xff] %v889
    %898 = vst [vmem:[#allocation3 + $0x240] sm:$0xff] %v890
    %899 = vst [vmem:[#allocation3 + $0x278] sm:$0xff] %v891
    %900 = vst [vmem:[#allocation3 + $0x2b0] sm:$0xff] %v892
    %901 = vst [vmem:[#allocation3 + $0x2e8] sm:$0xff] %v893
    %902 = vst [vmem:[#allocation3 + $0x320] sm:$0xff] %v894
    %903 = vst [vmem:[#allocation3 + $0x358] sm:$0xff] %v895
    %v904 = vld [vmem:[#allocation2 + $0x58] sm:$0xff]
    %v905 = vld [vmem:[#allocation2 + $0x60] sm:$0xff]
    %v906 = vld [vmem:[#allocation2 + $0x68] sm:$0xff]
    %v907 = vld [vmem:[#allocation2 + $0x70] sm:$0xff]
    %v908 = vld [vmem:[#allocation2 + $0x78] sm:$0xff]
    %v909 = vld [vmem:[#allocation2 + $0x80] sm:$0xff]
    %v910 = vld [vmem:[#allocation2 + $0x88] sm:$0xff]
    %v911 = vld [vmem:[#allocation2 + $0x90] sm:$0xff]
    %v912 = vld [vmem:[#allocation2 + $0x98] sm:$0x1]
    %v914 = vshrl.u32 %v904, 16
    %v916 = vshll.u32 %v904, 16
    %v918 = vrot.slane %v916, 1
    %v919 = vor.u32 %v914, %v918
    %v921 = vshll.u32 %v905, 16
    %v923 = vrot.slane %v921, 1
    %v924 = vsel %vm607, %v919, %v923
    %v925 = vshrl.u32 %v905, 16
    %v927 = vor.u32 %v925, %v923
    %v929 = vshll.u32 %v906, 16
    %v931 = vrot.slane %v929, 1
    %v932 = vsel %vm607, %v927, %v931
    %v933 = vshrl.u32 %v906, 16
    %v935 = vor.u32 %v933, %v931
    %v937 = vshll.u32 %v907, 16
    %v939 = vrot.slane %v937, 1
    %v940 = vsel %vm607, %v935, %v939
    %v941 = vshrl.u32 %v907, 16
    %v943 = vor.u32 %v941, %v939
    %v945 = vshll.u32 %v908, 16
    %v947 = vrot.slane %v945, 1
    %v948 = vsel %vm607, %v943, %v947
    %v949 = vshrl.u32 %v908, 16
    %v951 = vor.u32 %v949, %v947
    %v953 = vshll.u32 %v909, 16
    %v955 = vrot.slane %v953, 1
    %v956 = vsel %vm607, %v951, %v955
    %v957 = vshrl.u32 %v909, 16
    %v959 = vor.u32 %v957, %v955
    %v961 = vshll.u32 %v910, 16
    %v963 = vrot.slane %v961, 1
    %v964 = vsel %vm607, %v959, %v963
    %v965 = vshrl.u32 %v910, 16
    %v967 = vor.u32 %v965, %v963
    %v969 = vshll.u32 %v911, 16
    %v971 = vrot.slane %v969, 1
    %v972 = vsel %vm607, %v967, %v971
    %v973 = vshrl.u32 %v911, 16
    %v975 = vor.u32 %v973, %v971
    %v977 = vshll.u32 %v912, 16
    %v979 = vrot.slane %v977, 1
    %v980 = vsel %vm607, %v975, %v979
    %989 = vst [vmem:[#allocation3 + $0x1d8] sm:$0xff] %v924
    %990 = vst [vmem:[#allocation3 + $0x210] sm:$0xff] %v932
    %991 = vst [vmem:[#allocation3 + $0x248] sm:$0xff] %v940
    %992 = vst [vmem:[#allocation3 + $0x280] sm:$0xff] %v948
    %993 = vst [vmem:[#allocation3 + $0x2b8] sm:$0xff] %v956
    %994 = vst [vmem:[#allocation3 + $0x2f0] sm:$0xff] %v964
    %995 = vst [vmem:[#allocation3 + $0x328] sm:$0xff] %v972
    %996 = vst [vmem:[#allocation3 + $0x360] sm:$0xff] %v980
    %v997 = vld [vmem:[#allocation2 + $0x58] sm:$0xfe]
    %v998 = vld [vmem:[#allocation2 + $0x60] sm:$0xff]
    %v999 = vld [vmem:[#allocation2 + $0x68] sm:$0xff]
    %v1000 = vld [vmem:[#allocation2 + $0x70] sm:$0xff]
    %v1001 = vld [vmem:[#allocation2 + $0x78] sm:$0xff]
    %v1002 = vld [vmem:[#allocation2 + $0x80] sm:$0xff]
    %v1003 = vld [vmem:[#allocation2 + $0x88] sm:$0xff]
    %v1004 = vld [vmem:[#allocation2 + $0x90] sm:$0xff]
    %v1005 = vld [vmem:[#allocation2 + $0x98] sm:$0x1]
    %v1015 = vrot.slane %v997, 1
    %v1016 = vrot.slane %v998, 1
    %v1017 = vsel %vm710, %v1015, %v1016
    %v1018 = vrot.slane %v999, 1
    %v1019 = vsel %vm710, %v1016, %v1018
    %v1020 = vrot.slane %v1000, 1
    %v1021 = vsel %vm710, %v1018, %v1020
    %v1022 = vrot.slane %v1001, 1
    %v1023 = vsel %vm710, %v1020, %v1022
    %v1024 = vrot.slane %v1002, 1
    %v1025 = vsel %vm710, %v1022, %v1024
    %v1026 = vrot.slane %v1003, 1
    %v1027 = vsel %vm710, %v1024, %v1026
    %v1028 = vrot.slane %v1004, 1
    %v1029 = vsel %vm710, %v1026, %v1028
    %v1030 = vrot.slane %v1005, 1
    %v1031 = vsel %vm710, %v1028, %v1030
    %1040 = vst [vmem:[#allocation3 + $0x1e0] sm:$0xff] %v1017
    %1041 = vst [vmem:[#allocation3 + $0x218] sm:$0xff] %v1019
    %1042 = vst [vmem:[#allocation3 + $0x250] sm:$0xff] %v1021
    %1043 = vst [vmem:[#allocation3 + $0x288] sm:$0xff] %v1023
    %1044 = vst [vmem:[#allocation3 + $0x2c0] sm:$0xff] %v1025
    %1045 = vst [vmem:[#allocation3 + $0x2f8] sm:$0xff] %v1027
    %1046 = vst [vmem:[#allocation3 + $0x330] sm:$0xff] %v1029
    %1047 = vst [vmem:[#allocation3 + $0x368] sm:$0xff] %v1031
    %v1048 = vld [vmem:[#allocation3] sm:$0xff]
    %v1049 = vld [vmem:[#allocation3 + $0x8] sm:$0xff]
    %v1050 = vld [vmem:[#allocation3 + $0x10] sm:$0xff]
    %v1051 = vld [vmem:[#allocation3 + $0x18] sm:$0xff]
    %v1052 = vld [vmem:[#allocation3 + $0x20] sm:$0xff]
    %v1053 = vld [vmem:[#allocation3 + $0x38] sm:$0xff]
    %v1054 = vld [vmem:[#allocation3 + $0x40] sm:$0xff]
    %v1055 = vld [vmem:[#allocation3 + $0x48] sm:$0xff]
    %v1056 = vld [vmem:[#allocation3 + $0x50] sm:$0xff]
    %v1057 = vld [vmem:[#allocation3 + $0x58] sm:$0xff]
    %v1058 = vld [vmem:[#allocation3 + $0x70] sm:$0xff]
    %v1059 = vld [vmem:[#allocation3 + $0x78] sm:$0xff]
    %v1060 = vld [vmem:[#allocation3 + $0x80] sm:$0xff]
    %v1061 = vld [vmem:[#allocation3 + $0x88] sm:$0xff]
    %v1062 = vld [vmem:[#allocation3 + $0x90] sm:$0xff]
    %v1063 = vld [vmem:[#allocation3 + $0xa8] sm:$0xff]
    %v1064 = vld [vmem:[#allocation3 + $0xb0] sm:$0xff]
    %v1065 = vld [vmem:[#allocation3 + $0xb8] sm:$0xff]
    %v1066 = vld [vmem:[#allocation3 + $0xc0] sm:$0xff]
    %v1067 = vld [vmem:[#allocation3 + $0xc8] sm:$0xff]
    %v1068 = vld [vmem:[#allocation3 + $0xe0] sm:$0xff]
    %v1069 = vld [vmem:[#allocation3 + $0xe8] sm:$0xff]
    %v1070 = vld [vmem:[#allocation3 + $0xf0] sm:$0xff]
    %v1071 = vld [vmem:[#allocation3 + $0xf8] sm:$0xff]
    %v1072 = vld [vmem:[#allocation3 + $0x100] sm:$0xff]
    %v1073 = vld [vmem:[#allocation3 + $0x118] sm:$0xff]
    %v1074 = vld [vmem:[#allocation3 + $0x120] sm:$0xff]
    %v1075 = vld [vmem:[#allocation3 + $0x128] sm:$0xff]
    %v1076 = vld [vmem:[#allocation3 + $0x130] sm:$0xff]
    %v1077 = vld [vmem:[#allocation3 + $0x138] sm:$0xff]
    %v1078 = vld [vmem:[#allocation3 + $0x150] sm:$0xff]
    %v1079 = vld [vmem:[#allocation3 + $0x158] sm:$0xff]
    %v1080 = vld [vmem:[#allocation3 + $0x160] sm:$0xff]
    %v1081 = vld [vmem:[#allocation3 + $0x168] sm:$0xff]
    %v1082 = vld [vmem:[#allocation3 + $0x170] sm:$0xff]
    %v1083 = vld [vmem:[#allocation3 + $0x188] sm:$0xff]
    %v1084 = vld [vmem:[#allocation3 + $0x190] sm:$0xff]
    %v1085 = vld [vmem:[#allocation3 + $0x198] sm:$0xff]
    %v1086 = vld [vmem:[#allocation3 + $0x1a0] sm:$0xff]
    %v1087 = vld [vmem:[#allocation3 + $0x1a8] sm:$0xff]
    %v1088 = vld [vmem:[#allocation3 + $0x1c0] sm:$0xff]
    %v1089 = vld [vmem:[#allocation3 + $0x1c8] sm:$0xff]
    %v1090 = vld [vmem:[#allocation3 + $0x1d0] sm:$0xff]
    %v1091 = vld [vmem:[#allocation3 + $0x1d8] sm:$0xff]
    %v1092 = vld [vmem:[#allocation3 + $0x1e0] sm:$0xff]
    %v1093 = vld [vmem:[#allocation3 + $0x1f8] sm:$0xff]
    %v1094 = vld [vmem:[#allocation3 + $0x200] sm:$0xff]
    %v1095 = vld [vmem:[#allocation3 + $0x208] sm:$0xff]
    %v1096 = vld [vmem:[#allocation3 + $0x210] sm:$0xff]
    %v1097 = vld [vmem:[#allocation3 + $0x218] sm:$0xff]
    %v1098 = vld [vmem:[#allocation3 + $0x230] sm:$0xff]
    %v1099 = vld [vmem:[#allocation3 + $0x238] sm:$0xff]
    %v1100 = vld [vmem:[#allocation3 + $0x240] sm:$0xff]
    %v1101 = vld [vmem:[#allocation3 + $0x248] sm:$0xff]
    %v1102 = vld [vmem:[#allocation3 + $0x250] sm:$0xff]
    %v1103 = vld [vmem:[#allocation3 + $0x268] sm:$0xff]
    %v1104 = vld [vmem:[#allocation3 + $0x270] sm:$0xff]
    %v1105 = vld [vmem:[#allocation3 + $0x278] sm:$0xff]
    %v1106 = vld [vmem:[#allocation3 + $0x280] sm:$0xff]
    %v1107 = vld [vmem:[#allocation3 + $0x288] sm:$0xff]
    %v1108 = vld [vmem:[#allocation3 + $0x2a0] sm:$0xff]
    %v1109 = vld [vmem:[#allocation3 + $0x2a8] sm:$0xff]
    %v1110 = vld [vmem:[#allocation3 + $0x2b0] sm:$0xff]
    %v1111 = vld [vmem:[#allocation3 + $0x2b8] sm:$0xff]
    %v1112 = vld [vmem:[#allocation3 + $0x2c0] sm:$0xff]
    %v1113 = vld [vmem:[#allocation3 + $0x2d8] sm:$0xff]
    %v1114 = vld [vmem:[#allocation3 + $0x2e0] sm:$0xff]
    %v1115 = vld [vmem:[#allocation3 + $0x2e8] sm:$0xff]
    %v1116 = vld [vmem:[#allocation3 + $0x2f0] sm:$0xff]
    %v1117 = vld [vmem:[#allocation3 + $0x2f8] sm:$0xff]
    %v1118 = vld [vmem:[#allocation3 + $0x310] sm:$0xff]
    %v1119 = vld [vmem:[#allocation3 + $0x318] sm:$0xff]
    %v1120 = vld [vmem:[#allocation3 + $0x320] sm:$0xff]
    %v1121 = vld [vmem:[#allocation3 + $0x328] sm:$0xff]
    %v1122 = vld [vmem:[#allocation3 + $0x330] sm:$0xff]
    %v1123 = vld [vmem:[#allocation3 + $0x348] sm:$0xff]
    %v1124 = vld [vmem:[#allocation3 + $0x350] sm:$0xff]
    %v1125 = vld [vmem:[#allocation3 + $0x358] sm:$0xff]
    %v1126 = vld [vmem:[#allocation3 + $0x360] sm:$0xff]
    %v1127 = vld [vmem:[#allocation3 + $0x368] sm:$0xff]
    %v1128 = vld [vmem:[#allocation9] sm:$0xf]
    %v1129 = vld [vmem:[#allocation9 + $0x4] sm:$0xf]
    %v1130 = vld [vmem:[#allocation9 + $0x8] sm:$0xf]
    %v1131 = vld [vmem:[#allocation9 + $0xc] sm:$0xf]
    %v1132 = vld [vmem:[#allocation9 + $0x10] sm:$0xf]
    %v1133 = vld [vmem:[#allocation9 + $0x14] sm:$0xf]
    %v1134 = vld [vmem:[#allocation9 + $0x18] sm:$0xf]
    %v1135 = vld [vmem:[#allocation9 + $0x1c] sm:$0xf]
    %v1136 = vld [vmem:[#allocation9 + $0x20] sm:$0xf]
    %v1137 = vld [vmem:[#allocation9 + $0x24] sm:$0xf]
    %v1138 = vld [vmem:[#allocation9 + $0x28] sm:$0xf]
    %v1139 = vld [vmem:[#allocation9 + $0x2c] sm:$0xf]
    %v1140 = vld [vmem:[#allocation9 + $0x30] sm:$0xf]
    %v1141 = vld [vmem:[#allocation9 + $0x34] sm:$0xf]
    %v1142 = vld [vmem:[#allocation9 + $0x38] sm:$0xf]
    %v1143 = vld [vmem:[#allocation9 + $0x3c] sm:$0xf]
    %v1144 = vld [vmem:[#allocation9 + $0x40] sm:$0xf]
    %v1145 = vld [vmem:[#allocation9 + $0x44] sm:$0xf]
    %v1146 = vld [vmem:[#allocation9 + $0x48] sm:$0xf]
    %v1147 = vld [vmem:[#allocation9 + $0x4c] sm:$0xf]
    %v1148 = vld [vmem:[#allocation9 + $0x50] sm:$0xf]
    %v1149 = vld [vmem:[#allocation9 + $0x54] sm:$0xf]
    %v1150 = vld [vmem:[#allocation9 + $0x58] sm:$0xf]
    %v1151 = vld [vmem:[#allocation9 + $0x5c] sm:$0xf]
    %v1152 = vld [vmem:[#allocation9 + $0x60] sm:$0xf]
    %v1153 = vld [vmem:[#allocation9 + $0x64] sm:$0xf]
    %v1154 = vld [vmem:[#allocation9 + $0x68] sm:$0xf]
    %v1155 = vld [vmem:[#allocation9 + $0x6c] sm:$0xf]
    %v1156 = vld [vmem:[#allocation9 + $0x70] sm:$0xf]
    %v1157 = vld [vmem:[#allocation9 + $0x74] sm:$0xf]
    %v1158 = vld [vmem:[#allocation9 + $0x78] sm:$0xf]
    %v1159 = vld [vmem:[#allocation9 + $0x7c] sm:$0xf]
    %v1160 = vld [vmem:[#allocation9 + $0x80] sm:$0xf]
    %v1161 = vld [vmem:[#allocation9 + $0x84] sm:$0xf]
    %v1162 = vld [vmem:[#allocation9 + $0x88] sm:$0xf]
    %v1163 = vld [vmem:[#allocation9 + $0x8c] sm:$0xf]
    %v1164 = vld [vmem:[#allocation9 + $0x90] sm:$0xf]
    %v1165 = vld [vmem:[#allocation9 + $0x94] sm:$0xf]
    %v1166 = vld [vmem:[#allocation9 + $0x98] sm:$0xf]
    %v1167 = vld [vmem:[#allocation9 + $0x9c] sm:$0xf]
    %v1168 = vld [vmem:[#allocation9 + $0xa0] sm:$0xf]
    %v1169 = vld [vmem:[#allocation9 + $0xa4] sm:$0xf]
    %v1170 = vld [vmem:[#allocation9 + $0xa8] sm:$0xf]
    %v1171 = vld [vmem:[#allocation9 + $0xac] sm:$0xf]
    %v1172 = vld [vmem:[#allocation9 + $0xb0] sm:$0xf]
    %v1173 = vld [vmem:[#allocation9 + $0xb4] sm:$0xf]
    %v1174 = vld [vmem:[#allocation9 + $0xb8] sm:$0xf]
    %v1175 = vld [vmem:[#allocation9 + $0xbc] sm:$0xf]
    %v1176 = vld [vmem:[#allocation9 + $0xc0] sm:$0xf]
    %v1177 = vld [vmem:[#allocation9 + $0xc4] sm:$0xf]
    %v1178 = vld [vmem:[#allocation9 + $0xc8] sm:$0xf]
    %v1179 = vld [vmem:[#allocation9 + $0xcc] sm:$0xf]
    %v1180 = vld [vmem:[#allocation9 + $0xd0] sm:$0xf]
    %v1181 = vld [vmem:[#allocation9 + $0xd4] sm:$0xf]
    %v1182 = vld [vmem:[#allocation9 + $0xd8] sm:$0xf]
    %v1183 = vld [vmem:[#allocation9 + $0xdc] sm:$0xf]
    %v1184 = vld [vmem:[#allocation9 + $0xe0] sm:$0xf]
    %v1185 = vld [vmem:[#allocation9 + $0xe4] sm:$0xf]
    %v1186 = vld [vmem:[#allocation9 + $0xe8] sm:$0xf]
    %v1187 = vld [vmem:[#allocation9 + $0xec] sm:$0xf]
    %v1188 = vld [vmem:[#allocation9 + $0xf0] sm:$0xf]
    %v1189 = vld [vmem:[#allocation9 + $0xf4] sm:$0xf]
    %v1190 = vld [vmem:[#allocation9 + $0xf8] sm:$0xf]
    %v1191 = vld [vmem:[#allocation9 + $0xfc] sm:$0xf]
    %v1192 = vld [vmem:[#allocation9 + $0x100] sm:$0xf]
    %v1193 = vld [vmem:[#allocation9 + $0x104] sm:$0xf]
    %v1194 = vld [vmem:[#allocation9 + $0x108] sm:$0xf]
    %v1195 = vld [vmem:[#allocation9 + $0x10c] sm:$0xf]
    %v1196 = vld [vmem:[#allocation9 + $0x110] sm:$0xf]
    %v1197 = vld [vmem:[#allocation9 + $0x114] sm:$0xf]
    %v1198 = vld [vmem:[#allocation9 + $0x118] sm:$0xf]
    %v1199 = vld [vmem:[#allocation9 + $0x11c] sm:$0xf]
    %v1200 = vld [vmem:[#allocation9 + $0x120] sm:$0xf]
    %v1201 = vld [vmem:[#allocation9 + $0x124] sm:$0xf]
    %v1202 = vld [vmem:[#allocation9 + $0x128] sm:$0xf]
    %v1203 = vld [vmem:[#allocation9 + $0x12c] sm:$0xf]
    %v1204 = vld [vmem:[#allocation9 + $0x130] sm:$0xf]
    %v1205 = vld [vmem:[#allocation9 + $0x134] sm:$0xf]
    %v1206 = vld [vmem:[#allocation9 + $0x138] sm:$0xf]
    %v1207 = vld [vmem:[#allocation9 + $0x13c] sm:$0xf]
    %v1208 = vld [vmem:[%s4 + $0x1] sm:$0x1]
    %v1209 = vlaneseq
    %v1210 = vshrl.u32 %v1209, 7
    %v1211 = vsub.s32 0, %v1210
    %v1212 = vrot.slane %v1208, %v1211
    %v1293 = vunpack.c.l.b16 %v1128
    %v1294 = vunpack.c.l.b16 %v1129
    %v1295 = vunpack.c.l.b16 %v1130
    %v1296 = vunpack.c.l.b16 %v1131
    %v1297 = vunpack.c.l.b16 %v1132
    %v1298 = vunpack.c.l.b16 %v1133
    %v1299 = vunpack.c.l.b16 %v1134
    %v1300 = vunpack.c.l.b16 %v1135
    %v1301 = vunpack.c.l.b16 %v1136
    %v1302 = vunpack.c.l.b16 %v1137
    %v1303 = vunpack.c.l.b16 %v1138
    %v1304 = vunpack.c.l.b16 %v1139
    %v1305 = vunpack.c.l.b16 %v1140
    %v1306 = vunpack.c.l.b16 %v1141
    %v1307 = vunpack.c.l.b16 %v1142
    %v1308 = vunpack.c.l.b16 %v1143
    %v1309 = vunpack.c.l.b16 %v1144
    %v1310 = vunpack.c.l.b16 %v1145
    %v1311 = vunpack.c.l.b16 %v1146
    %v1312 = vunpack.c.l.b16 %v1147
    %v1313 = vunpack.c.l.b16 %v1148
    %v1314 = vunpack.c.l.b16 %v1149
    %v1315 = vunpack.c.l.b16 %v1150
    %v1316 = vunpack.c.l.b16 %v1151
    %v1317 = vunpack.c.l.b16 %v1152
    %v1318 = vunpack.c.l.b16 %v1153
    %v1319 = vunpack.c.l.b16 %v1154
    %v1320 = vunpack.c.l.b16 %v1155
    %v1321 = vunpack.c.l.b16 %v1156
    %v1322 = vunpack.c.l.b16 %v1157
    %v1323 = vunpack.c.l.b16 %v1158
    %v1324 = vunpack.c.l.b16 %v1159
    %v1325 = vunpack.c.l.b16 %v1160
    %v1326 = vunpack.c.l.b16 %v1161
    %v1327 = vunpack.c.l.b16 %v1162
    %v1328 = vunpack.c.l.b16 %v1163
    %v1329 = vunpack.c.l.b16 %v1164
    %v1330 = vunpack.c.l.b16 %v1165
    %v1331 = vunpack.c.l.b16 %v1166
    %v1332 = vunpack.c.l.b16 %v1167
    %v1333 = vunpack.c.l.b16 %v1168
    %v1334 = vunpack.c.l.b16 %v1169
    %v1335 = vunpack.c.l.b16 %v1170
    %v1336 = vunpack.c.l.b16 %v1171
    %v1337 = vunpack.c.l.b16 %v1172
    %v1338 = vunpack.c.l.b16 %v1173
    %v1339 = vunpack.c.l.b16 %v1174
    %v1340 = vunpack.c.l.b16 %v1175
    %v1341 = vunpack.c.l.b16 %v1176
    %v1342 = vunpack.c.l.b16 %v1177
    %v1343 = vunpack.c.l.b16 %v1178
    %v1344 = vunpack.c.l.b16 %v1179
    %v1345 = vunpack.c.l.b16 %v1180
    %v1346 = vunpack.c.l.b16 %v1181
    %v1347 = vunpack.c.l.b16 %v1182
    %v1348 = vunpack.c.l.b16 %v1183
    %v1349 = vunpack.c.l.b16 %v1184
    %v1350 = vunpack.c.l.b16 %v1185
    %v1351 = vunpack.c.l.b16 %v1186
    %v1352 = vunpack.c.l.b16 %v1187
    %v1353 = vunpack.c.l.b16 %v1188
    %v1354 = vunpack.c.l.b16 %v1189
    %v1355 = vunpack.c.l.b16 %v1190
    %v1356 = vunpack.c.l.b16 %v1191
    %v1357 = vunpack.c.l.b16 %v1192
    %v1358 = vunpack.c.l.b16 %v1193
    %v1359 = vunpack.c.l.b16 %v1194
    %v1360 = vunpack.c.l.b16 %v1195
    %v1361 = vunpack.c.l.b16 %v1196
    %v1362 = vunpack.c.l.b16 %v1197
    %v1363 = vunpack.c.l.b16 %v1198
    %v1364 = vunpack.c.l.b16 %v1199
    %v1365 = vunpack.c.l.b16 %v1200
    %v1366 = vunpack.c.l.b16 %v1201
    %v1367 = vunpack.c.l.b16 %v1202
    %v1368 = vunpack.c.l.b16 %v1203
    %v1369 = vunpack.c.l.b16 %v1204
    %v1370 = vunpack.c.l.b16 %v1205
    %v1371 = vunpack.c.l.b16 %v1206
    %v1372 = vunpack.c.l.b16 %v1207
    %v1373 = vpack.c.b16 %v1294, %v1293
    %v1374 = vpack.c.b16 %v1296, %v1295
    %v1375 = vpack.c.b16 %v1298, %v1297
    %v1376 = vpack.c.b16 %v1300, %v1299
    %v1377 = vpack.c.b16 %v1302, %v1301
    %v1378 = vpack.c.b16 %v1304, %v1303
    %v1379 = vpack.c.b16 %v1306, %v1305
    %v1380 = vpack.c.b16 %v1308, %v1307
    %v1381 = vpack.c.b16 %v1310, %v1309
    %v1382 = vpack.c.b16 %v1312, %v1311
    %v1383 = vpack.c.b16 %v1314, %v1313
    %v1384 = vpack.c.b16 %v1316, %v1315
    %v1385 = vpack.c.b16 %v1318, %v1317
    %v1386 = vpack.c.b16 %v1320, %v1319
    %v1387 = vpack.c.b16 %v1322, %v1321
    %v1388 = vpack.c.b16 %v1324, %v1323
    %v1389 = vpack.c.b16 %v1326, %v1325
    %v1390 = vpack.c.b16 %v1328, %v1327
    %v1391 = vpack.c.b16 %v1330, %v1329
    %v1392 = vpack.c.b16 %v1332, %v1331
    %v1393 = vpack.c.b16 %v1334, %v1333
    %v1394 = vpack.c.b16 %v1336, %v1335
    %v1395 = vpack.c.b16 %v1338, %v1337
    %v1396 = vpack.c.b16 %v1340, %v1339
    %v1397 = vpack.c.b16 %v1342, %v1341
    %v1398 = vpack.c.b16 %v1344, %v1343
    %v1399 = vpack.c.b16 %v1346, %v1345
    %v1400 = vpack.c.b16 %v1348, %v1347
    %v1401 = vpack.c.b16 %v1350, %v1349
    %v1402 = vpack.c.b16 %v1352, %v1351
    %v1403 = vpack.c.b16 %v1354, %v1353
    %v1404 = vpack.c.b16 %v1356, %v1355
    %v1405 = vpack.c.b16 %v1358, %v1357
    %v1406 = vpack.c.b16 %v1360, %v1359
    %v1407 = vpack.c.b16 %v1362, %v1361
    %v1408 = vpack.c.b16 %v1364, %v1363
    %v1409 = vpack.c.b16 %v1366, %v1365
    %v1410 = vpack.c.b16 %v1368, %v1367
    %v1411 = vpack.c.b16 %v1370, %v1369
    %v1412 = vpack.c.b16 %v1372, %v1371
    %1453 = vmatprep.subr.bf16.mxu0 0
    %1454 = vmatpush1.bf16.msra.mxu0 %v1373
    %1455 = vmatprep.subr.bf16.mxu0 0
    %1456 = vmatpush1.bf16.msra.mxu0 %v1374
    %1457 = vmatprep.subr.bf16.mxu0 0
    %1458 = vmatpush1.bf16.msra.mxu0 %v1375
    %1459 = vmatprep.subr.bf16.mxu0 0
    %1460 = vmatpush1.bf16.msra.mxu0 %v1376
    %1461 = vmatprep.subr.bf16.mxu0 0
    %1462 = vmatpush1.bf16.msra.mxu0 %v1377
    %1463 = vmatprep.subr.bf16.mxu0 0
    %1464 = vmatpush1.bf16.msra.mxu0 %v1378
    %1465 = vmatprep.subr.bf16.mxu0 0
    %1466 = vmatpush1.bf16.msra.mxu0 %v1379
    %1467 = vmatprep.subr.bf16.mxu0 0
    %1468 = vmatpush1.bf16.msra.mxu0 %v1380
    %1469 = vmatprep.subr.bf16.mxu0 0
    %1470 = vmatpush1.bf16.msra.mxu0 %v1381
    %1471 = vmatprep.subr.bf16.mxu0 0
    %1472 = vmatpush1.bf16.msra.mxu0 %v1382
    %1473 = vmatprep.subr.bf16.mxu0 0
    %1474 = vmatpush1.bf16.msra.mxu0 %v1383
    %1475 = vmatprep.subr.bf16.mxu0 0
    %1476 = vmatpush1.bf16.msra.mxu0 %v1384
    %1477 = vmatprep.subr.bf16.mxu0 0
    %1478 = vmatpush1.bf16.msra.mxu0 %v1385
    %1479 = vmatprep.subr.bf16.mxu0 0
    %1480 = vmatpush1.bf16.msra.mxu0 %v1386
    %1481 = vmatprep.subr.bf16.mxu0 0
    %1482 = vmatpush1.bf16.msra.mxu0 %v1387
    %1483 = vmatprep.subr.bf16.mxu0 0
    %1484 = vmatpush1.bf16.msra.mxu0 %v1388
    %1485 = vmatprep.mubr.bf16.mxu0 %v1049
    %1486 = vmatmul.mubr.bf16.gmra.mrb[0].mxu0 %v1048
    %v1487 = vpop.f32.mrb[0].mxu0
    %v1488 = vadd.f32 %v1212, %v1487
    %v1489 = vpop.f32.mrb[0].mxu0
    %v1490 = vpop.f32.mrb[0].mxu0
    %v1491 = vadd.f32 %v1212, %v1490
    %v1492 = vpop.f32.mrb[0].mxu0
    %1493 = vmatprep.mubr.bf16.mxu0 %v1054
    %1494 = vmatmul.mubr.bf16.gmra.mrb[0].mxu0 %v1053
    %v1495 = vpop.f32.mrb[0].mxu0
    %v1496 = vadd.f32 %v1212, %v1495
    %v1497 = vpop.f32.mrb[0].mxu0
    %v1498 = vpop.f32.mrb[0].mxu0
    %v1499 = vadd.f32 %v1212, %v1498
    %v1500 = vpop.f32.mrb[0].mxu0
    %1501 = vmatprep.mubr.bf16.mxu0 %v1059
    %1502 = vmatmul.mubr.bf16.gmra.mrb[0].mxu0 %v1058
    %v1503 = vpop.f32.mrb[0].mxu0
    %v1504 = vadd.f32 %v1212, %v1503
    %v1505 = vpop.f32.mrb[0].mxu0
    %v1506 = vpop.f32.mrb[0].mxu0
    %v1507 = vadd.f32 %v1212, %v1506
    %v1508 = vpop.f32.mrb[0].mxu0
    %1509 = vmatprep.mubr.bf16.mxu0 %v1064
    %1510 = vmatmul.mubr.bf16.gmra.mrb[0].mxu0 %v1063
    %v1511 = vpop.f32.mrb[0].mxu0
    %v1512 = vadd.f32 %v1212, %v1511
    %v1513 = vpop.f32.mrb[0].mxu0
    %v1514 = vpop.f32.mrb[0].mxu0
    %v1515 = vadd.f32 %v1212, %v1514
    %v1516 = vpop.f32.mrb[0].mxu0
    %1517 = vmatprep.mubr.bf16.mxu0 %v1069
    %1518 = vmatmul.mubr.bf16.gmra.mrb[0].mxu0 %v1068
    %v1519 = vpop.f32.mrb[0].mxu0
    %v1520 = vadd.f32 %v1212, %v1519
    %v1521 = vpop.f32.mrb[0].mxu0
    %v1522 = vpop.f32.mrb[0].mxu0
    %v1523 = vadd.f32 %v1212, %v1522
    %v1524 = vpop.f32.mrb[0].mxu0
    %1525 = vmatprep.mubr.bf16.mxu0 %v1074
    %1526 = vmatmul.mubr.bf16.gmra.mrb[0].mxu0 %v1073
    %v1527 = vpop.f32.mrb[0].mxu0
    %v1528 = vadd.f32 %v1212, %v1527
    %v1529 = vpop.f32.mrb[0].mxu0
    %v1530 = vpop.f32.mrb[0].mxu0
    %v1531 = vadd.f32 %v1212, %v1530
    %v1532 = vpop.f32.mrb[0].mxu0
    %1533 = vmatprep.mubr.bf16.mxu0 %v1079
    %1534 = vmatmul.mubr.bf16.gmra.mrb[0].mxu0 %v1078
    %v1535 = vpop.f32.mrb[0].mxu0
    %v1536 = vadd.f32 %v1212, %v1535
    %v1537 = vpop.f32.mrb[0].mxu0
    %v1538 = vpop.f32.mrb[0].mxu0
    %v1539 = vadd.f32 %v1212, %v1538
    %v1540 = vpop.f32.mrb[0].mxu0
    %1541 = vmatprep.mubr.bf16.mxu0 %v1084
    %1542 = vmatmul.mubr.bf16.gmra.mrb[0].mxu0 %v1083
    %v1543 = vpop.f32.mrb[0].mxu0
    %v1544 = vadd.f32 %v1212, %v1543
    %v1545 = vpop.f32.mrb[0].mxu0
    %v1546 = vpop.f32.mrb[0].mxu0
    %v1547 = vadd.f32 %v1212, %v1546
    %v1548 = vpop.f32.mrb[0].mxu0
    %1549 = vmatprep.mubr.bf16.mxu0 %v1089
    %1550 = vmatmul.mubr.bf16.gmra.mrb[0].mxu0 %v1088
    %v1551 = vpop.f32.mrb[0].mxu0
    %v1552 = vadd.f32 %v1212, %v1551
    %v1553 = vpop.f32.mrb[0].mxu0
    %v1554 = vpop.f32.mrb[0].mxu0
    %v1555 = vadd.f32 %v1212, %v1554
    %v1556 = vpop.f32.mrb[0].mxu0
    %1557 = vmatprep.mubr.bf16.mxu0 %v1094
    %1558 = vmatmul.mubr.bf16.gmra.mrb[0].mxu0 %v1093
    %v1559 = vpop.f32.mrb[0].mxu0
    %v1560 = vadd.f32 %v1212, %v1559
    %v1561 = vpop.f32.mrb[0].mxu0
    %v1562 = vpop.f32.mrb[0].mxu0
    %v1563 = vadd.f32 %v1212, %v1562
    %v1564 = vpop.f32.mrb[0].mxu0
    %1565 = vmatprep.mubr.bf16.mxu0 %v1099
    %1566 = vmatmul.mubr.bf16.gmra.mrb[0].mxu0 %v1098
    %v1567 = vpop.f32.mrb[0].mxu0
    %v1568 = vadd.f32 %v1212, %v1567
    %v1569 = vpop.f32.mrb[0].mxu0
    %v1570 = vpop.f32.mrb[0].mxu0
    %v1571 = vadd.f32 %v1212, %v1570
    %v1572 = vpop.f32.mrb[0].mxu0
    %1573 = vmatprep.mubr.bf16.mxu0 %v1104
    %1574 = vmatmul.mubr.bf16.gmra.mrb[0].mxu0 %v1103
    %v1575 = vpop.f32.mrb[0].mxu0
    %v1576 = vadd.f32 %v1212, %v1575
    %v1577 = vpop.f32.mrb[0].mxu0
    %v1578 = vpop.f32.mrb[0].mxu0
    %v1579 = vadd.f32 %v1212, %v1578
    %v1580 = vpop.f32.mrb[0].mxu0
    %1581 = vmatprep.mubr.bf16.mxu0 %v1109
    %1582 = vmatmul.mubr.bf16.gmra.mrb[0].mxu0 %v1108
    %v1583 = vpop.f32.mrb[0].mxu0
    %v1584 = vadd.f32 %v1212, %v1583
    %v1585 = vpop.f32.mrb[0].mxu0
    %v1586 = vpop.f32.mrb[0].mxu0
    %v1587 = vadd.f32 %v1212, %v1586
    %v1588 = vpop.f32.mrb[0].mxu0
    %1589 = vmatprep.mubr.bf16.mxu0 %v1114
    %1590 = vmatmul.mubr.bf16.gmra.mrb[0].mxu0 %v1113
    %v1591 = vpop.f32.mrb[0].mxu0
    %v1592 = vadd.f32 %v1212, %v1591
    %v1593 = vpop.f32.mrb[0].mxu0
    %v1594 = vpop.f32.mrb[0].mxu0
    %v1595 = vadd.f32 %v1212, %v1594
    %v1596 = vpop.f32.mrb[0].mxu0
    %1597 = vmatprep.mubr.bf16.mxu0 %v1119
    %1598 = vmatmul.mubr.bf16.gmra.mrb[0].mxu0 %v1118
    %v1599 = vpop.f32.mrb[0].mxu0
    %v1600 = vadd.f32 %v1212, %v1599
    %v1601 = vpop.f32.mrb[0].mxu0
    %v1602 = vpop.f32.mrb[0].mxu0
    %v1603 = vadd.f32 %v1212, %v1602
    %v1604 = vpop.f32.mrb[0].mxu0
    %1605 = vmatprep.mubr.bf16.mxu0 %v1124
    %1606 = vmatmul.mubr.bf16.gmra.mrb[0].mxu0 %v1123
    %v1607 = vpop.f32.mrb[0].mxu0
    %v1608 = vadd.f32 %v1212, %v1607
    %v1609 = vpop.f32.mrb[0].mxu0
    %v1610 = vpop.f32.mrb[0].mxu0
    %v1611 = vadd.f32 %v1212, %v1610
    %v1612 = vpop.f32.mrb[0].mxu0
    %1613 = vdwg.mxu0
    %1614 = vmatprep.subr.bf16.mxu0 0
    %1615 = vmatpush1.bf16.msra.mxu0 %v1389
    %1616 = vmatprep.subr.bf16.mxu0 0
    %1617 = vmatpush1.bf16.msra.mxu0 %v1390
    %1618 = vmatprep.subr.bf16.mxu0 0
    %1619 = vmatpush1.bf16.msra.mxu0 %v1391
    %1620 = vmatprep.subr.bf16.mxu0 0
    %1621 = vmatpush1.bf16.msra.mxu0 %v1392
    %1622 = vmatprep.subr.bf16.mxu0 0
    %1623 = vmatpush1.bf16.msra.mxu0 %v1393
    %1624 = vmatprep.subr.bf16.mxu0 0
    %1625 = vmatpush1.bf16.msra.mxu0 %v1394
    %1626 = vmatprep.subr.bf16.mxu0 0
    %1627 = vmatpush1.bf16.msra.mxu0 %v1395
    %1628 = vmatprep.subr.bf16.mxu0 0
    %1629 = vmatpush1.bf16.msra.mxu0 %v1396
    %1630 = vmatprep.subr.bf16.mxu0 0
    %1631 = vmatpush1.bf16.msra.mxu0 %v1397
    %1632 = vmatprep.subr.bf16.mxu0 0
    %1633 = vmatpush1.bf16.msra.mxu0 %v1398
    %1634 = vmatprep.subr.bf16.mxu0 0
    %1635 = vmatpush1.bf16.msra.mxu0 %v1399
    %1636 = vmatprep.subr.bf16.mxu0 0
    %1637 = vmatpush1.bf16.msra.mxu0 %v1400
    %1638 = vmatprep.subr.bf16.mxu0 0
    %1639 = vmatpush1.bf16.msra.mxu0 %v1401
    %1640 = vmatprep.subr.bf16.mxu0 0
    %1641 = vmatpush1.bf16.msra.mxu0 %v1402
    %1642 = vmatprep.subr.bf16.mxu0 0
    %1643 = vmatpush1.bf16.msra.mxu0 %v1403
    %1644 = vmatprep.subr.bf16.mxu0 0
    %1645 = vmatpush1.bf16.msra.mxu0 %v1404
    %1646 = vmatprep.mubr.bf16.mxu0 %v1051
    %1647 = vmatmul.mubr.bf16.gmra.mrb[0].mxu0 %v1050
    %v1648 = vpop.f32.mrb[0].mxu0
    %v1649 = vadd.f32 %v1488, %v1648
    %v1650 = vpop.f32.mrb[0].mxu0
    %v1651 = vpop.f32.mrb[0].mxu0
    %v1652 = vadd.f32 %v1491, %v1651
    %v1653 = vpop.f32.mrb[0].mxu0
    %1654 = vmatprep.mubr.bf16.mxu0 %v1056
    %1655 = vmatmul.mubr.bf16.gmra.mrb[0].mxu0 %v1055
    %v1656 = vpop.f32.mrb[0].mxu0
    %v1657 = vadd.f32 %v1496, %v1656
    %v1658 = vpop.f32.mrb[0].mxu0
    %v1659 = vpop.f32.mrb[0].mxu0
    %v1660 = vadd.f32 %v1499, %v1659
    %v1661 = vpop.f32.mrb[0].mxu0
    %1662 = vmatprep.mubr.bf16.mxu0 %v1061
    %1663 = vmatmul.mubr.bf16.gmra.mrb[0].mxu0 %v1060
    %v1664 = vpop.f32.mrb[0].mxu0
    %v1665 = vadd.f32 %v1504, %v1664
    %v1666 = vpop.f32.mrb[0].mxu0
    %v1667 = vpop.f32.mrb[0].mxu0
    %v1668 = vadd.f32 %v1507, %v1667
    %v1669 = vpop.f32.mrb[0].mxu0
    %1670 = vmatprep.mubr.bf16.mxu0 %v1066
    %1671 = vmatmul.mubr.bf16.gmra.mrb[0].mxu0 %v1065
    %v1672 = vpop.f32.mrb[0].mxu0
    %v1673 = vadd.f32 %v1512, %v1672
    %v1674 = vpop.f32.mrb[0].mxu0
    %v1675 = vpop.f32.mrb[0].mxu0
    %v1676 = vadd.f32 %v1515, %v1675
    %v1677 = vpop.f32.mrb[0].mxu0
    %1678 = vmatprep.mubr.bf16.mxu0 %v1071
    %1679 = vmatmul.mubr.bf16.gmra.mrb[0].mxu0 %v1070
    %v1680 = vpop.f32.mrb[0].mxu0
    %v1681 = vadd.f32 %v1520, %v1680
    %v1682 = vpop.f32.mrb[0].mxu0
    %v1683 = vpop.f32.mrb[0].mxu0
    %v1684 = vadd.f32 %v1523, %v1683
    %v1685 = vpop.f32.mrb[0].mxu0
    %1686 = vmatprep.mubr.bf16.mxu0 %v1076
    %1687 = vmatmul.mubr.bf16.gmra.mrb[0].mxu0 %v1075
    %v1688 = vpop.f32.mrb[0].mxu0
    %v1689 = vadd.f32 %v1528, %v1688
    %v1690 = vpop.f32.mrb[0].mxu0
    %v1691 = vpop.f32.mrb[0].mxu0
    %v1692 = vadd.f32 %v1531, %v1691
    %v1693 = vpop.f32.mrb[0].mxu0
    %1694 = vmatprep.mubr.bf16.mxu0 %v1081
    %1695 = vmatmul.mubr.bf16.gmra.mrb[0].mxu0 %v1080
    %v1696 = vpop.f32.mrb[0].mxu0
    %v1697 = vadd.f32 %v1536, %v1696
    %v1698 = vpop.f32.mrb[0].mxu0
    %v1699 = vpop.f32.mrb[0].mxu0
    %v1700 = vadd.f32 %v1539, %v1699
    %v1701 = vpop.f32.mrb[0].mxu0
    %1702 = vmatprep.mubr.bf16.mxu0 %v1086
    %1703 = vmatmul.mubr.bf16.gmra.mrb[0].mxu0 %v1085
    %v1704 = vpop.f32.mrb[0].mxu0
    %v1705 = vadd.f32 %v1544, %v1704
    %v1706 = vpop.f32.mrb[0].mxu0
    %v1707 = vpop.f32.mrb[0].mxu0
    %v1708 = vadd.f32 %v1547, %v1707
    %v1709 = vpop.f32.mrb[0].mxu0
    %1710 = vmatprep.mubr.bf16.mxu0 %v1091
    %1711 = vmatmul.mubr.bf16.gmra.mrb[0].mxu0 %v1090
    %v1712 = vpop.f32.mrb[0].mxu0
    %v1713 = vadd.f32 %v1552, %v1712
    %v1714 = vpop.f32.mrb[0].mxu0
    %v1715 = vpop.f32.mrb[0].mxu0
    %v1716 = vadd.f32 %v1555, %v1715
    %v1717 = vpop.f32.mrb[0].mxu0
    %1718 = vmatprep.mubr.bf16.mxu0 %v1096
    %1719 = vmatmul.mubr.bf16.gmra.mrb[0].mxu0 %v1095
    %v1720 = vpop.f32.mrb[0].mxu0
    %v1721 = vadd.f32 %v1560, %v1720
    %v1722 = vpop.f32.mrb[0].mxu0
    %v1723 = vpop.f32.mrb[0].mxu0
    %v1724 = vadd.f32 %v1563, %v1723
    %v1725 = vpop.f32.mrb[0].mxu0
    %1726 = vmatprep.mubr.bf16.mxu0 %v1101
    %1727 = vmatmul.mubr.bf16.gmra.mrb[0].mxu0 %v1100
    %v1728 = vpop.f32.mrb[0].mxu0
    %v1729 = vadd.f32 %v1568, %v1728
    %v1730 = vpop.f32.mrb[0].mxu0
    %v1731 = vpop.f32.mrb[0].mxu0
    %v1732 = vadd.f32 %v1571, %v1731
    %v1733 = vpop.f32.mrb[0].mxu0
    %1734 = vmatprep.mubr.bf16.mxu0 %v1106
    %1735 = vmatmul.mubr.bf16.gmra.mrb[0].mxu0 %v1105
    %v1736 = vpop.f32.mrb[0].mxu0
    %v1737 = vadd.f32 %v1576, %v1736
    %v1738 = vpop.f32.mrb[0].mxu0
    %v1739 = vpop.f32.mrb[0].mxu0
    %v1740 = vadd.f32 %v1579, %v1739
    %v1741 = vpop.f32.mrb[0].mxu0
    %1742 = vmatprep.mubr.bf16.mxu0 %v1111
    %1743 = vmatmul.mubr.bf16.gmra.mrb[0].mxu0 %v1110
    %v1744 = vpop.f32.mrb[0].mxu0
    %v1745 = vadd.f32 %v1584, %v1744
    %v1746 = vpop.f32.mrb[0].mxu0
    %v1747 = vpop.f32.mrb[0].mxu0
    %v1748 = vadd.f32 %v1587, %v1747
    %v1749 = vpop.f32.mrb[0].mxu0
    %1750 = vmatprep.mubr.bf16.mxu0 %v1116
    %1751 = vmatmul.mubr.bf16.gmra.mrb[0].mxu0 %v1115
    %v1752 = vpop.f32.mrb[0].mxu0
    %v1753 = vadd.f32 %v1592, %v1752
    %v1754 = vpop.f32.mrb[0].mxu0
    %v1755 = vpop.f32.mrb[0].mxu0
    %v1756 = vadd.f32 %v1595, %v1755
    %v1757 = vpop.f32.mrb[0].mxu0
    %1758 = vmatprep.mubr.bf16.mxu0 %v1121
    %1759 = vmatmul.mubr.bf16.gmra.mrb[0].mxu0 %v1120
    %v1760 = vpop.f32.mrb[0].mxu0
    %v1761 = vadd.f32 %v1600, %v1760
    %v1762 = vpop.f32.mrb[0].mxu0
    %v1763 = vpop.f32.mrb[0].mxu0
    %v1764 = vadd.f32 %v1603, %v1763
    %v1765 = vpop.f32.mrb[0].mxu0
    %1766 = vmatprep.mubr.bf16.mxu0 %v1126
    %1767 = vmatmul.mubr.bf16.gmra.mrb[0].mxu0 %v1125
    %v1768 = vpop.f32.mrb[0].mxu0
    %v1769 = vadd.f32 %v1608, %v1768
    %v1770 = vpop.f32.mrb[0].mxu0
    %v1771 = vpop.f32.mrb[0].mxu0
    %v1772 = vadd.f32 %v1611, %v1771
    %v1773 = vpop.f32.mrb[0].mxu0
    %1774 = vdwg.mxu0
    %1775 = vmatprep.subr.bf16.mxu0 0
    %1776 = vmatpush1.bf16.msra.mxu0 %v1405
    %1777 = vmatprep.subr.bf16.mxu0 0
    %1778 = vmatpush1.bf16.msra.mxu0 %v1406
    %1779 = vmatprep.subr.bf16.mxu0 0
    %1780 = vmatpush1.bf16.msra.mxu0 %v1407
    %1781 = vmatprep.subr.bf16.mxu0 0
    %1782 = vmatpush1.bf16.msra.mxu0 %v1408
    %1783 = vmatprep.subr.bf16.mxu0 0
    %1784 = vmatpush1.bf16.msra.mxu0 %v1409
    %1785 = vmatprep.subr.bf16.mxu0 0
    %1786 = vmatpush1.bf16.msra.mxu0 %v1410
    %1787 = vmatprep.subr.bf16.mxu0 0
    %1788 = vmatpush1.bf16.msra.mxu0 %v1411
    %1789 = vmatprep.subr.bf16.mxu0 0
    %1790 = vmatpush1.bf16.msra.mxu0 %v1412
    %1791 = vmatprep.subr.bf16.mxu0 0
    %1792 = vmatpush1.bf16.msra.mxu0 0
    %1793 = vmatprep.subr.bf16.mxu0 0
    %1794 = vmatpush1.bf16.msra.mxu0 0
    %1795 = vmatprep.subr.bf16.mxu0 0
    %1796 = vmatpush1.bf16.msra.mxu0 0
    %1797 = vmatprep.subr.bf16.mxu0 0
    %1798 = vmatpush1.bf16.msra.mxu0 0
    %1799 = vmatprep.subr.bf16.mxu0 0
    %1800 = vmatpush1.bf16.msra.mxu0 0
    %1801 = vmatprep.subr.bf16.mxu0 0
    %1802 = vmatpush1.bf16.msra.mxu0 0
    %1803 = vmatprep.subr.bf16.mxu0 0
    %1804 = vmatpush1.bf16.msra.mxu0 0
    %1805 = vmatprep.subr.bf16.mxu0 0
    %1806 = vmatpush1.bf16.msra.mxu0 0
    %1807 = vmatprep.mubr.bf16.mxu0 0
    %1808 = vmatmul.mubr.bf16.gmra.mrb[0].mxu0 %v1052
    %v1809 = vpop.f32.mrb[0].mxu0
    %v1810 = vadd.f32 %v1649, %v1809
    %v1811 = vpop.f32.mrb[0].mxu0
    %v1812 = vpop.f32.mrb[0].mxu0
    %v1813 = vadd.f32 %v1652, %v1812
    %v1814 = vpop.f32.mrb[0].mxu0
    %1815 = vmatprep.mubr.bf16.mxu0 0
    %1816 = vmatmul.mubr.bf16.gmra.mrb[0].mxu0 %v1057
    %v1817 = vpop.f32.mrb[0].mxu0
    %v1818 = vadd.f32 %v1657, %v1817
    %v1819 = vpop.f32.mrb[0].mxu0
    %v1820 = vpop.f32.mrb[0].mxu0
    %v1821 = vadd.f32 %v1660, %v1820
    %v1822 = vpop.f32.mrb[0].mxu0
    %1823 = vmatprep.mubr.bf16.mxu0 0
    %1824 = vmatmul.mubr.bf16.gmra.mrb[0].mxu0 %v1062
    %v1825 = vpop.f32.mrb[0].mxu0
    %v1826 = vadd.f32 %v1665, %v1825
    %v1827 = vpop.f32.mrb[0].mxu0
    %v1828 = vpop.f32.mrb[0].mxu0
    %v1829 = vadd.f32 %v1668, %v1828
    %v1830 = vpop.f32.mrb[0].mxu0
    %1831 = vmatprep.mubr.bf16.mxu0 0
    %1832 = vmatmul.mubr.bf16.gmra.mrb[0].mxu0 %v1067
    %v1833 = vpop.f32.mrb[0].mxu0
    %v1834 = vadd.f32 %v1673, %v1833
    %v1835 = vpop.f32.mrb[0].mxu0
    %v1836 = vpop.f32.mrb[0].mxu0
    %v1837 = vadd.f32 %v1676, %v1836
    %v1838 = vpop.f32.mrb[0].mxu0
    %1839 = vmatprep.mubr.bf16.mxu0 0
    %1840 = vmatmul.mubr.bf16.gmra.mrb[0].mxu0 %v1072
    %v1841 = vpop.f32.mrb[0].mxu0
    %v1842 = vadd.f32 %v1681, %v1841
    %v1843 = vpop.f32.mrb[0].mxu0
    %v1844 = vpop.f32.mrb[0].mxu0
    %v1845 = vadd.f32 %v1684, %v1844
    %v1846 = vpop.f32.mrb[0].mxu0
    %1847 = vmatprep.mubr.bf16.mxu0 0
    %1848 = vmatmul.mubr.bf16.gmra.mrb[0].mxu0 %v1077
    %v1849 = vpop.f32.mrb[0].mxu0
    %v1850 = vadd.f32 %v1689, %v1849
    %v1851 = vpop.f32.mrb[0].mxu0
    %v1852 = vpop.f32.mrb[0].mxu0
    %v1853 = vadd.f32 %v1692, %v1852
    %v1854 = vpop.f32.mrb[0].mxu0
    %1855 = vmatprep.mubr.bf16.mxu0 0
    %1856 = vmatmul.mubr.bf16.gmra.mrb[0].mxu0 %v1082
    %v1857 = vpop.f32.mrb[0].mxu0
    %v1858 = vadd.f32 %v1697, %v1857
    %v1859 = vpop.f32.mrb[0].mxu0
    %v1860 = vpop.f32.mrb[0].mxu0
    %v1861 = vadd.f32 %v1700, %v1860
    %v1862 = vpop.f32.mrb[0].mxu0
    %1863 = vmatprep.mubr.bf16.mxu0 0
    %1864 = vmatmul.mubr.bf16.gmra.mrb[0].mxu0 %v1087
    %v1865 = vpop.f32.mrb[0].mxu0
    %v1866 = vadd.f32 %v1705, %v1865
    %v1867 = vpop.f32.mrb[0].mxu0
    %v1868 = vpop.f32.mrb[0].mxu0
    %v1869 = vadd.f32 %v1708, %v1868
    %v1870 = vpop.f32.mrb[0].mxu0
    %1871 = vmatprep.mubr.bf16.mxu0 0
    %1872 = vmatmul.mubr.bf16.gmra.mrb[0].mxu0 %v1092
    %v1873 = vpop.f32.mrb[0].mxu0
    %v1874 = vadd.f32 %v1713, %v1873
    %v1875 = vpop.f32.mrb[0].mxu0
    %v1876 = vpop.f32.mrb[0].mxu0
    %v1877 = vadd.f32 %v1716, %v1876
    %v1878 = vpop.f32.mrb[0].mxu0
    %1879 = vmatprep.mubr.bf16.mxu0 0
    %1880 = vmatmul.mubr.bf16.gmra.mrb[0].mxu0 %v1097
    %v1881 = vpop.f32.mrb[0].mxu0
    %v1882 = vadd.f32 %v1721, %v1881
    %v1883 = vpop.f32.mrb[0].mxu0
    %v1884 = vpop.f32.mrb[0].mxu0
    %v1885 = vadd.f32 %v1724, %v1884
    %v1886 = vpop.f32.mrb[0].mxu0
    %1887 = vmatprep.mubr.bf16.mxu0 0
    %1888 = vmatmul.mubr.bf16.gmra.mrb[0].mxu0 %v1102
    %v1889 = vpop.f32.mrb[0].mxu0
    %v1890 = vadd.f32 %v1729, %v1889
    %v1891 = vpop.f32.mrb[0].mxu0
    %v1892 = vpop.f32.mrb[0].mxu0
    %v1893 = vadd.f32 %v1732, %v1892
    %v1894 = vpop.f32.mrb[0].mxu0
    %1895 = vmatprep.mubr.bf16.mxu0 0
    %1896 = vmatmul.mubr.bf16.gmra.mrb[0].mxu0 %v1107
    %v1897 = vpop.f32.mrb[0].mxu0
    %v1898 = vadd.f32 %v1737, %v1897
    %v1899 = vpop.f32.mrb[0].mxu0
    %v1900 = vpop.f32.mrb[0].mxu0
    %v1901 = vadd.f32 %v1740, %v1900
    %v1902 = vpop.f32.mrb[0].mxu0
    %1903 = vmatprep.mubr.bf16.mxu0 0
    %1904 = vmatmul.mubr.bf16.gmra.mrb[0].mxu0 %v1112
    %v1905 = vpop.f32.mrb[0].mxu0
    %v1906 = vadd.f32 %v1745, %v1905
    %v1907 = vpop.f32.mrb[0].mxu0
    %v1908 = vpop.f32.mrb[0].mxu0
    %v1909 = vadd.f32 %v1748, %v1908
    %v1910 = vpop.f32.mrb[0].mxu0
    %1911 = vmatprep.mubr.bf16.mxu0 0
    %1912 = vmatmul.mubr.bf16.gmra.mrb[0].mxu0 %v1117
    %v1913 = vpop.f32.mrb[0].mxu0
    %v1914 = vadd.f32 %v1753, %v1913
    %v1915 = vpop.f32.mrb[0].mxu0
    %v1916 = vpop.f32.mrb[0].mxu0
    %v1917 = vadd.f32 %v1756, %v1916
    %v1918 = vpop.f32.mrb[0].mxu0
    %1919 = vmatprep.mubr.bf16.mxu0 0
    %1920 = vmatmul.mubr.bf16.gmra.mrb[0].mxu0 %v1122
    %v1921 = vpop.f32.mrb[0].mxu0
    %v1922 = vadd.f32 %v1761, %v1921
    %v1923 = vpop.f32.mrb[0].mxu0
    %v1924 = vpop.f32.mrb[0].mxu0
    %v1925 = vadd.f32 %v1764, %v1924
    %v1926 = vpop.f32.mrb[0].mxu0
    %1927 = vmatprep.mubr.bf16.mxu0 0
    %1928 = vmatmul.mubr.bf16.gmra.mrb[0].mxu0 %v1127
    %v1929 = vpop.f32.mrb[0].mxu0
    %v1930 = vadd.f32 %v1769, %v1929
    %v1931 = vpop.f32.mrb[0].mxu0
    %v1932 = vpop.f32.mrb[0].mxu0
    %v1933 = vadd.f32 %v1772, %v1932
    %v1934 = vpop.f32.mrb[0].mxu0
    %1935 = vdwg.mxu0
    %v1936 = vmax.f32 %v1810, 0.0
    %v1937 = vmax.f32 %v1813, 0.0
    %v1938 = vmax.f32 %v1818, 0.0
    %v1939 = vmax.f32 %v1821, 0.0
    %v1940 = vmax.f32 %v1826, 0.0
    %v1941 = vmax.f32 %v1829, 0.0
    %v1942 = vmax.f32 %v1834, 0.0
    %v1943 = vmax.f32 %v1837, 0.0
    %v1944 = vmax.f32 %v1842, 0.0
    %v1945 = vmax.f32 %v1845, 0.0
    %v1946 = vmax.f32 %v1850, 0.0
    %v1947 = vmax.f32 %v1853, 0.0
    %v1948 = vmax.f32 %v1858, 0.0
    %v1949 = vmax.f32 %v1861, 0.0
    %v1950 = vmax.f32 %v1866, 0.0
    %v1951 = vmax.f32 %v1869, 0.0
    %v1952 = vmax.f32 %v1874, 0.0
    %v1953 = vmax.f32 %v1877, 0.0
    %v1954 = vmax.f32 %v1882, 0.0
    %v1955 = vmax.f32 %v1885, 0.0
    %v1956 = vmax.f32 %v1890, 0.0
    %v1957 = vmax.f32 %v1893, 0.0
    %v1958 = vmax.f32 %v1898, 0.0
    %v1959 = vmax.f32 %v1901, 0.0
    %v1960 = vmax.f32 %v1906, 0.0
    %v1961 = vmax.f32 %v1909, 0.0
    %v1962 = vmax.f32 %v1914, 0.0
    %v1963 = vmax.f32 %v1917, 0.0
    %v1964 = vmax.f32 %v1922, 0.0
    %v1965 = vmax.f32 %v1925, 0.0
    %v1966 = vmax.f32 %v1930, 0.0
    %v1967 = vmax.f32 %v1933, 0.0
    %1968 = vst [vmem:[#allocation4] sm:$0xff] %v1936
    %1969 = vst [vmem:[#allocation4 + $0x8] sm:$0xff] %v1937
    %1970 = vst [vmem:[#allocation4 + $0x10] sm:$0xff] %v1938
    %1971 = vst [vmem:[#allocation4 + $0x18] sm:$0xff] %v1939
    %1972 = vst [vmem:[#allocation4 + $0x20] sm:$0xff] %v1940
    %1973 = vst [vmem:[#allocation4 + $0x28] sm:$0xff] %v1941
    %1974 = vst [vmem:[#allocation4 + $0x30] sm:$0xff] %v1942
    %1975 = vst [vmem:[#allocation4 + $0x38] sm:$0xff] %v1943
    %1976 = vst [vmem:[#allocation4 + $0x40] sm:$0xff] %v1944
    %1977 = vst [vmem:[#allocation4 + $0x48] sm:$0xff] %v1945
    %1978 = vst [vmem:[#allocation4 + $0x50] sm:$0xff] %v1946
    %1979 = vst [vmem:[#allocation4 + $0x58] sm:$0xff] %v1947
    %1980 = vst [vmem:[#allocation4 + $0x60] sm:$0xff] %v1948
    %1981 = vst [vmem:[#allocation4 + $0x68] sm:$0xff] %v1949
    %1982 = vst [vmem:[#allocation4 + $0x70] sm:$0xff] %v1950
    %1983 = vst [vmem:[#allocation4 + $0x78] sm:$0xff] %v1951
    %1984 = vst [vmem:[#allocation4 + $0x80] sm:$0xff] %v1952
    %1985 = vst [vmem:[#allocation4 + $0x88] sm:$0xff] %v1953
    %1986 = vst [vmem:[#allocation4 + $0x90] sm:$0xff] %v1954
    %1987 = vst [vmem:[#allocation4 + $0x98] sm:$0xff] %v1955
    %1988 = vst [vmem:[#allocation4 + $0xa0] sm:$0xff] %v1956
    %1989 = vst [vmem:[#allocation4 + $0xa8] sm:$0xff] %v1957
    %1990 = vst [vmem:[#allocation4 + $0xb0] sm:$0xff] %v1958
    %1991 = vst [vmem:[#allocation4 + $0xb8] sm:$0xff] %v1959
    %1992 = vst [vmem:[#allocation4 + $0xc0] sm:$0xff] %v1960
    %1993 = vst [vmem:[#allocation4 + $0xc8] sm:$0xff] %v1961
    %1994 = vst [vmem:[#allocation4 + $0xd0] sm:$0xff] %v1962
    %1995 = vst [vmem:[#allocation4 + $0xd8] sm:$0xff] %v1963
    %1996 = vst [vmem:[#allocation4 + $0xe0] sm:$0xff] %v1964
    %1997 = vst [vmem:[#allocation4 + $0xe8] sm:$0xff] %v1965
    %1998 = vst [vmem:[#allocation4 + $0xf0] sm:$0xff] %v1966
    %1999 = vst [vmem:[#allocation4 + $0xf8] sm:$0xff] %v1967
    %v2000 = vld [vmem:[#allocation4] ss:$2 sm:$0xff]
    %s2001 = scalar_lea.vmem [#allocation4], 16
    %v2002 = vld [vmem:[%s2001] ss:$2 sm:$0xff]
    %s2003 = scalar_lea.vmem [#allocation4], 32
    %v2004 = vld [vmem:[%s2003] ss:$2 sm:$0xff]
    %s2005 = scalar_lea.vmem [#allocation4], 48
    %v2006 = vld [vmem:[%s2005] ss:$2 sm:$0xff]
    %s2007 = scalar_lea.vmem [#allocation4], 64
    %v2008 = vld [vmem:[%s2007] ss:$2 sm:$0xff]
    %s2009 = scalar_lea.vmem [#allocation4], 80
    %v2010 = vld [vmem:[%s2009] ss:$2 sm:$0xff]
    %s2011 = scalar_lea.vmem [#allocation4], 96
    %v2012 = vld [vmem:[%s2011] ss:$2 sm:$0xff]
    %s2013 = scalar_lea.vmem [#allocation4], 112
    %v2014 = vld [vmem:[%s2013] ss:$2 sm:$0xff]
    %s2015 = scalar_lea.vmem [#allocation4], 1
    %v2016 = vld [vmem:[%s2015] ss:$2 sm:$0xff]
    %s2017 = scalar_lea.vmem [#allocation4], 17
    %v2018 = vld [vmem:[%s2017] ss:$2 sm:$0xff]
    %s2019 = scalar_lea.vmem [#allocation4], 33
    %v2020 = vld [vmem:[%s2019] ss:$2 sm:$0xff]
    %s2021 = scalar_lea.vmem [#allocation4], 49
    %v2022 = vld [vmem:[%s2021] ss:$2 sm:$0xff]
    %s2023 = scalar_lea.vmem [#allocation4], 65
    %v2024 = vld [vmem:[%s2023] ss:$2 sm:$0xff]
    %s2025 = scalar_lea.vmem [#allocation4], 81
    %v2026 = vld [vmem:[%s2025] ss:$2 sm:$0xff]
    %s2027 = scalar_lea.vmem [#allocation4], 97
    %v2028 = vld [vmem:[%s2027] ss:$2 sm:$0xff]
    %s2029 = scalar_lea.vmem [#allocation4], 113
    %v2030 = vld [vmem:[%s2029] ss:$2 sm:$0xff]
    %v2031 = vmax.f32 %v2000, %v2016
    %v2032 = vmax.f32 %v2002, %v2018
    %v2033 = vmax.f32 %v2004, %v2020
    %v2034 = vmax.f32 %v2006, %v2022
    %v2035 = vmax.f32 %v2008, %v2024
    %v2036 = vmax.f32 %v2010, %v2026
    %v2037 = vmax.f32 %v2012, %v2028
    %v2038 = vmax.f32 %v2014, %v2030
    %v2039 = vpack.c.bf16 %v2032, %v2031
    %v2040 = vpack.c.bf16 %v2034, %v2033
    %v2041 = vpack.c.bf16 %v2036, %v2035
    %v2042 = vpack.c.bf16 %v2038, %v2037
    %2043 = vst [vmem:[#allocation2 + $0x8] sm:$0xff] %v2039
    %2044 = vst [vmem:[#allocation2 + $0x10] sm:$0xff] %v2040
    %2045 = vst [vmem:[#allocation2 + $0x18] sm:$0xff] %v2041
    %2046 = vst [vmem:[#allocation2 + $0x20] sm:$0xff] %v2042
    %2047 = vst [vmem:[#allocation2 + $0x28] sm:$0xff] 0
    %s2048 = scalar_lea.vmem [#allocation4], 128
    %v2049 = vld [vmem:[%s2048] ss:$2 sm:$0xff]
    %s2050 = scalar_lea.vmem [#allocation4], 144
    %v2051 = vld [vmem:[%s2050] ss:$2 sm:$0xff]
    %s2052 = scalar_lea.vmem [#allocation4], 160
    %v2053 = vld [vmem:[%s2052] ss:$2 sm:$0xff]
    %s2054 = scalar_lea.vmem [#allocation4], 176
    %v2055 = vld [vmem:[%s2054] ss:$2 sm:$0xff]
    %s2056 = scalar_lea.vmem [#allocation4], 192
    %v2057 = vld [vmem:[%s2056] ss:$2 sm:$0xff]
    %s2058 = scalar_lea.vmem [#allocation4], 208
    %v2059 = vld [vmem:[%s2058] ss:$2 sm:$0xff]
    %s2060 = scalar_lea.vmem [#allocation4], 224
    %v2061 = vld [vmem:[%s2060] ss:$2 sm:$0xff]
    %s2062 = scalar_lea.vmem [#allocation4], 240
    %v2063 = vld [vmem:[%s2062] ss:$2 sm:$0xff]
    %s2064 = scalar_lea.vmem [#allocation4], 129
    %v2065 = vld [vmem:[%s2064] ss:$2 sm:$0xff]
    %s2066 = scalar_lea.vmem [#allocation4], 145
    %v2067 = vld [vmem:[%s2066] ss:$2 sm:$0xff]
    %s2068 = scalar_lea.vmem [#allocation4], 161
    %v2069 = vld [vmem:[%s2068] ss:$2 sm:$0xff]
    %s2070 = scalar_lea.vmem [#allocation4], 177
    %v2071 = vld [vmem:[%s2070] ss:$2 sm:$0xff]
    %s2072 = scalar_lea.vmem [#allocation4], 193
    %v2073 = vld [vmem:[%s2072] ss:$2 sm:$0xff]
    %s2074 = scalar_lea.vmem [#allocation4], 209
    %v2075 = vld [vmem:[%s2074] ss:$2 sm:$0xff]
    %s2076 = scalar_lea.vmem [#allocation4], 225
    %v2077 = vld [vmem:[%s2076] ss:$2 sm:$0xff]
    %s2078 = scalar_lea.vmem [#allocation4], 241
    %v2079 = vld [vmem:[%s2078] ss:$2 sm:$0xff]
    %v2080 = vmax.f32 %v2049, %v2065
    %v2081 = vmax.f32 %v2051, %v2067
    %v2082 = vmax.f32 %v2053, %v2069
    %v2083 = vmax.f32 %v2055, %v2071
    %v2084 = vmax.f32 %v2057, %v2073
    %v2085 = vmax.f32 %v2059, %v2075
    %v2086 = vmax.f32 %v2061, %v2077
    %v2087 = vmax.f32 %v2063, %v2079
    %v2088 = vpack.c.bf16 %v2081, %v2080
    %v2089 = vpack.c.bf16 %v2083, %v2082
    %v2090 = vpack.c.bf16 %v2085, %v2084
    %v2091 = vpack.c.bf16 %v2087, %v2086
    %2092 = vst [vmem:[#allocation2 + $0x58] sm:$0xff] %v2088
    %2093 = vst [vmem:[#allocation2 + $0x60] sm:$0xff] %v2089
    %2094 = vst [vmem:[#allocation2 + $0x68] sm:$0xff] %v2090
    %2095 = vst [vmem:[#allocation2 + $0x70] sm:$0xff] %v2091
    %2096 = vst [vmem:[#allocation2 + $0x78] sm:$0xff] 0
    %v2097 = vld [vmem:[#allocation2] sm:$0xc0]
    %v2098 = vld [vmem:[#allocation2 + $0x8] sm:$0xff]
    %v2099 = vld [vmem:[#allocation2 + $0x10] sm:$0xff]
    %v2100 = vld [vmem:[#allocation2 + $0x18] sm:$0xff]
    %v2101 = vld [vmem:[#allocation2 + $0x20] sm:$0x7f]
    %vm2102 = vsmask.f32 1280
    %v2104 = vshrl.u32 %v2097, 16
    %v2106 = vrot.slane %v2104, 6
    %v2107 = vshll.u32 %v2097, 16
    %v2109 = vrot.slane %v2107, 7
    %v2110 = vor.u32 %v2106, %v2109
    %v2112 = vshrl.u32 %v2098, 16
    %v2114 = vrot.slane %v2112, 6
    %v2115 = vshll.u32 %v2098, 16
    %v2117 = vrot.slane %v2115, 7
    %v2118 = vor.u32 %v2114, %v2117
    %v2119 = vsel %vm2102, %v2110, %v2118
    %v2121 = vshrl.u32 %v2099, 16
    %v2123 = vrot.slane %v2121, 6
    %v2124 = vshll.u32 %v2099, 16
    %v2126 = vrot.slane %v2124, 7
    %v2127 = vor.u32 %v2123, %v2126
    %v2128 = vsel %vm2102, %v2118, %v2127
    %v2130 = vshrl.u32 %v2100, 16
    %v2132 = vrot.slane %v2130, 6
    %v2133 = vshll.u32 %v2100, 16
    %v2135 = vrot.slane %v2133, 7
    %v2136 = vor.u32 %v2132, %v2135
    %v2137 = vsel %vm2102, %v2127, %v2136
    %v2139 = vshrl.u32 %v2101, 16
    %v2141 = vrot.slane %v2139, 6
    %v2142 = vshll.u32 %v2101, 16
    %v2144 = vrot.slane %v2142, 7
    %v2145 = vor.u32 %v2141, %v2144
    %v2146 = vsel %vm2102, %v2136, %v2145
    %2151 = vst [vmem:[#allocation3] sm:$0xff] %v2119
    %2152 = vst [vmem:[#allocation3 + $0x38] sm:$0xff] %v2128
    %2153 = vst [vmem:[#allocation3 + $0x70] sm:$0xff] %v2137
    %2154 = vst [vmem:[#allocation3 + $0xa8] sm:$0xff] %v2146
    %v2155 = vld [vmem:[#allocation2] sm:$0x80]
    %v2156 = vld [vmem:[#allocation2 + $0x8] sm:$0xff]
    %v2157 = vld [vmem:[#allocation2 + $0x10] sm:$0xff]
    %v2158 = vld [vmem:[#allocation2 + $0x18] sm:$0xff]
    %v2159 = vld [vmem:[#allocation2 + $0x20] sm:$0x7f]
    %v2165 = vrot.slane %v2155, 7
    %v2166 = vrot.slane %v2156, 7
    %v2167 = vsel %vm454, %v2165, %v2166
    %v2168 = vrot.slane %v2157, 7
    %v2169 = vsel %vm454, %v2166, %v2168
    %v2170 = vrot.slane %v2158, 7
    %v2171 = vsel %vm454, %v2168, %v2170
    %v2172 = vrot.slane %v2159, 7
    %v2173 = vsel %vm454, %v2170, %v2172
    %2178 = vst [vmem:[#allocation3 + $0x8] sm:$0xff] %v2167
    %2179 = vst [vmem:[#allocation3 + $0x40] sm:$0xff] %v2169
    %2180 = vst [vmem:[#allocation3 + $0x78] sm:$0xff] %v2171
    %2181 = vst [vmem:[#allocation3 + $0xb0] sm:$0xff] %v2173
    %v2182 = vld [vmem:[#allocation2] sm:$0x80]
    %v2183 = vld [vmem:[#allocation2 + $0x8] sm:$0xff]
    %v2184 = vld [vmem:[#allocation2 + $0x10] sm:$0xff]
    %v2185 = vld [vmem:[#allocation2 + $0x18] sm:$0xff]
    %v2186 = vld [vmem:[#allocation2 + $0x20] sm:$0xff]
    %v2188 = vshrl.u32 %v2182, 16
    %v2190 = vrot.slane %v2188, 7
    %v2192 = vshrl.u32 %v2183, 16
    %v2194 = vrot.slane %v2192, 7
    %v2195 = vshll.u32 %v2183, 16
    %v2197 = vor.u32 %v2194, %v2195
    %v2198 = vsel %vm497, %v2190, %v2197
    %v2200 = vshrl.u32 %v2184, 16
    %v2202 = vrot.slane %v2200, 7
    %v2203 = vshll.u32 %v2184, 16
    %v2205 = vor.u32 %v2202, %v2203
    %v2206 = vsel %vm497, %v2194, %v2205
    %v2208 = vshrl.u32 %v2185, 16
    %v2210 = vrot.slane %v2208, 7
    %v2211 = vshll.u32 %v2185, 16
    %v2213 = vor.u32 %v2210, %v2211
    %v2214 = vsel %vm497, %v2202, %v2213
    %v2216 = vshrl.u32 %v2186, 16
    %v2218 = vrot.slane %v2216, 7
    %v2219 = vshll.u32 %v2186, 16
    %v2221 = vor.u32 %v2218, %v2219
    %v2222 = vsel %vm497, %v2210, %v2221
    %2227 = vst [vmem:[#allocation3 + $0x10] sm:$0xff] %v2198
    %2228 = vst [vmem:[#allocation3 + $0x48] sm:$0xff] %v2206
    %2229 = vst [vmem:[#allocation3 + $0x80] sm:$0xff] %v2214
    %2230 = vst [vmem:[#allocation3 + $0xb8] sm:$0xff] %v2222
    %v2231 = vld [vmem:[#allocation2 + $0x8] sm:$0xff]
    %v2232 = vld [vmem:[#allocation2 + $0x10] sm:$0xff]
    %v2233 = vld [vmem:[#allocation2 + $0x18] sm:$0xff]
    %v2234 = vld [vmem:[#allocation2 + $0x20] sm:$0xff]
    %2235 = vst [vmem:[#allocation3 + $0x18] sm:$0xff] %v2231
    %2236 = vst [vmem:[#allocation3 + $0x50] sm:$0xff] %v2232
    %2237 = vst [vmem:[#allocation3 + $0x88] sm:$0xff] %v2233
    %2238 = vst [vmem:[#allocation3 + $0xc0] sm:$0xff] %v2234
    %v2239 = vld [vmem:[#allocation2 + $0x8] sm:$0xff]
    %v2240 = vld [vmem:[#allocation2 + $0x10] sm:$0xff]
    %v2241 = vld [vmem:[#allocation2 + $0x18] sm:$0xff]
    %v2242 = vld [vmem:[#allocation2 + $0x20] sm:$0xff]
    %v2243 = vld [vmem:[#allocation2 + $0x28] sm:$0x1]
    %v2245 = vshrl.u32 %v2239, 16
    %v2247 = vshll.u32 %v2239, 16
    %v2249 = vrot.slane %v2247, 1
    %v2250 = vor.u32 %v2245, %v2249
    %v2252 = vshll.u32 %v2240, 16
    %v2254 = vrot.slane %v2252, 1
    %v2255 = vsel %vm607, %v2250, %v2254
    %v2256 = vshrl.u32 %v2240, 16
    %v2258 = vor.u32 %v2256, %v2254
    %v2260 = vshll.u32 %v2241, 16
    %v2262 = vrot.slane %v2260, 1
    %v2263 = vsel %vm607, %v2258, %v2262
    %v2264 = vshrl.u32 %v2241, 16
    %v2266 = vor.u32 %v2264, %v2262
    %v2268 = vshll.u32 %v2242, 16
    %v2270 = vrot.slane %v2268, 1
    %v2271 = vsel %vm607, %v2266, %v2270
    %v2272 = vshrl.u32 %v2242, 16
    %v2274 = vor.u32 %v2272, %v2270
    %v2276 = vshll.u32 %v2243, 16
    %v2278 = vrot.slane %v2276, 1
    %v2279 = vsel %vm607, %v2274, %v2278
    %2284 = vst [vmem:[#allocation3 + $0x20] sm:$0xff] %v2255
    %2285 = vst [vmem:[#allocation3 + $0x58] sm:$0xff] %v2263
    %2286 = vst [vmem:[#allocation3 + $0x90] sm:$0xff] %v2271
    %2287 = vst [vmem:[#allocation3 + $0xc8] sm:$0xff] %v2279
    %v2288 = vld [vmem:[#allocation2 + $0x8] sm:$0xfe]
    %v2289 = vld [vmem:[#allocation2 + $0x10] sm:$0xff]
    %v2290 = vld [vmem:[#allocation2 + $0x18] sm:$0xff]
    %v2291 = vld [vmem:[#allocation2 + $0x20] sm:$0xff]
    %v2292 = vld [vmem:[#allocation2 + $0x28] sm:$0x1]
    %v2298 = vrot.slane %v2288, 1
    %v2299 = vrot.slane %v2289, 1
    %v2300 = vsel %vm710, %v2298, %v2299
    %v2301 = vrot.slane %v2290, 1
    %v2302 = vsel %vm710, %v2299, %v2301
    %v2303 = vrot.slane %v2291, 1
    %v2304 = vsel %vm710, %v2301, %v2303
    %v2305 = vrot.slane %v2292, 1
    %v2306 = vsel %vm710, %v2303, %v2305
    %2311 = vst [vmem:[#allocation3 + $0x28] sm:$0xff] %v2300
    %2312 = vst [vmem:[#allocation3 + $0x60] sm:$0xff] %v2302
    %2313 = vst [vmem:[#allocation3 + $0x98] sm:$0xff] %v2304
    %2314 = vst [vmem:[#allocation3 + $0xd0] sm:$0xff] %v2306
    %v2315 = vld [vmem:[#allocation2 + $0x8] sm:$0xfe]
    %v2316 = vld [vmem:[#allocation2 + $0x10] sm:$0xff]
    %v2317 = vld [vmem:[#allocation2 + $0x18] sm:$0xff]
    %v2318 = vld [vmem:[#allocation2 + $0x20] sm:$0xff]
    %v2319 = vld [vmem:[#allocation2 + $0x28] sm:$0x3]
    %vm2320 = vsmask.f32 6400
    %v2322 = vshrl.u32 %v2315, 16
    %v2324 = vrot.slane %v2322, 1
    %v2325 = vshll.u32 %v2315, 16
    %v2327 = vrot.slane %v2325, 2
    %v2328 = vor.u32 %v2324, %v2327
    %v2330 = vshrl.u32 %v2316, 16
    %v2332 = vrot.slane %v2330, 1
    %v2333 = vshll.u32 %v2316, 16
    %v2335 = vrot.slane %v2333, 2
    %v2336 = vor.u32 %v2332, %v2335
    %v2337 = vsel %vm2320, %v2328, %v2336
    %v2339 = vshrl.u32 %v2317, 16
    %v2341 = vrot.slane %v2339, 1
    %v2342 = vshll.u32 %v2317, 16
    %v2344 = vrot.slane %v2342, 2
    %v2345 = vor.u32 %v2341, %v2344
    %v2346 = vsel %vm2320, %v2336, %v2345
    %v2348 = vshrl.u32 %v2318, 16
    %v2350 = vrot.slane %v2348, 1
    %v2351 = vshll.u32 %v2318, 16
    %v2353 = vrot.slane %v2351, 2
    %v2354 = vor.u32 %v2350, %v2353
    %v2355 = vsel %vm2320, %v2345, %v2354
    %v2357 = vshrl.u32 %v2319, 16
    %v2359 = vrot.slane %v2357, 1
    %v2360 = vshll.u32 %v2319, 16
    %v2362 = vrot.slane %v2360, 2
    %v2363 = vor.u32 %v2359, %v2362
    %v2364 = vsel %vm2320, %v2354, %v2363
    %2369 = vst [vmem:[#allocation3 + $0x30] sm:$0xff] %v2337
    %2370 = vst [vmem:[#allocation3 + $0x68] sm:$0xff] %v2346
    %2371 = vst [vmem:[#allocation3 + $0xa0] sm:$0xff] %v2355
    %2372 = vst [vmem:[#allocation3 + $0xd8] sm:$0xff] %v2364
    %v2373 = vld [vmem:[#allocation2 + $0x50] sm:$0xc0]
    %v2374 = vld [vmem:[#allocation2 + $0x58] sm:$0xff]
    %v2375 = vld [vmem:[#allocation2 + $0x60] sm:$0xff]
    %v2376 = vld [vmem:[#allocation2 + $0x68] sm:$0xff]
    %v2377 = vld [vmem:[#allocation2 + $0x70] sm:$0x7f]
    %v2379 = vshrl.u32 %v2373, 16
    %v2381 = vrot.slane %v2379, 6
    %v2382 = vshll.u32 %v2373, 16
    %v2384 = vrot.slane %v2382, 7
    %v2385 = vor.u32 %v2381, %v2384
    %v2387 = vshrl.u32 %v2374, 16
    %v2389 = vrot.slane %v2387, 6
    %v2390 = vshll.u32 %v2374, 16
    %v2392 = vrot.slane %v2390, 7
    %v2393 = vor.u32 %v2389, %v2392
    %v2394 = vsel %vm2102, %v2385, %v2393
    %v2396 = vshrl.u32 %v2375, 16
    %v2398 = vrot.slane %v2396, 6
    %v2399 = vshll.u32 %v2375, 16
    %v2401 = vrot.slane %v2399, 7
    %v2402 = vor.u32 %v2398, %v2401
    %v2403 = vsel %vm2102, %v2393, %v2402
    %v2405 = vshrl.u32 %v2376, 16
    %v2407 = vrot.slane %v2405, 6
    %v2408 = vshll.u32 %v2376, 16
    %v2410 = vrot.slane %v2408, 7
    %v2411 = vor.u32 %v2407, %v2410
    %v2412 = vsel %vm2102, %v2402, %v2411
    %v2414 = vshrl.u32 %v2377, 16
    %v2416 = vrot.slane %v2414, 6
    %v2417 = vshll.u32 %v2377, 16
    %v2419 = vrot.slane %v2417, 7
    %v2420 = vor.u32 %v2416, %v2419
    %v2421 = vsel %vm2102, %v2411, %v2420
    %2426 = vst [vmem:[#allocation3 + $0xe0] sm:$0xff] %v2394
    %2427 = vst [vmem:[#allocation3 + $0x118] sm:$0xff] %v2403
    %2428 = vst [vmem:[#allocation3 + $0x150] sm:$0xff] %v2412
    %2429 = vst [vmem:[#allocation3 + $0x188] sm:$0xff] %v2421
    %v2430 = vld [vmem:[#allocation2 + $0x50] sm:$0x80]
    %v2431 = vld [vmem:[#allocation2 + $0x58] sm:$0xff]
    %v2432 = vld [vmem:[#allocation2 + $0x60] sm:$0xff]
    %v2433 = vld [vmem:[#allocation2 + $0x68] sm:$0xff]
    %v2434 = vld [vmem:[#allocation2 + $0x70] sm:$0x7f]
    %v2440 = vrot.slane %v2430, 7
    %v2441 = vrot.slane %v2431, 7
    %v2442 = vsel %vm454, %v2440, %v2441
    %v2443 = vrot.slane %v2432, 7
    %v2444 = vsel %vm454, %v2441, %v2443
    %v2445 = vrot.slane %v2433, 7
    %v2446 = vsel %vm454, %v2443, %v2445
    %v2447 = vrot.slane %v2434, 7
    %v2448 = vsel %vm454, %v2445, %v2447
    %2453 = vst [vmem:[#allocation3 + $0xe8] sm:$0xff] %v2442
    %2454 = vst [vmem:[#allocation3 + $0x120] sm:$0xff] %v2444
    %2455 = vst [vmem:[#allocation3 + $0x158] sm:$0xff] %v2446
    %2456 = vst [vmem:[#allocation3 + $0x190] sm:$0xff] %v2448
    %v2457 = vld [vmem:[#allocation2 + $0x50] sm:$0x80]
    %v2458 = vld [vmem:[#allocation2 + $0x58] sm:$0xff]
    %v2459 = vld [vmem:[#allocation2 + $0x60] sm:$0xff]
    %v2460 = vld [vmem:[#allocation2 + $0x68] sm:$0xff]
    %v2461 = vld [vmem:[#allocation2 + $0x70] sm:$0xff]
    %v2463 = vshrl.u32 %v2457, 16
    %v2465 = vrot.slane %v2463, 7
    %v2467 = vshrl.u32 %v2458, 16
    %v2469 = vrot.slane %v2467, 7
    %v2470 = vshll.u32 %v2458, 16
    %v2472 = vor.u32 %v2469, %v2470
    %v2473 = vsel %vm497, %v2465, %v2472
    %v2475 = vshrl.u32 %v2459, 16
    %v2477 = vrot.slane %v2475, 7
    %v2478 = vshll.u32 %v2459, 16
    %v2480 = vor.u32 %v2477, %v2478
    %v2481 = vsel %vm497, %v2469, %v2480
    %v2483 = vshrl.u32 %v2460, 16
    %v2485 = vrot.slane %v2483, 7
    %v2486 = vshll.u32 %v2460, 16
    %v2488 = vor.u32 %v2485, %v2486
    %v2489 = vsel %vm497, %v2477, %v2488
    %v2491 = vshrl.u32 %v2461, 16
    %v2493 = vrot.slane %v2491, 7
    %v2494 = vshll.u32 %v2461, 16
    %v2496 = vor.u32 %v2493, %v2494
    %v2497 = vsel %vm497, %v2485, %v2496
    %2502 = vst [vmem:[#allocation3 + $0xf0] sm:$0xff] %v2473
    %2503 = vst [vmem:[#allocation3 + $0x128] sm:$0xff] %v2481
    %2504 = vst [vmem:[#allocation3 + $0x160] sm:$0xff] %v2489
    %2505 = vst [vmem:[#allocation3 + $0x198] sm:$0xff] %v2497
    %v2506 = vld [vmem:[#allocation2 + $0x58] sm:$0xff]
    %v2507 = vld [vmem:[#allocation2 + $0x60] sm:$0xff]
    %v2508 = vld [vmem:[#allocation2 + $0x68] sm:$0xff]
    %v2509 = vld [vmem:[#allocation2 + $0x70] sm:$0xff]
    %2510 = vst [vmem:[#allocation3 + $0xf8] sm:$0xff] %v2506
    %2511 = vst [vmem:[#allocation3 + $0x130] sm:$0xff] %v2507
    %2512 = vst [vmem:[#allocation3 + $0x168] sm:$0xff] %v2508
    %2513 = vst [vmem:[#allocation3 + $0x1a0] sm:$0xff] %v2509
    %v2514 = vld [vmem:[#allocation2 + $0x58] sm:$0xff]
    %v2515 = vld [vmem:[#allocation2 + $0x60] sm:$0xff]
    %v2516 = vld [vmem:[#allocation2 + $0x68] sm:$0xff]
    %v2517 = vld [vmem:[#allocation2 + $0x70] sm:$0xff]
    %v2518 = vld [vmem:[#allocation2 + $0x78] sm:$0x1]
    %v2520 = vshrl.u32 %v2514, 16
    %v2522 = vshll.u32 %v2514, 16
    %v2524 = vrot.slane %v2522, 1
    %v2525 = vor.u32 %v2520, %v2524
    %v2527 = vshll.u32 %v2515, 16
    %v2529 = vrot.slane %v2527, 1
    %v2530 = vsel %vm607, %v2525, %v2529
    %v2531 = vshrl.u32 %v2515, 16
    %v2533 = vor.u32 %v2531, %v2529
    %v2535 = vshll.u32 %v2516, 16
    %v2537 = vrot.slane %v2535, 1
    %v2538 = vsel %vm607, %v2533, %v2537
    %v2539 = vshrl.u32 %v2516, 16
    %v2541 = vor.u32 %v2539, %v2537
    %v2543 = vshll.u32 %v2517, 16
    %v2545 = vrot.slane %v2543, 1
    %v2546 = vsel %vm607, %v2541, %v2545
    %v2547 = vshrl.u32 %v2517, 16
    %v2549 = vor.u32 %v2547, %v2545
    %v2551 = vshll.u32 %v2518, 16
    %v2553 = vrot.slane %v2551, 1
    %v2554 = vsel %vm607, %v2549, %v2553
    %2559 = vst [vmem:[#allocation3 + $0x100] sm:$0xff] %v2530
    %2560 = vst [vmem:[#allocation3 + $0x138] sm:$0xff] %v2538
    %2561 = vst [vmem:[#allocation3 + $0x170] sm:$0xff] %v2546
    %2562 = vst [vmem:[#allocation3 + $0x1a8] sm:$0xff] %v2554
    %v2563 = vld [vmem:[#allocation2 + $0x58] sm:$0xfe]
    %v2564 = vld [vmem:[#allocation2 + $0x60] sm:$0xff]
    %v2565 = vld [vmem:[#allocation2 + $0x68] sm:$0xff]
    %v2566 = vld [vmem:[#allocation2 + $0x70] sm:$0xff]
    %v2567 = vld [vmem:[#allocation2 + $0x78] sm:$0x1]
    %v2573 = vrot.slane %v2563, 1
    %v2574 = vrot.slane %v2564, 1
    %v2575 = vsel %vm710, %v2573, %v2574
    %v2576 = vrot.slane %v2565, 1
    %v2577 = vsel %vm710, %v2574, %v2576
    %v2578 = vrot.slane %v2566, 1
    %v2579 = vsel %vm710, %v2576, %v2578
    %v2580 = vrot.slane %v2567, 1
    %v2581 = vsel %vm710, %v2578, %v2580
    %2586 = vst [vmem:[#allocation3 + $0x108] sm:$0xff] %v2575
    %2587 = vst [vmem:[#allocation3 + $0x140] sm:$0xff] %v2577
    %2588 = vst [vmem:[#allocation3 + $0x178] sm:$0xff] %v2579
    %2589 = vst [vmem:[#allocation3 + $0x1b0] sm:$0xff] %v2581
    %v2590 = vld [vmem:[#allocation2 + $0x58] sm:$0xfe]
    %v2591 = vld [vmem:[#allocation2 + $0x60] sm:$0xff]
    %v2592 = vld [vmem:[#allocation2 + $0x68] sm:$0xff]
    %v2593 = vld [vmem:[#allocation2 + $0x70] sm:$0xff]
    %v2594 = vld [vmem:[#allocation2 + $0x78] sm:$0x3]
    %v2596 = vshrl.u32 %v2590, 16
    %v2598 = vrot.slane %v2596, 1
    %v2599 = vshll.u32 %v2590, 16
    %v2601 = vrot.slane %v2599, 2
    %v2602 = vor.u32 %v2598, %v2601
    %v2604 = vshrl.u32 %v2591, 16
    %v2606 = vrot.slane %v2604, 1
    %v2607 = vshll.u32 %v2591, 16
    %v2609 = vrot.slane %v2607, 2
    %v2610 = vor.u32 %v2606, %v2609
    %v2611 = vsel %vm2320, %v2602, %v2610
    %v2613 = vshrl.u32 %v2592, 16
    %v2615 = vrot.slane %v2613, 1
    %v2616 = vshll.u32 %v2592, 16
    %v2618 = vrot.slane %v2616, 2
    %v2619 = vor.u32 %v2615, %v2618
    %v2620 = vsel %vm2320, %v2610, %v2619
    %v2622 = vshrl.u32 %v2593, 16
    %v2624 = vrot.slane %v2622, 1
    %v2625 = vshll.u32 %v2593, 16
    %v2627 = vrot.slane %v2625, 2
    %v2628 = vor.u32 %v2624, %v2627
    %v2629 = vsel %vm2320, %v2619, %v2628
    %v2631 = vshrl.u32 %v2594, 16
    %v2633 = vrot.slane %v2631, 1
    %v2634 = vshll.u32 %v2594, 16
    %v2636 = vrot.slane %v2634, 2
    %v2637 = vor.u32 %v2633, %v2636
    %v2638 = vsel %vm2320, %v2628, %v2637
    %2643 = vst [vmem:[#allocation3 + $0x110] sm:$0xff] %v2611
    %2644 = vst [vmem:[#allocation3 + $0x148] sm:$0xff] %v2620
    %2645 = vst [vmem:[#allocation3 + $0x180] sm:$0xff] %v2629
    %2646 = vst [vmem:[#allocation3 + $0x1b8] sm:$0xff] %v2638
    %v2647 = vld [vmem:[#allocation3] sm:$0xff]
    %v2648 = vld [vmem:[#allocation3 + $0x8] sm:$0xff]
    %v2649 = vld [vmem:[#allocation3 + $0x10] sm:$0xff]
    %v2650 = vld [vmem:[#allocation3 + $0x18] sm:$0xff]
    %v2651 = vld [vmem:[#allocation3 + $0x20] sm:$0xff]
    %v2652 = vld [vmem:[#allocation3 + $0x28] sm:$0xff]
    %v2653 = vld [vmem:[#allocation3 + $0x30] sm:$0xff]
    %v2654 = vld [vmem:[#allocation3 + $0x38] sm:$0xff]
    %v2655 = vld [vmem:[#allocation3 + $0x40] sm:$0xff]
    %v2656 = vld [vmem:[#allocation3 + $0x48] sm:$0xff]
    %v2657 = vld [vmem:[#allocation3 + $0x50] sm:$0xff]
    %v2658 = vld [vmem:[#allocation3 + $0x58] sm:$0xff]
    %v2659 = vld [vmem:[#allocation3 + $0x60] sm:$0xff]
    %v2660 = vld [vmem:[#allocation3 + $0x68] sm:$0xff]
    %v2661 = vld [vmem:[#allocation3 + $0x70] sm:$0xff]
    %v2662 = vld [vmem:[#allocation3 + $0x78] sm:$0xff]
    %v2663 = vld [vmem:[#allocation3 + $0x80] sm:$0xff]
    %v2664 = vld [vmem:[#allocation3 + $0x88] sm:$0xff]
    %v2665 = vld [vmem:[#allocation3 + $0x90] sm:$0xff]
    %v2666 = vld [vmem:[#allocation3 + $0x98] sm:$0xff]
    %v2667 = vld [vmem:[#allocation3 + $0xa0] sm:$0xff]
    %v2668 = vld [vmem:[#allocation3 + $0xa8] sm:$0xff]
    %v2669 = vld [vmem:[#allocation3 + $0xb0] sm:$0xff]
    %v2670 = vld [vmem:[#allocation3 + $0xb8] sm:$0xff]
    %v2671 = vld [vmem:[#allocation3 + $0xc0] sm:$0xff]
    %v2672 = vld [vmem:[#allocation3 + $0xc8] sm:$0xff]
    %v2673 = vld [vmem:[#allocation3 + $0xd0] sm:$0xff]
    %v2674 = vld [vmem:[#allocation3 + $0xd8] sm:$0xff]
    %v2675 = vld [vmem:[#allocation3 + $0xe0] sm:$0xff]
    %v2676 = vld [vmem:[#allocation3 + $0xe8] sm:$0xff]
    %v2677 = vld [vmem:[#allocation3 + $0xf0] sm:$0xff]
    %v2678 = vld [vmem:[#allocation3 + $0xf8] sm:$0xff]
    %v2679 = vld [vmem:[#allocation3 + $0x100] sm:$0xff]
    %v2680 = vld [vmem:[#allocation3 + $0x108] sm:$0xff]
    %v2681 = vld [vmem:[#allocation3 + $0x110] sm:$0xff]
    %v2682 = vld [vmem:[#allocation3 + $0x118] sm:$0xff]
    %v2683 = vld [vmem:[#allocation3 + $0x120] sm:$0xff]
    %v2684 = vld [vmem:[#allocation3 + $0x128] sm:$0xff]
    %v2685 = vld [vmem:[#allocation3 + $0x130] sm:$0xff]
    %v2686 = vld [vmem:[#allocation3 + $0x138] sm:$0xff]
    %v2687 = vld [vmem:[#allocation3 + $0x140] sm:$0xff]
    %v2688 = vld [vmem:[#allocation3 + $0x148] sm:$0xff]
    %v2689 = vld [vmem:[#allocation3 + $0x150] sm:$0xff]
    %v2690 = vld [vmem:[#allocation3 + $0x158] sm:$0xff]
    %v2691 = vld [vmem:[#allocation3 + $0x160] sm:$0xff]
    %v2692 = vld [vmem:[#allocation3 + $0x168] sm:$0xff]
    %v2693 = vld [vmem:[#allocation3 + $0x170] sm:$0xff]
    %v2694 = vld [vmem:[#allocation3 + $0x178] sm:$0xff]
    %v2695 = vld [vmem:[#allocation3 + $0x180] sm:$0xff]
    %v2696 = vld [vmem:[#allocation3 + $0x188] sm:$0xff]
    %v2697 = vld [vmem:[#allocation3 + $0x190] sm:$0xff]
    %v2698 = vld [vmem:[#allocation3 + $0x198] sm:$0xff]
    %v2699 = vld [vmem:[#allocation3 + $0x1a0] sm:$0xff]
    %v2700 = vld [vmem:[#allocation3 + $0x1a8] sm:$0xff]
    %v2701 = vld [vmem:[#allocation3 + $0x1b0] sm:$0xff]
    %v2702 = vld [vmem:[#allocation3 + $0x1b8] sm:$0xff]
    %v2703 = vld [vmem:[#allocation9 + $0x140] sm:$0xf]
    %v2704 = vld [vmem:[#allocation9 + $0x144] sm:$0xf]
    %v2705 = vld [vmem:[#allocation9 + $0x148] sm:$0xf]
    %v2706 = vld [vmem:[#allocation9 + $0x14c] sm:$0xf]
    %v2707 = vld [vmem:[#allocation9 + $0x150] sm:$0xf]
    %v2708 = vld [vmem:[#allocation9 + $0x154] sm:$0xf]
    %v2709 = vld [vmem:[#allocation9 + $0x158] sm:$0xf]
    %v2710 = vld [vmem:[#allocation9 + $0x15c] sm:$0xf]
    %v2711 = vld [vmem:[#allocation9 + $0x160] sm:$0xf]
    %v2712 = vld [vmem:[#allocation9 + $0x164] sm:$0xf]
    %v2713 = vld [vmem:[#allocation9 + $0x168] sm:$0xf]
    %v2714 = vld [vmem:[#allocation9 + $0x16c] sm:$0xf]
    %v2715 = vld [vmem:[#allocation9 + $0x170] sm:$0xf]
    %v2716 = vld [vmem:[#allocation9 + $0x174] sm:$0xf]
    %v2717 = vld [vmem:[#allocation9 + $0x178] sm:$0xf]
    %v2718 = vld [vmem:[#allocation9 + $0x17c] sm:$0xf]
    %v2719 = vld [vmem:[#allocation9 + $0x180] sm:$0xf]
    %v2720 = vld [vmem:[#allocation9 + $0x184] sm:$0xf]
    %v2721 = vld [vmem:[#allocation9 + $0x188] sm:$0xf]
    %v2722 = vld [vmem:[#allocation9 + $0x18c] sm:$0xf]
    %v2723 = vld [vmem:[#allocation9 + $0x190] sm:$0xf]
    %v2724 = vld [vmem:[#allocation9 + $0x194] sm:$0xf]
    %v2725 = vld [vmem:[#allocation9 + $0x198] sm:$0xf]
    %v2726 = vld [vmem:[#allocation9 + $0x19c] sm:$0xf]
    %v2727 = vld [vmem:[#allocation9 + $0x1a0] sm:$0xf]
    %v2728 = vld [vmem:[#allocation9 + $0x1a4] sm:$0xf]
    %v2729 = vld [vmem:[#allocation9 + $0x1a8] sm:$0xf]
    %v2730 = vld [vmem:[#allocation9 + $0x1ac] sm:$0xf]
    %v2731 = vld [vmem:[#allocation9 + $0x1b0] sm:$0xf]
    %v2732 = vld [vmem:[#allocation9 + $0x1b4] sm:$0xf]
    %v2733 = vld [vmem:[#allocation9 + $0x1b8] sm:$0xf]
    %v2734 = vld [vmem:[#allocation9 + $0x1bc] sm:$0xf]
    %v2735 = vld [vmem:[#allocation9 + $0x1c0] sm:$0xf]
    %v2736 = vld [vmem:[#allocation9 + $0x1c4] sm:$0xf]
    %v2737 = vld [vmem:[#allocation9 + $0x1c8] sm:$0xf]
    %v2738 = vld [vmem:[#allocation9 + $0x1cc] sm:$0xf]
    %v2739 = vld [vmem:[#allocation9 + $0x1d0] sm:$0xf]
    %v2740 = vld [vmem:[#allocation9 + $0x1d4] sm:$0xf]
    %v2741 = vld [vmem:[#allocation9 + $0x1d8] sm:$0xf]
    %v2742 = vld [vmem:[#allocation9 + $0x1dc] sm:$0xf]
    %v2743 = vld [vmem:[#allocation9 + $0x1e0] sm:$0xf]
    %v2744 = vld [vmem:[#allocation9 + $0x1e4] sm:$0xf]
    %v2745 = vld [vmem:[#allocation9 + $0x1e8] sm:$0xf]
    %v2746 = vld [vmem:[#allocation9 + $0x1ec] sm:$0xf]
    %v2747 = vld [vmem:[#allocation9 + $0x1f0] sm:$0xf]
    %v2748 = vld [vmem:[#allocation9 + $0x1f4] sm:$0xf]
    %v2749 = vld [vmem:[#allocation9 + $0x1f8] sm:$0xf]
    %v2750 = vld [vmem:[#allocation9 + $0x1fc] sm:$0xf]
    %v2751 = vld [vmem:[#allocation9 + $0x200] sm:$0xf]
    %v2752 = vld [vmem:[#allocation9 + $0x204] sm:$0xf]
    %v2753 = vld [vmem:[#allocation9 + $0x208] sm:$0xf]
    %v2754 = vld [vmem:[#allocation9 + $0x20c] sm:$0xf]
    %v2755 = vld [vmem:[#allocation9 + $0x210] sm:$0xf]
    %v2756 = vld [vmem:[#allocation9 + $0x214] sm:$0xf]
    %v2757 = vld [vmem:[#allocation9 + $0x218] sm:$0xf]
    %v2758 = vld [vmem:[#allocation9 + $0x21c] sm:$0xf]
    %v2759 = vld [vmem:[#allocation9 + $0x220] sm:$0xf]
    %v2760 = vld [vmem:[#allocation9 + $0x224] sm:$0xf]
    %v2761 = vld [vmem:[#allocation9 + $0x228] sm:$0xf]
    %v2762 = vld [vmem:[#allocation9 + $0x22c] sm:$0xf]
    %v2763 = vld [vmem:[#allocation9 + $0x230] sm:$0xf]
    %v2764 = vld [vmem:[#allocation9 + $0x234] sm:$0xf]
    %v2765 = vld [vmem:[#allocation9 + $0x238] sm:$0xf]
    %v2766 = vld [vmem:[#allocation9 + $0x23c] sm:$0xf]
    %v2767 = vld [vmem:[#allocation9 + $0x240] sm:$0xf]
    %v2768 = vld [vmem:[#allocation9 + $0x244] sm:$0xf]
    %v2769 = vld [vmem:[#allocation9 + $0x248] sm:$0xf]
    %v2770 = vld [vmem:[#allocation9 + $0x24c] sm:$0xf]
    %v2771 = vld [vmem:[#allocation9 + $0x250] sm:$0xf]
    %v2772 = vld [vmem:[#allocation9 + $0x254] sm:$0xf]
    %v2773 = vld [vmem:[#allocation9 + $0x258] sm:$0xf]
    %v2774 = vld [vmem:[#allocation9 + $0x25c] sm:$0xf]
    %v2775 = vld [vmem:[#allocation9 + $0x260] sm:$0xf]
    %v2776 = vld [vmem:[#allocation9 + $0x264] sm:$0xf]
    %v2777 = vld [vmem:[#allocation9 + $0x268] sm:$0xf]
    %v2778 = vld [vmem:[#allocation9 + $0x26c] sm:$0xf]
    %v2779 = vld [vmem:[#allocation9 + $0x270] sm:$0xf]
    %v2780 = vld [vmem:[#allocation9 + $0x274] sm:$0xf]
    %v2781 = vld [vmem:[#allocation9 + $0x278] sm:$0xf]
    %v2782 = vld [vmem:[#allocation9 + $0x27c] sm:$0xf]
    %v2783 = vld [vmem:[#allocation9 + $0x280] sm:$0xf]
    %v2784 = vld [vmem:[#allocation9 + $0x284] sm:$0xf]
    %v2785 = vld [vmem:[#allocation9 + $0x288] sm:$0xf]
    %v2786 = vld [vmem:[#allocation9 + $0x28c] sm:$0xf]
    %v2787 = vld [vmem:[#allocation9 + $0x290] sm:$0xf]
    %v2788 = vld [vmem:[#allocation9 + $0x294] sm:$0xf]
    %v2789 = vld [vmem:[#allocation9 + $0x298] sm:$0xf]
    %v2790 = vld [vmem:[#allocation9 + $0x29c] sm:$0xf]
    %v2791 = vld [vmem:[#allocation9 + $0x2a0] sm:$0xf]
    %v2792 = vld [vmem:[#allocation9 + $0x2a4] sm:$0xf]
    %v2793 = vld [vmem:[#allocation9 + $0x2a8] sm:$0xf]
    %v2794 = vld [vmem:[#allocation9 + $0x2ac] sm:$0xf]
    %v2795 = vld [vmem:[#allocation9 + $0x2b0] sm:$0xf]
    %v2796 = vld [vmem:[#allocation9 + $0x2b4] sm:$0xf]
    %v2797 = vld [vmem:[#allocation9 + $0x2b8] sm:$0xf]
    %v2798 = vld [vmem:[#allocation9 + $0x2bc] sm:$0xf]
    %v2799 = vld [vmem:[#allocation9 + $0x2c0] sm:$0xf]
    %v2800 = vld [vmem:[#allocation9 + $0x2c4] sm:$0xf]
    %v2801 = vld [vmem:[#allocation9 + $0x2c8] sm:$0xf]
    %v2802 = vld [vmem:[#allocation9 + $0x2cc] sm:$0xf]
    %v2803 = vld [vmem:[#allocation9 + $0x2d0] sm:$0xf]
    %v2804 = vld [vmem:[#allocation9 + $0x2d4] sm:$0xf]
    %v2805 = vld [vmem:[#allocation9 + $0x2d8] sm:$0xf]
    %v2806 = vld [vmem:[#allocation9 + $0x2dc] sm:$0xf]
    %v2807 = vld [vmem:[#allocation9 + $0x2e0] sm:$0xf]
    %v2808 = vld [vmem:[#allocation9 + $0x2e4] sm:$0xf]
    %v2809 = vld [vmem:[#allocation9 + $0x2e8] sm:$0xf]
    %v2810 = vld [vmem:[#allocation9 + $0x2ec] sm:$0xf]
    %v2811 = vld [vmem:[#allocation9 + $0x2f0] sm:$0xf]
    %v2812 = vld [vmem:[#allocation9 + $0x2f4] sm:$0xf]
    %v2813 = vld [vmem:[#allocation9 + $0x2f8] sm:$0xf]
    %v2814 = vld [vmem:[#allocation9 + $0x2fc] sm:$0xf]
    %v2815 = vld [vmem:[%s4 + $0x2] sm:$0x1]
    %v2816 = vlaneseq
    %v2817 = vshrl.u32 %v2816, 7
    %v2818 = vsub.s32 0, %v2817
    %v2819 = vrot.slane %v2815, %v2818
    %v2932 = vunpack.c.l.b16 %v2703
    %v2933 = vunpack.c.l.b16 %v2704
    %v2934 = vunpack.c.l.b16 %v2705
    %v2935 = vunpack.c.l.b16 %v2706
    %v2936 = vunpack.c.l.b16 %v2707
    %v2937 = vunpack.c.l.b16 %v2708
    %v2938 = vunpack.c.l.b16 %v2709
    %v2939 = vunpack.c.l.b16 %v2710
    %v2940 = vunpack.c.l.b16 %v2711
    %v2941 = vunpack.c.l.b16 %v2712
    %v2942 = vunpack.c.l.b16 %v2713
    %v2943 = vunpack.c.l.b16 %v2714
    %v2944 = vunpack.c.l.b16 %v2715
    %v2945 = vunpack.c.l.b16 %v2716
    %v2946 = vunpack.c.l.b16 %v2717
    %v2947 = vunpack.c.l.b16 %v2718
    %v2948 = vunpack.c.l.b16 %v2719
    %v2949 = vunpack.c.l.b16 %v2720
    %v2950 = vunpack.c.l.b16 %v2721
    %v2951 = vunpack.c.l.b16 %v2722
    %v2952 = vunpack.c.l.b16 %v2723
    %v2953 = vunpack.c.l.b16 %v2724
    %v2954 = vunpack.c.l.b16 %v2725
    %v2955 = vunpack.c.l.b16 %v2726
    %v2956 = vunpack.c.l.b16 %v2727
    %v2957 = vunpack.c.l.b16 %v2728
    %v2958 = vunpack.c.l.b16 %v2729
    %v2959 = vunpack.c.l.b16 %v2730
    %v2960 = vunpack.c.l.b16 %v2731
    %v2961 = vunpack.c.l.b16 %v2732
    %v2962 = vunpack.c.l.b16 %v2733
    %v2963 = vunpack.c.l.b16 %v2734
    %v2964 = vunpack.c.l.b16 %v2735
    %v2965 = vunpack.c.l.b16 %v2736
    %v2966 = vunpack.c.l.b16 %v2737
    %v2967 = vunpack.c.l.b16 %v2738
    %v2968 = vunpack.c.l.b16 %v2739
    %v2969 = vunpack.c.l.b16 %v2740
    %v2970 = vunpack.c.l.b16 %v2741
    %v2971 = vunpack.c.l.b16 %v2742
    %v2972 = vunpack.c.l.b16 %v2743
    %v2973 = vunpack.c.l.b16 %v2744
    %v2974 = vunpack.c.l.b16 %v2745
    %v2975 = vunpack.c.l.b16 %v2746
    %v2976 = vunpack.c.l.b16 %v2747
    %v2977 = vunpack.c.l.b16 %v2748
    %v2978 = vunpack.c.l.b16 %v2749
    %v2979 = vunpack.c.l.b16 %v2750
    %v2980 = vunpack.c.l.b16 %v2751
    %v2981 = vunpack.c.l.b16 %v2752
    %v2982 = vunpack.c.l.b16 %v2753
    %v2983 = vunpack.c.l.b16 %v2754
    %v2984 = vunpack.c.l.b16 %v2755
    %v2985 = vunpack.c.l.b16 %v2756
    %v2986 = vunpack.c.l.b16 %v2757
    %v2987 = vunpack.c.l.b16 %v2758
    %v2988 = vunpack.c.l.b16 %v2759
    %v2989 = vunpack.c.l.b16 %v2760
    %v2990 = vunpack.c.l.b16 %v2761
    %v2991 = vunpack.c.l.b16 %v2762
    %v2992 = vunpack.c.l.b16 %v2763
    %v2993 = vunpack.c.l.b16 %v2764
    %v2994 = vunpack.c.l.b16 %v2765
    %v2995 = vunpack.c.l.b16 %v2766
    %v2996 = vunpack.c.l.b16 %v2767
    %v2997 = vunpack.c.l.b16 %v2768
    %v2998 = vunpack.c.l.b16 %v2769
    %v2999 = vunpack.c.l.b16 %v2770
    %v3000 = vunpack.c.l.b16 %v2771
    %v3001 = vunpack.c.l.b16 %v2772
    %v3002 = vunpack.c.l.b16 %v2773
    %v3003 = vunpack.c.l.b16 %v2774
    %v3004 = vunpack.c.l.b16 %v2775
    %v3005 = vunpack.c.l.b16 %v2776
    %v3006 = vunpack.c.l.b16 %v2777
    %v3007 = vunpack.c.l.b16 %v2778
    %v3008 = vunpack.c.l.b16 %v2779
    %v3009 = vunpack.c.l.b16 %v2780
    %v3010 = vunpack.c.l.b16 %v2781
    %v3011 = vunpack.c.l.b16 %v2782
    %v3012 = vunpack.c.l.b16 %v2783
    %v3013 = vunpack.c.l.b16 %v2784
    %v3014 = vunpack.c.l.b16 %v2785
    %v3015 = vunpack.c.l.b16 %v2786
    %v3016 = vunpack.c.l.b16 %v2787
    %v3017 = vunpack.c.l.b16 %v2788
    %v3018 = vunpack.c.l.b16 %v2789
    %v3019 = vunpack.c.l.b16 %v2790
    %v3020 = vunpack.c.l.b16 %v2791
    %v3021 = vunpack.c.l.b16 %v2792
    %v3022 = vunpack.c.l.b16 %v2793
    %v3023 = vunpack.c.l.b16 %v2794
    %v3024 = vunpack.c.l.b16 %v2795
    %v3025 = vunpack.c.l.b16 %v2796
    %v3026 = vunpack.c.l.b16 %v2797
    %v3027 = vunpack.c.l.b16 %v2798
    %v3028 = vunpack.c.l.b16 %v2799
    %v3029 = vunpack.c.l.b16 %v2800
    %v3030 = vunpack.c.l.b16 %v2801
    %v3031 = vunpack.c.l.b16 %v2802
    %v3032 = vunpack.c.l.b16 %v2803
    %v3033 = vunpack.c.l.b16 %v2804
    %v3034 = vunpack.c.l.b16 %v2805
    %v3035 = vunpack.c.l.b16 %v2806
    %v3036 = vunpack.c.l.b16 %v2807
    %v3037 = vunpack.c.l.b16 %v2808
    %v3038 = vunpack.c.l.b16 %v2809
    %v3039 = vunpack.c.l.b16 %v2810
    %v3040 = vunpack.c.l.b16 %v2811
    %v3041 = vunpack.c.l.b16 %v2812
    %v3042 = vunpack.c.l.b16 %v2813
    %v3043 = vunpack.c.l.b16 %v2814
    %v3044 = vpack.c.b16 %v2933, %v2932
    %v3045 = vpack.c.b16 %v2935, %v2934
    %v3046 = vpack.c.b16 %v2937, %v2936
    %v3047 = vpack.c.b16 %v2939, %v2938
    %v3048 = vpack.c.b16 %v2941, %v2940
    %v3049 = vpack.c.b16 %v2943, %v2942
    %v3050 = vpack.c.b16 %v2945, %v2944
    %v3051 = vpack.c.b16 %v2947, %v2946
    %v3052 = vpack.c.b16 %v2949, %v2948
    %v3053 = vpack.c.b16 %v2951, %v2950
    %v3054 = vpack.c.b16 %v2953, %v2952
    %v3055 = vpack.c.b16 %v2955, %v2954
    %v3056 = vpack.c.b16 %v2957, %v2956
    %v3057 = vpack.c.b16 %v2959, %v2958
    %v3058 = vpack.c.b16 %v2961, %v2960
    %v3059 = vpack.c.b16 %v2963, %v2962
    %v3060 = vpack.c.b16 %v2965, %v2964
    %v3061 = vpack.c.b16 %v2967, %v2966
    %v3062 = vpack.c.b16 %v2969, %v2968
    %v3063 = vpack.c.b16 %v2971, %v2970
    %v3064 = vpack.c.b16 %v2973, %v2972
    %v3065 = vpack.c.b16 %v2975, %v2974
    %v3066 = vpack.c.b16 %v2977, %v2976
    %v3067 = vpack.c.b16 %v2979, %v2978
    %v3068 = vpack.c.b16 %v2981, %v2980
    %v3069 = vpack.c.b16 %v2983, %v2982
    %v3070 = vpack.c.b16 %v2985, %v2984
    %v3071 = vpack.c.b16 %v2987, %v2986
    %v3072 = vpack.c.b16 %v2989, %v2988
    %v3073 = vpack.c.b16 %v2991, %v2990
    %v3074 = vpack.c.b16 %v2993, %v2992
    %v3075 = vpack.c.b16 %v2995, %v2994
    %v3076 = vpack.c.b16 %v2997, %v2996
    %v3077 = vpack.c.b16 %v2999, %v2998
    %v3078 = vpack.c.b16 %v3001, %v3000
    %v3079 = vpack.c.b16 %v3003, %v3002
    %v3080 = vpack.c.b16 %v3005, %v3004
    %v3081 = vpack.c.b16 %v3007, %v3006
    %v3082 = vpack.c.b16 %v3009, %v3008
    %v3083 = vpack.c.b16 %v3011, %v3010
    %v3084 = vpack.c.b16 %v3013, %v3012
    %v3085 = vpack.c.b16 %v3015, %v3014
    %v3086 = vpack.c.b16 %v3017, %v3016
    %v3087 = vpack.c.b16 %v3019, %v3018
    %v3088 = vpack.c.b16 %v3021, %v3020
    %v3089 = vpack.c.b16 %v3023, %v3022
    %v3090 = vpack.c.b16 %v3025, %v3024
    %v3091 = vpack.c.b16 %v3027, %v3026
    %v3092 = vpack.c.b16 %v3029, %v3028
    %v3093 = vpack.c.b16 %v3031, %v3030
    %v3094 = vpack.c.b16 %v3033, %v3032
    %v3095 = vpack.c.b16 %v3035, %v3034
    %v3096 = vpack.c.b16 %v3037, %v3036
    %v3097 = vpack.c.b16 %v3039, %v3038
    %v3098 = vpack.c.b16 %v3041, %v3040
    %v3099 = vpack.c.b16 %v3043, %v3042
    %3156 = vmatprep.subr.bf16.mxu0 0
    %3157 = vmatpush1.bf16.msra.mxu0 %v3044
    %3158 = vmatprep.subr.bf16.mxu0 0
    %3159 = vmatpush1.bf16.msra.mxu0 %v3045
    %3160 = vmatprep.subr.bf16.mxu0 0
    %3161 = vmatpush1.bf16.msra.mxu0 %v3046
    %3162 = vmatprep.subr.bf16.mxu0 0
    %3163 = vmatpush1.bf16.msra.mxu0 %v3047
    %3164 = vmatprep.subr.bf16.mxu0 0
    %3165 = vmatpush1.bf16.msra.mxu0 %v3048
    %3166 = vmatprep.subr.bf16.mxu0 0
    %3167 = vmatpush1.bf16.msra.mxu0 %v3049
    %3168 = vmatprep.subr.bf16.mxu0 0
    %3169 = vmatpush1.bf16.msra.mxu0 %v3050
    %3170 = vmatprep.subr.bf16.mxu0 0
    %3171 = vmatpush1.bf16.msra.mxu0 %v3051
    %3172 = vmatprep.subr.bf16.mxu0 0
    %3173 = vmatpush1.bf16.msra.mxu0 %v3052
    %3174 = vmatprep.subr.bf16.mxu0 0
    %3175 = vmatpush1.bf16.msra.mxu0 %v3053
    %3176 = vmatprep.subr.bf16.mxu0 0
    %3177 = vmatpush1.bf16.msra.mxu0 %v3054
    %3178 = vmatprep.subr.bf16.mxu0 0
    %3179 = vmatpush1.bf16.msra.mxu0 %v3055
    %3180 = vmatprep.subr.bf16.mxu0 0
    %3181 = vmatpush1.bf16.msra.mxu0 %v3056
    %3182 = vmatprep.subr.bf16.mxu0 0
    %3183 = vmatpush1.bf16.msra.mxu0 %v3057
    %3184 = vmatprep.subr.bf16.mxu0 0
    %3185 = vmatpush1.bf16.msra.mxu0 %v3058
    %3186 = vmatprep.subr.bf16.mxu0 0
    %3187 = vmatpush1.bf16.msra.mxu0 %v3059
    %3188 = vmatprep.mubr.bf16.mxu0 %v2648
    %3189 = vmatmul.mubr.bf16.gmra.mrb[0].mxu0 %v2647
    %v3190 = vpop.f32.mrb[0].mxu0
    %v3191 = vadd.f32 %v2819, %v3190
    %v3192 = vpop.f32.mrb[0].mxu0
    %v3193 = vpop.f32.mrb[0].mxu0
    %v3194 = vadd.f32 %v2819, %v3193
    %v3195 = vpop.f32.mrb[0].mxu0
    %3196 = vmatprep.mubr.bf16.mxu0 %v2655
    %3197 = vmatmul.mubr.bf16.gmra.mrb[0].mxu0 %v2654
    %v3198 = vpop.f32.mrb[0].mxu0
    %v3199 = vadd.f32 %v2819, %v3198
    %v3200 = vpop.f32.mrb[0].mxu0
    %v3201 = vpop.f32.mrb[0].mxu0
    %v3202 = vadd.f32 %v2819, %v3201
    %v3203 = vpop.f32.mrb[0].mxu0
    %3204 = vmatprep.mubr.bf16.mxu0 %v2662
    %3205 = vmatmul.mubr.bf16.gmra.mrb[0].mxu0 %v2661
    %v3206 = vpop.f32.mrb[0].mxu0
    %v3207 = vadd.f32 %v2819, %v3206
    %v3208 = vpop.f32.mrb[0].mxu0
    %v3209 = vpop.f32.mrb[0].mxu0
    %v3210 = vadd.f32 %v2819, %v3209
    %v3211 = vpop.f32.mrb[0].mxu0
    %3212 = vmatprep.mubr.bf16.mxu0 %v2669
    %3213 = vmatmul.mubr.bf16.gmra.mrb[0].mxu0 %v2668
    %v3214 = vpop.f32.mrb[0].mxu0
    %v3215 = vadd.f32 %v2819, %v3214
    %v3216 = vpop.f32.mrb[0].mxu0
    %v3217 = vpop.f32.mrb[0].mxu0
    %v3218 = vadd.f32 %v2819, %v3217
    %v3219 = vpop.f32.mrb[0].mxu0
    %3220 = vmatprep.mubr.bf16.mxu0 %v2676
    %3221 = vmatmul.mubr.bf16.gmra.mrb[0].mxu0 %v2675
    %v3222 = vpop.f32.mrb[0].mxu0
    %v3223 = vadd.f32 %v2819, %v3222
    %v3224 = vpop.f32.mrb[0].mxu0
    %v3225 = vpop.f32.mrb[0].mxu0
    %v3226 = vadd.f32 %v2819, %v3225
    %v3227 = vpop.f32.mrb[0].mxu0
    %3228 = vmatprep.mubr.bf16.mxu0 %v2683
    %3229 = vmatmul.mubr.bf16.gmra.mrb[0].mxu0 %v2682
    %v3230 = vpop.f32.mrb[0].mxu0
    %v3231 = vadd.f32 %v2819, %v3230
    %v3232 = vpop.f32.mrb[0].mxu0
    %v3233 = vpop.f32.mrb[0].mxu0
    %v3234 = vadd.f32 %v2819, %v3233
    %v3235 = vpop.f32.mrb[0].mxu0
    %3236 = vmatprep.mubr.bf16.mxu0 %v2690
    %3237 = vmatmul.mubr.bf16.gmra.mrb[0].mxu0 %v2689
    %v3238 = vpop.f32.mrb[0].mxu0
    %v3239 = vadd.f32 %v2819, %v3238
    %v3240 = vpop.f32.mrb[0].mxu0
    %v3241 = vpop.f32.mrb[0].mxu0
    %v3242 = vadd.f32 %v2819, %v3241
    %v3243 = vpop.f32.mrb[0].mxu0
    %3244 = vmatprep.mubr.bf16.mxu0 %v2697
    %3245 = vmatmul.mubr.bf16.gmra.mrb[0].mxu0 %v2696
    %v3246 = vpop.f32.mrb[0].mxu0
    %v3247 = vadd.f32 %v2819, %v3246
    %v3248 = vpop.f32.mrb[0].mxu0
    %v3249 = vpop.f32.mrb[0].mxu0
    %v3250 = vadd.f32 %v2819, %v3249
    %v3251 = vpop.f32.mrb[0].mxu0
    %3252 = vdwg.mxu0
    %3253 = vmatprep.subr.bf16.mxu0 0
    %3254 = vmatpush1.bf16.msra.mxu0 %v3060
    %3255 = vmatprep.subr.bf16.mxu0 0
    %3256 = vmatpush1.bf16.msra.mxu0 %v3061
    %3257 = vmatprep.subr.bf16.mxu0 0
    %3258 = vmatpush1.bf16.msra.mxu0 %v3062
    %3259 = vmatprep.subr.bf16.mxu0 0
    %3260 = vmatpush1.bf16.msra.mxu0 %v3063
    %3261 = vmatprep.subr.bf16.mxu0 0
    %3262 = vmatpush1.bf16.msra.mxu0 %v3064
    %3263 = vmatprep.subr.bf16.mxu0 0
    %3264 = vmatpush1.bf16.msra.mxu0 %v3065
    %3265 = vmatprep.subr.bf16.mxu0 0
    %3266 = vmatpush1.bf16.msra.mxu0 %v3066
    %3267 = vmatprep.subr.bf16.mxu0 0
    %3268 = vmatpush1.bf16.msra.mxu0 %v3067
    %3269 = vmatprep.subr.bf16.mxu0 0
    %3270 = vmatpush1.bf16.msra.mxu0 %v3068
    %3271 = vmatprep.subr.bf16.mxu0 0
    %3272 = vmatpush1.bf16.msra.mxu0 %v3069
    %3273 = vmatprep.subr.bf16.mxu0 0
    %3274 = vmatpush1.bf16.msra.mxu0 %v3070
    %3275 = vmatprep.subr.bf16.mxu0 0
    %3276 = vmatpush1.bf16.msra.mxu0 %v3071
    %3277 = vmatprep.subr.bf16.mxu0 0
    %3278 = vmatpush1.bf16.msra.mxu0 %v3072
    %3279 = vmatprep.subr.bf16.mxu0 0
    %3280 = vmatpush1.bf16.msra.mxu0 %v3073
    %3281 = vmatprep.subr.bf16.mxu0 0
    %3282 = vmatpush1.bf16.msra.mxu0 %v3074
    %3283 = vmatprep.subr.bf16.mxu0 0
    %3284 = vmatpush1.bf16.msra.mxu0 %v3075
    %3285 = vmatprep.mubr.bf16.mxu0 %v2650
    %3286 = vmatmul.mubr.bf16.gmra.mrb[0].mxu0 %v2649
    %v3287 = vpop.f32.mrb[0].mxu0
    %v3288 = vadd.f32 %v3191, %v3287
    %v3289 = vpop.f32.mrb[0].mxu0
    %v3290 = vpop.f32.mrb[0].mxu0
    %v3291 = vadd.f32 %v3194, %v3290
    %v3292 = vpop.f32.mrb[0].mxu0
    %3293 = vmatprep.mubr.bf16.mxu0 %v2657
    %3294 = vmatmul.mubr.bf16.gmra.mrb[0].mxu0 %v2656
    %v3295 = vpop.f32.mrb[0].mxu0
    %v3296 = vadd.f32 %v3199, %v3295
    %v3297 = vpop.f32.mrb[0].mxu0
    %v3298 = vpop.f32.mrb[0].mxu0
    %v3299 = vadd.f32 %v3202, %v3298
    %v3300 = vpop.f32.mrb[0].mxu0
    %3301 = vmatprep.mubr.bf16.mxu0 %v2664
    %3302 = vmatmul.mubr.bf16.gmra.mrb[0].mxu0 %v2663
    %v3303 = vpop.f32.mrb[0].mxu0
    %v3304 = vadd.f32 %v3207, %v3303
    %v3305 = vpop.f32.mrb[0].mxu0
    %v3306 = vpop.f32.mrb[0].mxu0
    %v3307 = vadd.f32 %v3210, %v3306
    %v3308 = vpop.f32.mrb[0].mxu0
    %3309 = vmatprep.mubr.bf16.mxu0 %v2671
    %3310 = vmatmul.mubr.bf16.gmra.mrb[0].mxu0 %v2670
    %v3311 = vpop.f32.mrb[0].mxu0
    %v3312 = vadd.f32 %v3215, %v3311
    %v3313 = vpop.f32.mrb[0].mxu0
    %v3314 = vpop.f32.mrb[0].mxu0
    %v3315 = vadd.f32 %v3218, %v3314
    %v3316 = vpop.f32.mrb[0].mxu0
    %3317 = vmatprep.mubr.bf16.mxu0 %v2678
    %3318 = vmatmul.mubr.bf16.gmra.mrb[0].mxu0 %v2677
    %v3319 = vpop.f32.mrb[0].mxu0
    %v3320 = vadd.f32 %v3223, %v3319
    %v3321 = vpop.f32.mrb[0].mxu0
    %v3322 = vpop.f32.mrb[0].mxu0
    %v3323 = vadd.f32 %v3226, %v3322
    %v3324 = vpop.f32.mrb[0].mxu0
    %3325 = vmatprep.mubr.bf16.mxu0 %v2685
    %3326 = vmatmul.mubr.bf16.gmra.mrb[0].mxu0 %v2684
    %v3327 = vpop.f32.mrb[0].mxu0
    %v3328 = vadd.f32 %v3231, %v3327
    %v3329 = vpop.f32.mrb[0].mxu0
    %v3330 = vpop.f32.mrb[0].mxu0
    %v3331 = vadd.f32 %v3234, %v3330
    %v3332 = vpop.f32.mrb[0].mxu0
    %3333 = vmatprep.mubr.bf16.mxu0 %v2692
    %3334 = vmatmul.mubr.bf16.gmra.mrb[0].mxu0 %v2691
    %v3335 = vpop.f32.mrb[0].mxu0
    %v3336 = vadd.f32 %v3239, %v3335
    %v3337 = vpop.f32.mrb[0].mxu0
    %v3338 = vpop.f32.mrb[0].mxu0
    %v3339 = vadd.f32 %v3242, %v3338
    %v3340 = vpop.f32.mrb[0].mxu0
    %3341 = vmatprep.mubr.bf16.mxu0 %v2699
    %3342 = vmatmul.mubr.bf16.gmra.mrb[0].mxu0 %v2698
    %v3343 = vpop.f32.mrb[0].mxu0
    %v3344 = vadd.f32 %v3247, %v3343
    %v3345 = vpop.f32.mrb[0].mxu0
    %v3346 = vpop.f32.mrb[0].mxu0
    %v3347 = vadd.f32 %v3250, %v3346
    %v3348 = vpop.f32.mrb[0].mxu0
    %3349 = vdwg.mxu0
    %3350 = vmatprep.subr.bf16.mxu0 0
    %3351 = vmatpush1.bf16.msra.mxu0 %v3076
    %3352 = vmatprep.subr.bf16.mxu0 0
    %3353 = vmatpush1.bf16.msra.mxu0 %v3077
    %3354 = vmatprep.subr.bf16.mxu0 0
    %3355 = vmatpush1.bf16.msra.mxu0 %v3078
    %3356 = vmatprep.subr.bf16.mxu0 0
    %3357 = vmatpush1.bf16.msra.mxu0 %v3079
    %3358 = vmatprep.subr.bf16.mxu0 0
    %3359 = vmatpush1.bf16.msra.mxu0 %v3080
    %3360 = vmatprep.subr.bf16.mxu0 0
    %3361 = vmatpush1.bf16.msra.mxu0 %v3081
    %3362 = vmatprep.subr.bf16.mxu0 0
    %3363 = vmatpush1.bf16.msra.mxu0 %v3082
    %3364 = vmatprep.subr.bf16.mxu0 0
    %3365 = vmatpush1.bf16.msra.mxu0 %v3083
    %3366 = vmatprep.subr.bf16.mxu0 0
    %3367 = vmatpush1.bf16.msra.mxu0 %v3084
    %3368 = vmatprep.subr.bf16.mxu0 0
    %3369 = vmatpush1.bf16.msra.mxu0 %v3085
    %3370 = vmatprep.subr.bf16.mxu0 0
    %3371 = vmatpush1.bf16.msra.mxu0 %v3086
    %3372 = vmatprep.subr.bf16.mxu0 0
    %3373 = vmatpush1.bf16.msra.mxu0 %v3087
    %3374 = vmatprep.subr.bf16.mxu0 0
    %3375 = vmatpush1.bf16.msra.mxu0 %v3088
    %3376 = vmatprep.subr.bf16.mxu0 0
    %3377 = vmatpush1.bf16.msra.mxu0 %v3089
    %3378 = vmatprep.subr.bf16.mxu0 0
    %3379 = vmatpush1.bf16.msra.mxu0 %v3090
    %3380 = vmatprep.subr.bf16.mxu0 0
    %3381 = vmatpush1.bf16.msra.mxu0 %v3091
    %3382 = vmatprep.mubr.bf16.mxu0 %v2652
    %3383 = vmatmul.mubr.bf16.gmra.mrb[0].mxu0 %v2651
    %v3384 = vpop.f32.mrb[0].mxu0
    %v3385 = vadd.f32 %v3288, %v3384
    %v3386 = vpop.f32.mrb[0].mxu0
    %v3387 = vpop.f32.mrb[0].mxu0
    %v3388 = vadd.f32 %v3291, %v3387
    %v3389 = vpop.f32.mrb[0].mxu0
    %3390 = vmatprep.mubr.bf16.mxu0 %v2659
    %3391 = vmatmul.mubr.bf16.gmra.mrb[0].mxu0 %v2658
    %v3392 = vpop.f32.mrb[0].mxu0
    %v3393 = vadd.f32 %v3296, %v3392
    %v3394 = vpop.f32.mrb[0].mxu0
    %v3395 = vpop.f32.mrb[0].mxu0
    %v3396 = vadd.f32 %v3299, %v3395
    %v3397 = vpop.f32.mrb[0].mxu0
    %3398 = vmatprep.mubr.bf16.mxu0 %v2666
    %3399 = vmatmul.mubr.bf16.gmra.mrb[0].mxu0 %v2665
    %v3400 = vpop.f32.mrb[0].mxu0
    %v3401 = vadd.f32 %v3304, %v3400
    %v3402 = vpop.f32.mrb[0].mxu0
    %v3403 = vpop.f32.mrb[0].mxu0
    %v3404 = vadd.f32 %v3307, %v3403
    %v3405 = vpop.f32.mrb[0].mxu0
    %3406 = vmatprep.mubr.bf16.mxu0 %v2673
    %3407 = vmatmul.mubr.bf16.gmra.mrb[0].mxu0 %v2672
    %v3408 = vpop.f32.mrb[0].mxu0
    %v3409 = vadd.f32 %v3312, %v3408
    %v3410 = vpop.f32.mrb[0].mxu0
    %v3411 = vpop.f32.mrb[0].mxu0
    %v3412 = vadd.f32 %v3315, %v3411
    %v3413 = vpop.f32.mrb[0].mxu0
    %3414 = vmatprep.mubr.bf16.mxu0 %v2680
    %3415 = vmatmul.mubr.bf16.gmra.mrb[0].mxu0 %v2679
    %v3416 = vpop.f32.mrb[0].mxu0
    %v3417 = vadd.f32 %v3320, %v3416
    %v3418 = vpop.f32.mrb[0].mxu0
    %v3419 = vpop.f32.mrb[0].mxu0
    %v3420 = vadd.f32 %v3323, %v3419
    %v3421 = vpop.f32.mrb[0].mxu0
    %3422 = vmatprep.mubr.bf16.mxu0 %v2687
    %3423 = vmatmul.mubr.bf16.gmra.mrb[0].mxu0 %v2686
    %v3424 = vpop.f32.mrb[0].mxu0
    %v3425 = vadd.f32 %v3328, %v3424
    %v3426 = vpop.f32.mrb[0].mxu0
    %v3427 = vpop.f32.mrb[0].mxu0
    %v3428 = vadd.f32 %v3331, %v3427
    %v3429 = vpop.f32.mrb[0].mxu0
    %3430 = vmatprep.mubr.bf16.mxu0 %v2694
    %3431 = vmatmul.mubr.bf16.gmra.mrb[0].mxu0 %v2693
    %v3432 = vpop.f32.mrb[0].mxu0
    %v3433 = vadd.f32 %v3336, %v3432
    %v3434 = vpop.f32.mrb[0].mxu0
    %v3435 = vpop.f32.mrb[0].mxu0
    %v3436 = vadd.f32 %v3339, %v3435
    %v3437 = vpop.f32.mrb[0].mxu0
    %3438 = vmatprep.mubr.bf16.mxu0 %v2701
    %3439 = vmatmul.mubr.bf16.gmra.mrb[0].mxu0 %v2700
    %v3440 = vpop.f32.mrb[0].mxu0
    %v3441 = vadd.f32 %v3344, %v3440
    %v3442 = vpop.f32.mrb[0].mxu0
    %v3443 = vpop.f32.mrb[0].mxu0
    %v3444 = vadd.f32 %v3347, %v3443
    %v3445 = vpop.f32.mrb[0].mxu0
    %3446 = vdwg.mxu0
    %3447 = vmatprep.subr.bf16.mxu0 0
    %3448 = vmatpush1.bf16.msra.mxu0 %v3092
    %3449 = vmatprep.subr.bf16.mxu0 0
    %3450 = vmatpush1.bf16.msra.mxu0 %v3093
    %3451 = vmatprep.subr.bf16.mxu0 0
    %3452 = vmatpush1.bf16.msra.mxu0 %v3094
    %3453 = vmatprep.subr.bf16.mxu0 0
    %3454 = vmatpush1.bf16.msra.mxu0 %v3095
    %3455 = vmatprep.subr.bf16.mxu0 0
    %3456 = vmatpush1.bf16.msra.mxu0 %v3096
    %3457 = vmatprep.subr.bf16.mxu0 0
    %3458 = vmatpush1.bf16.msra.mxu0 %v3097
    %3459 = vmatprep.subr.bf16.mxu0 0
    %3460 = vmatpush1.bf16.msra.mxu0 %v3098
    %3461 = vmatprep.subr.bf16.mxu0 0
    %3462 = vmatpush1.bf16.msra.mxu0 %v3099
    %3463 = vmatprep.subr.bf16.mxu0 0
    %3464 = vmatpush1.bf16.msra.mxu0 0
    %3465 = vmatprep.subr.bf16.mxu0 0
    %3466 = vmatpush1.bf16.msra.mxu0 0
    %3467 = vmatprep.subr.bf16.mxu0 0
    %3468 = vmatpush1.bf16.msra.mxu0 0
    %3469 = vmatprep.subr.bf16.mxu0 0
    %3470 = vmatpush1.bf16.msra.mxu0 0
    %3471 = vmatprep.subr.bf16.mxu0 0
    %3472 = vmatpush1.bf16.msra.mxu0 0
    %3473 = vmatprep.subr.bf16.mxu0 0
    %3474 = vmatpush1.bf16.msra.mxu0 0
    %3475 = vmatprep.subr.bf16.mxu0 0
    %3476 = vmatpush1.bf16.msra.mxu0 0
    %3477 = vmatprep.subr.bf16.mxu0 0
    %3478 = vmatpush1.bf16.msra.mxu0 0
    %3479 = vmatprep.mubr.bf16.mxu0 0
    %3480 = vmatmul.mubr.bf16.gmra.mrb[0].mxu0 %v2653
    %v3481 = vpop.f32.mrb[0].mxu0
    %v3482 = vadd.f32 %v3385, %v3481
    %v3483 = vpop.f32.mrb[0].mxu0
    %v3484 = vpop.f32.mrb[0].mxu0
    %v3485 = vadd.f32 %v3388, %v3484
    %v3486 = vpop.f32.mrb[0].mxu0
    %3487 = vmatprep.mubr.bf16.mxu0 0
    %3488 = vmatmul.mubr.bf16.gmra.mrb[0].mxu0 %v2660
    %v3489 = vpop.f32.mrb[0].mxu0
    %v3490 = vadd.f32 %v3393, %v3489
    %v3491 = vpop.f32.mrb[0].mxu0
    %v3492 = vpop.f32.mrb[0].mxu0
    %v3493 = vadd.f32 %v3396, %v3492
    %v3494 = vpop.f32.mrb[0].mxu0
    %3495 = vmatprep.mubr.bf16.mxu0 0
    %3496 = vmatmul.mubr.bf16.gmra.mrb[0].mxu0 %v2667
    %v3497 = vpop.f32.mrb[0].mxu0
    %v3498 = vadd.f32 %v3401, %v3497
    %v3499 = vpop.f32.mrb[0].mxu0
    %v3500 = vpop.f32.mrb[0].mxu0
    %v3501 = vadd.f32 %v3404, %v3500
    %v3502 = vpop.f32.mrb[0].mxu0
    %3503 = vmatprep.mubr.bf16.mxu0 0
    %3504 = vmatmul.mubr.bf16.gmra.mrb[0].mxu0 %v2674
    %v3505 = vpop.f32.mrb[0].mxu0
    %v3506 = vadd.f32 %v3409, %v3505
    %v3507 = vpop.f32.mrb[0].mxu0
    %v3508 = vpop.f32.mrb[0].mxu0
    %v3509 = vadd.f32 %v3412, %v3508
    %v3510 = vpop.f32.mrb[0].mxu0
    %3511 = vmatprep.mubr.bf16.mxu0 0
    %3512 = vmatmul.mubr.bf16.gmra.mrb[0].mxu0 %v2681
    %v3513 = vpop.f32.mrb[0].mxu0
    %v3514 = vadd.f32 %v3417, %v3513
    %v3515 = vpop.f32.mrb[0].mxu0
    %v3516 = vpop.f32.mrb[0].mxu0
    %v3517 = vadd.f32 %v3420, %v3516
    %v3518 = vpop.f32.mrb[0].mxu0
    %3519 = vmatprep.mubr.bf16.mxu0 0
    %3520 = vmatmul.mubr.bf16.gmra.mrb[0].mxu0 %v2688
    %v3521 = vpop.f32.mrb[0].mxu0
    %v3522 = vadd.f32 %v3425, %v3521
    %v3523 = vpop.f32.mrb[0].mxu0
    %v3524 = vpop.f32.mrb[0].mxu0
    %v3525 = vadd.f32 %v3428, %v3524
    %v3526 = vpop.f32.mrb[0].mxu0
    %3527 = vmatprep.mubr.bf16.mxu0 0
    %3528 = vmatmul.mubr.bf16.gmra.mrb[0].mxu0 %v2695
    %v3529 = vpop.f32.mrb[0].mxu0
    %v3530 = vadd.f32 %v3433, %v3529
    %v3531 = vpop.f32.mrb[0].mxu0
    %v3532 = vpop.f32.mrb[0].mxu0
    %v3533 = vadd.f32 %v3436, %v3532
    %v3534 = vpop.f32.mrb[0].mxu0
    %3535 = vmatprep.mubr.bf16.mxu0 0
    %3536 = vmatmul.mubr.bf16.gmra.mrb[0].mxu0 %v2702
    %v3537 = vpop.f32.mrb[0].mxu0
    %v3538 = vadd.f32 %v3441, %v3537
    %v3539 = vpop.f32.mrb[0].mxu0
    %v3540 = vpop.f32.mrb[0].mxu0
    %v3541 = vadd.f32 %v3444, %v3540
    %v3542 = vpop.f32.mrb[0].mxu0
    %3543 = vdwg.mxu0
    %v3544 = vmax.f32 %v3482, 0.0
    %v3545 = vmax.f32 %v3485, 0.0
    %v3546 = vmax.f32 %v3490, 0.0
    %v3547 = vmax.f32 %v3493, 0.0
    %v3548 = vmax.f32 %v3498, 0.0
    %v3549 = vmax.f32 %v3501, 0.0
    %v3550 = vmax.f32 %v3506, 0.0
    %v3551 = vmax.f32 %v3509, 0.0
    %v3552 = vmax.f32 %v3514, 0.0
    %v3553 = vmax.f32 %v3517, 0.0
    %v3554 = vmax.f32 %v3522, 0.0
    %v3555 = vmax.f32 %v3525, 0.0
    %v3556 = vmax.f32 %v3530, 0.0
    %v3557 = vmax.f32 %v3533, 0.0
    %v3558 = vmax.f32 %v3538, 0.0
    %v3559 = vmax.f32 %v3541, 0.0
    %v3560 = vpack.c.bf16 %v3545, %v3544
    %v3561 = vpack.c.bf16 %v3547, %v3546
    %v3562 = vpack.c.bf16 %v3549, %v3548
    %v3563 = vpack.c.bf16 %v3551, %v3550
    %v3564 = vpack.c.bf16 %v3553, %v3552
    %v3565 = vpack.c.bf16 %v3555, %v3554
    %v3566 = vpack.c.bf16 %v3557, %v3556
    %v3567 = vpack.c.bf16 %v3559, %v3558
    %3568 = vst [vmem:[#allocation2 + $0x8] sm:$0xff] %v3560
    %3569 = vst [vmem:[#allocation2 + $0x10] sm:$0xff] %v3561
    %3570 = vst [vmem:[#allocation2 + $0x18] sm:$0xff] %v3562
    %3571 = vst [vmem:[#allocation2 + $0x20] sm:$0xff] %v3563
    %3572 = vst [vmem:[#allocation2 + $0x28] sm:$0xff] 0
    %3573 = vst [vmem:[#allocation2 + $0x58] sm:$0xff] %v3564
    %3574 = vst [vmem:[#allocation2 + $0x60] sm:$0xff] %v3565
    %3575 = vst [vmem:[#allocation2 + $0x68] sm:$0xff] %v3566
    %3576 = vst [vmem:[#allocation2 + $0x70] sm:$0xff] %v3567
    %3577 = vst [vmem:[#allocation2 + $0x78] sm:$0xff] 0
    %v3578 = vld [vmem:[#allocation2] sm:$0x80]
    %v3579 = vld [vmem:[#allocation2 + $0x8] sm:$0xff]
    %v3580 = vld [vmem:[#allocation2 + $0x10] sm:$0xff]
    %v3581 = vld [vmem:[#allocation2 + $0x18] sm:$0xff]
    %v3582 = vld [vmem:[#allocation2 + $0x20] sm:$0x7f]
    %v3588 = vrot.slane %v3578, 7
    %v3589 = vrot.slane %v3579, 7
    %v3590 = vsel %vm454, %v3588, %v3589
    %v3591 = vrot.slane %v3580, 7
    %v3592 = vsel %vm454, %v3589, %v3591
    %v3593 = vrot.slane %v3581, 7
    %v3594 = vsel %vm454, %v3591, %v3593
    %v3595 = vrot.slane %v3582, 7
    %v3596 = vsel %vm454, %v3593, %v3595
    %3601 = vst [vmem:[#allocation3] sm:$0xff] %v3590
    %3602 = vst [vmem:[#allocation3 + $0x38] sm:$0xff] %v3592
    %3603 = vst [vmem:[#allocation3 + $0x70] sm:$0xff] %v3594
    %3604 = vst [vmem:[#allocation3 + $0xa8] sm:$0xff] %v3596
    %v3605 = vld [vmem:[#allocation2] sm:$0x80]
    %v3606 = vld [vmem:[#allocation2 + $0x8] sm:$0xff]
    %v3607 = vld [vmem:[#allocation2 + $0x10] sm:$0xff]
    %v3608 = vld [vmem:[#allocation2 + $0x18] sm:$0xff]
    %v3609 = vld [vmem:[#allocation2 + $0x20] sm:$0xff]
    %v3611 = vshrl.u32 %v3605, 16
    %v3613 = vrot.slane %v3611, 7
    %v3615 = vshrl.u32 %v3606, 16
    %v3617 = vrot.slane %v3615, 7
    %v3618 = vshll.u32 %v3606, 16
    %v3620 = vor.u32 %v3617, %v3618
    %v3621 = vsel %vm497, %v3613, %v3620
    %v3623 = vshrl.u32 %v3607, 16
    %v3625 = vrot.slane %v3623, 7
    %v3626 = vshll.u32 %v3607, 16
    %v3628 = vor.u32 %v3625, %v3626
    %v3629 = vsel %vm497, %v3617, %v3628
    %v3631 = vshrl.u32 %v3608, 16
    %v3633 = vrot.slane %v3631, 7
    %v3634 = vshll.u32 %v3608, 16
    %v3636 = vor.u32 %v3633, %v3634
    %v3637 = vsel %vm497, %v3625, %v3636
    %v3639 = vshrl.u32 %v3609, 16
    %v3641 = vrot.slane %v3639, 7
    %v3642 = vshll.u32 %v3609, 16
    %v3644 = vor.u32 %v3641, %v3642
    %v3645 = vsel %vm497, %v3633, %v3644
    %3650 = vst [vmem:[#allocation3 + $0x8] sm:$0xff] %v3621
    %3651 = vst [vmem:[#allocation3 + $0x40] sm:$0xff] %v3629
    %3652 = vst [vmem:[#allocation3 + $0x78] sm:$0xff] %v3637
    %3653 = vst [vmem:[#allocation3 + $0xb0] sm:$0xff] %v3645
    %v3654 = vld [vmem:[#allocation2 + $0x8] sm:$0xff]
    %v3655 = vld [vmem:[#allocation2 + $0x10] sm:$0xff]
    %v3656 = vld [vmem:[#allocation2 + $0x18] sm:$0xff]
    %v3657 = vld [vmem:[#allocation2 + $0x20] sm:$0xff]
    %3658 = vst [vmem:[#allocation3 + $0x10] sm:$0xff] %v3654
    %3659 = vst [vmem:[#allocation3 + $0x48] sm:$0xff] %v3655
    %3660 = vst [vmem:[#allocation3 + $0x80] sm:$0xff] %v3656
    %3661 = vst [vmem:[#allocation3 + $0xb8] sm:$0xff] %v3657
    %v3662 = vld [vmem:[#allocation2 + $0x8] sm:$0xff]
    %v3663 = vld [vmem:[#allocation2 + $0x10] sm:$0xff]
    %v3664 = vld [vmem:[#allocation2 + $0x18] sm:$0xff]
    %v3665 = vld [vmem:[#allocation2 + $0x20] sm:$0xff]
    %v3666 = vld [vmem:[#allocation2 + $0x28] sm:$0x1]
    %v3668 = vshrl.u32 %v3662, 16
    %v3670 = vshll.u32 %v3662, 16
    %v3672 = vrot.slane %v3670, 1
    %v3673 = vor.u32 %v3668, %v3672
    %v3675 = vshll.u32 %v3663, 16
    %v3677 = vrot.slane %v3675, 1
    %v3678 = vsel %vm607, %v3673, %v3677
    %v3679 = vshrl.u32 %v3663, 16
    %v3681 = vor.u32 %v3679, %v3677
    %v3683 = vshll.u32 %v3664, 16
    %v3685 = vrot.slane %v3683, 1
    %v3686 = vsel %vm607, %v3681, %v3685
    %v3687 = vshrl.u32 %v3664, 16
    %v3689 = vor.u32 %v3687, %v3685
    %v3691 = vshll.u32 %v3665, 16
    %v3693 = vrot.slane %v3691, 1
    %v3694 = vsel %vm607, %v3689, %v3693
    %v3695 = vshrl.u32 %v3665, 16
    %v3697 = vor.u32 %v3695, %v3693
    %v3699 = vshll.u32 %v3666, 16
    %v3701 = vrot.slane %v3699, 1
    %v3702 = vsel %vm607, %v3697, %v3701
    %3707 = vst [vmem:[#allocation3 + $0x18] sm:$0xff] %v3678
    %3708 = vst [vmem:[#allocation3 + $0x50] sm:$0xff] %v3686
    %3709 = vst [vmem:[#allocation3 + $0x88] sm:$0xff] %v3694
    %3710 = vst [vmem:[#allocation3 + $0xc0] sm:$0xff] %v3702
    %v3711 = vld [vmem:[#allocation2 + $0x8] sm:$0xfe]
    %v3712 = vld [vmem:[#allocation2 + $0x10] sm:$0xff]
    %v3713 = vld [vmem:[#allocation2 + $0x18] sm:$0xff]
    %v3714 = vld [vmem:[#allocation2 + $0x20] sm:$0xff]
    %v3715 = vld [vmem:[#allocation2 + $0x28] sm:$0x1]
    %v3721 = vrot.slane %v3711, 1
    %v3722 = vrot.slane %v3712, 1
    %v3723 = vsel %vm710, %v3721, %v3722
    %v3724 = vrot.slane %v3713, 1
    %v3725 = vsel %vm710, %v3722, %v3724
    %v3726 = vrot.slane %v3714, 1
    %v3727 = vsel %vm710, %v3724, %v3726
    %v3728 = vrot.slane %v3715, 1
    %v3729 = vsel %vm710, %v3726, %v3728
    %3734 = vst [vmem:[#allocation3 + $0x20] sm:$0xff] %v3723
    %3735 = vst [vmem:[#allocation3 + $0x58] sm:$0xff] %v3725
    %3736 = vst [vmem:[#allocation3 + $0x90] sm:$0xff] %v3727
    %3737 = vst [vmem:[#allocation3 + $0xc8] sm:$0xff] %v3729
    %v3738 = vld [vmem:[#allocation2 + $0x50] sm:$0x80]
    %v3739 = vld [vmem:[#allocation2 + $0x58] sm:$0xff]
    %v3740 = vld [vmem:[#allocation2 + $0x60] sm:$0xff]
    %v3741 = vld [vmem:[#allocation2 + $0x68] sm:$0xff]
    %v3742 = vld [vmem:[#allocation2 + $0x70] sm:$0x7f]
    %v3748 = vrot.slane %v3738, 7
    %v3749 = vrot.slane %v3739, 7
    %v3750 = vsel %vm454, %v3748, %v3749
    %v3751 = vrot.slane %v3740, 7
    %v3752 = vsel %vm454, %v3749, %v3751
    %v3753 = vrot.slane %v3741, 7
    %v3754 = vsel %vm454, %v3751, %v3753
    %v3755 = vrot.slane %v3742, 7
    %v3756 = vsel %vm454, %v3753, %v3755
    %3761 = vst [vmem:[#allocation3 + $0xe0] sm:$0xff] %v3750
    %3762 = vst [vmem:[#allocation3 + $0x118] sm:$0xff] %v3752
    %3763 = vst [vmem:[#allocation3 + $0x150] sm:$0xff] %v3754
    %3764 = vst [vmem:[#allocation3 + $0x188] sm:$0xff] %v3756
    %v3765 = vld [vmem:[#allocation2 + $0x50] sm:$0x80]
    %v3766 = vld [vmem:[#allocation2 + $0x58] sm:$0xff]
    %v3767 = vld [vmem:[#allocation2 + $0x60] sm:$0xff]
    %v3768 = vld [vmem:[#allocation2 + $0x68] sm:$0xff]
    %v3769 = vld [vmem:[#allocation2 + $0x70] sm:$0xff]
    %v3771 = vshrl.u32 %v3765, 16
    %v3773 = vrot.slane %v3771, 7
    %v3775 = vshrl.u32 %v3766, 16
    %v3777 = vrot.slane %v3775, 7
    %v3778 = vshll.u32 %v3766, 16
    %v3780 = vor.u32 %v3777, %v3778
    %v3781 = vsel %vm497, %v3773, %v3780
    %v3783 = vshrl.u32 %v3767, 16
    %v3785 = vrot.slane %v3783, 7
    %v3786 = vshll.u32 %v3767, 16
    %v3788 = vor.u32 %v3785, %v3786
    %v3789 = vsel %vm497, %v3777, %v3788
    %v3791 = vshrl.u32 %v3768, 16
    %v3793 = vrot.slane %v3791, 7
    %v3794 = vshll.u32 %v3768, 16
    %v3796 = vor.u32 %v3793, %v3794
    %v3797 = vsel %vm497, %v3785, %v3796
    %v3799 = vshrl.u32 %v3769, 16
    %v3801 = vrot.slane %v3799, 7
    %v3802 = vshll.u32 %v3769, 16
    %v3804 = vor.u32 %v3801, %v3802
    %v3805 = vsel %vm497, %v3793, %v3804
    %3810 = vst [vmem:[#allocation3 + $0xe8] sm:$0xff] %v3781
    %3811 = vst [vmem:[#allocation3 + $0x120] sm:$0xff] %v3789
    %3812 = vst [vmem:[#allocation3 + $0x158] sm:$0xff] %v3797
    %3813 = vst [vmem:[#allocation3 + $0x190] sm:$0xff] %v3805
    %v3814 = vld [vmem:[#allocation2 + $0x58] sm:$0xff]
    %v3815 = vld [vmem:[#allocation2 + $0x60] sm:$0xff]
    %v3816 = vld [vmem:[#allocation2 + $0x68] sm:$0xff]
    %v3817 = vld [vmem:[#allocation2 + $0x70] sm:$0xff]
    %3818 = vst [vmem:[#allocation3 + $0xf0] sm:$0xff] %v3814
    %3819 = vst [vmem:[#allocation3 + $0x128] sm:$0xff] %v3815
    %3820 = vst [vmem:[#allocation3 + $0x160] sm:$0xff] %v3816
    %3821 = vst [vmem:[#allocation3 + $0x198] sm:$0xff] %v3817
    %v3822 = vld [vmem:[#allocation2 + $0x58] sm:$0xff]
    %v3823 = vld [vmem:[#allocation2 + $0x60] sm:$0xff]
    %v3824 = vld [vmem:[#allocation2 + $0x68] sm:$0xff]
    %v3825 = vld [vmem:[#allocation2 + $0x70] sm:$0xff]
    %v3826 = vld [vmem:[#allocation2 + $0x78] sm:$0x1]
    %v3828 = vshrl.u32 %v3822, 16
    %v3830 = vshll.u32 %v3822, 16
    %v3832 = vrot.slane %v3830, 1
    %v3833 = vor.u32 %v3828, %v3832
    %v3835 = vshll.u32 %v3823, 16
    %v3837 = vrot.slane %v3835, 1
    %v3838 = vsel %vm607, %v3833, %v3837
    %v3839 = vshrl.u32 %v3823, 16
    %v3841 = vor.u32 %v3839, %v3837
    %v3843 = vshll.u32 %v3824, 16
    %v3845 = vrot.slane %v3843, 1
    %v3846 = vsel %vm607, %v3841, %v3845
    %v3847 = vshrl.u32 %v3824, 16
    %v3849 = vor.u32 %v3847, %v3845
    %v3851 = vshll.u32 %v3825, 16
    %v3853 = vrot.slane %v3851, 1
    %v3854 = vsel %vm607, %v3849, %v3853
    %v3855 = vshrl.u32 %v3825, 16
    %v3857 = vor.u32 %v3855, %v3853
    %v3859 = vshll.u32 %v3826, 16
    %v3861 = vrot.slane %v3859, 1
    %v3862 = vsel %vm607, %v3857, %v3861
    %3867 = vst [vmem:[#allocation3 + $0xf8] sm:$0xff] %v3838
    %3868 = vst [vmem:[#allocation3 + $0x130] sm:$0xff] %v3846
    %3869 = vst [vmem:[#allocation3 + $0x168] sm:$0xff] %v3854
    %3870 = vst [vmem:[#allocation3 + $0x1a0] sm:$0xff] %v3862
    %v3871 = vld [vmem:[#allocation2 + $0x58] sm:$0xfe]
    %v3872 = vld [vmem:[#allocation2 + $0x60] sm:$0xff]
    %v3873 = vld [vmem:[#allocation2 + $0x68] sm:$0xff]
    %v3874 = vld [vmem:[#allocation2 + $0x70] sm:$0xff]
    %v3875 = vld [vmem:[#allocation2 + $0x78] sm:$0x1]
    %v3881 = vrot.slane %v3871, 1
    %v3882 = vrot.slane %v3872, 1
    %v3883 = vsel %vm710, %v3881, %v3882
    %v3884 = vrot.slane %v3873, 1
    %v3885 = vsel %vm710, %v3882, %v3884
    %v3886 = vrot.slane %v3874, 1
    %v3887 = vsel %vm710, %v3884, %v3886
    %v3888 = vrot.slane %v3875, 1
    %v3889 = vsel %vm710, %v3886, %v3888
    %3894 = vst [vmem:[#allocation3 + $0x100] sm:$0xff] %v3883
    %3895 = vst [vmem:[#allocation3 + $0x138] sm:$0xff] %v3885
    %3896 = vst [vmem:[#allocation3 + $0x170] sm:$0xff] %v3887
    %3897 = vst [vmem:[#allocation3 + $0x1a8] sm:$0xff] %v3889
    %v3898 = vld [vmem:[#allocation3] sm:$0xff]
    %v3899 = vld [vmem:[#allocation3 + $0x8] sm:$0xff]
    %v3900 = vld [vmem:[#allocation3 + $0x10] sm:$0xff]
    %v3901 = vld [vmem:[#allocation3 + $0x18] sm:$0xff]
    %v3902 = vld [vmem:[#allocation3 + $0x20] sm:$0xff]
    %v3903 = vld [vmem:[#allocation3 + $0x38] sm:$0xff]
    %v3904 = vld [vmem:[#allocation3 + $0x40] sm:$0xff]
    %v3905 = vld [vmem:[#allocation3 + $0x48] sm:$0xff]
    %v3906 = vld [vmem:[#allocation3 + $0x50] sm:$0xff]
    %v3907 = vld [vmem:[#allocation3 + $0x58] sm:$0xff]
    %v3908 = vld [vmem:[#allocation3 + $0x70] sm:$0xff]
    %v3909 = vld [vmem:[#allocation3 + $0x78] sm:$0xff]
    %v3910 = vld [vmem:[#allocation3 + $0x80] sm:$0xff]
    %v3911 = vld [vmem:[#allocation3 + $0x88] sm:$0xff]
    %v3912 = vld [vmem:[#allocation3 + $0x90] sm:$0xff]
    %v3913 = vld [vmem:[#allocation3 + $0xa8] sm:$0xff]
    %v3914 = vld [vmem:[#allocation3 + $0xb0] sm:$0xff]
    %v3915 = vld [vmem:[#allocation3 + $0xb8] sm:$0xff]
    %v3916 = vld [vmem:[#allocation3 + $0xc0] sm:$0xff]
    %v3917 = vld [vmem:[#allocation3 + $0xc8] sm:$0xff]
    %v3918 = vld [vmem:[#allocation3 + $0xe0] sm:$0xff]
    %v3919 = vld [vmem:[#allocation3 + $0xe8] sm:$0xff]
    %v3920 = vld [vmem:[#allocation3 + $0xf0] sm:$0xff]
    %v3921 = vld [vmem:[#allocation3 + $0xf8] sm:$0xff]
    %v3922 = vld [vmem:[#allocation3 + $0x100] sm:$0xff]
    %v3923 = vld [vmem:[#allocation3 + $0x118] sm:$0xff]
    %v3924 = vld [vmem:[#allocation3 + $0x120] sm:$0xff]
    %v3925 = vld [vmem:[#allocation3 + $0x128] sm:$0xff]
    %v3926 = vld [vmem:[#allocation3 + $0x130] sm:$0xff]
    %v3927 = vld [vmem:[#allocation3 + $0x138] sm:$0xff]
    %v3928 = vld [vmem:[#allocation3 + $0x150] sm:$0xff]
    %v3929 = vld [vmem:[#allocation3 + $0x158] sm:$0xff]
    %v3930 = vld [vmem:[#allocation3 + $0x160] sm:$0xff]
    %v3931 = vld [vmem:[#allocation3 + $0x168] sm:$0xff]
    %v3932 = vld [vmem:[#allocation3 + $0x170] sm:$0xff]
    %v3933 = vld [vmem:[#allocation3 + $0x188] sm:$0xff]
    %v3934 = vld [vmem:[#allocation3 + $0x190] sm:$0xff]
    %v3935 = vld [vmem:[#allocation3 + $0x198] sm:$0xff]
    %v3936 = vld [vmem:[#allocation3 + $0x1a0] sm:$0xff]
    %v3937 = vld [vmem:[#allocation3 + $0x1a8] sm:$0xff]
    %v3938 = vld [vmem:[#allocation9 + $0x300] sm:$0xf]
    %v3939 = vld [vmem:[#allocation9 + $0x304] sm:$0xf]
    %v3940 = vld [vmem:[#allocation9 + $0x308] sm:$0xf]
    %v3941 = vld [vmem:[#allocation9 + $0x30c] sm:$0xf]
    %v3942 = vld [vmem:[#allocation9 + $0x310] sm:$0xf]
    %v3943 = vld [vmem:[#allocation9 + $0x314] sm:$0xf]
    %v3944 = vld [vmem:[#allocation9 + $0x318] sm:$0xf]
    %v3945 = vld [vmem:[#allocation9 + $0x31c] sm:$0xf]
    %v3946 = vld [vmem:[#allocation9 + $0x320] sm:$0xf]
    %v3947 = vld [vmem:[#allocation9 + $0x324] sm:$0xf]
    %v3948 = vld [vmem:[#allocation9 + $0x328] sm:$0xf]
    %v3949 = vld [vmem:[#allocation9 + $0x32c] sm:$0xf]
    %v3950 = vld [vmem:[#allocation9 + $0x330] sm:$0xf]
    %v3951 = vld [vmem:[#allocation9 + $0x334] sm:$0xf]
    %v3952 = vld [vmem:[#allocation9 + $0x338] sm:$0xf]
    %v3953 = vld [vmem:[#allocation9 + $0x33c] sm:$0xf]
    %v3954 = vld [vmem:[#allocation9 + $0x340] sm:$0xf]
    %v3955 = vld [vmem:[#allocation9 + $0x344] sm:$0xf]
    %v3956 = vld [vmem:[#allocation9 + $0x348] sm:$0xf]
    %v3957 = vld [vmem:[#allocation9 + $0x34c] sm:$0xf]
    %v3958 = vld [vmem:[#allocation9 + $0x350] sm:$0xf]
    %v3959 = vld [vmem:[#allocation9 + $0x354] sm:$0xf]
    %v3960 = vld [vmem:[#allocation9 + $0x358] sm:$0xf]
    %v3961 = vld [vmem:[#allocation9 + $0x35c] sm:$0xf]
    %v3962 = vld [vmem:[#allocation9 + $0x360] sm:$0xf]
    %v3963 = vld [vmem:[#allocation9 + $0x364] sm:$0xf]
    %v3964 = vld [vmem:[#allocation9 + $0x368] sm:$0xf]
    %v3965 = vld [vmem:[#allocation9 + $0x36c] sm:$0xf]
    %v3966 = vld [vmem:[#allocation9 + $0x370] sm:$0xf]
    %v3967 = vld [vmem:[#allocation9 + $0x374] sm:$0xf]
    %v3968 = vld [vmem:[#allocation9 + $0x378] sm:$0xf]
    %v3969 = vld [vmem:[#allocation9 + $0x37c] sm:$0xf]
    %v3970 = vld [vmem:[#allocation9 + $0x380] sm:$0xf]
    %v3971 = vld [vmem:[#allocation9 + $0x384] sm:$0xf]
    %v3972 = vld [vmem:[#allocation9 + $0x388] sm:$0xf]
    %v3973 = vld [vmem:[#allocation9 + $0x38c] sm:$0xf]
    %v3974 = vld [vmem:[#allocation9 + $0x390] sm:$0xf]
    %v3975 = vld [vmem:[#allocation9 + $0x394] sm:$0xf]
    %v3976 = vld [vmem:[#allocation9 + $0x398] sm:$0xf]
    %v3977 = vld [vmem:[#allocation9 + $0x39c] sm:$0xf]
    %v3978 = vld [vmem:[#allocation9 + $0x3a0] sm:$0xf]
    %v3979 = vld [vmem:[#allocation9 + $0x3a4] sm:$0xf]
    %v3980 = vld [vmem:[#allocation9 + $0x3a8] sm:$0xf]
    %v3981 = vld [vmem:[#allocation9 + $0x3ac] sm:$0xf]
    %v3982 = vld [vmem:[#allocation9 + $0x3b0] sm:$0xf]
    %v3983 = vld [vmem:[#allocation9 + $0x3b4] sm:$0xf]
    %v3984 = vld [vmem:[#allocation9 + $0x3b8] sm:$0xf]
    %v3985 = vld [vmem:[#allocation9 + $0x3bc] sm:$0xf]
    %v3986 = vld [vmem:[#allocation9 + $0x3c0] sm:$0xf]
    %v3987 = vld [vmem:[#allocation9 + $0x3c4] sm:$0xf]
    %v3988 = vld [vmem:[#allocation9 + $0x3c8] sm:$0xf]
    %v3989 = vld [vmem:[#allocation9 + $0x3cc] sm:$0xf]
    %v3990 = vld [vmem:[#allocation9 + $0x3d0] sm:$0xf]
    %v3991 = vld [vmem:[#allocation9 + $0x3d4] sm:$0xf]
    %v3992 = vld [vmem:[#allocation9 + $0x3d8] sm:$0xf]
    %v3993 = vld [vmem:[#allocation9 + $0x3dc] sm:$0xf]
    %v3994 = vld [vmem:[#allocation9 + $0x3e0] sm:$0xf]
    %v3995 = vld [vmem:[#allocation9 + $0x3e4] sm:$0xf]
    %v3996 = vld [vmem:[#allocation9 + $0x3e8] sm:$0xf]
    %v3997 = vld [vmem:[#allocation9 + $0x3ec] sm:$0xf]
    %v3998 = vld [vmem:[#allocation9 + $0x3f0] sm:$0xf]
    %v3999 = vld [vmem:[#allocation9 + $0x3f4] sm:$0xf]
    %v4000 = vld [vmem:[#allocation9 + $0x3f8] sm:$0xf]
    %v4001 = vld [vmem:[#allocation9 + $0x3fc] sm:$0xf]
    %v4002 = vld [vmem:[#allocation9 + $0x400] sm:$0xf]
    %v4003 = vld [vmem:[#allocation9 + $0x404] sm:$0xf]
    %v4004 = vld [vmem:[#allocation9 + $0x408] sm:$0xf]
    %v4005 = vld [vmem:[#allocation9 + $0x40c] sm:$0xf]
    %v4006 = vld [vmem:[#allocation9 + $0x410] sm:$0xf]
    %v4007 = vld [vmem:[#allocation9 + $0x414] sm:$0xf]
    %v4008 = vld [vmem:[#allocation9 + $0x418] sm:$0xf]
    %v4009 = vld [vmem:[#allocation9 + $0x41c] sm:$0xf]
    %v4010 = vld [vmem:[#allocation9 + $0x420] sm:$0xf]
    %v4011 = vld [vmem:[#allocation9 + $0x424] sm:$0xf]
    %v4012 = vld [vmem:[#allocation9 + $0x428] sm:$0xf]
    %v4013 = vld [vmem:[#allocation9 + $0x42c] sm:$0xf]
    %v4014 = vld [vmem:[#allocation9 + $0x430] sm:$0xf]
    %v4015 = vld [vmem:[#allocation9 + $0x434] sm:$0xf]
    %v4016 = vld [vmem:[#allocation9 + $0x438] sm:$0xf]
    %v4017 = vld [vmem:[#allocation9 + $0x43c] sm:$0xf]
    %v4018 = vld [vmem:[%s4 + $0x3] sm:$0x1]
    %v4019 = vlaneseq
    %v4020 = vshrl.u32 %v4019, 7
    %v4021 = vsub.s32 0, %v4020
    %v4022 = vrot.slane %v4018, %v4021
    %v4103 = vunpack.c.l.b16 %v3938
    %v4104 = vunpack.c.l.b16 %v3939
    %v4105 = vunpack.c.l.b16 %v3940
    %v4106 = vunpack.c.l.b16 %v3941
    %v4107 = vunpack.c.l.b16 %v3942
    %v4108 = vunpack.c.l.b16 %v3943
    %v4109 = vunpack.c.l.b16 %v3944
    %v4110 = vunpack.c.l.b16 %v3945
    %v4111 = vunpack.c.l.b16 %v3946
    %v4112 = vunpack.c.l.b16 %v3947
    %v4113 = vunpack.c.l.b16 %v3948
    %v4114 = vunpack.c.l.b16 %v3949
    %v4115 = vunpack.c.l.b16 %v3950
    %v4116 = vunpack.c.l.b16 %v3951
    %v4117 = vunpack.c.l.b16 %v3952
    %v4118 = vunpack.c.l.b16 %v3953
    %v4119 = vunpack.c.l.b16 %v3954
    %v4120 = vunpack.c.l.b16 %v3955
    %v4121 = vunpack.c.l.b16 %v3956
    %v4122 = vunpack.c.l.b16 %v3957
    %v4123 = vunpack.c.l.b16 %v3958
    %v4124 = vunpack.c.l.b16 %v3959
    %v4125 = vunpack.c.l.b16 %v3960
    %v4126 = vunpack.c.l.b16 %v3961
    %v4127 = vunpack.c.l.b16 %v3962
    %v4128 = vunpack.c.l.b16 %v3963
    %v4129 = vunpack.c.l.b16 %v3964
    %v4130 = vunpack.c.l.b16 %v3965
    %v4131 = vunpack.c.l.b16 %v3966
    %v4132 = vunpack.c.l.b16 %v3967
    %v4133 = vunpack.c.l.b16 %v3968
    %v4134 = vunpack.c.l.b16 %v3969
    %v4135 = vunpack.c.l.b16 %v3970
    %v4136 = vunpack.c.l.b16 %v3971
    %v4137 = vunpack.c.l.b16 %v3972
    %v4138 = vunpack.c.l.b16 %v3973
    %v4139 = vunpack.c.l.b16 %v3974
    %v4140 = vunpack.c.l.b16 %v3975
    %v4141 = vunpack.c.l.b16 %v3976
    %v4142 = vunpack.c.l.b16 %v3977
    %v4143 = vunpack.c.l.b16 %v3978
    %v4144 = vunpack.c.l.b16 %v3979
    %v4145 = vunpack.c.l.b16 %v3980
    %v4146 = vunpack.c.l.b16 %v3981
    %v4147 = vunpack.c.l.b16 %v3982
    %v4148 = vunpack.c.l.b16 %v3983
    %v4149 = vunpack.c.l.b16 %v3984
    %v4150 = vunpack.c.l.b16 %v3985
    %v4151 = vunpack.c.l.b16 %v3986
    %v4152 = vunpack.c.l.b16 %v3987
    %v4153 = vunpack.c.l.b16 %v3988
    %v4154 = vunpack.c.l.b16 %v3989
    %v4155 = vunpack.c.l.b16 %v3990
    %v4156 = vunpack.c.l.b16 %v3991
    %v4157 = vunpack.c.l.b16 %v3992
    %v4158 = vunpack.c.l.b16 %v3993
    %v4159 = vunpack.c.l.b16 %v3994
    %v4160 = vunpack.c.l.b16 %v3995
    %v4161 = vunpack.c.l.b16 %v3996
    %v4162 = vunpack.c.l.b16 %v3997
    %v4163 = vunpack.c.l.b16 %v3998
    %v4164 = vunpack.c.l.b16 %v3999
    %v4165 = vunpack.c.l.b16 %v4000
    %v4166 = vunpack.c.l.b16 %v4001
    %v4167 = vunpack.c.l.b16 %v4002
    %v4168 = vunpack.c.l.b16 %v4003
    %v4169 = vunpack.c.l.b16 %v4004
    %v4170 = vunpack.c.l.b16 %v4005
    %v4171 = vunpack.c.l.b16 %v4006
    %v4172 = vunpack.c.l.b16 %v4007
    %v4173 = vunpack.c.l.b16 %v4008
    %v4174 = vunpack.c.l.b16 %v4009
    %v4175 = vunpack.c.l.b16 %v4010
    %v4176 = vunpack.c.l.b16 %v4011
    %v4177 = vunpack.c.l.b16 %v4012
    %v4178 = vunpack.c.l.b16 %v4013
    %v4179 = vunpack.c.l.b16 %v4014
    %v4180 = vunpack.c.l.b16 %v4015
    %v4181 = vunpack.c.l.b16 %v4016
    %v4182 = vunpack.c.l.b16 %v4017
    %v4183 = vpack.c.b16 %v4104, %v4103
    %v4184 = vpack.c.b16 %v4106, %v4105
    %v4185 = vpack.c.b16 %v4108, %v4107
    %v4186 = vpack.c.b16 %v4110, %v4109
    %v4187 = vpack.c.b16 %v4112, %v4111
    %v4188 = vpack.c.b16 %v4114, %v4113
    %v4189 = vpack.c.b16 %v4116, %v4115
    %v4190 = vpack.c.b16 %v4118, %v4117
    %v4191 = vpack.c.b16 %v4120, %v4119
    %v4192 = vpack.c.b16 %v4122, %v4121
    %v4193 = vpack.c.b16 %v4124, %v4123
    %v4194 = vpack.c.b16 %v4126, %v4125
    %v4195 = vpack.c.b16 %v4128, %v4127
    %v4196 = vpack.c.b16 %v4130, %v4129
    %v4197 = vpack.c.b16 %v4132, %v4131
    %v4198 = vpack.c.b16 %v4134, %v4133
    %v4199 = vpack.c.b16 %v4136, %v4135
    %v4200 = vpack.c.b16 %v4138, %v4137
    %v4201 = vpack.c.b16 %v4140, %v4139
    %v4202 = vpack.c.b16 %v4142, %v4141
    %v4203 = vpack.c.b16 %v4144, %v4143
    %v4204 = vpack.c.b16 %v4146, %v4145
    %v4205 = vpack.c.b16 %v4148, %v4147
    %v4206 = vpack.c.b16 %v4150, %v4149
    %v4207 = vpack.c.b16 %v4152, %v4151
    %v4208 = vpack.c.b16 %v4154, %v4153
    %v4209 = vpack.c.b16 %v4156, %v4155
    %v4210 = vpack.c.b16 %v4158, %v4157
    %v4211 = vpack.c.b16 %v4160, %v4159
    %v4212 = vpack.c.b16 %v4162, %v4161
    %v4213 = vpack.c.b16 %v4164, %v4163
    %v4214 = vpack.c.b16 %v4166, %v4165
    %v4215 = vpack.c.b16 %v4168, %v4167
    %v4216 = vpack.c.b16 %v4170, %v4169
    %v4217 = vpack.c.b16 %v4172, %v4171
    %v4218 = vpack.c.b16 %v4174, %v4173
    %v4219 = vpack.c.b16 %v4176, %v4175
    %v4220 = vpack.c.b16 %v4178, %v4177
    %v4221 = vpack.c.b16 %v4180, %v4179
    %v4222 = vpack.c.b16 %v4182, %v4181
    %4263 = vmatprep.subr.bf16.mxu0 0
    %4264 = vmatpush1.bf16.msra.mxu0 %v4183
    %4265 = vmatprep.subr.bf16.mxu0 0
    %4266 = vmatpush1.bf16.msra.mxu0 %v4184
    %4267 = vmatprep.subr.bf16.mxu0 0
    %4268 = vmatpush1.bf16.msra.mxu0 %v4185
    %4269 = vmatprep.subr.bf16.mxu0 0
    %4270 = vmatpush1.bf16.msra.mxu0 %v4186
    %4271 = vmatprep.subr.bf16.mxu0 0
    %4272 = vmatpush1.bf16.msra.mxu0 %v4187
    %4273 = vmatprep.subr.bf16.mxu0 0
    %4274 = vmatpush1.bf16.msra.mxu0 %v4188
    %4275 = vmatprep.subr.bf16.mxu0 0
    %4276 = vmatpush1.bf16.msra.mxu0 %v4189
    %4277 = vmatprep.subr.bf16.mxu0 0
    %4278 = vmatpush1.bf16.msra.mxu0 %v4190
    %4279 = vmatprep.subr.bf16.mxu0 0
    %4280 = vmatpush1.bf16.msra.mxu0 %v4191
    %4281 = vmatprep.subr.bf16.mxu0 0
    %4282 = vmatpush1.bf16.msra.mxu0 %v4192
    %4283 = vmatprep.subr.bf16.mxu0 0
    %4284 = vmatpush1.bf16.msra.mxu0 %v4193
    %4285 = vmatprep.subr.bf16.mxu0 0
    %4286 = vmatpush1.bf16.msra.mxu0 %v4194
    %4287 = vmatprep.subr.bf16.mxu0 0
    %4288 = vmatpush1.bf16.msra.mxu0 %v4195
    %4289 = vmatprep.subr.bf16.mxu0 0
    %4290 = vmatpush1.bf16.msra.mxu0 %v4196
    %4291 = vmatprep.subr.bf16.mxu0 0
    %4292 = vmatpush1.bf16.msra.mxu0 %v4197
    %4293 = vmatprep.subr.bf16.mxu0 0
    %4294 = vmatpush1.bf16.msra.mxu0 %v4198
    %4295 = vmatprep.mubr.bf16.mxu0 %v3899
    %4296 = vmatmul.mubr.bf16.gmra.mrb[0].mxu0 %v3898
    %v4297 = vpop.f32.mrb[0].mxu0
    %v4298 = vadd.f32 %v4022, %v4297
    %v4299 = vpop.f32.mrb[0].mxu0
    %v4300 = vpop.f32.mrb[0].mxu0
    %v4301 = vadd.f32 %v4022, %v4300
    %v4302 = vpop.f32.mrb[0].mxu0
    %4303 = vmatprep.mubr.bf16.mxu0 %v3904
    %4304 = vmatmul.mubr.bf16.gmra.mrb[0].mxu0 %v3903
    %v4305 = vpop.f32.mrb[0].mxu0
    %v4306 = vadd.f32 %v4022, %v4305
    %v4307 = vpop.f32.mrb[0].mxu0
    %v4308 = vpop.f32.mrb[0].mxu0
    %v4309 = vadd.f32 %v4022, %v4308
    %v4310 = vpop.f32.mrb[0].mxu0
    %4311 = vmatprep.mubr.bf16.mxu0 %v3909
    %4312 = vmatmul.mubr.bf16.gmra.mrb[0].mxu0 %v3908
    %v4313 = vpop.f32.mrb[0].mxu0
    %v4314 = vadd.f32 %v4022, %v4313
    %v4315 = vpop.f32.mrb[0].mxu0
    %v4316 = vpop.f32.mrb[0].mxu0
    %v4317 = vadd.f32 %v4022, %v4316
    %v4318 = vpop.f32.mrb[0].mxu0
    %4319 = vmatprep.mubr.bf16.mxu0 %v3914
    %4320 = vmatmul.mubr.bf16.gmra.mrb[0].mxu0 %v3913
    %v4321 = vpop.f32.mrb[0].mxu0
    %v4322 = vadd.f32 %v4022, %v4321
    %v4323 = vpop.f32.mrb[0].mxu0
    %v4324 = vpop.f32.mrb[0].mxu0
    %v4325 = vadd.f32 %v4022, %v4324
    %v4326 = vpop.f32.mrb[0].mxu0
    %4327 = vmatprep.mubr.bf16.mxu0 %v3919
    %4328 = vmatmul.mubr.bf16.gmra.mrb[0].mxu0 %v3918
    %v4329 = vpop.f32.mrb[0].mxu0
    %v4330 = vadd.f32 %v4022, %v4329
    %v4331 = vpop.f32.mrb[0].mxu0
    %v4332 = vpop.f32.mrb[0].mxu0
    %v4333 = vadd.f32 %v4022, %v4332
    %v4334 = vpop.f32.mrb[0].mxu0
    %4335 = vmatprep.mubr.bf16.mxu0 %v3924
    %4336 = vmatmul.mubr.bf16.gmra.mrb[0].mxu0 %v3923
    %v4337 = vpop.f32.mrb[0].mxu0
    %v4338 = vadd.f32 %v4022, %v4337
    %v4339 = vpop.f32.mrb[0].mxu0
    %v4340 = vpop.f32.mrb[0].mxu0
    %v4341 = vadd.f32 %v4022, %v4340
    %v4342 = vpop.f32.mrb[0].mxu0
    %4343 = vmatprep.mubr.bf16.mxu0 %v3929
    %4344 = vmatmul.mubr.bf16.gmra.mrb[0].mxu0 %v3928
    %v4345 = vpop.f32.mrb[0].mxu0
    %v4346 = vadd.f32 %v4022, %v4345
    %v4347 = vpop.f32.mrb[0].mxu0
    %v4348 = vpop.f32.mrb[0].mxu0
    %v4349 = vadd.f32 %v4022, %v4348
    %v4350 = vpop.f32.mrb[0].mxu0
    %4351 = vmatprep.mubr.bf16.mxu0 %v3934
    %4352 = vmatmul.mubr.bf16.gmra.mrb[0].mxu0 %v3933
    %v4353 = vpop.f32.mrb[0].mxu0
    %v4354 = vadd.f32 %v4022, %v4353
    %v4355 = vpop.f32.mrb[0].mxu0
    %v4356 = vpop.f32.mrb[0].mxu0
    %v4357 = vadd.f32 %v4022, %v4356
    %v4358 = vpop.f32.mrb[0].mxu0
    %4359 = vdwg.mxu0
    %4360 = vmatprep.subr.bf16.mxu0 0
    %4361 = vmatpush1.bf16.msra.mxu0 %v4199
    %4362 = vmatprep.subr.bf16.mxu0 0
    %4363 = vmatpush1.bf16.msra.mxu0 %v4200
    %4364 = vmatprep.subr.bf16.mxu0 0
    %4365 = vmatpush1.bf16.msra.mxu0 %v4201
    %4366 = vmatprep.subr.bf16.mxu0 0
    %4367 = vmatpush1.bf16.msra.mxu0 %v4202
    %4368 = vmatprep.subr.bf16.mxu0 0
    %4369 = vmatpush1.bf16.msra.mxu0 %v4203
    %4370 = vmatprep.subr.bf16.mxu0 0
    %4371 = vmatpush1.bf16.msra.mxu0 %v4204
    %4372 = vmatprep.subr.bf16.mxu0 0
    %4373 = vmatpush1.bf16.msra.mxu0 %v4205
    %4374 = vmatprep.subr.bf16.mxu0 0
    %4375 = vmatpush1.bf16.msra.mxu0 %v4206
    %4376 = vmatprep.subr.bf16.mxu0 0
    %4377 = vmatpush1.bf16.msra.mxu0 %v4207
    %4378 = vmatprep.subr.bf16.mxu0 0
    %4379 = vmatpush1.bf16.msra.mxu0 %v4208
    %4380 = vmatprep.subr.bf16.mxu0 0
    %4381 = vmatpush1.bf16.msra.mxu0 %v4209
    %4382 = vmatprep.subr.bf16.mxu0 0
    %4383 = vmatpush1.bf16.msra.mxu0 %v4210
    %4384 = vmatprep.subr.bf16.mxu0 0
    %4385 = vmatpush1.bf16.msra.mxu0 %v4211
    %4386 = vmatprep.subr.bf16.mxu0 0
    %4387 = vmatpush1.bf16.msra.mxu0 %v4212
    %4388 = vmatprep.subr.bf16.mxu0 0
    %4389 = vmatpush1.bf16.msra.mxu0 %v4213
    %4390 = vmatprep.subr.bf16.mxu0 0
    %4391 = vmatpush1.bf16.msra.mxu0 %v4214
    %4392 = vmatprep.mubr.bf16.mxu0 %v3901
    %4393 = vmatmul.mubr.bf16.gmra.mrb[0].mxu0 %v3900
    %v4394 = vpop.f32.mrb[0].mxu0
    %v4395 = vadd.f32 %v4298, %v4394
    %v4396 = vpop.f32.mrb[0].mxu0
    %v4397 = vpop.f32.mrb[0].mxu0
    %v4398 = vadd.f32 %v4301, %v4397
    %v4399 = vpop.f32.mrb[0].mxu0
    %4400 = vmatprep.mubr.bf16.mxu0 %v3906
    %4401 = vmatmul.mubr.bf16.gmra.mrb[0].mxu0 %v3905
    %v4402 = vpop.f32.mrb[0].mxu0
    %v4403 = vadd.f32 %v4306, %v4402
    %v4404 = vpop.f32.mrb[0].mxu0
    %v4405 = vpop.f32.mrb[0].mxu0
    %v4406 = vadd.f32 %v4309, %v4405
    %v4407 = vpop.f32.mrb[0].mxu0
    %4408 = vmatprep.mubr.bf16.mxu0 %v3911
    %4409 = vmatmul.mubr.bf16.gmra.mrb[0].mxu0 %v3910
    %v4410 = vpop.f32.mrb[0].mxu0
    %v4411 = vadd.f32 %v4314, %v4410
    %v4412 = vpop.f32.mrb[0].mxu0
    %v4413 = vpop.f32.mrb[0].mxu0
    %v4414 = vadd.f32 %v4317, %v4413
    %v4415 = vpop.f32.mrb[0].mxu0
    %4416 = vmatprep.mubr.bf16.mxu0 %v3916
    %4417 = vmatmul.mubr.bf16.gmra.mrb[0].mxu0 %v3915
    %v4418 = vpop.f32.mrb[0].mxu0
    %v4419 = vadd.f32 %v4322, %v4418
    %v4420 = vpop.f32.mrb[0].mxu0
    %v4421 = vpop.f32.mrb[0].mxu0
    %v4422 = vadd.f32 %v4325, %v4421
    %v4423 = vpop.f32.mrb[0].mxu0
    %4424 = vmatprep.mubr.bf16.mxu0 %v3921
    %4425 = vmatmul.mubr.bf16.gmra.mrb[0].mxu0 %v3920
    %v4426 = vpop.f32.mrb[0].mxu0
    %v4427 = vadd.f32 %v4330, %v4426
    %v4428 = vpop.f32.mrb[0].mxu0
    %v4429 = vpop.f32.mrb[0].mxu0
    %v4430 = vadd.f32 %v4333, %v4429
    %v4431 = vpop.f32.mrb[0].mxu0
    %4432 = vmatprep.mubr.bf16.mxu0 %v3926
    %4433 = vmatmul.mubr.bf16.gmra.mrb[0].mxu0 %v3925
    %v4434 = vpop.f32.mrb[0].mxu0
    %v4435 = vadd.f32 %v4338, %v4434
    %v4436 = vpop.f32.mrb[0].mxu0
    %v4437 = vpop.f32.mrb[0].mxu0
    %v4438 = vadd.f32 %v4341, %v4437
    %v4439 = vpop.f32.mrb[0].mxu0
    %4440 = vmatprep.mubr.bf16.mxu0 %v3931
    %4441 = vmatmul.mubr.bf16.gmra.mrb[0].mxu0 %v3930
    %v4442 = vpop.f32.mrb[0].mxu0
    %v4443 = vadd.f32 %v4346, %v4442
    %v4444 = vpop.f32.mrb[0].mxu0
    %v4445 = vpop.f32.mrb[0].mxu0
    %v4446 = vadd.f32 %v4349, %v4445
    %v4447 = vpop.f32.mrb[0].mxu0
    %4448 = vmatprep.mubr.bf16.mxu0 %v3936
    %4449 = vmatmul.mubr.bf16.gmra.mrb[0].mxu0 %v3935
    %v4450 = vpop.f32.mrb[0].mxu0
    %v4451 = vadd.f32 %v4354, %v4450
    %v4452 = vpop.f32.mrb[0].mxu0
    %v4453 = vpop.f32.mrb[0].mxu0
    %v4454 = vadd.f32 %v4357, %v4453
    %v4455 = vpop.f32.mrb[0].mxu0
    %4456 = vdwg.mxu0
    %4457 = vmatprep.subr.bf16.mxu0 0
    %4458 = vmatpush1.bf16.msra.mxu0 %v4215
    %4459 = vmatprep.subr.bf16.mxu0 0
    %4460 = vmatpush1.bf16.msra.mxu0 %v4216
    %4461 = vmatprep.subr.bf16.mxu0 0
    %4462 = vmatpush1.bf16.msra.mxu0 %v4217
    %4463 = vmatprep.subr.bf16.mxu0 0
    %4464 = vmatpush1.bf16.msra.mxu0 %v4218
    %4465 = vmatprep.subr.bf16.mxu0 0
    %4466 = vmatpush1.bf16.msra.mxu0 %v4219
    %4467 = vmatprep.subr.bf16.mxu0 0
    %4468 = vmatpush1.bf16.msra.mxu0 %v4220
    %4469 = vmatprep.subr.bf16.mxu0 0
    %4470 = vmatpush1.bf16.msra.mxu0 %v4221
    %4471 = vmatprep.subr.bf16.mxu0 0
    %4472 = vmatpush1.bf16.msra.mxu0 %v4222
    %4473 = vmatprep.subr.bf16.mxu0 0
    %4474 = vmatpush1.bf16.msra.mxu0 0
    %4475 = vmatprep.subr.bf16.mxu0 0
    %4476 = vmatpush1.bf16.msra.mxu0 0
    %4477 = vmatprep.subr.bf16.mxu0 0
    %4478 = vmatpush1.bf16.msra.mxu0 0
    %4479 = vmatprep.subr.bf16.mxu0 0
    %4480 = vmatpush1.bf16.msra.mxu0 0
    %4481 = vmatprep.subr.bf16.mxu0 0
    %4482 = vmatpush1.bf16.msra.mxu0 0
    %4483 = vmatprep.subr.bf16.mxu0 0
    %4484 = vmatpush1.bf16.msra.mxu0 0
    %4485 = vmatprep.subr.bf16.mxu0 0
    %4486 = vmatpush1.bf16.msra.mxu0 0
    %4487 = vmatprep.subr.bf16.mxu0 0
    %4488 = vmatpush1.bf16.msra.mxu0 0
    %4489 = vmatprep.mubr.bf16.mxu0 0
    %4490 = vmatmul.mubr.bf16.gmra.mrb[0].mxu0 %v3902
    %v4491 = vpop.f32.mrb[0].mxu0
    %v4492 = vadd.f32 %v4395, %v4491
    %v4493 = vpop.f32.mrb[0].mxu0
    %v4494 = vpop.f32.mrb[0].mxu0
    %v4495 = vadd.f32 %v4398, %v4494
    %v4496 = vpop.f32.mrb[0].mxu0
    %4497 = vmatprep.mubr.bf16.mxu0 0
    %4498 = vmatmul.mubr.bf16.gmra.mrb[0].mxu0 %v3907
    %v4499 = vpop.f32.mrb[0].mxu0
    %v4500 = vadd.f32 %v4403, %v4499
    %v4501 = vpop.f32.mrb[0].mxu0
    %v4502 = vpop.f32.mrb[0].mxu0
    %v4503 = vadd.f32 %v4406, %v4502
    %v4504 = vpop.f32.mrb[0].mxu0
    %4505 = vmatprep.mubr.bf16.mxu0 0
    %4506 = vmatmul.mubr.bf16.gmra.mrb[0].mxu0 %v3912
    %v4507 = vpop.f32.mrb[0].mxu0
    %v4508 = vadd.f32 %v4411, %v4507
    %v4509 = vpop.f32.mrb[0].mxu0
    %v4510 = vpop.f32.mrb[0].mxu0
    %v4511 = vadd.f32 %v4414, %v4510
    %v4512 = vpop.f32.mrb[0].mxu0
    %4513 = vmatprep.mubr.bf16.mxu0 0
    %4514 = vmatmul.mubr.bf16.gmra.mrb[0].mxu0 %v3917
    %v4515 = vpop.f32.mrb[0].mxu0
    %v4516 = vadd.f32 %v4419, %v4515
    %v4517 = vpop.f32.mrb[0].mxu0
    %v4518 = vpop.f32.mrb[0].mxu0
    %v4519 = vadd.f32 %v4422, %v4518
    %v4520 = vpop.f32.mrb[0].mxu0
    %4521 = vmatprep.mubr.bf16.mxu0 0
    %4522 = vmatmul.mubr.bf16.gmra.mrb[0].mxu0 %v3922
    %v4523 = vpop.f32.mrb[0].mxu0
    %v4524 = vadd.f32 %v4427, %v4523
    %v4525 = vpop.f32.mrb[0].mxu0
    %v4526 = vpop.f32.mrb[0].mxu0
    %v4527 = vadd.f32 %v4430, %v4526
    %v4528 = vpop.f32.mrb[0].mxu0
    %4529 = vmatprep.mubr.bf16.mxu0 0
    %4530 = vmatmul.mubr.bf16.gmra.mrb[0].mxu0 %v3927
    %v4531 = vpop.f32.mrb[0].mxu0
    %v4532 = vadd.f32 %v4435, %v4531
    %v4533 = vpop.f32.mrb[0].mxu0
    %v4534 = vpop.f32.mrb[0].mxu0
    %v4535 = vadd.f32 %v4438, %v4534
    %v4536 = vpop.f32.mrb[0].mxu0
    %4537 = vmatprep.mubr.bf16.mxu0 0
    %4538 = vmatmul.mubr.bf16.gmra.mrb[0].mxu0 %v3932
    %v4539 = vpop.f32.mrb[0].mxu0
    %v4540 = vadd.f32 %v4443, %v4539
    %v4541 = vpop.f32.mrb[0].mxu0
    %v4542 = vpop.f32.mrb[0].mxu0
    %v4543 = vadd.f32 %v4446, %v4542
    %v4544 = vpop.f32.mrb[0].mxu0
    %4545 = vmatprep.mubr.bf16.mxu0 0
    %4546 = vmatmul.mubr.bf16.gmra.mrb[0].mxu0 %v3937
    %v4547 = vpop.f32.mrb[0].mxu0
    %v4548 = vadd.f32 %v4451, %v4547
    %v4549 = vpop.f32.mrb[0].mxu0
    %v4550 = vpop.f32.mrb[0].mxu0
    %v4551 = vadd.f32 %v4454, %v4550
    %v4552 = vpop.f32.mrb[0].mxu0
    %4553 = vdwg.mxu0
    %v4554 = vmax.f32 %v4492, 0.0
    %v4555 = vmax.f32 %v4495, 0.0
    %v4556 = vmax.f32 %v4500, 0.0
    %v4557 = vmax.f32 %v4503, 0.0
    %v4558 = vmax.f32 %v4508, 0.0
    %v4559 = vmax.f32 %v4511, 0.0
    %v4560 = vmax.f32 %v4516, 0.0
    %v4561 = vmax.f32 %v4519, 0.0
    %v4562 = vmax.f32 %v4524, 0.0
    %v4563 = vmax.f32 %v4527, 0.0
    %v4564 = vmax.f32 %v4532, 0.0
    %v4565 = vmax.f32 %v4535, 0.0
    %v4566 = vmax.f32 %v4540, 0.0
    %v4567 = vmax.f32 %v4543, 0.0
    %v4568 = vmax.f32 %v4548, 0.0
    %v4569 = vmax.f32 %v4551, 0.0
    %4570 = vst [vmem:[#allocation4] sm:$0xff] %v4554
    %4571 = vst [vmem:[#allocation4 + $0x8] sm:$0xff] %v4555
    %4572 = vst [vmem:[#allocation4 + $0x10] sm:$0xff] %v4556
    %4573 = vst [vmem:[#allocation4 + $0x18] sm:$0xff] %v4557
    %4574 = vst [vmem:[#allocation4 + $0x20] sm:$0xff] %v4558
    %4575 = vst [vmem:[#allocation4 + $0x28] sm:$0xff] %v4559
    %4576 = vst [vmem:[#allocation4 + $0x30] sm:$0xff] %v4560
    %4577 = vst [vmem:[#allocation4 + $0x38] sm:$0xff] %v4561
    %4578 = vst [vmem:[#allocation4 + $0x40] sm:$0xff] %v4562
    %4579 = vst [vmem:[#allocation4 + $0x48] sm:$0xff] %v4563
    %4580 = vst [vmem:[#allocation4 + $0x50] sm:$0xff] %v4564
    %4581 = vst [vmem:[#allocation4 + $0x58] sm:$0xff] %v4565
    %4582 = vst [vmem:[#allocation4 + $0x60] sm:$0xff] %v4566
    %4583 = vst [vmem:[#allocation4 + $0x68] sm:$0xff] %v4567
    %4584 = vst [vmem:[#allocation4 + $0x70] sm:$0xff] %v4568
    %4585 = vst [vmem:[#allocation4 + $0x78] sm:$0xff] %v4569
    %v4586 = vld [vmem:[#allocation4] ss:$2 sm:$0xff]
    %v4587 = vld [vmem:[%s2001] ss:$2 sm:$0xff]
    %v4588 = vld [vmem:[%s2003] ss:$2 sm:$0xff]
    %v4589 = vld [vmem:[%s2005] ss:$2 sm:$0xff]
    %v4590 = vld [vmem:[%s2015] ss:$2 sm:$0xff]
    %v4591 = vld [vmem:[%s2017] ss:$2 sm:$0xff]
    %v4592 = vld [vmem:[%s2019] ss:$2 sm:$0xff]
    %v4593 = vld [vmem:[%s2021] ss:$2 sm:$0xff]
    %v4594 = vmax.f32 %v4586, %v4590
    %v4595 = vmax.f32 %v4587, %v4591
    %v4596 = vmax.f32 %v4588, %v4592
    %v4597 = vmax.f32 %v4589, %v4593
    %v4598 = vpack.c.bf16 %v4595, %v4594
    %v4599 = vpack.c.bf16 %v4597, %v4596
    %4600 = vst [vmem:[#allocation2 + $0x8] sm:$0xff] %v4598
    %4601 = vst [vmem:[#allocation2 + $0x10] sm:$0xff] %v4599
    %4602 = vst [vmem:[#allocation2 + $0x18] sm:$0xff] 0
    %v4603 = vld [vmem:[%s2007] ss:$2 sm:$0xff]
    %v4604 = vld [vmem:[%s2009] ss:$2 sm:$0xff]
    %v4605 = vld [vmem:[%s2011] ss:$2 sm:$0xff]
    %v4606 = vld [vmem:[%s2013] ss:$2 sm:$0xff]
    %v4607 = vld [vmem:[%s2023] ss:$2 sm:$0xff]
    %v4608 = vld [vmem:[%s2025] ss:$2 sm:$0xff]
    %v4609 = vld [vmem:[%s2027] ss:$2 sm:$0xff]
    %v4610 = vld [vmem:[%s2029] ss:$2 sm:$0xff]
    %v4611 = vmax.f32 %v4603, %v4607
    %v4612 = vmax.f32 %v4604, %v4608
    %v4613 = vmax.f32 %v4605, %v4609
    %v4614 = vmax.f32 %v4606, %v4610
    %v4615 = vpack.c.bf16 %v4612, %v4611
    %v4616 = vpack.c.bf16 %v4614, %v4613
    %4617 = vst [vmem:[#allocation2 + $0x58] sm:$0xff] %v4615
    %4618 = vst [vmem:[#allocation2 + $0x60] sm:$0xff] %v4616
    %4619 = vst [vmem:[#allocation2 + $0x68] sm:$0xff] 0
    %s4620 = smul.u32 4, 384
    %s4621 = smul.u32 %s4620, 1
    %s4622 = sshll.u32 %s4621, 4
    %4623 = dma.done [#allocation8], %s4622
    %v4624 = vld [vmem:[#allocation2] sm:$0xc0]
    %v4625 = vld [vmem:[#allocation2 + $0x8] sm:$0xff]
    %v4626 = vld [vmem:[#allocation2 + $0x10] sm:$0x7f]
    %v4628 = vshrl.u32 %v4624, 16
    %v4630 = vrot.slane %v4628, 6
    %v4631 = vshll.u32 %v4624, 16
    %v4633 = vrot.slane %v4631, 7
    %v4634 = vor.u32 %v4630, %v4633
    %v4636 = vshrl.u32 %v4625, 16
    %v4638 = vrot.slane %v4636, 6
    %v4639 = vshll.u32 %v4625, 16
    %v4641 = vrot.slane %v4639, 7
    %v4642 = vor.u32 %v4638, %v4641
    %v4643 = vsel %vm2102, %v4634, %v4642
    %v4645 = vshrl.u32 %v4626, 16
    %v4647 = vrot.slane %v4645, 6
    %v4648 = vshll.u32 %v4626, 16
    %v4650 = vrot.slane %v4648, 7
    %v4651 = vor.u32 %v4647, %v4650
    %v4652 = vsel %vm2102, %v4642, %v4651
    %4655 = vst [vmem:[#allocation3] sm:$0xff] %v4643
    %4656 = vst [vmem:[#allocation3 + $0x38] sm:$0xff] %v4652
    %v4657 = vld [vmem:[#allocation2] sm:$0x80]
    %v4658 = vld [vmem:[#allocation2 + $0x8] sm:$0xff]
    %v4659 = vld [vmem:[#allocation2 + $0x10] sm:$0x7f]
    %v4663 = vrot.slane %v4657, 7
    %v4664 = vrot.slane %v4658, 7
    %v4665 = vsel %vm454, %v4663, %v4664
    %v4666 = vrot.slane %v4659, 7
    %v4667 = vsel %vm454, %v4664, %v4666
    %4670 = vst [vmem:[#allocation3 + $0x8] sm:$0xff] %v4665
    %4671 = vst [vmem:[#allocation3 + $0x40] sm:$0xff] %v4667
    %v4672 = vld [vmem:[#allocation2] sm:$0x80]
    %v4673 = vld [vmem:[#allocation2 + $0x8] sm:$0xff]
    %v4674 = vld [vmem:[#allocation2 + $0x10] sm:$0xff]
    %v4676 = vshrl.u32 %v4672, 16
    %v4678 = vrot.slane %v4676, 7
    %v4680 = vshrl.u32 %v4673, 16
    %v4682 = vrot.slane %v4680, 7
    %v4683 = vshll.u32 %v4673, 16
    %v4685 = vor.u32 %v4682, %v4683
    %v4686 = vsel %vm497, %v4678, %v4685
    %v4688 = vshrl.u32 %v4674, 16
    %v4690 = vrot.slane %v4688, 7
    %v4691 = vshll.u32 %v4674, 16
    %v4693 = vor.u32 %v4690, %v4691
    %v4694 = vsel %vm497, %v4682, %v4693
    %4697 = vst [vmem:[#allocation3 + $0x10] sm:$0xff] %v4686
    %4698 = vst [vmem:[#allocation3 + $0x48] sm:$0xff] %v4694
    %v4699 = vld [vmem:[#allocation2 + $0x8] sm:$0xff]
    %v4700 = vld [vmem:[#allocation2 + $0x10] sm:$0xff]
    %4701 = vst [vmem:[#allocation3 + $0x18] sm:$0xff] %v4699
    %4702 = vst [vmem:[#allocation3 + $0x50] sm:$0xff] %v4700
    %v4703 = vld [vmem:[#allocation2 + $0x8] sm:$0xff]
    %v4704 = vld [vmem:[#allocation2 + $0x10] sm:$0xff]
    %v4705 = vld [vmem:[#allocation2 + $0x18] sm:$0x1]
    %v4707 = vshrl.u32 %v4703, 16
    %v4709 = vshll.u32 %v4703, 16
    %v4711 = vrot.slane %v4709, 1
    %v4712 = vor.u32 %v4707, %v4711
    %v4714 = vshll.u32 %v4704, 16
    %v4716 = vrot.slane %v4714, 1
    %v4717 = vsel %vm607, %v4712, %v4716
    %v4718 = vshrl.u32 %v4704, 16
    %v4720 = vor.u32 %v4718, %v4716
    %v4722 = vshll.u32 %v4705, 16
    %v4724 = vrot.slane %v4722, 1
    %v4725 = vsel %vm607, %v4720, %v4724
    %4728 = vst [vmem:[#allocation3 + $0x20] sm:$0xff] %v4717
    %4729 = vst [vmem:[#allocation3 + $0x58] sm:$0xff] %v4725
    %v4730 = vld [vmem:[#allocation2 + $0x8] sm:$0xfe]
    %v4731 = vld [vmem:[#allocation2 + $0x10] sm:$0xff]
    %v4732 = vld [vmem:[#allocation2 + $0x18] sm:$0x1]
    %v4736 = vrot.slane %v4730, 1
    %v4737 = vrot.slane %v4731, 1
    %v4738 = vsel %vm710, %v4736, %v4737
    %v4739 = vrot.slane %v4732, 1
    %v4740 = vsel %vm710, %v4737, %v4739
    %4743 = vst [vmem:[#allocation3 + $0x28] sm:$0xff] %v4738
    %4744 = vst [vmem:[#allocation3 + $0x60] sm:$0xff] %v4740
    %v4745 = vld [vmem:[#allocation2 + $0x8] sm:$0xfe]
    %v4746 = vld [vmem:[#allocation2 + $0x10] sm:$0xff]
    %v4747 = vld [vmem:[#allocation2 + $0x18] sm:$0x3]
    %v4749 = vshrl.u32 %v4745, 16
    %v4751 = vrot.slane %v4749, 1
    %v4752 = vshll.u32 %v4745, 16
    %v4754 = vrot.slane %v4752, 2
    %v4755 = vor.u32 %v4751, %v4754
    %v4757 = vshrl.u32 %v4746, 16
    %v4759 = vrot.slane %v4757, 1
    %v4760 = vshll.u32 %v4746, 16
    %v4762 = vrot.slane %v4760, 2
    %v4763 = vor.u32 %v4759, %v4762
    %v4764 = vsel %vm2320, %v4755, %v4763
    %v4766 = vshrl.u32 %v4747, 16
    %v4768 = vrot.slane %v4766, 1
    %v4769 = vshll.u32 %v4747, 16
    %v4771 = vrot.slane %v4769, 2
    %v4772 = vor.u32 %v4768, %v4771
    %v4773 = vsel %vm2320, %v4763, %v4772
    %4776 = vst [vmem:[#allocation3 + $0x30] sm:$0xff] %v4764
    %4777 = vst [vmem:[#allocation3 + $0x68] sm:$0xff] %v4773
    %v4778 = vld [vmem:[#allocation2 + $0x50] sm:$0xc0]
    %v4779 = vld [vmem:[#allocation2 + $0x58] sm:$0xff]
    %v4780 = vld [vmem:[#allocation2 + $0x60] sm:$0x7f]
    %v4782 = vshrl.u32 %v4778, 16
    %v4784 = vrot.slane %v4782, 6
    %v4785 = vshll.u32 %v4778, 16
    %v4787 = vrot.slane %v4785, 7
    %v4788 = vor.u32 %v4784, %v4787
    %v4790 = vshrl.u32 %v4779, 16
    %v4792 = vrot.slane %v4790, 6
    %v4793 = vshll.u32 %v4779, 16
    %v4795 = vrot.slane %v4793, 7
    %v4796 = vor.u32 %v4792, %v4795
    %v4797 = vsel %vm2102, %v4788, %v4796
    %v4799 = vshrl.u32 %v4780, 16
    %v4801 = vrot.slane %v4799, 6
    %v4802 = vshll.u32 %v4780, 16
    %v4804 = vrot.slane %v4802, 7
    %v4805 = vor.u32 %v4801, %v4804
    %v4806 = vsel %vm2102, %v4796, %v4805
    %4809 = vst [vmem:[#allocation3 + $0x70] sm:$0xff] %v4797
    %4810 = vst [vmem:[#allocation3 + $0xa8] sm:$0xff] %v4806
    %v4811 = vld [vmem:[#allocation2 + $0x50] sm:$0x80]
    %v4812 = vld [vmem:[#allocation2 + $0x58] sm:$0xff]
    %v4813 = vld [vmem:[#allocation2 + $0x60] sm:$0x7f]
    %v4817 = vrot.slane %v4811, 7
    %v4818 = vrot.slane %v4812, 7
    %v4819 = vsel %vm454, %v4817, %v4818
    %v4820 = vrot.slane %v4813, 7
    %v4821 = vsel %vm454, %v4818, %v4820
    %4824 = vst [vmem:[#allocation3 + $0x78] sm:$0xff] %v4819
    %4825 = vst [vmem:[#allocation3 + $0xb0] sm:$0xff] %v4821
    %v4826 = vld [vmem:[#allocation2 + $0x50] sm:$0x80]
    %v4827 = vld [vmem:[#allocation2 + $0x58] sm:$0xff]
    %v4828 = vld [vmem:[#allocation2 + $0x60] sm:$0xff]
    %v4830 = vshrl.u32 %v4826, 16
    %v4832 = vrot.slane %v4830, 7
    %v4834 = vshrl.u32 %v4827, 16
    %v4836 = vrot.slane %v4834, 7
    %v4837 = vshll.u32 %v4827, 16
    %v4839 = vor.u32 %v4836, %v4837
    %v4840 = vsel %vm497, %v4832, %v4839
    %v4842 = vshrl.u32 %v4828, 16
    %v4844 = vrot.slane %v4842, 7
    %v4845 = vshll.u32 %v4828, 16
    %v4847 = vor.u32 %v4844, %v4845
    %v4848 = vsel %vm497, %v4836, %v4847
    %4851 = vst [vmem:[#allocation3 + $0x80] sm:$0xff] %v4840
    %4852 = vst [vmem:[#allocation3 + $0xb8] sm:$0xff] %v4848
    %v4853 = vld [vmem:[#allocation2 + $0x58] sm:$0xff]
    %v4854 = vld [vmem:[#allocation2 + $0x60] sm:$0xff]
    %4855 = vst [vmem:[#allocation3 + $0x88] sm:$0xff] %v4853
    %4856 = vst [vmem:[#allocation3 + $0xc0] sm:$0xff] %v4854
    %v4857 = vld [vmem:[#allocation2 + $0x58] sm:$0xff]
    %v4858 = vld [vmem:[#allocation2 + $0x60] sm:$0xff]
    %v4859 = vld [vmem:[#allocation2 + $0x68] sm:$0x1]
    %v4861 = vshrl.u32 %v4857, 16
    %v4863 = vshll.u32 %v4857, 16
    %v4865 = vrot.slane %v4863, 1
    %v4866 = vor.u32 %v4861, %v4865
    %v4868 = vshll.u32 %v4858, 16
    %v4870 = vrot.slane %v4868, 1
    %v4871 = vsel %vm607, %v4866, %v4870
    %v4872 = vshrl.u32 %v4858, 16
    %v4874 = vor.u32 %v4872, %v4870
    %v4876 = vshll.u32 %v4859, 16
    %v4878 = vrot.slane %v4876, 1
    %v4879 = vsel %vm607, %v4874, %v4878
    %4882 = vst [vmem:[#allocation3 + $0x90] sm:$0xff] %v4871
    %4883 = vst [vmem:[#allocation3 + $0xc8] sm:$0xff] %v4879
    %v4884 = vld [vmem:[#allocation2 + $0x58] sm:$0xfe]
    %v4885 = vld [vmem:[#allocation2 + $0x60] sm:$0xff]
    %v4886 = vld [vmem:[#allocation2 + $0x68] sm:$0x1]
    %v4890 = vrot.slane %v4884, 1
    %v4891 = vrot.slane %v4885, 1
    %v4892 = vsel %vm710, %v4890, %v4891
    %v4893 = vrot.slane %v4886, 1
    %v4894 = vsel %vm710, %v4891, %v4893
    %4897 = vst [vmem:[#allocation3 + $0x98] sm:$0xff] %v4892
    %4898 = vst [vmem:[#allocation3 + $0xd0] sm:$0xff] %v4894
    %v4899 = vld [vmem:[#allocation2 + $0x58] sm:$0xfe]
    %v4900 = vld [vmem:[#allocation2 + $0x60] sm:$0xff]
    %v4901 = vld [vmem:[#allocation2 + $0x68] sm:$0x3]
    %v4903 = vshrl.u32 %v4899, 16
    %v4905 = vrot.slane %v4903, 1
    %v4906 = vshll.u32 %v4899, 16
    %v4908 = vrot.slane %v4906, 2
    %v4909 = vor.u32 %v4905, %v4908
    %v4911 = vshrl.u32 %v4900, 16
    %v4913 = vrot.slane %v4911, 1
    %v4914 = vshll.u32 %v4900, 16
    %v4916 = vrot.slane %v4914, 2
    %v4917 = vor.u32 %v4913, %v4916
    %v4918 = vsel %vm2320, %v4909, %v4917
    %v4920 = vshrl.u32 %v4901, 16
    %v4922 = vrot.slane %v4920, 1
    %v4923 = vshll.u32 %v4901, 16
    %v4925 = vrot.slane %v4923, 2
    %v4926 = vor.u32 %v4922, %v4925
    %v4927 = vsel %vm2320, %v4917, %v4926
    %4930 = vst [vmem:[#allocation3 + $0xa0] sm:$0xff] %v4918
    %4931 = vst [vmem:[#allocation3 + $0xd8] sm:$0xff] %v4927
    %v4932 = vld [vmem:[#allocation3] sm:$0xff]
    %v4933 = vld [vmem:[#allocation3 + $0x8] sm:$0xff]
    %v4934 = vld [vmem:[#allocation3 + $0x10] sm:$0xff]
    %v4935 = vld [vmem:[#allocation3 + $0x18] sm:$0xff]
    %v4936 = vld [vmem:[#allocation3 + $0x20] sm:$0xff]
    %v4937 = vld [vmem:[#allocation3 + $0x28] sm:$0xff]
    %v4938 = vld [vmem:[#allocation3 + $0x30] sm:$0xff]
    %v4939 = vld [vmem:[#allocation3 + $0x38] sm:$0xff]
    %v4940 = vld [vmem:[#allocation3 + $0x40] sm:$0xff]
    %v4941 = vld [vmem:[#allocation3 + $0x48] sm:$0xff]
    %v4942 = vld [vmem:[#allocation3 + $0x50] sm:$0xff]
    %v4943 = vld [vmem:[#allocation3 + $0x58] sm:$0xff]
    %v4944 = vld [vmem:[#allocation3 + $0x60] sm:$0xff]
    %v4945 = vld [vmem:[#allocation3 + $0x68] sm:$0xff]
    %v4946 = vld [vmem:[#allocation3 + $0x70] sm:$0xff]
    %v4947 = vld [vmem:[#allocation3 + $0x78] sm:$0xff]
    %v4948 = vld [vmem:[#allocation3 + $0x80] sm:$0xff]
    %v4949 = vld [vmem:[#allocation3 + $0x88] sm:$0xff]
    %v4950 = vld [vmem:[#allocation3 + $0x90] sm:$0xff]
    %v4951 = vld [vmem:[#allocation3 + $0x98] sm:$0xff]
    %v4952 = vld [vmem:[#allocation3 + $0xa0] sm:$0xff]
    %v4953 = vld [vmem:[#allocation3 + $0xa8] sm:$0xff]
    %v4954 = vld [vmem:[#allocation3 + $0xb0] sm:$0xff]
    %v4955 = vld [vmem:[#allocation3 + $0xb8] sm:$0xff]
    %v4956 = vld [vmem:[#allocation3 + $0xc0] sm:$0xff]
    %v4957 = vld [vmem:[#allocation3 + $0xc8] sm:$0xff]
    %v4958 = vld [vmem:[#allocation3 + $0xd0] sm:$0xff]
    %v4959 = vld [vmem:[#allocation3 + $0xd8] sm:$0xff]
    %v4960 = vld [vmem:[#allocation6] sm:$0xff]
    %v4961 = vld [vmem:[#allocation6 + $0x8] sm:$0xff]
    %v4962 = vld [vmem:[#allocation6 + $0x10] sm:$0xff]
    %v4963 = vld [vmem:[#allocation6 + $0x18] sm:$0xff]
    %v4964 = vld [vmem:[#allocation6 + $0x20] sm:$0xff]
    %v4965 = vld [vmem:[#allocation6 + $0x28] sm:$0xff]
    %v4966 = vld [vmem:[#allocation6 + $0x30] sm:$0xff]
    %v4967 = vld [vmem:[#allocation6 + $0x38] sm:$0xff]
    %v4968 = vld [vmem:[#allocation6 + $0x40] sm:$0xff]
    %v4969 = vld [vmem:[#allocation6 + $0x48] sm:$0xff]
    %v4970 = vld [vmem:[#allocation6 + $0x50] sm:$0xff]
    %v4971 = vld [vmem:[#allocation6 + $0x58] sm:$0xff]
    %v4972 = vld [vmem:[#allocation6 + $0x60] sm:$0xff]
    %v4973 = vld [vmem:[#allocation6 + $0x68] sm:$0xff]
    %v4974 = vld [vmem:[#allocation6 + $0x70] sm:$0xff]
    %v4975 = vld [vmem:[#allocation6 + $0x78] sm:$0xff]
    %v4976 = vld [vmem:[#allocation6 + $0x80] sm:$0xff]
    %v4977 = vld [vmem:[#allocation6 + $0x88] sm:$0xff]
    %v4978 = vld [vmem:[#allocation6 + $0x90] sm:$0xff]
    %v4979 = vld [vmem:[#allocation6 + $0x98] sm:$0xff]
    %v4980 = vld [vmem:[#allocation6 + $0xa0] sm:$0xff]
    %v4981 = vld [vmem:[#allocation6 + $0xa8] sm:$0xff]
    %v4982 = vld [vmem:[#allocation6 + $0xb0] sm:$0xff]
    %v4983 = vld [vmem:[#allocation6 + $0xb8] sm:$0xff]
    %v4984 = vld [vmem:[#allocation6 + $0xc0] sm:$0xff]
    %v4985 = vld [vmem:[#allocation6 + $0xc8] sm:$0xff]
    %v4986 = vld [vmem:[#allocation6 + $0xd0] sm:$0xff]
    %v4987 = vld [vmem:[#allocation6 + $0xd8] sm:$0xff]
    %v4988 = vld [vmem:[#allocation6 + $0xe0] sm:$0xff]
    %v4989 = vld [vmem:[#allocation6 + $0xe8] sm:$0xff]
    %v4990 = vld [vmem:[#allocation6 + $0xf0] sm:$0xff]
    %v4991 = vld [vmem:[#allocation6 + $0xf8] sm:$0xff]
    %v4992 = vld [vmem:[#allocation6 + $0x100] sm:$0xff]
    %v4993 = vld [vmem:[#allocation6 + $0x108] sm:$0xff]
    %v4994 = vld [vmem:[#allocation6 + $0x110] sm:$0xff]
    %v4995 = vld [vmem:[#allocation6 + $0x118] sm:$0xff]
    %v4996 = vld [vmem:[#allocation6 + $0x120] sm:$0xff]
    %v4997 = vld [vmem:[#allocation6 + $0x128] sm:$0xff]
    %v4998 = vld [vmem:[#allocation6 + $0x130] sm:$0xff]
    %v4999 = vld [vmem:[#allocation6 + $0x138] sm:$0xff]
    %v5000 = vld [vmem:[#allocation6 + $0x140] sm:$0xff]
    %v5001 = vld [vmem:[#allocation6 + $0x148] sm:$0xff]
    %v5002 = vld [vmem:[#allocation6 + $0x150] sm:$0xff]
    %v5003 = vld [vmem:[#allocation6 + $0x158] sm:$0xff]
    %v5004 = vld [vmem:[#allocation6 + $0x160] sm:$0xff]
    %v5005 = vld [vmem:[#allocation6 + $0x168] sm:$0xff]
    %v5006 = vld [vmem:[#allocation6 + $0x170] sm:$0xff]
    %v5007 = vld [vmem:[#allocation6 + $0x178] sm:$0xff]
    %v5008 = vld [vmem:[#allocation6 + $0x180] sm:$0xff]
    %v5009 = vld [vmem:[#allocation6 + $0x188] sm:$0xff]
    %v5010 = vld [vmem:[#allocation6 + $0x190] sm:$0xff]
    %v5011 = vld [vmem:[#allocation6 + $0x198] sm:$0xff]
    %v5012 = vld [vmem:[#allocation6 + $0x1a0] sm:$0xff]
    %v5013 = vld [vmem:[#allocation6 + $0x1a8] sm:$0xff]
    %v5014 = vld [vmem:[#allocation6 + $0x1b0] sm:$0xff]
    %v5015 = vld [vmem:[#allocation6 + $0x1b8] sm:$0xff]
    %v5016 = vld [vmem:[%s4 + $0x4] sm:$0x1]
    %v5017 = vlaneseq
    %v5018 = vshrl.u32 %v5017, 7
    %v5019 = vsub.s32 0, %v5018
    %v5020 = vrot.slane %v5016, %v5019
    %5021 = vmatprep.subr.bf16.mxu0 0
    %5022 = vmatpush1.bf16.msra.mxu0 %v4960
    %5023 = vmatprep.subr.bf16.mxu0 0
    %5024 = vmatpush1.bf16.msra.mxu0 %v4961
    %5025 = vmatprep.subr.bf16.mxu0 0
    %5026 = vmatpush1.bf16.msra.mxu0 %v4962
    %5027 = vmatprep.subr.bf16.mxu0 0
    %5028 = vmatpush1.bf16.msra.mxu0 %v4963
    %5029 = vmatprep.subr.bf16.mxu0 0
    %5030 = vmatpush1.bf16.msra.mxu0 %v4964
    %5031 = vmatprep.subr.bf16.mxu0 0
    %5032 = vmatpush1.bf16.msra.mxu0 %v4965
    %5033 = vmatprep.subr.bf16.mxu0 0
    %5034 = vmatpush1.bf16.msra.mxu0 %v4966
    %5035 = vmatprep.subr.bf16.mxu0 0
    %5036 = vmatpush1.bf16.msra.mxu0 %v4967
    %5037 = vmatprep.subr.bf16.mxu0 0
    %5038 = vmatpush1.bf16.msra.mxu0 %v4968
    %5039 = vmatprep.subr.bf16.mxu0 0
    %5040 = vmatpush1.bf16.msra.mxu0 %v4969
    %5041 = vmatprep.subr.bf16.mxu0 0
    %5042 = vmatpush1.bf16.msra.mxu0 %v4970
    %5043 = vmatprep.subr.bf16.mxu0 0
    %5044 = vmatpush1.bf16.msra.mxu0 %v4971
    %5045 = vmatprep.subr.bf16.mxu0 0
    %5046 = vmatpush1.bf16.msra.mxu0 %v4972
    %5047 = vmatprep.subr.bf16.mxu0 0
    %5048 = vmatpush1.bf16.msra.mxu0 %v4973
    %5049 = vmatprep.subr.bf16.mxu0 0
    %5050 = vmatpush1.bf16.msra.mxu0 %v4974
    %5051 = vmatprep.subr.bf16.mxu0 0
    %5052 = vmatpush1.bf16.msra.mxu0 %v4975
    %5053 = vmatprep.mubr.bf16.mxu0 %v4933
    %5054 = vmatmul.mubr.bf16.gmra.mrb[0].mxu0 %v4932
    %v5055 = vpop.f32.mrb[0].mxu0
    %v5056 = vadd.f32 %v5020, %v5055
    %v5057 = vpop.f32.mrb[0].mxu0
    %v5058 = vpop.f32.mrb[0].mxu0
    %v5059 = vadd.f32 %v5020, %v5058
    %v5060 = vpop.f32.mrb[0].mxu0
    %5061 = vmatprep.mubr.bf16.mxu0 %v4940
    %5062 = vmatmul.mubr.bf16.gmra.mrb[0].mxu0 %v4939
    %v5063 = vpop.f32.mrb[0].mxu0
    %v5064 = vadd.f32 %v5020, %v5063
    %v5065 = vpop.f32.mrb[0].mxu0
    %v5066 = vpop.f32.mrb[0].mxu0
    %v5067 = vadd.f32 %v5020, %v5066
    %v5068 = vpop.f32.mrb[0].mxu0
    %5069 = vmatprep.mubr.bf16.mxu0 %v4947
    %5070 = vmatmul.mubr.bf16.gmra.mrb[0].mxu0 %v4946
    %v5071 = vpop.f32.mrb[0].mxu0
    %v5072 = vadd.f32 %v5020, %v5071
    %v5073 = vpop.f32.mrb[0].mxu0
    %v5074 = vpop.f32.mrb[0].mxu0
    %v5075 = vadd.f32 %v5020, %v5074
    %v5076 = vpop.f32.mrb[0].mxu0
    %5077 = vmatprep.mubr.bf16.mxu0 %v4954
    %5078 = vmatmul.mubr.bf16.gmra.mrb[0].mxu0 %v4953
    %v5079 = vpop.f32.mrb[0].mxu0
    %v5080 = vadd.f32 %v5020, %v5079
    %v5081 = vpop.f32.mrb[0].mxu0
    %v5082 = vpop.f32.mrb[0].mxu0
    %v5083 = vadd.f32 %v5020, %v5082
    %v5084 = vpop.f32.mrb[0].mxu0
    %5085 = vdwg.mxu0
    %5086 = vmatprep.subr.bf16.mxu0 0
    %5087 = vmatpush1.bf16.msra.mxu0 %v4976
    %5088 = vmatprep.subr.bf16.mxu0 0
    %5089 = vmatpush1.bf16.msra.mxu0 %v4977
    %5090 = vmatprep.subr.bf16.mxu0 0
    %5091 = vmatpush1.bf16.msra.mxu0 %v4978
    %5092 = vmatprep.subr.bf16.mxu0 0
    %5093 = vmatpush1.bf16.msra.mxu0 %v4979
    %5094 = vmatprep.subr.bf16.mxu0 0
    %5095 = vmatpush1.bf16.msra.mxu0 %v4980
    %5096 = vmatprep.subr.bf16.mxu0 0
    %5097 = vmatpush1.bf16.msra.mxu0 %v4981
    %5098 = vmatprep.subr.bf16.mxu0 0
    %5099 = vmatpush1.bf16.msra.mxu0 %v4982
    %5100 = vmatprep.subr.bf16.mxu0 0
    %5101 = vmatpush1.bf16.msra.mxu0 %v4983
    %5102 = vmatprep.subr.bf16.mxu0 0
    %5103 = vmatpush1.bf16.msra.mxu0 %v4984
    %5104 = vmatprep.subr.bf16.mxu0 0
    %5105 = vmatpush1.bf16.msra.mxu0 %v4985
    %5106 = vmatprep.subr.bf16.mxu0 0
    %5107 = vmatpush1.bf16.msra.mxu0 %v4986
    %5108 = vmatprep.subr.bf16.mxu0 0
    %5109 = vmatpush1.bf16.msra.mxu0 %v4987
    %5110 = vmatprep.subr.bf16.mxu0 0
    %5111 = vmatpush1.bf16.msra.mxu0 %v4988
    %5112 = vmatprep.subr.bf16.mxu0 0
    %5113 = vmatpush1.bf16.msra.mxu0 %v4989
    %5114 = vmatprep.subr.bf16.mxu0 0
    %5115 = vmatpush1.bf16.msra.mxu0 %v4990
    %5116 = vmatprep.subr.bf16.mxu0 0
    %5117 = vmatpush1.bf16.msra.mxu0 %v4991
    %5118 = vmatprep.mubr.bf16.mxu0 %v4935
    %5119 = vmatmul.mubr.bf16.gmra.mrb[0].mxu0 %v4934
    %v5120 = vpop.f32.mrb[0].mxu0
    %v5121 = vadd.f32 %v5056, %v5120
    %v5122 = vpop.f32.mrb[0].mxu0
    %v5123 = vpop.f32.mrb[0].mxu0
    %v5124 = vadd.f32 %v5059, %v5123
    %v5125 = vpop.f32.mrb[0].mxu0
    %5126 = vmatprep.mubr.bf16.mxu0 %v4942
    %5127 = vmatmul.mubr.bf16.gmra.mrb[0].mxu0 %v4941
    %v5128 = vpop.f32.mrb[0].mxu0
    %v5129 = vadd.f32 %v5064, %v5128
    %v5130 = vpop.f32.mrb[0].mxu0
    %v5131 = vpop.f32.mrb[0].mxu0
    %v5132 = vadd.f32 %v5067, %v5131
    %v5133 = vpop.f32.mrb[0].mxu0
    %5134 = vmatprep.mubr.bf16.mxu0 %v4949
    %5135 = vmatmul.mubr.bf16.gmra.mrb[0].mxu0 %v4948
    %v5136 = vpop.f32.mrb[0].mxu0
    %v5137 = vadd.f32 %v5072, %v5136
    %v5138 = vpop.f32.mrb[0].mxu0
    %v5139 = vpop.f32.mrb[0].mxu0
    %v5140 = vadd.f32 %v5075, %v5139
    %v5141 = vpop.f32.mrb[0].mxu0
    %5142 = vmatprep.mubr.bf16.mxu0 %v4956
    %5143 = vmatmul.mubr.bf16.gmra.mrb[0].mxu0 %v4955
    %v5144 = vpop.f32.mrb[0].mxu0
    %v5145 = vadd.f32 %v5080, %v5144
    %v5146 = vpop.f32.mrb[0].mxu0
    %v5147 = vpop.f32.mrb[0].mxu0
    %v5148 = vadd.f32 %v5083, %v5147
    %v5149 = vpop.f32.mrb[0].mxu0
    %5150 = vdwg.mxu0
    %5151 = vmatprep.subr.bf16.mxu0 0
    %5152 = vmatpush1.bf16.msra.mxu0 %v4992
    %5153 = vmatprep.subr.bf16.mxu0 0
    %5154 = vmatpush1.bf16.msra.mxu0 %v4993
    %5155 = vmatprep.subr.bf16.mxu0 0
    %5156 = vmatpush1.bf16.msra.mxu0 %v4994
    %5157 = vmatprep.subr.bf16.mxu0 0
    %5158 = vmatpush1.bf16.msra.mxu0 %v4995
    %5159 = vmatprep.subr.bf16.mxu0 0
    %5160 = vmatpush1.bf16.msra.mxu0 %v4996
    %5161 = vmatprep.subr.bf16.mxu0 0
    %5162 = vmatpush1.bf16.msra.mxu0 %v4997
    %5163 = vmatprep.subr.bf16.mxu0 0
    %5164 = vmatpush1.bf16.msra.mxu0 %v4998
    %5165 = vmatprep.subr.bf16.mxu0 0
    %5166 = vmatpush1.bf16.msra.mxu0 %v4999
    %5167 = vmatprep.subr.bf16.mxu0 0
    %5168 = vmatpush1.bf16.msra.mxu0 %v5000
    %5169 = vmatprep.subr.bf16.mxu0 0
    %5170 = vmatpush1.bf16.msra.mxu0 %v5001
    %5171 = vmatprep.subr.bf16.mxu0 0
    %5172 = vmatpush1.bf16.msra.mxu0 %v5002
    %5173 = vmatprep.subr.bf16.mxu0 0
    %5174 = vmatpush1.bf16.msra.mxu0 %v5003
    %5175 = vmatprep.subr.bf16.mxu0 0
    %5176 = vmatpush1.bf16.msra.mxu0 %v5004
    %5177 = vmatprep.subr.bf16.mxu0 0
    %5178 = vmatpush1.bf16.msra.mxu0 %v5005
    %5179 = vmatprep.subr.bf16.mxu0 0
    %5180 = vmatpush1.bf16.msra.mxu0 %v5006
    %5181 = vmatprep.subr.bf16.mxu0 0
    %5182 = vmatpush1.bf16.msra.mxu0 %v5007
    %5183 = vmatprep.mubr.bf16.mxu0 %v4937
    %5184 = vmatmul.mubr.bf16.gmra.mrb[0].mxu0 %v4936
    %v5185 = vpop.f32.mrb[0].mxu0
    %v5186 = vadd.f32 %v5121, %v5185
    %v5187 = vpop.f32.mrb[0].mxu0
    %v5188 = vpop.f32.mrb[0].mxu0
    %v5189 = vadd.f32 %v5124, %v5188
    %v5190 = vpop.f32.mrb[0].mxu0
    %5191 = vmatprep.mubr.bf16.mxu0 %v4944
    %5192 = vmatmul.mubr.bf16.gmra.mrb[0].mxu0 %v4943
    %v5193 = vpop.f32.mrb[0].mxu0
    %v5194 = vadd.f32 %v5129, %v5193
    %v5195 = vpop.f32.mrb[0].mxu0
    %v5196 = vpop.f32.mrb[0].mxu0
    %v5197 = vadd.f32 %v5132, %v5196
    %v5198 = vpop.f32.mrb[0].mxu0
    %5199 = vmatprep.mubr.bf16.mxu0 %v4951
    %5200 = vmatmul.mubr.bf16.gmra.mrb[0].mxu0 %v4950
    %v5201 = vpop.f32.mrb[0].mxu0
    %v5202 = vadd.f32 %v5137, %v5201
    %v5203 = vpop.f32.mrb[0].mxu0
    %v5204 = vpop.f32.mrb[0].mxu0
    %v5205 = vadd.f32 %v5140, %v5204
    %v5206 = vpop.f32.mrb[0].mxu0
    %5207 = vmatprep.mubr.bf16.mxu0 %v4958
    %5208 = vmatmul.mubr.bf16.gmra.mrb[0].mxu0 %v4957
    %v5209 = vpop.f32.mrb[0].mxu0
    %v5210 = vadd.f32 %v5145, %v5209
    %v5211 = vpop.f32.mrb[0].mxu0
    %v5212 = vpop.f32.mrb[0].mxu0
    %v5213 = vadd.f32 %v5148, %v5212
    %v5214 = vpop.f32.mrb[0].mxu0
    %5215 = vdwg.mxu0
    %5216 = vmatprep.subr.bf16.mxu0 0
    %5217 = vmatpush1.bf16.msra.mxu0 %v5008
    %5218 = vmatprep.subr.bf16.mxu0 0
    %5219 = vmatpush1.bf16.msra.mxu0 %v5009
    %5220 = vmatprep.subr.bf16.mxu0 0
    %5221 = vmatpush1.bf16.msra.mxu0 %v5010
    %5222 = vmatprep.subr.bf16.mxu0 0
    %5223 = vmatpush1.bf16.msra.mxu0 %v5011
    %5224 = vmatprep.subr.bf16.mxu0 0
    %5225 = vmatpush1.bf16.msra.mxu0 %v5012
    %5226 = vmatprep.subr.bf16.mxu0 0
    %5227 = vmatpush1.bf16.msra.mxu0 %v5013
    %5228 = vmatprep.subr.bf16.mxu0 0
    %5229 = vmatpush1.bf16.msra.mxu0 %v5014
    %5230 = vmatprep.subr.bf16.mxu0 0
    %5231 = vmatpush1.bf16.msra.mxu0 %v5015
    %5232 = vmatprep.subr.bf16.mxu0 0
    %5233 = vmatpush1.bf16.msra.mxu0 0
    %5234 = vmatprep.subr.bf16.mxu0 0
    %5235 = vmatpush1.bf16.msra.mxu0 0
    %5236 = vmatprep.subr.bf16.mxu0 0
    %5237 = vmatpush1.bf16.msra.mxu0 0
    %5238 = vmatprep.subr.bf16.mxu0 0
    %5239 = vmatpush1.bf16.msra.mxu0 0
    %5240 = vmatprep.subr.bf16.mxu0 0
    %5241 = vmatpush1.bf16.msra.mxu0 0
    %5242 = vmatprep.subr.bf16.mxu0 0
    %5243 = vmatpush1.bf16.msra.mxu0 0
    %5244 = vmatprep.subr.bf16.mxu0 0
    %5245 = vmatpush1.bf16.msra.mxu0 0
    %5246 = vmatprep.subr.bf16.mxu0 0
    %5247 = vmatpush1.bf16.msra.mxu0 0
    %5248 = vmatprep.mubr.bf16.mxu0 0
    %5249 = vmatmul.mubr.bf16.gmra.mrb[0].mxu0 %v4938
    %v5250 = vpop.f32.mrb[0].mxu0
    %v5251 = vadd.f32 %v5186, %v5250
    %v5252 = vpop.f32.mrb[0].mxu0
    %v5253 = vpop.f32.mrb[0].mxu0
    %v5254 = vadd.f32 %v5189, %v5253
    %v5255 = vpop.f32.mrb[0].mxu0
    %5256 = vmatprep.mubr.bf16.mxu0 0
    %5257 = vmatmul.mubr.bf16.gmra.mrb[0].mxu0 %v4945
    %v5258 = vpop.f32.mrb[0].mxu0
    %v5259 = vadd.f32 %v5194, %v5258
    %v5260 = vpop.f32.mrb[0].mxu0
    %v5261 = vpop.f32.mrb[0].mxu0
    %v5262 = vadd.f32 %v5197, %v5261
    %v5263 = vpop.f32.mrb[0].mxu0
    %5264 = vmatprep.mubr.bf16.mxu0 0
    %5265 = vmatmul.mubr.bf16.gmra.mrb[0].mxu0 %v4952
    %v5266 = vpop.f32.mrb[0].mxu0
    %v5267 = vadd.f32 %v5202, %v5266
    %v5268 = vpop.f32.mrb[0].mxu0
    %v5269 = vpop.f32.mrb[0].mxu0
    %v5270 = vadd.f32 %v5205, %v5269
    %v5271 = vpop.f32.mrb[0].mxu0
    %5272 = vmatprep.mubr.bf16.mxu0 0
    %5273 = vmatmul.mubr.bf16.gmra.mrb[0].mxu0 %v4959
    %v5274 = vpop.f32.mrb[0].mxu0
    %v5275 = vadd.f32 %v5210, %v5274
    %v5276 = vpop.f32.mrb[0].mxu0
    %v5277 = vpop.f32.mrb[0].mxu0
    %v5278 = vadd.f32 %v5213, %v5277
    %v5279 = vpop.f32.mrb[0].mxu0
    %5280 = vdwg.mxu0
    %v5281 = vmax.f32 %v5251, 0.0
    %v5282 = vmax.f32 %v5254, 0.0
    %v5283 = vmax.f32 %v5259, 0.0
    %v5284 = vmax.f32 %v5262, 0.0
    %v5285 = vmax.f32 %v5267, 0.0
    %v5286 = vmax.f32 %v5270, 0.0
    %v5287 = vmax.f32 %v5275, 0.0
    %v5288 = vmax.f32 %v5278, 0.0
    %v5289 = vpack.c.bf16 %v5282, %v5281
    %v5290 = vpack.c.bf16 %v5284, %v5283
    %v5291 = vpack.c.bf16 %v5286, %v5285
    %v5292 = vpack.c.bf16 %v5288, %v5287
    %5293 = vst [vmem:[#allocation2 + $0x8] sm:$0xff] %v5289
    %5294 = vst [vmem:[#allocation2 + $0x10] sm:$0xff] %v5290
    %5295 = vst [vmem:[#allocation2 + $0x18] sm:$0xff] 0
    %5296 = vst [vmem:[#allocation2 + $0x58] sm:$0xff] %v5291
    %5297 = vst [vmem:[#allocation2 + $0x60] sm:$0xff] %v5292
    %5298 = vst [vmem:[#allocation2 + $0x68] sm:$0xff] 0
    %v5299 = vld [vmem:[#allocation2] sm:$0x80]
    %v5300 = vld [vmem:[#allocation2 + $0x8] sm:$0xff]
    %v5301 = vld [vmem:[#allocation2 + $0x10] sm:$0x7f]
    %v5305 = vrot.slane %v5299, 7
    %v5306 = vrot.slane %v5300, 7
    %v5307 = vsel %vm454, %v5305, %v5306
    %v5308 = vrot.slane %v5301, 7
    %v5309 = vsel %vm454, %v5306, %v5308
    %5312 = vst [vmem:[#allocation3] sm:$0xff] %v5307
    %5313 = vst [vmem:[#allocation3 + $0x38] sm:$0xff] %v5309
    %v5314 = vld [vmem:[#allocation2] sm:$0x80]
    %v5315 = vld [vmem:[#allocation2 + $0x8] sm:$0xff]
    %v5316 = vld [vmem:[#allocation2 + $0x10] sm:$0xff]
    %v5318 = vshrl.u32 %v5314, 16
    %v5320 = vrot.slane %v5318, 7
    %v5322 = vshrl.u32 %v5315, 16
    %v5324 = vrot.slane %v5322, 7
    %v5325 = vshll.u32 %v5315, 16
    %v5327 = vor.u32 %v5324, %v5325
    %v5328 = vsel %vm497, %v5320, %v5327
    %v5330 = vshrl.u32 %v5316, 16
    %v5332 = vrot.slane %v5330, 7
    %v5333 = vshll.u32 %v5316, 16
    %v5335 = vor.u32 %v5332, %v5333
    %v5336 = vsel %vm497, %v5324, %v5335
    %5339 = vst [vmem:[#allocation3 + $0x8] sm:$0xff] %v5328
    %5340 = vst [vmem:[#allocation3 + $0x40] sm:$0xff] %v5336
    %v5341 = vld [vmem:[#allocation2 + $0x8] sm:$0xff]
    %v5342 = vld [vmem:[#allocation2 + $0x10] sm:$0xff]
    %5343 = vst [vmem:[#allocation3 + $0x10] sm:$0xff] %v5341
    %5344 = vst [vmem:[#allocation3 + $0x48] sm:$0xff] %v5342
    %v5345 = vld [vmem:[#allocation2 + $0x8] sm:$0xff]
    %v5346 = vld [vmem:[#allocation2 + $0x10] sm:$0xff]
    %v5347 = vld [vmem:[#allocation2 + $0x18] sm:$0x1]
    %v5349 = vshrl.u32 %v5345, 16
    %v5351 = vshll.u32 %v5345, 16
    %v5353 = vrot.slane %v5351, 1
    %v5354 = vor.u32 %v5349, %v5353
    %v5356 = vshll.u32 %v5346, 16
    %v5358 = vrot.slane %v5356, 1
    %v5359 = vsel %vm607, %v5354, %v5358
    %v5360 = vshrl.u32 %v5346, 16
    %v5362 = vor.u32 %v5360, %v5358
    %v5364 = vshll.u32 %v5347, 16
    %v5366 = vrot.slane %v5364, 1
    %v5367 = vsel %vm607, %v5362, %v5366
    %5370 = vst [vmem:[#allocation3 + $0x18] sm:$0xff] %v5359
    %5371 = vst [vmem:[#allocation3 + $0x50] sm:$0xff] %v5367
    %v5372 = vld [vmem:[#allocation2 + $0x8] sm:$0xfe]
    %v5373 = vld [vmem:[#allocation2 + $0x10] sm:$0xff]
    %v5374 = vld [vmem:[#allocation2 + $0x18] sm:$0x1]
    %v5378 = vrot.slane %v5372, 1
    %v5379 = vrot.slane %v5373, 1
    %v5380 = vsel %vm710, %v5378, %v5379
    %v5381 = vrot.slane %v5374, 1
    %v5382 = vsel %vm710, %v5379, %v5381
    %5385 = vst [vmem:[#allocation3 + $0x20] sm:$0xff] %v5380
    %5386 = vst [vmem:[#allocation3 + $0x58] sm:$0xff] %v5382
    %v5387 = vld [vmem:[#allocation2 + $0x50] sm:$0x80]
    %v5388 = vld [vmem:[#allocation2 + $0x58] sm:$0xff]
    %v5389 = vld [vmem:[#allocation2 + $0x60] sm:$0x7f]
    %v5393 = vrot.slane %v5387, 7
    %v5394 = vrot.slane %v5388, 7
    %v5395 = vsel %vm454, %v5393, %v5394
    %v5396 = vrot.slane %v5389, 7
    %v5397 = vsel %vm454, %v5394, %v5396
    %5400 = vst [vmem:[#allocation3 + $0x70] sm:$0xff] %v5395
    %5401 = vst [vmem:[#allocation3 + $0xa8] sm:$0xff] %v5397
    %v5402 = vld [vmem:[#allocation2 + $0x50] sm:$0x80]
    %v5403 = vld [vmem:[#allocation2 + $0x58] sm:$0xff]
    %v5404 = vld [vmem:[#allocation2 + $0x60] sm:$0xff]
    %v5406 = vshrl.u32 %v5402, 16
    %v5408 = vrot.slane %v5406, 7
    %v5410 = vshrl.u32 %v5403, 16
    %v5412 = vrot.slane %v5410, 7
    %v5413 = vshll.u32 %v5403, 16
    %v5415 = vor.u32 %v5412, %v5413
    %v5416 = vsel %vm497, %v5408, %v5415
    %v5418 = vshrl.u32 %v5404, 16
    %v5420 = vrot.slane %v5418, 7
    %v5421 = vshll.u32 %v5404, 16
    %v5423 = vor.u32 %v5420, %v5421
    %v5424 = vsel %vm497, %v5412, %v5423
    %5427 = vst [vmem:[#allocation3 + $0x78] sm:$0xff] %v5416
    %5428 = vst [vmem:[#allocation3 + $0xb0] sm:$0xff] %v5424
    %v5429 = vld [vmem:[#allocation2 + $0x58] sm:$0xff]
    %v5430 = vld [vmem:[#allocation2 + $0x60] sm:$0xff]
    %5431 = vst [vmem:[#allocation3 + $0x80] sm:$0xff] %v5429
    %5432 = vst [vmem:[#allocation3 + $0xb8] sm:$0xff] %v5430
    %v5433 = vld [vmem:[#allocation2 + $0x58] sm:$0xff]
    %v5434 = vld [vmem:[#allocation2 + $0x60] sm:$0xff]
    %v5435 = vld [vmem:[#allocation2 + $0x68] sm:$0x1]
    %v5437 = vshrl.u32 %v5433, 16
    %v5439 = vshll.u32 %v5433, 16
    %v5441 = vrot.slane %v5439, 1
    %v5442 = vor.u32 %v5437, %v5441
    %v5444 = vshll.u32 %v5434, 16
    %v5446 = vrot.slane %v5444, 1
    %v5447 = vsel %vm607, %v5442, %v5446
    %v5448 = vshrl.u32 %v5434, 16
    %v5450 = vor.u32 %v5448, %v5446
    %v5452 = vshll.u32 %v5435, 16
    %v5454 = vrot.slane %v5452, 1
    %v5455 = vsel %vm607, %v5450, %v5454
    %5458 = vst [vmem:[#allocation3 + $0x88] sm:$0xff] %v5447
    %5459 = vst [vmem:[#allocation3 + $0xc0] sm:$0xff] %v5455
    %v5460 = vld [vmem:[#allocation2 + $0x58] sm:$0xfe]
    %v5461 = vld [vmem:[#allocation2 + $0x60] sm:$0xff]
    %v5462 = vld [vmem:[#allocation2 + $0x68] sm:$0x1]
    %v5466 = vrot.slane %v5460, 1
    %v5467 = vrot.slane %v5461, 1
    %v5468 = vsel %vm710, %v5466, %v5467
    %v5469 = vrot.slane %v5462, 1
    %v5470 = vsel %vm710, %v5467, %v5469
    %5473 = vst [vmem:[#allocation3 + $0x90] sm:$0xff] %v5468
    %5474 = vst [vmem:[#allocation3 + $0xc8] sm:$0xff] %v5470
    %v5475 = vld [vmem:[#allocation3] sm:$0xff]
    %v5476 = vld [vmem:[#allocation3 + $0x8] sm:$0xff]
    %v5477 = vld [vmem:[#allocation3 + $0x10] sm:$0xff]
    %v5478 = vld [vmem:[#allocation3 + $0x18] sm:$0xff]
    %v5479 = vld [vmem:[#allocation3 + $0x20] sm:$0xff]
    %v5480 = vld [vmem:[#allocation3 + $0x38] sm:$0xff]
    %v5481 = vld [vmem:[#allocation3 + $0x40] sm:$0xff]
    %v5482 = vld [vmem:[#allocation3 + $0x48] sm:$0xff]
    %v5483 = vld [vmem:[#allocation3 + $0x50] sm:$0xff]
    %v5484 = vld [vmem:[#allocation3 + $0x58] sm:$0xff]
    %v5485 = vld [vmem:[#allocation3 + $0x70] sm:$0xff]
    %v5486 = vld [vmem:[#allocation3 + $0x78] sm:$0xff]
    %v5487 = vld [vmem:[#allocation3 + $0x80] sm:$0xff]
    %v5488 = vld [vmem:[#allocation3 + $0x88] sm:$0xff]
    %v5489 = vld [vmem:[#allocation3 + $0x90] sm:$0xff]
    %v5490 = vld [vmem:[#allocation3 + $0xa8] sm:$0xff]
    %v5491 = vld [vmem:[#allocation3 + $0xb0] sm:$0xff]
    %v5492 = vld [vmem:[#allocation3 + $0xb8] sm:$0xff]
    %v5493 = vld [vmem:[#allocation3 + $0xc0] sm:$0xff]
    %v5494 = vld [vmem:[#allocation3 + $0xc8] sm:$0xff]
    %v5495 = vld [vmem:[#allocation6 + $0x1c0] sm:$0xff]
    %v5496 = vld [vmem:[#allocation6 + $0x1c8] sm:$0xff]
    %v5497 = vld [vmem:[#allocation6 + $0x1d0] sm:$0xff]
    %v5498 = vld [vmem:[#allocation6 + $0x1d8] sm:$0xff]
    %v5499 = vld [vmem:[#allocation6 + $0x1e0] sm:$0xff]
    %v5500 = vld [vmem:[#allocation6 + $0x1e8] sm:$0xff]
    %v5501 = vld [vmem:[#allocation6 + $0x1f0] sm:$0xff]
    %v5502 = vld [vmem:[#allocation6 + $0x1f8] sm:$0xff]
    %v5503 = vld [vmem:[#allocation6 + $0x200] sm:$0xff]
    %v5504 = vld [vmem:[#allocation6 + $0x208] sm:$0xff]
    %v5505 = vld [vmem:[#allocation6 + $0x210] sm:$0xff]
    %v5506 = vld [vmem:[#allocation6 + $0x218] sm:$0xff]
    %v5507 = vld [vmem:[#allocation6 + $0x220] sm:$0xff]
    %v5508 = vld [vmem:[#allocation6 + $0x228] sm:$0xff]
    %v5509 = vld [vmem:[#allocation6 + $0x230] sm:$0xff]
    %v5510 = vld [vmem:[#allocation6 + $0x238] sm:$0xff]
    %v5511 = vld [vmem:[#allocation6 + $0x240] sm:$0xff]
    %v5512 = vld [vmem:[#allocation6 + $0x248] sm:$0xff]
    %v5513 = vld [vmem:[#allocation6 + $0x250] sm:$0xff]
    %v5514 = vld [vmem:[#allocation6 + $0x258] sm:$0xff]
    %v5515 = vld [vmem:[#allocation6 + $0x260] sm:$0xff]
    %v5516 = vld [vmem:[#allocation6 + $0x268] sm:$0xff]
    %v5517 = vld [vmem:[#allocation6 + $0x270] sm:$0xff]
    %v5518 = vld [vmem:[#allocation6 + $0x278] sm:$0xff]
    %v5519 = vld [vmem:[#allocation6 + $0x280] sm:$0xff]
    %v5520 = vld [vmem:[#allocation6 + $0x288] sm:$0xff]
    %v5521 = vld [vmem:[#allocation6 + $0x290] sm:$0xff]
    %v5522 = vld [vmem:[#allocation6 + $0x298] sm:$0xff]
    %v5523 = vld [vmem:[#allocation6 + $0x2a0] sm:$0xff]
    %v5524 = vld [vmem:[#allocation6 + $0x2a8] sm:$0xff]
    %v5525 = vld [vmem:[#allocation6 + $0x2b0] sm:$0xff]
    %v5526 = vld [vmem:[#allocation6 + $0x2b8] sm:$0xff]
    %v5527 = vld [vmem:[#allocation6 + $0x2c0] sm:$0xff]
    %v5528 = vld [vmem:[#allocation6 + $0x2c8] sm:$0xff]
    %v5529 = vld [vmem:[#allocation6 + $0x2d0] sm:$0xff]
    %v5530 = vld [vmem:[#allocation6 + $0x2d8] sm:$0xff]
    %v5531 = vld [vmem:[#allocation6 + $0x2e0] sm:$0xff]
    %v5532 = vld [vmem:[#allocation6 + $0x2e8] sm:$0xff]
    %v5533 = vld [vmem:[#allocation6 + $0x2f0] sm:$0xff]
    %v5534 = vld [vmem:[#allocation6 + $0x2f8] sm:$0xff]
    %v5535 = vld [vmem:[%s4 + $0x5] sm:$0x1]
    %v5536 = vlaneseq
    %v5537 = vshrl.u32 %v5536, 7
    %v5538 = vsub.s32 0, %v5537
    %v5539 = vrot.slane %v5535, %v5538
    %5540 = vmatprep.subr.bf16.mxu0 0
    %5541 = vmatpush1.bf16.msra.mxu0 %v5495
    %5542 = vmatprep.subr.bf16.mxu0 0
    %5543 = vmatpush1.bf16.msra.mxu0 %v5496
    %5544 = vmatprep.subr.bf16.mxu0 0
    %5545 = vmatpush1.bf16.msra.mxu0 %v5497
    %5546 = vmatprep.subr.bf16.mxu0 0
    %5547 = vmatpush1.bf16.msra.mxu0 %v5498
    %5548 = vmatprep.subr.bf16.mxu0 0
    %5549 = vmatpush1.bf16.msra.mxu0 %v5499
    %5550 = vmatprep.subr.bf16.mxu0 0
    %5551 = vmatpush1.bf16.msra.mxu0 %v5500
    %5552 = vmatprep.subr.bf16.mxu0 0
    %5553 = vmatpush1.bf16.msra.mxu0 %v5501
    %5554 = vmatprep.subr.bf16.mxu0 0
    %5555 = vmatpush1.bf16.msra.mxu0 %v5502
    %5556 = vmatprep.subr.bf16.mxu0 0
    %5557 = vmatpush1.bf16.msra.mxu0 %v5503
    %5558 = vmatprep.subr.bf16.mxu0 0
    %5559 = vmatpush1.bf16.msra.mxu0 %v5504
    %5560 = vmatprep.subr.bf16.mxu0 0
    %5561 = vmatpush1.bf16.msra.mxu0 %v5505
    %5562 = vmatprep.subr.bf16.mxu0 0
    %5563 = vmatpush1.bf16.msra.mxu0 %v5506
    %5564 = vmatprep.subr.bf16.mxu0 0
    %5565 = vmatpush1.bf16.msra.mxu0 %v5507
    %5566 = vmatprep.subr.bf16.mxu0 0
    %5567 = vmatpush1.bf16.msra.mxu0 %v5508
    %5568 = vmatprep.subr.bf16.mxu0 0
    %5569 = vmatpush1.bf16.msra.mxu0 %v5509
    %5570 = vmatprep.subr.bf16.mxu0 0
    %5571 = vmatpush1.bf16.msra.mxu0 %v5510
    %5572 = vmatprep.mubr.bf16.mxu0 %v5476
    %5573 = vmatmul.mubr.bf16.gmra.mrb[0].mxu0 %v5475
    %v5574 = vpop.f32.mrb[0].mxu0
    %v5575 = vadd.f32 %v5539, %v5574
    %v5576 = vpop.f32.mrb[0].mxu0
    %v5577 = vpop.f32.mrb[0].mxu0
    %v5578 = vadd.f32 %v5539, %v5577
    %v5579 = vpop.f32.mrb[0].mxu0
    %5580 = vmatprep.mubr.bf16.mxu0 %v5481
    %5581 = vmatmul.mubr.bf16.gmra.mrb[0].mxu0 %v5480
    %v5582 = vpop.f32.mrb[0].mxu0
    %v5583 = vadd.f32 %v5539, %v5582
    %v5584 = vpop.f32.mrb[0].mxu0
    %v5585 = vpop.f32.mrb[0].mxu0
    %v5586 = vadd.f32 %v5539, %v5585
    %v5587 = vpop.f32.mrb[0].mxu0
    %5588 = vmatprep.mubr.bf16.mxu0 %v5486
    %5589 = vmatmul.mubr.bf16.gmra.mrb[0].mxu0 %v5485
    %v5590 = vpop.f32.mrb[0].mxu0
    %v5591 = vadd.f32 %v5539, %v5590
    %v5592 = vpop.f32.mrb[0].mxu0
    %v5593 = vpop.f32.mrb[0].mxu0
    %v5594 = vadd.f32 %v5539, %v5593
    %v5595 = vpop.f32.mrb[0].mxu0
    %5596 = vmatprep.mubr.bf16.mxu0 %v5491
    %5597 = vmatmul.mubr.bf16.gmra.mrb[0].mxu0 %v5490
    %v5598 = vpop.f32.mrb[0].mxu0
    %v5599 = vadd.f32 %v5539, %v5598
    %v5600 = vpop.f32.mrb[0].mxu0
    %v5601 = vpop.f32.mrb[0].mxu0
    %v5602 = vadd.f32 %v5539, %v5601
    %v5603 = vpop.f32.mrb[0].mxu0
    %5604 = vdwg.mxu0
    %5605 = vmatprep.subr.bf16.mxu0 0
    %5606 = vmatpush1.bf16.msra.mxu0 %v5511
    %5607 = vmatprep.subr.bf16.mxu0 0
    %5608 = vmatpush1.bf16.msra.mxu0 %v5512
    %5609 = vmatprep.subr.bf16.mxu0 0
    %5610 = vmatpush1.bf16.msra.mxu0 %v5513
    %5611 = vmatprep.subr.bf16.mxu0 0
    %5612 = vmatpush1.bf16.msra.mxu0 %v5514
    %5613 = vmatprep.subr.bf16.mxu0 0
    %5614 = vmatpush1.bf16.msra.mxu0 %v5515
    %5615 = vmatprep.subr.bf16.mxu0 0
    %5616 = vmatpush1.bf16.msra.mxu0 %v5516
    %5617 = vmatprep.subr.bf16.mxu0 0
    %5618 = vmatpush1.bf16.msra.mxu0 %v5517
    %5619 = vmatprep.subr.bf16.mxu0 0
    %5620 = vmatpush1.bf16.msra.mxu0 %v5518
    %5621 = vmatprep.subr.bf16.mxu0 0
    %5622 = vmatpush1.bf16.msra.mxu0 %v5519
    %5623 = vmatprep.subr.bf16.mxu0 0
    %5624 = vmatpush1.bf16.msra.mxu0 %v5520
    %5625 = vmatprep.subr.bf16.mxu0 0
    %5626 = vmatpush1.bf16.msra.mxu0 %v5521
    %5627 = vmatprep.subr.bf16.mxu0 0
    %5628 = vmatpush1.bf16.msra.mxu0 %v5522
    %5629 = vmatprep.subr.bf16.mxu0 0
    %5630 = vmatpush1.bf16.msra.mxu0 %v5523
    %5631 = vmatprep.subr.bf16.mxu0 0
    %5632 = vmatpush1.bf16.msra.mxu0 %v5524
    %5633 = vmatprep.subr.bf16.mxu0 0
    %5634 = vmatpush1.bf16.msra.mxu0 %v5525
    %5635 = vmatprep.subr.bf16.mxu0 0
    %5636 = vmatpush1.bf16.msra.mxu0 %v5526
    %5637 = vmatprep.mubr.bf16.mxu0 %v5478
    %5638 = vmatmul.mubr.bf16.gmra.mrb[0].mxu0 %v5477
    %v5639 = vpop.f32.mrb[0].mxu0
    %v5640 = vadd.f32 %v5575, %v5639
    %v5641 = vpop.f32.mrb[0].mxu0
    %v5642 = vpop.f32.mrb[0].mxu0
    %v5643 = vadd.f32 %v5578, %v5642
    %v5644 = vpop.f32.mrb[0].mxu0
    %5645 = vmatprep.mubr.bf16.mxu0 %v5483
    %5646 = vmatmul.mubr.bf16.gmra.mrb[0].mxu0 %v5482
    %v5647 = vpop.f32.mrb[0].mxu0
    %v5648 = vadd.f32 %v5583, %v5647
    %v5649 = vpop.f32.mrb[0].mxu0
    %v5650 = vpop.f32.mrb[0].mxu0
    %v5651 = vadd.f32 %v5586, %v5650
    %v5652 = vpop.f32.mrb[0].mxu0
    %5653 = vmatprep.mubr.bf16.mxu0 %v5488
    %5654 = vmatmul.mubr.bf16.gmra.mrb[0].mxu0 %v5487
    %v5655 = vpop.f32.mrb[0].mxu0
    %v5656 = vadd.f32 %v5591, %v5655
    %v5657 = vpop.f32.mrb[0].mxu0
    %v5658 = vpop.f32.mrb[0].mxu0
    %v5659 = vadd.f32 %v5594, %v5658
    %v5660 = vpop.f32.mrb[0].mxu0
    %5661 = vmatprep.mubr.bf16.mxu0 %v5493
    %5662 = vmatmul.mubr.bf16.gmra.mrb[0].mxu0 %v5492
    %v5663 = vpop.f32.mrb[0].mxu0
    %v5664 = vadd.f32 %v5599, %v5663
    %v5665 = vpop.f32.mrb[0].mxu0
    %v5666 = vpop.f32.mrb[0].mxu0
    %v5667 = vadd.f32 %v5602, %v5666
    %v5668 = vpop.f32.mrb[0].mxu0
    %5669 = vdwg.mxu0
    %5670 = vmatprep.subr.bf16.mxu0 0
    %5671 = vmatpush1.bf16.msra.mxu0 %v5527
    %5672 = vmatprep.subr.bf16.mxu0 0
    %5673 = vmatpush1.bf16.msra.mxu0 %v5528
    %5674 = vmatprep.subr.bf16.mxu0 0
    %5675 = vmatpush1.bf16.msra.mxu0 %v5529
    %5676 = vmatprep.subr.bf16.mxu0 0
    %5677 = vmatpush1.bf16.msra.mxu0 %v5530
    %5678 = vmatprep.subr.bf16.mxu0 0
    %5679 = vmatpush1.bf16.msra.mxu0 %v5531
    %5680 = vmatprep.subr.bf16.mxu0 0
    %5681 = vmatpush1.bf16.msra.mxu0 %v5532
    %5682 = vmatprep.subr.bf16.mxu0 0
    %5683 = vmatpush1.bf16.msra.mxu0 %v5533
    %5684 = vmatprep.subr.bf16.mxu0 0
    %5685 = vmatpush1.bf16.msra.mxu0 %v5534
    %5686 = vmatprep.subr.bf16.mxu0 0
    %5687 = vmatpush1.bf16.msra.mxu0 0
    %5688 = vmatprep.subr.bf16.mxu0 0
    %5689 = vmatpush1.bf16.msra.mxu0 0
    %5690 = vmatprep.subr.bf16.mxu0 0
    %5691 = vmatpush1.bf16.msra.mxu0 0
    %5692 = vmatprep.subr.bf16.mxu0 0
    %5693 = vmatpush1.bf16.msra.mxu0 0
    %5694 = vmatprep.subr.bf16.mxu0 0
    %5695 = vmatpush1.bf16.msra.mxu0 0
    %5696 = vmatprep.subr.bf16.mxu0 0
    %5697 = vmatpush1.bf16.msra.mxu0 0
    %5698 = vmatprep.subr.bf16.mxu0 0
    %5699 = vmatpush1.bf16.msra.mxu0 0
    %5700 = vmatprep.subr.bf16.mxu0 0
    %5701 = vmatpush1.bf16.msra.mxu0 0
    %5702 = vmatprep.mubr.bf16.mxu0 0
    %5703 = vmatmul.mubr.bf16.gmra.mrb[0].mxu0 %v5479
    %v5704 = vpop.f32.mrb[0].mxu0
    %v5705 = vadd.f32 %v5640, %v5704
    %v5706 = vpop.f32.mrb[0].mxu0
    %v5707 = vpop.f32.mrb[0].mxu0
    %v5708 = vadd.f32 %v5643, %v5707
    %v5709 = vpop.f32.mrb[0].mxu0
    %5710 = vmatprep.mubr.bf16.mxu0 0
    %5711 = vmatmul.mubr.bf16.gmra.mrb[0].mxu0 %v5484
    %v5712 = vpop.f32.mrb[0].mxu0
    %v5713 = vadd.f32 %v5648, %v5712
    %v5714 = vpop.f32.mrb[0].mxu0
    %v5715 = vpop.f32.mrb[0].mxu0
    %v5716 = vadd.f32 %v5651, %v5715
    %v5717 = vpop.f32.mrb[0].mxu0
    %5718 = vmatprep.mubr.bf16.mxu0 0
    %5719 = vmatmul.mubr.bf16.gmra.mrb[0].mxu0 %v5489
    %v5720 = vpop.f32.mrb[0].mxu0
    %v5721 = vadd.f32 %v5656, %v5720
    %v5722 = vpop.f32.mrb[0].mxu0
    %v5723 = vpop.f32.mrb[0].mxu0
    %v5724 = vadd.f32 %v5659, %v5723
    %v5725 = vpop.f32.mrb[0].mxu0
    %5726 = vmatprep.mubr.bf16.mxu0 0
    %5727 = vmatmul.mubr.bf16.gmra.mrb[0].mxu0 %v5494
    %v5728 = vpop.f32.mrb[0].mxu0
    %v5729 = vadd.f32 %v5664, %v5728
    %v5730 = vpop.f32.mrb[0].mxu0
    %v5731 = vpop.f32.mrb[0].mxu0
    %v5732 = vadd.f32 %v5667, %v5731
    %v5733 = vpop.f32.mrb[0].mxu0
    %5734 = vdwg.mxu0
    %v5735 = vmax.f32 %v5705, 0.0
    %v5736 = vmax.f32 %v5708, 0.0
    %v5737 = vmax.f32 %v5713, 0.0
    %v5738 = vmax.f32 %v5716, 0.0
    %v5739 = vmax.f32 %v5721, 0.0
    %v5740 = vmax.f32 %v5724, 0.0
    %v5741 = vmax.f32 %v5729, 0.0
    %v5742 = vmax.f32 %v5732, 0.0
    %5743 = vst [vmem:[#allocation4] sm:$0xff] %v5735
    %5744 = vst [vmem:[#allocation4 + $0x8] sm:$0xff] %v5736
    %5745 = vst [vmem:[#allocation4 + $0x10] sm:$0xff] %v5737
    %5746 = vst [vmem:[#allocation4 + $0x18] sm:$0xff] %v5738
    %5747 = vst [vmem:[#allocation4 + $0x20] sm:$0xff] %v5739
    %5748 = vst [vmem:[#allocation4 + $0x28] sm:$0xff] %v5740
    %5749 = vst [vmem:[#allocation4 + $0x30] sm:$0xff] %v5741
    %5750 = vst [vmem:[#allocation4 + $0x38] sm:$0xff] %v5742
    %v5751 = vld [vmem:[#allocation4] ss:$2 sm:$0xff]
    %v5752 = vld [vmem:[%s2001] ss:$2 sm:$0xff]
    %v5753 = vld [vmem:[%s2015] ss:$2 sm:$0xff]
    %v5754 = vld [vmem:[%s2017] ss:$2 sm:$0xff]
    %v5755 = vmax.f32 %v5751, %v5753
    %v5756 = vmax.f32 %v5752, %v5754
    %v5757 = vpack.c.bf16 %v5756, %v5755
    %5758 = vst [vmem:[#allocation2 + $0x8] sm:$0xff] %v5757
    %5759 = vst [vmem:[#allocation2 + $0x10] sm:$0xff] 0
    %v5760 = vld [vmem:[%s2003] ss:$2 sm:$0xff]
    %v5761 = vld [vmem:[%s2005] ss:$2 sm:$0xff]
    %v5762 = vld [vmem:[%s2019] ss:$2 sm:$0xff]
    %v5763 = vld [vmem:[%s2021] ss:$2 sm:$0xff]
    %v5764 = vmax.f32 %v5760, %v5762
    %v5765 = vmax.f32 %v5761, %v5763
    %v5766 = vpack.c.bf16 %v5765, %v5764
    %5767 = vst [vmem:[#allocation2 + $0x58] sm:$0xff] %v5766
    %5768 = vst [vmem:[#allocation2 + $0x60] sm:$0xff] 0
    %v5769 = vld [vmem:[#allocation2] sm:$0xc0]
    %v5770 = vld [vmem:[#allocation2 + $0x8] sm:$0x7f]
    %v5772 = vshrl.u32 %v5769, 16
    %v5774 = vrot.slane %v5772, 6
    %v5775 = vshll.u32 %v5769, 16
    %v5777 = vrot.slane %v5775, 7
    %v5778 = vor.u32 %v5774, %v5777
    %v5780 = vshrl.u32 %v5770, 16
    %v5782 = vrot.slane %v5780, 6
    %v5783 = vshll.u32 %v5770, 16
    %v5785 = vrot.slane %v5783, 7
    %v5786 = vor.u32 %v5782, %v5785
    %v5787 = vsel %vm2102, %v5778, %v5786
    %5789 = vst [vmem:[#allocation3] sm:$0xff] %v5787
    %v5790 = vld [vmem:[#allocation2] sm:$0x80]
    %v5791 = vld [vmem:[#allocation2 + $0x8] sm:$0x7f]
    %v5794 = vrot.slane %v5790, 7
    %v5795 = vrot.slane %v5791, 7
    %v5796 = vsel %vm454, %v5794, %v5795
    %5798 = vst [vmem:[#allocation3 + $0x8] sm:$0xff] %v5796
    %v5799 = vld [vmem:[#allocation2] sm:$0x80]
    %v5800 = vld [vmem:[#allocation2 + $0x8] sm:$0xff]
    %v5802 = vshrl.u32 %v5799, 16
    %v5804 = vrot.slane %v5802, 7
    %v5806 = vshrl.u32 %v5800, 16
    %v5808 = vrot.slane %v5806, 7
    %v5809 = vshll.u32 %v5800, 16
    %v5811 = vor.u32 %v5808, %v5809
    %v5812 = vsel %vm497, %v5804, %v5811
    %5814 = vst [vmem:[#allocation3 + $0x10] sm:$0xff] %v5812
    %v5815 = vld [vmem:[#allocation2 + $0x8] sm:$0xff]
    %5816 = vst [vmem:[#allocation3 + $0x18] sm:$0xff] %v5815
    %v5817 = vld [vmem:[#allocation2 + $0x8] sm:$0xff]
    %v5818 = vld [vmem:[#allocation2 + $0x10] sm:$0x1]
    %v5820 = vshrl.u32 %v5817, 16
    %v5822 = vshll.u32 %v5817, 16
    %v5824 = vrot.slane %v5822, 1
    %v5825 = vor.u32 %v5820, %v5824
    %v5827 = vshll.u32 %v5818, 16
    %v5829 = vrot.slane %v5827, 1
    %v5830 = vsel %vm607, %v5825, %v5829
    %5832 = vst [vmem:[#allocation3 + $0x20] sm:$0xff] %v5830
    %v5833 = vld [vmem:[#allocation2 + $0x8] sm:$0xfe]
    %v5834 = vld [vmem:[#allocation2 + $0x10] sm:$0x1]
    %v5837 = vrot.slane %v5833, 1
    %v5838 = vrot.slane %v5834, 1
    %v5839 = vsel %vm710, %v5837, %v5838
    %5841 = vst [vmem:[#allocation3 + $0x28] sm:$0xff] %v5839
    %v5842 = vld [vmem:[#allocation2 + $0x8] sm:$0xfe]
    %v5843 = vld [vmem:[#allocation2 + $0x10] sm:$0x3]
    %v5845 = vshrl.u32 %v5842, 16
    %v5847 = vrot.slane %v5845, 1
    %v5848 = vshll.u32 %v5842, 16
    %v5850 = vrot.slane %v5848, 2
    %v5851 = vor.u32 %v5847, %v5850
    %v5853 = vshrl.u32 %v5843, 16
    %v5855 = vrot.slane %v5853, 1
    %v5856 = vshll.u32 %v5843, 16
    %v5858 = vrot.slane %v5856, 2
    %v5859 = vor.u32 %v5855, %v5858
    %v5860 = vsel %vm2320, %v5851, %v5859
    %5862 = vst [vmem:[#allocation3 + $0x30] sm:$0xff] %v5860
    %v5863 = vld [vmem:[#allocation2 + $0x50] sm:$0xc0]
    %v5864 = vld [vmem:[#allocation2 + $0x58] sm:$0x7f]
    %v5866 = vshrl.u32 %v5863, 16
    %v5868 = vrot.slane %v5866, 6
    %v5869 = vshll.u32 %v5863, 16
    %v5871 = vrot.slane %v5869, 7
    %v5872 = vor.u32 %v5868, %v5871
    %v5874 = vshrl.u32 %v5864, 16
    %v5876 = vrot.slane %v5874, 6
    %v5877 = vshll.u32 %v5864, 16
    %v5879 = vrot.slane %v5877, 7
    %v5880 = vor.u32 %v5876, %v5879
    %v5881 = vsel %vm2102, %v5872, %v5880
    %5883 = vst [vmem:[#allocation3 + $0x38] sm:$0xff] %v5881
    %v5884 = vld [vmem:[#allocation2 + $0x50] sm:$0x80]
    %v5885 = vld [vmem:[#allocation2 + $0x58] sm:$0x7f]
    %v5888 = vrot.slane %v5884, 7
    %v5889 = vrot.slane %v5885, 7
    %v5890 = vsel %vm454, %v5888, %v5889
    %5892 = vst [vmem:[#allocation3 + $0x40] sm:$0xff] %v5890
    %v5893 = vld [vmem:[#allocation2 + $0x50] sm:$0x80]
    %v5894 = vld [vmem:[#allocation2 + $0x58] sm:$0xff]
    %v5896 = vshrl.u32 %v5893, 16
    %v5898 = vrot.slane %v5896, 7
    %v5900 = vshrl.u32 %v5894, 16
    %v5902 = vrot.slane %v5900, 7
    %v5903 = vshll.u32 %v5894, 16
    %v5905 = vor.u32 %v5902, %v5903
    %v5906 = vsel %vm497, %v5898, %v5905
    %5908 = vst [vmem:[#allocation3 + $0x48] sm:$0xff] %v5906
    %v5909 = vld [vmem:[#allocation2 + $0x58] sm:$0xff]
    %5910 = vst [vmem:[#allocation3 + $0x50] sm:$0xff] %v5909
    %v5911 = vld [vmem:[#allocation2 + $0x58] sm:$0xff]
    %v5912 = vld [vmem:[#allocation2 + $0x60] sm:$0x1]
    %v5914 = vshrl.u32 %v5911, 16
    %v5916 = vshll.u32 %v5911, 16
    %v5918 = vrot.slane %v5916, 1
    %v5919 = vor.u32 %v5914, %v5918
    %v5921 = vshll.u32 %v5912, 16
    %v5923 = vrot.slane %v5921, 1
    %v5924 = vsel %vm607, %v5919, %v5923
    %5926 = vst [vmem:[#allocation3 + $0x58] sm:$0xff] %v5924
    %v5927 = vld [vmem:[#allocation2 + $0x58] sm:$0xfe]
    %v5928 = vld [vmem:[#allocation2 + $0x60] sm:$0x1]
    %v5931 = vrot.slane %v5927, 1
    %v5932 = vrot.slane %v5928, 1
    %v5933 = vsel %vm710, %v5931, %v5932
    %5935 = vst [vmem:[#allocation3 + $0x60] sm:$0xff] %v5933
    %v5936 = vld [vmem:[#allocation2 + $0x58] sm:$0xfe]
    %v5937 = vld [vmem:[#allocation2 + $0x60] sm:$0x3]
    %v5939 = vshrl.u32 %v5936, 16
    %v5941 = vrot.slane %v5939, 1
    %v5942 = vshll.u32 %v5936, 16
    %v5944 = vrot.slane %v5942, 2
    %v5945 = vor.u32 %v5941, %v5944
    %v5947 = vshrl.u32 %v5937, 16
    %v5949 = vrot.slane %v5947, 1
    %v5950 = vshll.u32 %v5937, 16
    %v5952 = vrot.slane %v5950, 2
    %v5953 = vor.u32 %v5949, %v5952
    %v5954 = vsel %vm2320, %v5945, %v5953
    %5956 = vst [vmem:[#allocation3 + $0x68] sm:$0xff] %v5954
    %v5957 = vld [vmem:[#allocation3] sm:$0xff]
    %v5958 = vld [vmem:[#allocation3 + $0x8] sm:$0xff]
    %v5959 = vld [vmem:[#allocation3 + $0x10] sm:$0xff]
    %v5960 = vld [vmem:[#allocation3 + $0x18] sm:$0xff]
    %v5961 = vld [vmem:[#allocation3 + $0x20] sm:$0xff]
    %v5962 = vld [vmem:[#allocation3 + $0x28] sm:$0xff]
    %v5963 = vld [vmem:[#allocation3 + $0x30] sm:$0xff]
    %v5964 = vld [vmem:[#allocation3 + $0x38] sm:$0xff]
    %v5965 = vld [vmem:[#allocation3 + $0x40] sm:$0xff]
    %v5966 = vld [vmem:[#allocation3 + $0x48] sm:$0xff]
    %v5967 = vld [vmem:[#allocation3 + $0x50] sm:$0xff]
    %v5968 = vld [vmem:[#allocation3 + $0x58] sm:$0xff]
    %v5969 = vld [vmem:[#allocation3 + $0x60] sm:$0xff]
    %v5970 = vld [vmem:[#allocation3 + $0x68] sm:$0xff]
    %v5971 = vld [vmem:[#allocation6 + $0x300] sm:$0xff]
    %v5972 = vld [vmem:[#allocation6 + $0x308] sm:$0xff]
    %v5973 = vld [vmem:[#allocation6 + $0x310] sm:$0xff]
    %v5974 = vld [vmem:[#allocation6 + $0x318] sm:$0xff]
    %v5975 = vld [vmem:[#allocation6 + $0x320] sm:$0xff]
    %v5976 = vld [vmem:[#allocation6 + $0x328] sm:$0xff]
    %v5977 = vld [vmem:[#allocation6 + $0x330] sm:$0xff]
    %v5978 = vld [vmem:[#allocation6 + $0x338] sm:$0xff]
    %v5979 = vld [vmem:[#allocation6 + $0x340] sm:$0xff]
    %v5980 = vld [vmem:[#allocation6 + $0x348] sm:$0xff]
    %v5981 = vld [vmem:[#allocation6 + $0x350] sm:$0xff]
    %v5982 = vld [vmem:[#allocation6 + $0x358] sm:$0xff]
    %v5983 = vld [vmem:[#allocation6 + $0x360] sm:$0xff]
    %v5984 = vld [vmem:[#allocation6 + $0x368] sm:$0xff]
    %v5985 = vld [vmem:[#allocation6 + $0x370] sm:$0xff]
    %v5986 = vld [vmem:[#allocation6 + $0x378] sm:$0xff]
    %v5987 = vld [vmem:[#allocation6 + $0x380] sm:$0xff]
    %v5988 = vld [vmem:[#allocation6 + $0x388] sm:$0xff]
    %v5989 = vld [vmem:[#allocation6 + $0x390] sm:$0xff]
    %v5990 = vld [vmem:[#allocation6 + $0x398] sm:$0xff]
    %v5991 = vld [vmem:[#allocation6 + $0x3a0] sm:$0xff]
    %v5992 = vld [vmem:[#allocation6 + $0x3a8] sm:$0xff]
    %v5993 = vld [vmem:[#allocation6 + $0x3b0] sm:$0xff]
    %v5994 = vld [vmem:[#allocation6 + $0x3b8] sm:$0xff]
    %v5995 = vld [vmem:[#allocation6 + $0x3c0] sm:$0xff]
    %v5996 = vld [vmem:[#allocation6 + $0x3c8] sm:$0xff]
    %v5997 = vld [vmem:[#allocation6 + $0x3d0] sm:$0xff]
    %v5998 = vld [vmem:[#allocation6 + $0x3d8] sm:$0xff]
    %v5999 = vld [vmem:[#allocation6 + $0x3e0] sm:$0xff]
    %v6000 = vld [vmem:[#allocation6 + $0x3e8] sm:$0xff]
    %v6001 = vld [vmem:[#allocation6 + $0x3f0] sm:$0xff]
    %v6002 = vld [vmem:[#allocation6 + $0x3f8] sm:$0xff]
    %v6003 = vld [vmem:[#allocation6 + $0x400] sm:$0xff]
    %v6004 = vld [vmem:[#allocation6 + $0x408] sm:$0xff]
    %v6005 = vld [vmem:[#allocation6 + $0x410] sm:$0xff]
    %v6006 = vld [vmem:[#allocation6 + $0x418] sm:$0xff]
    %v6007 = vld [vmem:[#allocation6 + $0x420] sm:$0xff]
    %v6008 = vld [vmem:[#allocation6 + $0x428] sm:$0xff]
    %v6009 = vld [vmem:[#allocation6 + $0x430] sm:$0xff]
    %v6010 = vld [vmem:[#allocation6 + $0x438] sm:$0xff]
    %v6011 = vld [vmem:[#allocation6 + $0x440] sm:$0xff]
    %v6012 = vld [vmem:[#allocation6 + $0x448] sm:$0xff]
    %v6013 = vld [vmem:[#allocation6 + $0x450] sm:$0xff]
    %v6014 = vld [vmem:[#allocation6 + $0x458] sm:$0xff]
    %v6015 = vld [vmem:[#allocation6 + $0x460] sm:$0xff]
    %v6016 = vld [vmem:[#allocation6 + $0x468] sm:$0xff]
    %v6017 = vld [vmem:[#allocation6 + $0x470] sm:$0xff]
    %v6018 = vld [vmem:[#allocation6 + $0x478] sm:$0xff]
    %v6019 = vld [vmem:[#allocation6 + $0x480] sm:$0xff]
    %v6020 = vld [vmem:[#allocation6 + $0x488] sm:$0xff]
    %v6021 = vld [vmem:[#allocation6 + $0x490] sm:$0xff]
    %v6022 = vld [vmem:[#allocation6 + $0x498] sm:$0xff]
    %v6023 = vld [vmem:[#allocation6 + $0x4a0] sm:$0xff]
    %v6024 = vld [vmem:[#allocation6 + $0x4a8] sm:$0xff]
    %v6025 = vld [vmem:[#allocation6 + $0x4b0] sm:$0xff]
    %v6026 = vld [vmem:[#allocation6 + $0x4b8] sm:$0xff]
    %v6027 = vld [vmem:[%s4 + $0x6] sm:$0x1]
    %v6028 = vlaneseq
    %v6029 = vshrl.u32 %v6028, 7
    %v6030 = vsub.s32 0, %v6029
    %v6031 = vrot.slane %v6027, %v6030
    %6032 = vmatprep.subr.bf16.mxu0 0
    %6033 = vmatpush1.bf16.msra.mxu0 %v5971
    %6034 = vmatprep.subr.bf16.mxu0 0
    %6035 = vmatpush1.bf16.msra.mxu0 %v5972
    %6036 = vmatprep.subr.bf16.mxu0 0
    %6037 = vmatpush1.bf16.msra.mxu0 %v5973
    %6038 = vmatprep.subr.bf16.mxu0 0
    %6039 = vmatpush1.bf16.msra.mxu0 %v5974
    %6040 = vmatprep.subr.bf16.mxu0 0
    %6041 = vmatpush1.bf16.msra.mxu0 %v5975
    %6042 = vmatprep.subr.bf16.mxu0 0
    %6043 = vmatpush1.bf16.msra.mxu0 %v5976
    %6044 = vmatprep.subr.bf16.mxu0 0
    %6045 = vmatpush1.bf16.msra.mxu0 %v5977
    %6046 = vmatprep.subr.bf16.mxu0 0
    %6047 = vmatpush1.bf16.msra.mxu0 %v5978
    %6048 = vmatprep.subr.bf16.mxu0 0
    %6049 = vmatpush1.bf16.msra.mxu0 %v5979
    %6050 = vmatprep.subr.bf16.mxu0 0
    %6051 = vmatpush1.bf16.msra.mxu0 %v5980
    %6052 = vmatprep.subr.bf16.mxu0 0
    %6053 = vmatpush1.bf16.msra.mxu0 %v5981
    %6054 = vmatprep.subr.bf16.mxu0 0
    %6055 = vmatpush1.bf16.msra.mxu0 %v5982
    %6056 = vmatprep.subr.bf16.mxu0 0
    %6057 = vmatpush1.bf16.msra.mxu0 %v5983
    %6058 = vmatprep.subr.bf16.mxu0 0
    %6059 = vmatpush1.bf16.msra.mxu0 %v5984
    %6060 = vmatprep.subr.bf16.mxu0 0
    %6061 = vmatpush1.bf16.msra.mxu0 %v5985
    %6062 = vmatprep.subr.bf16.mxu0 0
    %6063 = vmatpush1.bf16.msra.mxu0 %v5986
    %6064 = vmatprep.mubr.bf16.mxu0 %v5958
    %6065 = vmatmul.mubr.bf16.gmra.mrb[0].mxu0 %v5957
    %v6066 = vpop.f32.mrb[0].mxu0
    %v6067 = vadd.f32 %v6031, %v6066
    %v6068 = vpop.f32.mrb[0].mxu0
    %v6069 = vpop.f32.mrb[0].mxu0
    %v6070 = vadd.f32 %v6031, %v6069
    %v6071 = vpop.f32.mrb[0].mxu0
    %6072 = vmatprep.mubr.bf16.mxu0 %v5965
    %6073 = vmatmul.mubr.bf16.gmra.mrb[0].mxu0 %v5964
    %v6074 = vpop.f32.mrb[0].mxu0
    %v6075 = vadd.f32 %v6031, %v6074
    %v6076 = vpop.f32.mrb[0].mxu0
    %v6077 = vpop.f32.mrb[0].mxu0
    %v6078 = vadd.f32 %v6031, %v6077
    %v6079 = vpop.f32.mrb[0].mxu0
    %6080 = vdwg.mxu0
    %6081 = vmatprep.subr.bf16.mxu0 0
    %6082 = vmatpush1.bf16.msra.mxu0 %v5987
    %6083 = vmatprep.subr.bf16.mxu0 0
    %6084 = vmatpush1.bf16.msra.mxu0 %v5988
    %6085 = vmatprep.subr.bf16.mxu0 0
    %6086 = vmatpush1.bf16.msra.mxu0 %v5989
    %6087 = vmatprep.subr.bf16.mxu0 0
    %6088 = vmatpush1.bf16.msra.mxu0 %v5990
    %6089 = vmatprep.subr.bf16.mxu0 0
    %6090 = vmatpush1.bf16.msra.mxu0 %v5991
    %6091 = vmatprep.subr.bf16.mxu0 0
    %6092 = vmatpush1.bf16.msra.mxu0 %v5992
    %6093 = vmatprep.subr.bf16.mxu0 0
    %6094 = vmatpush1.bf16.msra.mxu0 %v5993
    %6095 = vmatprep.subr.bf16.mxu0 0
    %6096 = vmatpush1.bf16.msra.mxu0 %v5994
    %6097 = vmatprep.subr.bf16.mxu0 0
    %6098 = vmatpush1.bf16.msra.mxu0 %v5995
    %6099 = vmatprep.subr.bf16.mxu0 0
    %6100 = vmatpush1.bf16.msra.mxu0 %v5996
    %6101 = vmatprep.subr.bf16.mxu0 0
    %6102 = vmatpush1.bf16.msra.mxu0 %v5997
    %6103 = vmatprep.subr.bf16.mxu0 0
    %6104 = vmatpush1.bf16.msra.mxu0 %v5998
    %6105 = vmatprep.subr.bf16.mxu0 0
    %6106 = vmatpush1.bf16.msra.mxu0 %v5999
    %6107 = vmatprep.subr.bf16.mxu0 0
    %6108 = vmatpush1.bf16.msra.mxu0 %v6000
    %6109 = vmatprep.subr.bf16.mxu0 0
    %6110 = vmatpush1.bf16.msra.mxu0 %v6001
    %6111 = vmatprep.subr.bf16.mxu0 0
    %6112 = vmatpush1.bf16.msra.mxu0 %v6002
    %6113 = vmatprep.mubr.bf16.mxu0 %v5960
    %6114 = vmatmul.mubr.bf16.gmra.mrb[0].mxu0 %v5959
    %v6115 = vpop.f32.mrb[0].mxu0
    %v6116 = vadd.f32 %v6067, %v6115
    %v6117 = vpop.f32.mrb[0].mxu0
    %v6118 = vpop.f32.mrb[0].mxu0
    %v6119 = vadd.f32 %v6070, %v6118
    %v6120 = vpop.f32.mrb[0].mxu0
    %6121 = vmatprep.mubr.bf16.mxu0 %v5967
    %6122 = vmatmul.mubr.bf16.gmra.mrb[0].mxu0 %v5966
    %v6123 = vpop.f32.mrb[0].mxu0
    %v6124 = vadd.f32 %v6075, %v6123
    %v6125 = vpop.f32.mrb[0].mxu0
    %v6126 = vpop.f32.mrb[0].mxu0
    %v6127 = vadd.f32 %v6078, %v6126
    %v6128 = vpop.f32.mrb[0].mxu0
    %6129 = vdwg.mxu0
    %6130 = vmatprep.subr.bf16.mxu0 0
    %6131 = vmatpush1.bf16.msra.mxu0 %v6003
    %6132 = vmatprep.subr.bf16.mxu0 0
    %6133 = vmatpush1.bf16.msra.mxu0 %v6004
    %6134 = vmatprep.subr.bf16.mxu0 0
    %6135 = vmatpush1.bf16.msra.mxu0 %v6005
    %6136 = vmatprep.subr.bf16.mxu0 0
    %6137 = vmatpush1.bf16.msra.mxu0 %v6006
    %6138 = vmatprep.subr.bf16.mxu0 0
    %6139 = vmatpush1.bf16.msra.mxu0 %v6007
    %6140 = vmatprep.subr.bf16.mxu0 0
    %6141 = vmatpush1.bf16.msra.mxu0 %v6008
    %6142 = vmatprep.subr.bf16.mxu0 0
    %6143 = vmatpush1.bf16.msra.mxu0 %v6009
    %6144 = vmatprep.subr.bf16.mxu0 0
    %6145 = vmatpush1.bf16.msra.mxu0 %v6010
    %6146 = vmatprep.subr.bf16.mxu0 0
    %6147 = vmatpush1.bf16.msra.mxu0 %v6011
    %6148 = vmatprep.subr.bf16.mxu0 0
    %6149 = vmatpush1.bf16.msra.mxu0 %v6012
    %6150 = vmatprep.subr.bf16.mxu0 0
    %6151 = vmatpush1.bf16.msra.mxu0 %v6013
    %6152 = vmatprep.subr.bf16.mxu0 0
    %6153 = vmatpush1.bf16.msra.mxu0 %v6014
    %6154 = vmatprep.subr.bf16.mxu0 0
    %6155 = vmatpush1.bf16.msra.mxu0 %v6015
    %6156 = vmatprep.subr.bf16.mxu0 0
    %6157 = vmatpush1.bf16.msra.mxu0 %v6016
    %6158 = vmatprep.subr.bf16.mxu0 0
    %6159 = vmatpush1.bf16.msra.mxu0 %v6017
    %6160 = vmatprep.subr.bf16.mxu0 0
    %6161 = vmatpush1.bf16.msra.mxu0 %v6018
    %6162 = vmatprep.mubr.bf16.mxu0 %v5962
    %6163 = vmatmul.mubr.bf16.gmra.mrb[0].mxu0 %v5961
    %v6164 = vpop.f32.mrb[0].mxu0
    %v6165 = vadd.f32 %v6116, %v6164
    %v6166 = vpop.f32.mrb[0].mxu0
    %v6167 = vpop.f32.mrb[0].mxu0
    %v6168 = vadd.f32 %v6119, %v6167
    %v6169 = vpop.f32.mrb[0].mxu0
    %6170 = vmatprep.mubr.bf16.mxu0 %v5969
    %6171 = vmatmul.mubr.bf16.gmra.mrb[0].mxu0 %v5968
    %v6172 = vpop.f32.mrb[0].mxu0
    %v6173 = vadd.f32 %v6124, %v6172
    %v6174 = vpop.f32.mrb[0].mxu0
    %v6175 = vpop.f32.mrb[0].mxu0
    %v6176 = vadd.f32 %v6127, %v6175
    %v6177 = vpop.f32.mrb[0].mxu0
    %6178 = vdwg.mxu0
    %6179 = vmatprep.subr.bf16.mxu0 0
    %6180 = vmatpush1.bf16.msra.mxu0 %v6019
    %6181 = vmatprep.subr.bf16.mxu0 0
    %6182 = vmatpush1.bf16.msra.mxu0 %v6020
    %6183 = vmatprep.subr.bf16.mxu0 0
    %6184 = vmatpush1.bf16.msra.mxu0 %v6021
    %6185 = vmatprep.subr.bf16.mxu0 0
    %6186 = vmatpush1.bf16.msra.mxu0 %v6022
    %6187 = vmatprep.subr.bf16.mxu0 0
    %6188 = vmatpush1.bf16.msra.mxu0 %v6023
    %6189 = vmatprep.subr.bf16.mxu0 0
    %6190 = vmatpush1.bf16.msra.mxu0 %v6024
    %6191 = vmatprep.subr.bf16.mxu0 0
    %6192 = vmatpush1.bf16.msra.mxu0 %v6025
    %6193 = vmatprep.subr.bf16.mxu0 0
    %6194 = vmatpush1.bf16.msra.mxu0 %v6026
    %6195 = vmatprep.subr.bf16.mxu0 0
    %6196 = vmatpush1.bf16.msra.mxu0 0
    %6197 = vmatprep.subr.bf16.mxu0 0
    %6198 = vmatpush1.bf16.msra.mxu0 0
    %6199 = vmatprep.subr.bf16.mxu0 0
    %6200 = vmatpush1.bf16.msra.mxu0 0
    %6201 = vmatprep.subr.bf16.mxu0 0
    %6202 = vmatpush1.bf16.msra.mxu0 0
    %6203 = vmatprep.subr.bf16.mxu0 0
    %6204 = vmatpush1.bf16.msra.mxu0 0
    %6205 = vmatprep.subr.bf16.mxu0 0
    %6206 = vmatpush1.bf16.msra.mxu0 0
    %6207 = vmatprep.subr.bf16.mxu0 0
    %6208 = vmatpush1.bf16.msra.mxu0 0
    %6209 = vmatprep.subr.bf16.mxu0 0
    %6210 = vmatpush1.bf16.msra.mxu0 0
    %6211 = vmatprep.mubr.bf16.mxu0 0
    %6212 = vmatmul.mubr.bf16.gmra.mrb[0].mxu0 %v5963
    %v6213 = vpop.f32.mrb[0].mxu0
    %v6214 = vadd.f32 %v6165, %v6213
    %v6215 = vpop.f32.mrb[0].mxu0
    %v6216 = vpop.f32.mrb[0].mxu0
    %v6217 = vadd.f32 %v6168, %v6216
    %v6218 = vpop.f32.mrb[0].mxu0
    %6219 = vmatprep.mubr.bf16.mxu0 0
    %6220 = vmatmul.mubr.bf16.gmra.mrb[0].mxu0 %v5970
    %v6221 = vpop.f32.mrb[0].mxu0
    %v6222 = vadd.f32 %v6173, %v6221
    %v6223 = vpop.f32.mrb[0].mxu0
    %v6224 = vpop.f32.mrb[0].mxu0
    %v6225 = vadd.f32 %v6176, %v6224
    %v6226 = vpop.f32.mrb[0].mxu0
    %6227 = vdwg.mxu0
    %v6228 = vmax.f32 %v6214, 0.0
    %v6229 = vmax.f32 %v6217, 0.0
    %v6230 = vmax.f32 %v6222, 0.0
    %v6231 = vmax.f32 %v6225, 0.0
    %v6232 = vpack.c.bf16 %v6229, %v6228
    %v6233 = vpack.c.bf16 %v6231, %v6230
    %6234 = vst [vmem:[#allocation2 + $0x8] sm:$0xff] %v6232
    %6235 = vst [vmem:[#allocation2 + $0x10] sm:$0xff] 0
    %6236 = vst [vmem:[#allocation2 + $0x58] sm:$0xff] %v6233
    %6237 = vst [vmem:[#allocation2 + $0x60] sm:$0xff] 0
    %v6238 = vld [vmem:[#allocation2] sm:$0x80]
    %v6239 = vld [vmem:[#allocation2 + $0x8] sm:$0x7f]
    %v6242 = vrot.slane %v6238, 7
    %v6243 = vrot.slane %v6239, 7
    %v6244 = vsel %vm454, %v6242, %v6243
    %6246 = vst [vmem:[#allocation3] sm:$0xff] %v6244
    %v6247 = vld [vmem:[#allocation2] sm:$0x80]
    %v6248 = vld [vmem:[#allocation2 + $0x8] sm:$0xff]
    %v6250 = vshrl.u32 %v6247, 16
    %v6252 = vrot.slane %v6250, 7
    %v6254 = vshrl.u32 %v6248, 16
    %v6256 = vrot.slane %v6254, 7
    %v6257 = vshll.u32 %v6248, 16
    %v6259 = vor.u32 %v6256, %v6257
    %v6260 = vsel %vm497, %v6252, %v6259
    %6262 = vst [vmem:[#allocation3 + $0x8] sm:$0xff] %v6260
    %v6263 = vld [vmem:[#allocation2 + $0x8] sm:$0xff]
    %6264 = vst [vmem:[#allocation3 + $0x10] sm:$0xff] %v6263
    %v6265 = vld [vmem:[#allocation2 + $0x8] sm:$0xff]
    %v6266 = vld [vmem:[#allocation2 + $0x10] sm:$0x1]
    %v6268 = vshrl.u32 %v6265, 16
    %v6270 = vshll.u32 %v6265, 16
    %v6272 = vrot.slane %v6270, 1
    %v6273 = vor.u32 %v6268, %v6272
    %v6275 = vshll.u32 %v6266, 16
    %v6277 = vrot.slane %v6275, 1
    %v6278 = vsel %vm607, %v6273, %v6277
    %6280 = vst [vmem:[#allocation3 + $0x18] sm:$0xff] %v6278
    %v6281 = vld [vmem:[#allocation2 + $0x8] sm:$0xfe]
    %v6282 = vld [vmem:[#allocation2 + $0x10] sm:$0x1]
    %v6285 = vrot.slane %v6281, 1
    %v6286 = vrot.slane %v6282, 1
    %v6287 = vsel %vm710, %v6285, %v6286
    %6289 = vst [vmem:[#allocation3 + $0x20] sm:$0xff] %v6287
    %v6290 = vld [vmem:[#allocation2 + $0x50] sm:$0x80]
    %v6291 = vld [vmem:[#allocation2 + $0x58] sm:$0x7f]
    %v6294 = vrot.slane %v6290, 7
    %v6295 = vrot.slane %v6291, 7
    %v6296 = vsel %vm454, %v6294, %v6295
    %6298 = vst [vmem:[#allocation3 + $0x38] sm:$0xff] %v6296
    %v6299 = vld [vmem:[#allocation2 + $0x50] sm:$0x80]
    %v6300 = vld [vmem:[#allocation2 + $0x58] sm:$0xff]
    %v6302 = vshrl.u32 %v6299, 16
    %v6304 = vrot.slane %v6302, 7
    %v6306 = vshrl.u32 %v6300, 16
    %v6308 = vrot.slane %v6306, 7
    %v6309 = vshll.u32 %v6300, 16
    %v6311 = vor.u32 %v6308, %v6309
    %v6312 = vsel %vm497, %v6304, %v6311
    %6314 = vst [vmem:[#allocation3 + $0x40] sm:$0xff] %v6312
    %v6315 = vld [vmem:[#allocation2 + $0x58] sm:$0xff]
    %6316 = vst [vmem:[#allocation3 + $0x48] sm:$0xff] %v6315
    %v6317 = vld [vmem:[#allocation2 + $0x58] sm:$0xff]
    %v6318 = vld [vmem:[#allocation2 + $0x60] sm:$0x1]
    %v6320 = vshrl.u32 %v6317, 16
    %v6322 = vshll.u32 %v6317, 16
    %v6324 = vrot.slane %v6322, 1
    %v6325 = vor.u32 %v6320, %v6324
    %v6327 = vshll.u32 %v6318, 16
    %v6329 = vrot.slane %v6327, 1
    %v6330 = vsel %vm607, %v6325, %v6329
    %6332 = vst [vmem:[#allocation3 + $0x50] sm:$0xff] %v6330
    %v6333 = vld [vmem:[#allocation2 + $0x58] sm:$0xfe]
    %v6334 = vld [vmem:[#allocation2 + $0x60] sm:$0x1]
    %v6337 = vrot.slane %v6333, 1
    %v6338 = vrot.slane %v6334, 1
    %v6339 = vsel %vm710, %v6337, %v6338
    %6341 = vst [vmem:[#allocation3 + $0x58] sm:$0xff] %v6339
    %v6342 = vld [vmem:[#allocation3] sm:$0xff]
    %v6343 = vld [vmem:[#allocation3 + $0x8] sm:$0xff]
    %v6344 = vld [vmem:[#allocation3 + $0x10] sm:$0xff]
    %v6345 = vld [vmem:[#allocation3 + $0x18] sm:$0xff]
    %v6346 = vld [vmem:[#allocation3 + $0x20] sm:$0xff]
    %v6347 = vld [vmem:[#allocation3 + $0x38] sm:$0xff]
    %v6348 = vld [vmem:[#allocation3 + $0x40] sm:$0xff]
    %v6349 = vld [vmem:[#allocation3 + $0x48] sm:$0xff]
    %v6350 = vld [vmem:[#allocation3 + $0x50] sm:$0xff]
    %v6351 = vld [vmem:[#allocation3 + $0x58] sm:$0xff]
    %v6352 = vld [vmem:[#allocation6 + $0x4c0] sm:$0xff]
    %v6353 = vld [vmem:[#allocation6 + $0x4c8] sm:$0xff]
    %v6354 = vld [vmem:[#allocation6 + $0x4d0] sm:$0xff]
    %v6355 = vld [vmem:[#allocation6 + $0x4d8] sm:$0xff]
    %v6356 = vld [vmem:[#allocation6 + $0x4e0] sm:$0xff]
    %v6357 = vld [vmem:[#allocation6 + $0x4e8] sm:$0xff]
    %v6358 = vld [vmem:[#allocation6 + $0x4f0] sm:$0xff]
    %v6359 = vld [vmem:[#allocation6 + $0x4f8] sm:$0xff]
    %v6360 = vld [vmem:[#allocation6 + $0x500] sm:$0xff]
    %v6361 = vld [vmem:[#allocation6 + $0x508] sm:$0xff]
    %v6362 = vld [vmem:[#allocation6 + $0x510] sm:$0xff]
    %v6363 = vld [vmem:[#allocation6 + $0x518] sm:$0xff]
    %v6364 = vld [vmem:[#allocation6 + $0x520] sm:$0xff]
    %v6365 = vld [vmem:[#allocation6 + $0x528] sm:$0xff]
    %v6366 = vld [vmem:[#allocation6 + $0x530] sm:$0xff]
    %v6367 = vld [vmem:[#allocation6 + $0x538] sm:$0xff]
    %v6368 = vld [vmem:[#allocation6 + $0x540] sm:$0xff]
    %v6369 = vld [vmem:[#allocation6 + $0x548] sm:$0xff]
    %v6370 = vld [vmem:[#allocation6 + $0x550] sm:$0xff]
    %v6371 = vld [vmem:[#allocation6 + $0x558] sm:$0xff]
    %v6372 = vld [vmem:[#allocation6 + $0x560] sm:$0xff]
    %v6373 = vld [vmem:[#allocation6 + $0x568] sm:$0xff]
    %v6374 = vld [vmem:[#allocation6 + $0x570] sm:$0xff]
    %v6375 = vld [vmem:[#allocation6 + $0x578] sm:$0xff]
    %v6376 = vld [vmem:[#allocation6 + $0x580] sm:$0xff]
    %v6377 = vld [vmem:[#allocation6 + $0x588] sm:$0xff]
    %v6378 = vld [vmem:[#allocation6 + $0x590] sm:$0xff]
    %v6379 = vld [vmem:[#allocation6 + $0x598] sm:$0xff]
    %v6380 = vld [vmem:[#allocation6 + $0x5a0] sm:$0xff]
    %v6381 = vld [vmem:[#allocation6 + $0x5a8] sm:$0xff]
    %v6382 = vld [vmem:[#allocation6 + $0x5b0] sm:$0xff]
    %v6383 = vld [vmem:[#allocation6 + $0x5b8] sm:$0xff]
    %v6384 = vld [vmem:[#allocation6 + $0x5c0] sm:$0xff]
    %v6385 = vld [vmem:[#allocation6 + $0x5c8] sm:$0xff]
    %v6386 = vld [vmem:[#allocation6 + $0x5d0] sm:$0xff]
    %v6387 = vld [vmem:[#allocation6 + $0x5d8] sm:$0xff]
    %v6388 = vld [vmem:[#allocation6 + $0x5e0] sm:$0xff]
    %v6389 = vld [vmem:[#allocation6 + $0x5e8] sm:$0xff]
    %v6390 = vld [vmem:[#allocation6 + $0x5f0] sm:$0xff]
    %v6391 = vld [vmem:[#allocation6 + $0x5f8] sm:$0xff]
    %v6392 = vld [vmem:[%s4 + $0x7] sm:$0x1]
    %v6393 = vlaneseq
    %v6394 = vshrl.u32 %v6393, 7
    %v6395 = vsub.s32 0, %v6394
    %v6396 = vrot.slane %v6392, %v6395
    %6397 = vmatprep.subr.bf16.mxu0 0
    %6398 = vmatpush1.bf16.msra.mxu0 %v6352
    %6399 = vmatprep.subr.bf16.mxu0 0
    %6400 = vmatpush1.bf16.msra.mxu0 %v6353
    %6401 = vmatprep.subr.bf16.mxu0 0
    %6402 = vmatpush1.bf16.msra.mxu0 %v6354
    %6403 = vmatprep.subr.bf16.mxu0 0
    %6404 = vmatpush1.bf16.msra.mxu0 %v6355
    %6405 = vmatprep.subr.bf16.mxu0 0
    %6406 = vmatpush1.bf16.msra.mxu0 %v6356
    %6407 = vmatprep.subr.bf16.mxu0 0
    %6408 = vmatpush1.bf16.msra.mxu0 %v6357
    %6409 = vmatprep.subr.bf16.mxu0 0
    %6410 = vmatpush1.bf16.msra.mxu0 %v6358
    %6411 = vmatprep.subr.bf16.mxu0 0
    %6412 = vmatpush1.bf16.msra.mxu0 %v6359
    %6413 = vmatprep.subr.bf16.mxu0 0
    %6414 = vmatpush1.bf16.msra.mxu0 %v6360
    %6415 = vmatprep.subr.bf16.mxu0 0
    %6416 = vmatpush1.bf16.msra.mxu0 %v6361
    %6417 = vmatprep.subr.bf16.mxu0 0
    %6418 = vmatpush1.bf16.msra.mxu0 %v6362
    %6419 = vmatprep.subr.bf16.mxu0 0
    %6420 = vmatpush1.bf16.msra.mxu0 %v6363
    %6421 = vmatprep.subr.bf16.mxu0 0
    %6422 = vmatpush1.bf16.msra.mxu0 %v6364
    %6423 = vmatprep.subr.bf16.mxu0 0
    %6424 = vmatpush1.bf16.msra.mxu0 %v6365
    %6425 = vmatprep.subr.bf16.mxu0 0
    %6426 = vmatpush1.bf16.msra.mxu0 %v6366
    %6427 = vmatprep.subr.bf16.mxu0 0
    %6428 = vmatpush1.bf16.msra.mxu0 %v6367
    %6429 = vmatprep.mubr.bf16.mxu0 %v6343
    %6430 = vmatmul.mubr.bf16.gmra.mrb[0].mxu0 %v6342
    %v6431 = vpop.f32.mrb[0].mxu0
    %v6432 = vadd.f32 %v6396, %v6431
    %v6433 = vpop.f32.mrb[0].mxu0
    %v6434 = vpop.f32.mrb[0].mxu0
    %v6435 = vadd.f32 %v6396, %v6434
    %v6436 = vpop.f32.mrb[0].mxu0
    %6437 = vmatprep.mubr.bf16.mxu0 %v6348
    %6438 = vmatmul.mubr.bf16.gmra.mrb[0].mxu0 %v6347
    %v6439 = vpop.f32.mrb[0].mxu0
    %v6440 = vadd.f32 %v6396, %v6439
    %v6441 = vpop.f32.mrb[0].mxu0
    %v6442 = vpop.f32.mrb[0].mxu0
    %v6443 = vadd.f32 %v6396, %v6442
    %v6444 = vpop.f32.mrb[0].mxu0
    %6445 = vdwg.mxu0
    %6446 = vmatprep.subr.bf16.mxu0 0
    %6447 = vmatpush1.bf16.msra.mxu0 %v6368
    %6448 = vmatprep.subr.bf16.mxu0 0
    %6449 = vmatpush1.bf16.msra.mxu0 %v6369
    %6450 = vmatprep.subr.bf16.mxu0 0
    %6451 = vmatpush1.bf16.msra.mxu0 %v6370
    %6452 = vmatprep.subr.bf16.mxu0 0
    %6453 = vmatpush1.bf16.msra.mxu0 %v6371
    %6454 = vmatprep.subr.bf16.mxu0 0
    %6455 = vmatpush1.bf16.msra.mxu0 %v6372
    %6456 = vmatprep.subr.bf16.mxu0 0
    %6457 = vmatpush1.bf16.msra.mxu0 %v6373
    %6458 = vmatprep.subr.bf16.mxu0 0
    %6459 = vmatpush1.bf16.msra.mxu0 %v6374
    %6460 = vmatprep.subr.bf16.mxu0 0
    %6461 = vmatpush1.bf16.msra.mxu0 %v6375
    %6462 = vmatprep.subr.bf16.mxu0 0
    %6463 = vmatpush1.bf16.msra.mxu0 %v6376
    %6464 = vmatprep.subr.bf16.mxu0 0
    %6465 = vmatpush1.bf16.msra.mxu0 %v6377
    %6466 = vmatprep.subr.bf16.mxu0 0
    %6467 = vmatpush1.bf16.msra.mxu0 %v6378
    %6468 = vmatprep.subr.bf16.mxu0 0
    %6469 = vmatpush1.bf16.msra.mxu0 %v6379
    %6470 = vmatprep.subr.bf16.mxu0 0
    %6471 = vmatpush1.bf16.msra.mxu0 %v6380
    %6472 = vmatprep.subr.bf16.mxu0 0
    %6473 = vmatpush1.bf16.msra.mxu0 %v6381
    %6474 = vmatprep.subr.bf16.mxu0 0
    %6475 = vmatpush1.bf16.msra.mxu0 %v6382
    %6476 = vmatprep.subr.bf16.mxu0 0
    %6477 = vmatpush1.bf16.msra.mxu0 %v6383
    %6478 = vmatprep.mubr.bf16.mxu0 %v6345
    %6479 = vmatmul.mubr.bf16.gmra.mrb[0].mxu0 %v6344
    %v6480 = vpop.f32.mrb[0].mxu0
    %v6481 = vadd.f32 %v6432, %v6480
    %v6482 = vpop.f32.mrb[0].mxu0
    %v6483 = vpop.f32.mrb[0].mxu0
    %v6484 = vadd.f32 %v6435, %v6483
    %v6485 = vpop.f32.mrb[0].mxu0
    %6486 = vmatprep.mubr.bf16.mxu0 %v6350
    %6487 = vmatmul.mubr.bf16.gmra.mrb[0].mxu0 %v6349
    %v6488 = vpop.f32.mrb[0].mxu0
    %v6489 = vadd.f32 %v6440, %v6488
    %v6490 = vpop.f32.mrb[0].mxu0
    %v6491 = vpop.f32.mrb[0].mxu0
    %v6492 = vadd.f32 %v6443, %v6491
    %v6493 = vpop.f32.mrb[0].mxu0
    %6494 = vdwg.mxu0
    %6495 = vmatprep.subr.bf16.mxu0 0
    %6496 = vmatpush1.bf16.msra.mxu0 %v6384
    %6497 = vmatprep.subr.bf16.mxu0 0
    %6498 = vmatpush1.bf16.msra.mxu0 %v6385
    %6499 = vmatprep.subr.bf16.mxu0 0
    %6500 = vmatpush1.bf16.msra.mxu0 %v6386
    %6501 = vmatprep.subr.bf16.mxu0 0
    %6502 = vmatpush1.bf16.msra.mxu0 %v6387
    %6503 = vmatprep.subr.bf16.mxu0 0
    %6504 = vmatpush1.bf16.msra.mxu0 %v6388
    %6505 = vmatprep.subr.bf16.mxu0 0
    %6506 = vmatpush1.bf16.msra.mxu0 %v6389
    %6507 = vmatprep.subr.bf16.mxu0 0
    %6508 = vmatpush1.bf16.msra.mxu0 %v6390
    %6509 = vmatprep.subr.bf16.mxu0 0
    %6510 = vmatpush1.bf16.msra.mxu0 %v6391
    %6511 = vmatprep.subr.bf16.mxu0 0
    %6512 = vmatpush1.bf16.msra.mxu0 0
    %6513 = vmatprep.subr.bf16.mxu0 0
    %6514 = vmatpush1.bf16.msra.mxu0 0
    %6515 = vmatprep.subr.bf16.mxu0 0
    %6516 = vmatpush1.bf16.msra.mxu0 0
    %6517 = vmatprep.subr.bf16.mxu0 0
    %6518 = vmatpush1.bf16.msra.mxu0 0
    %6519 = vmatprep.subr.bf16.mxu0 0
    %6520 = vmatpush1.bf16.msra.mxu0 0
    %6521 = vmatprep.subr.bf16.mxu0 0
    %6522 = vmatpush1.bf16.msra.mxu0 0
    %6523 = vmatprep.subr.bf16.mxu0 0
    %6524 = vmatpush1.bf16.msra.mxu0 0
    %6525 = vmatprep.subr.bf16.mxu0 0
    %6526 = vmatpush1.bf16.msra.mxu0 0
    %6527 = vmatprep.mubr.bf16.mxu0 0
    %6528 = vmatmul.mubr.bf16.gmra.mrb[0].mxu0 %v6346
    %v6529 = vpop.f32.mrb[0].mxu0
    %v6530 = vadd.f32 %v6481, %v6529
    %v6531 = vpop.f32.mrb[0].mxu0
    %v6532 = vpop.f32.mrb[0].mxu0
    %v6533 = vadd.f32 %v6484, %v6532
    %v6534 = vpop.f32.mrb[0].mxu0
    %6535 = vmatprep.mubr.bf16.mxu0 0
    %6536 = vmatmul.mubr.bf16.gmra.mrb[0].mxu0 %v6351
    %v6537 = vpop.f32.mrb[0].mxu0
    %v6538 = vadd.f32 %v6489, %v6537
    %v6539 = vpop.f32.mrb[0].mxu0
    %v6540 = vpop.f32.mrb[0].mxu0
    %v6541 = vadd.f32 %v6492, %v6540
    %v6542 = vpop.f32.mrb[0].mxu0
    %6543 = vdwg.mxu0
    %v6544 = vmax.f32 %v6530, 0.0
    %v6545 = vmax.f32 %v6533, 0.0
    %v6546 = vmax.f32 %v6538, 0.0
    %v6547 = vmax.f32 %v6541, 0.0
    %6548 = vst [vmem:[#allocation4] sm:$0xff] %v6544
    %6549 = vst [vmem:[#allocation4 + $0x8] sm:$0xff] %v6545
    %6550 = vst [vmem:[#allocation4 + $0x10] sm:$0xff] %v6546
    %6551 = vst [vmem:[#allocation4 + $0x18] sm:$0xff] %v6547
    %v6552 = vld [vmem:[#allocation4] sm:$0x1]
    %v6553 = vld [vmem:[#allocation4 + $0x1] sm:$0x1]
    %v6554 = vmax.f32 %v6552, %v6553
    %6555 = vst [vmem:[#allocation5] sm:$0x1] %v6554
    %v6556 = vld [vmem:[#allocation4 + $0x2] sm:$0x1]
    %v6557 = vld [vmem:[#allocation4 + $0x3] sm:$0x1]
    %v6558 = vmax.f32 %v6556, %v6557
    %6559 = vst [vmem:[#allocation5 + $0x8] sm:$0x1] %v6558
    %v6560 = vld [vmem:[#allocation4 + $0x4] sm:$0x1]
    %v6561 = vld [vmem:[#allocation4 + $0x5] sm:$0x1]
    %v6562 = vmax.f32 %v6560, %v6561
    %6563 = vst [vmem:[#allocation5 + $0x10] sm:$0x1] %v6562
    %v6564 = vld [vmem:[#allocation4 + $0x6] sm:$0x1]
    %v6565 = vld [vmem:[#allocation4 + $0x7] sm:$0x1]
    %v6566 = vmax.f32 %v6564, %v6565
    %6567 = vst [vmem:[#allocation5 + $0x18] sm:$0x1] %v6566
    %v6568 = vld [vmem:[#allocation4 + $0x8] sm:$0x1]
    %v6569 = vld [vmem:[#allocation4 + $0x9] sm:$0x1]
    %v6570 = vmax.f32 %v6568, %v6569
    %6571 = vst [vmem:[#allocation5 + $0x20] sm:$0x1] %v6570
    %v6572 = vld [vmem:[#allocation4 + $0xa] sm:$0x1]
    %v6573 = vld [vmem:[#allocation4 + $0xb] sm:$0x1]
    %v6574 = vmax.f32 %v6572, %v6573
    %6575 = vst [vmem:[#allocation5 + $0x28] sm:$0x1] %v6574
    %v6576 = vld [vmem:[#allocation4 + $0xc] sm:$0x1]
    %v6577 = vld [vmem:[#allocation4 + $0xd] sm:$0x1]
    %v6578 = vmax.f32 %v6576, %v6577
    %6579 = vst [vmem:[#allocation5 + $0x30] sm:$0x1] %v6578
    %v6580 = vld [vmem:[#allocation4 + $0xe] sm:$0x1]
    %v6581 = vld [vmem:[#allocation4 + $0xf] sm:$0x1]
    %v6582 = vmax.f32 %v6580, %v6581
    %6583 = vst [vmem:[#allocation5 + $0x38] sm:$0x1] %v6582
    %v6584 = vld [vmem:[#allocation4 + $0x10] sm:$0x1]
    %v6585 = vld [vmem:[#allocation4 + $0x11] sm:$0x1]
    %v6586 = vmax.f32 %v6584, %v6585
    %6587 = vst [vmem:[#allocation5 + $0x1] sm:$0x1] %v6586
    %v6588 = vld [vmem:[#allocation4 + $0x12] sm:$0x1]
    %v6589 = vld [vmem:[#allocation4 + $0x13] sm:$0x1]
    %v6590 = vmax.f32 %v6588, %v6589
    %6591 = vst [vmem:[#allocation5 + $0x9] sm:$0x1] %v6590
    %v6592 = vld [vmem:[#allocation4 + $0x14] sm:$0x1]
    %v6593 = vld [vmem:[#allocation4 + $0x15] sm:$0x1]
    %v6594 = vmax.f32 %v6592, %v6593
    %6595 = vst [vmem:[#allocation5 + $0x11] sm:$0x1] %v6594
    %v6596 = vld [vmem:[#allocation4 + $0x16] sm:$0x1]
    %v6597 = vld [vmem:[#allocation4 + $0x17] sm:$0x1]
    %v6598 = vmax.f32 %v6596, %v6597
    %6599 = vst [vmem:[#allocation5 + $0x19] sm:$0x1] %v6598
    %v6600 = vld [vmem:[#allocation4 + $0x18] sm:$0x1]
    %v6601 = vld [vmem:[#allocation4 + $0x19] sm:$0x1]
    %v6602 = vmax.f32 %v6600, %v6601
    %6603 = vst [vmem:[#allocation5 + $0x21] sm:$0x1] %v6602
    %v6604 = vld [vmem:[#allocation4 + $0x1a] sm:$0x1]
    %v6605 = vld [vmem:[#allocation4 + $0x1b] sm:$0x1]
    %v6606 = vmax.f32 %v6604, %v6605
    %6607 = vst [vmem:[#allocation5 + $0x29] sm:$0x1] %v6606
    %v6608 = vld [vmem:[#allocation4 + $0x1c] sm:$0x1]
    %v6609 = vld [vmem:[#allocation4 + $0x1d] sm:$0x1]
    %v6610 = vmax.f32 %v6608, %v6609
    %6611 = vst [vmem:[#allocation5 + $0x31] sm:$0x1] %v6610
    %v6612 = vld [vmem:[#allocation4 + $0x1e] sm:$0x1]
    %v6613 = vld [vmem:[#allocation4 + $0x1f] sm:$0x1]
    %v6614 = vmax.f32 %v6612, %v6613
    %6615 = vst [vmem:[#allocation5 + $0x39] sm:$0x1] %v6614
    %s6616 = smul.u32 4, 128
    %s6617 = smul.u32 %s6616, 2
    %s6618 = sshll.u32 %s6617, 4
    %6619 = dma.done %s61, %s6618
    %v6620 = vld [vmem:[#allocation5] sm:$0x3]
    %v6621 = vld [vmem:[#allocation5 + $0x8] sm:$0x3]
    %v6622 = vld [vmem:[#allocation5 + $0x10] sm:$0x3]
    %v6623 = vld [vmem:[#allocation5 + $0x18] sm:$0x3]
    %v6624 = vld [vmem:[#allocation5 + $0x20] sm:$0x3]
    %v6625 = vld [vmem:[#allocation5 + $0x28] sm:$0x3]
    %v6626 = vld [vmem:[#allocation5 + $0x30] sm:$0x3]
    %v6627 = vld [vmem:[#allocation5 + $0x38] sm:$0x3]
    %v6628 = vpack.c.bf16 %v6620, %v6620
    %v6629 = vpack.c.bf16 %v6621, %v6621
    %v6630 = vpack.c.bf16 %v6622, %v6622
    %v6631 = vpack.c.bf16 %v6623, %v6623
    %v6632 = vpack.c.bf16 %v6624, %v6624
    %v6633 = vpack.c.bf16 %v6625, %v6625
    %v6634 = vpack.c.bf16 %v6626, %v6626
    %v6635 = vpack.c.bf16 %v6627, %v6627
    %v6636 = vld [vmem:[#allocation7] sm:$0xff]
    %v6637 = vld [vmem:[#allocation7 + $0x8] sm:$0xff]
    %v6638 = vld [vmem:[#allocation7 + $0x10] sm:$0xff]
    %v6639 = vld [vmem:[#allocation7 + $0x18] sm:$0xff]
    %v6640 = vld [vmem:[#allocation7 + $0x20] sm:$0xff]
    %v6641 = vld [vmem:[#allocation7 + $0x28] sm:$0xff]
    %v6642 = vld [vmem:[#allocation7 + $0x30] sm:$0xff]
    %v6643 = vld [vmem:[#allocation7 + $0x38] sm:$0xff]
    %v6644 = vld [vmem:[#allocation7 + $0x40] sm:$0xff]
    %v6645 = vld [vmem:[#allocation7 + $0x48] sm:$0xff]
    %v6646 = vld [vmem:[#allocation7 + $0x50] sm:$0xff]
    %v6647 = vld [vmem:[#allocation7 + $0x58] sm:$0xff]
    %v6648 = vld [vmem:[#allocation7 + $0x60] sm:$0xff]
    %v6649 = vld [vmem:[#allocation7 + $0x68] sm:$0xff]
    %v6650 = vld [vmem:[#allocation7 + $0x70] sm:$0xff]
    %v6651 = vld [vmem:[#allocation7 + $0x78] sm:$0xff]
    %v6652 = vld [vmem:[#allocation7 + $0x80] sm:$0xff]
    %v6653 = vld [vmem:[#allocation7 + $0x88] sm:$0xff]
    %v6654 = vld [vmem:[#allocation7 + $0x90] sm:$0xff]
    %v6655 = vld [vmem:[#allocation7 + $0x98] sm:$0xff]
    %v6656 = vld [vmem:[#allocation7 + $0xa0] sm:$0xff]
    %v6657 = vld [vmem:[#allocation7 + $0xa8] sm:$0xff]
    %v6658 = vld [vmem:[#allocation7 + $0xb0] sm:$0xff]
    %v6659 = vld [vmem:[#allocation7 + $0xb8] sm:$0xff]
    %v6660 = vld [vmem:[#allocation7 + $0xc0] sm:$0xff]
    %v6661 = vld [vmem:[#allocation7 + $0xc8] sm:$0xff]
    %v6662 = vld [vmem:[#allocation7 + $0xd0] sm:$0xff]
    %v6663 = vld [vmem:[#allocation7 + $0xd8] sm:$0xff]
    %v6664 = vld [vmem:[#allocation7 + $0xe0] sm:$0xff]
    %v6665 = vld [vmem:[#allocation7 + $0xe8] sm:$0xff]
    %v6666 = vld [vmem:[#allocation7 + $0xf0] sm:$0xff]
    %v6667 = vld [vmem:[#allocation7 + $0xf8] sm:$0xff]
    %v6668 = vld [vmem:[#allocation7 + $0x100] sm:$0xff]
    %v6669 = vld [vmem:[#allocation7 + $0x108] sm:$0xff]
    %v6670 = vld [vmem:[#allocation7 + $0x110] sm:$0xff]
    %v6671 = vld [vmem:[#allocation7 + $0x118] sm:$0xff]
    %v6672 = vld [vmem:[#allocation7 + $0x120] sm:$0xff]
    %v6673 = vld [vmem:[#allocation7 + $0x128] sm:$0xff]
    %v6674 = vld [vmem:[#allocation7 + $0x130] sm:$0xff]
    %v6675 = vld [vmem:[#allocation7 + $0x138] sm:$0xff]
    %v6676 = vld [vmem:[#allocation7 + $0x140] sm:$0xff]
    %v6677 = vld [vmem:[#allocation7 + $0x148] sm:$0xff]
    %v6678 = vld [vmem:[#allocation7 + $0x150] sm:$0xff]
    %v6679 = vld [vmem:[#allocation7 + $0x158] sm:$0xff]
    %v6680 = vld [vmem:[#allocation7 + $0x160] sm:$0xff]
    %v6681 = vld [vmem:[#allocation7 + $0x168] sm:$0xff]
    %v6682 = vld [vmem:[#allocation7 + $0x170] sm:$0xff]
    %v6683 = vld [vmem:[#allocation7 + $0x178] sm:$0xff]
    %v6684 = vld [vmem:[#allocation7 + $0x180] sm:$0xff]
    %v6685 = vld [vmem:[#allocation7 + $0x188] sm:$0xff]
    %v6686 = vld [vmem:[#allocation7 + $0x190] sm:$0xff]
    %v6687 = vld [vmem:[#allocation7 + $0x198] sm:$0xff]
    %v6688 = vld [vmem:[#allocation7 + $0x1a0] sm:$0xff]
    %v6689 = vld [vmem:[#allocation7 + $0x1a8] sm:$0xff]
    %v6690 = vld [vmem:[#allocation7 + $0x1b0] sm:$0xff]
    %v6691 = vld [vmem:[#allocation7 + $0x1b8] sm:$0xff]
    %v6692 = vld [vmem:[#allocation7 + $0x1c0] sm:$0xff]
    %v6693 = vld [vmem:[#allocation7 + $0x1c8] sm:$0xff]
    %v6694 = vld [vmem:[#allocation7 + $0x1d0] sm:$0xff]
    %v6695 = vld [vmem:[#allocation7 + $0x1d8] sm:$0xff]
    %v6696 = vld [vmem:[#allocation7 + $0x1e0] sm:$0xff]
    %v6697 = vld [vmem:[#allocation7 + $0x1e8] sm:$0xff]
    %v6698 = vld [vmem:[#allocation7 + $0x1f0] sm:$0xff]
    %v6699 = vld [vmem:[#allocation7 + $0x1f8] sm:$0xff]
    %v6700 = vld [vmem:[#allocation7 + $0x200] sm:$0xff]
    %v6701 = vld [vmem:[#allocation7 + $0x208] sm:$0xff]
    %v6702 = vld [vmem:[#allocation7 + $0x210] sm:$0xff]
    %v6703 = vld [vmem:[#allocation7 + $0x218] sm:$0xff]
    %v6704 = vld [vmem:[#allocation7 + $0x220] sm:$0xff]
    %v6705 = vld [vmem:[#allocation7 + $0x228] sm:$0xff]
    %v6706 = vld [vmem:[#allocation7 + $0x230] sm:$0xff]
    %v6707 = vld [vmem:[#allocation7 + $0x238] sm:$0xff]
    %v6708 = vld [vmem:[#allocation7 + $0x240] sm:$0xff]
    %v6709 = vld [vmem:[#allocation7 + $0x248] sm:$0xff]
    %v6710 = vld [vmem:[#allocation7 + $0x250] sm:$0xff]
    %v6711 = vld [vmem:[#allocation7 + $0x258] sm:$0xff]
    %v6712 = vld [vmem:[#allocation7 + $0x260] sm:$0xff]
    %v6713 = vld [vmem:[#allocation7 + $0x268] sm:$0xff]
    %v6714 = vld [vmem:[#allocation7 + $0x270] sm:$0xff]
    %v6715 = vld [vmem:[#allocation7 + $0x278] sm:$0xff]
    %v6716 = vld [vmem:[#allocation7 + $0x280] sm:$0xff]
    %v6717 = vld [vmem:[#allocation7 + $0x288] sm:$0xff]
    %v6718 = vld [vmem:[#allocation7 + $0x290] sm:$0xff]
    %v6719 = vld [vmem:[#allocation7 + $0x298] sm:$0xff]
    %v6720 = vld [vmem:[#allocation7 + $0x2a0] sm:$0xff]
    %v6721 = vld [vmem:[#allocation7 + $0x2a8] sm:$0xff]
    %v6722 = vld [vmem:[#allocation7 + $0x2b0] sm:$0xff]
    %v6723 = vld [vmem:[#allocation7 + $0x2b8] sm:$0xff]
    %v6724 = vld [vmem:[#allocation7 + $0x2c0] sm:$0xff]
    %v6725 = vld [vmem:[#allocation7 + $0x2c8] sm:$0xff]
    %v6726 = vld [vmem:[#allocation7 + $0x2d0] sm:$0xff]
    %v6727 = vld [vmem:[#allocation7 + $0x2d8] sm:$0xff]
    %v6728 = vld [vmem:[#allocation7 + $0x2e0] sm:$0xff]
    %v6729 = vld [vmem:[#allocation7 + $0x2e8] sm:$0xff]
    %v6730 = vld [vmem:[#allocation7 + $0x2f0] sm:$0xff]
    %v6731 = vld [vmem:[#allocation7 + $0x2f8] sm:$0xff]
    %v6732 = vld [vmem:[#allocation7 + $0x300] sm:$0xff]
    %v6733 = vld [vmem:[#allocation7 + $0x308] sm:$0xff]
    %v6734 = vld [vmem:[#allocation7 + $0x310] sm:$0xff]
    %v6735 = vld [vmem:[#allocation7 + $0x318] sm:$0xff]
    %v6736 = vld [vmem:[#allocation7 + $0x320] sm:$0xff]
    %v6737 = vld [vmem:[#allocation7 + $0x328] sm:$0xff]
    %v6738 = vld [vmem:[#allocation7 + $0x330] sm:$0xff]
    %v6739 = vld [vmem:[#allocation7 + $0x338] sm:$0xff]
    %v6740 = vld [vmem:[#allocation7 + $0x340] sm:$0xff]
    %v6741 = vld [vmem:[#allocation7 + $0x348] sm:$0xff]
    %v6742 = vld [vmem:[#allocation7 + $0x350] sm:$0xff]
    %v6743 = vld [vmem:[#allocation7 + $0x358] sm:$0xff]
    %v6744 = vld [vmem:[#allocation7 + $0x360] sm:$0xff]
    %v6745 = vld [vmem:[#allocation7 + $0x368] sm:$0xff]
    %v6746 = vld [vmem:[#allocation7 + $0x370] sm:$0xff]
    %v6747 = vld [vmem:[#allocation7 + $0x378] sm:$0xff]
    %v6748 = vld [vmem:[#allocation7 + $0x380] sm:$0xff]
    %v6749 = vld [vmem:[#allocation7 + $0x388] sm:$0xff]
    %v6750 = vld [vmem:[#allocation7 + $0x390] sm:$0xff]
    %v6751 = vld [vmem:[#allocation7 + $0x398] sm:$0xff]
    %v6752 = vld [vmem:[#allocation7 + $0x3a0] sm:$0xff]
    %v6753 = vld [vmem:[#allocation7 + $0x3a8] sm:$0xff]
    %v6754 = vld [vmem:[#allocation7 + $0x3b0] sm:$0xff]
    %v6755 = vld [vmem:[#allocation7 + $0x3b8] sm:$0xff]
    %v6756 = vld [vmem:[#allocation7 + $0x3c0] sm:$0xff]
    %v6757 = vld [vmem:[#allocation7 + $0x3c8] sm:$0xff]
    %v6758 = vld [vmem:[#allocation7 + $0x3d0] sm:$0xff]
    %v6759 = vld [vmem:[#allocation7 + $0x3d8] sm:$0xff]
    %v6760 = vld [vmem:[#allocation7 + $0x3e0] sm:$0xff]
    %v6761 = vld [vmem:[#allocation7 + $0x3e8] sm:$0xff]
    %v6762 = vld [vmem:[#allocation7 + $0x3f0] sm:$0xff]
    %v6763 = vld [vmem:[#allocation7 + $0x3f8] sm:$0xff]
    %v6764 = vld [vmem:[%s6] sm:$0x3]
    %v6766 = vlaneseq
    %v6767 = vshrl.u32 %v6766, 7
    %v6768 = vsub.s32 0, %v6767
    %v6769 = vrot.slane %v6764, %v6768
    %v6770 = vlaneseq
    %v6771 = vshrl.u32 %v6770, 7
    %v6772 = vsub.s32 1, %v6771
    %v6773 = vrot.slane %v6764, %v6772
    %6776 = vmatprep.subr.bf16.mxu0 %v6637
    %6777 = vmatpush1.bf16.msra.mxu0 %v6636
    %6778 = vmatprep.subr.bf16.mxu0 %v6639
    %6779 = vmatpush1.bf16.msra.mxu0 %v6638
    %6780 = vmatprep.subr.bf16.mxu0 %v6641
    %6781 = vmatpush1.bf16.msra.mxu0 %v6640
    %6782 = vmatprep.subr.bf16.mxu0 %v6643
    %6783 = vmatpush1.bf16.msra.mxu0 %v6642
    %6784 = vmatprep.subr.bf16.mxu0 %v6645
    %6785 = vmatpush1.bf16.msra.mxu0 %v6644
    %6786 = vmatprep.subr.bf16.mxu0 %v6647
    %6787 = vmatpush1.bf16.msra.mxu0 %v6646
    %6788 = vmatprep.subr.bf16.mxu0 %v6649
    %6789 = vmatpush1.bf16.msra.mxu0 %v6648
    %6790 = vmatprep.subr.bf16.mxu0 %v6651
    %6791 = vmatpush1.bf16.msra.mxu0 %v6650
    %6792 = vmatprep.subr.bf16.mxu0 %v6653
    %6793 = vmatpush1.bf16.msra.mxu0 %v6652
    %6794 = vmatprep.subr.bf16.mxu0 %v6655
    %6795 = vmatpush1.bf16.msra.mxu0 %v6654
    %6796 = vmatprep.subr.bf16.mxu0 %v6657
    %6797 = vmatpush1.bf16.msra.mxu0 %v6656
    %6798 = vmatprep.subr.bf16.mxu0 %v6659
    %6799 = vmatpush1.bf16.msra.mxu0 %v6658
    %6800 = vmatprep.subr.bf16.mxu0 %v6661
    %6801 = vmatpush1.bf16.msra.mxu0 %v6660
    %6802 = vmatprep.subr.bf16.mxu0 %v6663
    %6803 = vmatpush1.bf16.msra.mxu0 %v6662
    %6804 = vmatprep.subr.bf16.mxu0 %v6665
    %6805 = vmatpush1.bf16.msra.mxu0 %v6664
    %6806 = vmatprep.subr.bf16.mxu0 %v6667
    %6807 = vmatpush1.bf16.msra.mxu0 %v6666
    %6808 = vmatprep.mubr.bf16.mxu0 %v6629
    %6809 = vmatmul.mubr.bf16.gmra.mrb[0].mxu0 %v6628
    %v6810 = vpop.f32.mrb[0].mxu0
    %v6811 = vadd.f32 %v6769, %v6810
    %v6812 = vpop.f32.mrb[0].mxu0
    %v6813 = vadd.f32 %v6773, %v6812
    %v6814 = vpop.f32.mrb[0].mxu0
    %v6815 = vpop.f32.mrb[0].mxu0
    %6816 = vdwg.mxu0
    %6817 = vmatprep.subr.bf16.mxu0 %v6669
    %6818 = vmatpush1.bf16.msra.mxu0 %v6668
    %6819 = vmatprep.subr.bf16.mxu0 %v6671
    %6820 = vmatpush1.bf16.msra.mxu0 %v6670
    %6821 = vmatprep.subr.bf16.mxu0 %v6673
    %6822 = vmatpush1.bf16.msra.mxu0 %v6672
    %6823 = vmatprep.subr.bf16.mxu0 %v6675
    %6824 = vmatpush1.bf16.msra.mxu0 %v6674
    %6825 = vmatprep.subr.bf16.mxu0 %v6677
    %6826 = vmatpush1.bf16.msra.mxu0 %v6676
    %6827 = vmatprep.subr.bf16.mxu0 %v6679
    %6828 = vmatpush1.bf16.msra.mxu0 %v6678
    %6829 = vmatprep.subr.bf16.mxu0 %v6681
    %6830 = vmatpush1.bf16.msra.mxu0 %v6680
    %6831 = vmatprep.subr.bf16.mxu0 %v6683
    %6832 = vmatpush1.bf16.msra.mxu0 %v6682
    %6833 = vmatprep.subr.bf16.mxu0 %v6685
    %6834 = vmatpush1.bf16.msra.mxu0 %v6684
    %6835 = vmatprep.subr.bf16.mxu0 %v6687
    %6836 = vmatpush1.bf16.msra.mxu0 %v6686
    %6837 = vmatprep.subr.bf16.mxu0 %v6689
    %6838 = vmatpush1.bf16.msra.mxu0 %v6688
    %6839 = vmatprep.subr.bf16.mxu0 %v6691
    %6840 = vmatpush1.bf16.msra.mxu0 %v6690
    %6841 = vmatprep.subr.bf16.mxu0 %v6693
    %6842 = vmatpush1.bf16.msra.mxu0 %v6692
    %6843 = vmatprep.subr.bf16.mxu0 %v6695
    %6844 = vmatpush1.bf16.msra.mxu0 %v6694
    %6845 = vmatprep.subr.bf16.mxu0 %v6697
    %6846 = vmatpush1.bf16.msra.mxu0 %v6696
    %6847 = vmatprep.subr.bf16.mxu0 %v6699
    %6848 = vmatpush1.bf16.msra.mxu0 %v6698
    %6849 = vmatprep.mubr.bf16.mxu0 %v6631
    %6850 = vmatmul.mubr.bf16.gmra.mrb[0].mxu0 %v6630
    %v6851 = vpop.f32.mrb[0].mxu0
    %v6852 = vadd.f32 %v6811, %v6851
    %v6853 = vpop.f32.mrb[0].mxu0
    %v6854 = vadd.f32 %v6813, %v6853
    %v6855 = vpop.f32.mrb[0].mxu0
    %v6856 = vpop.f32.mrb[0].mxu0
    %6857 = vdwg.mxu0
    %6858 = vmatprep.subr.bf16.mxu0 %v6701
    %6859 = vmatpush1.bf16.msra.mxu0 %v6700
    %6860 = vmatprep.subr.bf16.mxu0 %v6703
    %6861 = vmatpush1.bf16.msra.mxu0 %v6702
    %6862 = vmatprep.subr.bf16.mxu0 %v6705
    %6863 = vmatpush1.bf16.msra.mxu0 %v6704
    %6864 = vmatprep.subr.bf16.mxu0 %v6707
    %6865 = vmatpush1.bf16.msra.mxu0 %v6706
    %6866 = vmatprep.subr.bf16.mxu0 %v6709
    %6867 = vmatpush1.bf16.msra.mxu0 %v6708
    %6868 = vmatprep.subr.bf16.mxu0 %v6711
    %6869 = vmatpush1.bf16.msra.mxu0 %v6710
    %6870 = vmatprep.subr.bf16.mxu0 %v6713
    %6871 = vmatpush1.bf16.msra.mxu0 %v6712
    %6872 = vmatprep.subr.bf16.mxu0 %v6715
    %6873 = vmatpush1.bf16.msra.mxu0 %v6714
    %6874 = vmatprep.subr.bf16.mxu0 %v6717
    %6875 = vmatpush1.bf16.msra.mxu0 %v6716
    %6876 = vmatprep.subr.bf16.mxu0 %v6719
    %6877 = vmatpush1.bf16.msra.mxu0 %v6718
    %6878 = vmatprep.subr.bf16.mxu0 %v6721
    %6879 = vmatpush1.bf16.msra.mxu0 %v6720
    %6880 = vmatprep.subr.bf16.mxu0 %v6723
    %6881 = vmatpush1.bf16.msra.mxu0 %v6722
    %6882 = vmatprep.subr.bf16.mxu0 %v6725
    %6883 = vmatpush1.bf16.msra.mxu0 %v6724
    %6884 = vmatprep.subr.bf16.mxu0 %v6727
    %6885 = vmatpush1.bf16.msra.mxu0 %v6726
    %6886 = vmatprep.subr.bf16.mxu0 %v6729
    %6887 = vmatpush1.bf16.msra.mxu0 %v6728
    %6888 = vmatprep.subr.bf16.mxu0 %v6731
    %6889 = vmatpush1.bf16.msra.mxu0 %v6730
    %6890 = vmatprep.mubr.bf16.mxu0 %v6633
    %6891 = vmatmul.mubr.bf16.gmra.mrb[0].mxu0 %v6632
    %v6892 = vpop.f32.mrb[0].mxu0
    %v6893 = vadd.f32 %v6852, %v6892
    %v6894 = vpop.f32.mrb[0].mxu0
    %v6895 = vadd.f32 %v6854, %v6894
    %v6896 = vpop.f32.mrb[0].mxu0
    %v6897 = vpop.f32.mrb[0].mxu0
    %6898 = vdwg.mxu0
    %6899 = vmatprep.subr.bf16.mxu0 %v6733
    %6900 = vmatpush1.bf16.msra.mxu0 %v6732
    %6901 = vmatprep.subr.bf16.mxu0 %v6735
    %6902 = vmatpush1.bf16.msra.mxu0 %v6734
    %6903 = vmatprep.subr.bf16.mxu0 %v6737
    %6904 = vmatpush1.bf16.msra.mxu0 %v6736
    %6905 = vmatprep.subr.bf16.mxu0 %v6739
    %6906 = vmatpush1.bf16.msra.mxu0 %v6738
    %6907 = vmatprep.subr.bf16.mxu0 %v6741
    %6908 = vmatpush1.bf16.msra.mxu0 %v6740
    %6909 = vmatprep.subr.bf16.mxu0 %v6743
    %6910 = vmatpush1.bf16.msra.mxu0 %v6742
    %6911 = vmatprep.subr.bf16.mxu0 %v6745
    %6912 = vmatpush1.bf16.msra.mxu0 %v6744
    %6913 = vmatprep.subr.bf16.mxu0 %v6747
    %6914 = vmatpush1.bf16.msra.mxu0 %v6746
    %6915 = vmatprep.subr.bf16.mxu0 %v6749
    %6916 = vmatpush1.bf16.msra.mxu0 %v6748
    %6917 = vmatprep.subr.bf16.mxu0 %v6751
    %6918 = vmatpush1.bf16.msra.mxu0 %v6750
    %6919 = vmatprep.subr.bf16.mxu0 %v6753
    %6920 = vmatpush1.bf16.msra.mxu0 %v6752
    %6921 = vmatprep.subr.bf16.mxu0 %v6755
    %6922 = vmatpush1.bf16.msra.mxu0 %v6754
    %6923 = vmatprep.subr.bf16.mxu0 %v6757
    %6924 = vmatpush1.bf16.msra.mxu0 %v6756
    %6925 = vmatprep.subr.bf16.mxu0 %v6759
    %6926 = vmatpush1.bf16.msra.mxu0 %v6758
    %6927 = vmatprep.subr.bf16.mxu0 %v6761
    %6928 = vmatpush1.bf16.msra.mxu0 %v6760
    %6929 = vmatprep.subr.bf16.mxu0 %v6763
    %6930 = vmatpush1.bf16.msra.mxu0 %v6762
    %6931 = vmatprep.mubr.bf16.mxu0 %v6635
    %6932 = vmatmul.mubr.bf16.gmra.mrb[0].mxu0 %v6634
    %v6933 = vpop.f32.mrb[0].mxu0
    %v6934 = vadd.f32 %v6893, %v6933
    %v6935 = vpop.f32.mrb[0].mxu0
    %v6936 = vadd.f32 %v6895, %v6935
    %v6937 = vpop.f32.mrb[0].mxu0
    %v6938 = vpop.f32.mrb[0].mxu0
    %6939 = vdwg.mxu0
    %v6940 = vmax.f32 %v6934, 0.0
    %v6941 = vmax.f32 %v6936, 0.0
    %v6942 = vpack.c.bf16 %v6940, %v6940
    %v6943 = vpack.c.bf16 %v6941, %v6941
    %v6944 = vld [vmem:[%s7] sm:$0xf]
    %v6945 = vld [vmem:[%s7 + $0x4] sm:$0xf]
    %v6946 = vld [vmem:[%s7 + $0x8] sm:$0xf]
    %v6947 = vld [vmem:[%s7 + $0xc] sm:$0xf]
    %v6948 = vld [vmem:[%s7 + $0x10] sm:$0xf]
    %v6949 = vld [vmem:[%s7 + $0x14] sm:$0xf]
    %v6950 = vld [vmem:[%s7 + $0x18] sm:$0xf]
    %v6951 = vld [vmem:[%s7 + $0x1c] sm:$0xf]
    %v6952 = vld [vmem:[%s7 + $0x20] sm:$0xf]
    %v6953 = vld [vmem:[%s7 + $0x24] sm:$0xf]
    %v6954 = vld [vmem:[%s7 + $0x28] sm:$0xf]
    %v6955 = vld [vmem:[%s7 + $0x2c] sm:$0xf]
    %v6956 = vld [vmem:[%s7 + $0x30] sm:$0xf]
    %v6957 = vld [vmem:[%s7 + $0x34] sm:$0xf]
    %v6958 = vld [vmem:[%s7 + $0x38] sm:$0xf]
    %v6959 = vld [vmem:[%s7 + $0x3c] sm:$0xf]
    %v6960 = vld [vmem:[%s7 + $0x40] sm:$0xf]
    %v6961 = vld [vmem:[%s7 + $0x44] sm:$0xf]
    %v6962 = vld [vmem:[%s7 + $0x48] sm:$0xf]
    %v6963 = vld [vmem:[%s7 + $0x4c] sm:$0xf]
    %v6964 = vld [vmem:[%s7 + $0x50] sm:$0xf]
    %v6965 = vld [vmem:[%s7 + $0x54] sm:$0xf]
    %v6966 = vld [vmem:[%s7 + $0x58] sm:$0xf]
    %v6967 = vld [vmem:[%s7 + $0x5c] sm:$0xf]
    %v6968 = vld [vmem:[%s7 + $0x60] sm:$0xf]
    %v6969 = vld [vmem:[%s7 + $0x64] sm:$0xf]
    %v6970 = vld [vmem:[%s7 + $0x68] sm:$0xf]
    %v6971 = vld [vmem:[%s7 + $0x6c] sm:$0xf]
    %v6972 = vld [vmem:[%s7 + $0x70] sm:$0xf]
    %v6973 = vld [vmem:[%s7 + $0x74] sm:$0xf]
    %v6974 = vld [vmem:[%s7 + $0x78] sm:$0xf]
    %v6975 = vld [vmem:[%s7 + $0x7c] sm:$0xf]
    %v6976 = vld [vmem:[%s8] sm:$0x1]
    %v6978 = vlaneseq
    %v6979 = vshrl.u32 %v6978, 7
    %v6980 = vsub.s32 0, %v6979
    %v6981 = vrot.slane %v6976, %v6980
    %v7015 = vunpack.c.l.b16 %v6944
    %v7016 = vunpack.c.l.b16 %v6945
    %v7017 = vunpack.c.l.b16 %v6946
    %v7018 = vunpack.c.l.b16 %v6947
    %v7019 = vunpack.c.l.b16 %v6948
    %v7020 = vunpack.c.l.b16 %v6949
    %v7021 = vunpack.c.l.b16 %v6950
    %v7022 = vunpack.c.l.b16 %v6951
    %v7023 = vunpack.c.l.b16 %v6952
    %v7024 = vunpack.c.l.b16 %v6953
    %v7025 = vunpack.c.l.b16 %v6954
    %v7026 = vunpack.c.l.b16 %v6955
    %v7027 = vunpack.c.l.b16 %v6956
    %v7028 = vunpack.c.l.b16 %v6957
    %v7029 = vunpack.c.l.b16 %v6958
    %v7030 = vunpack.c.l.b16 %v6959
    %v7031 = vunpack.c.l.b16 %v6960
    %v7032 = vunpack.c.l.b16 %v6961
    %v7033 = vunpack.c.l.b16 %v6962
    %v7034 = vunpack.c.l.b16 %v6963
    %v7035 = vunpack.c.l.b16 %v6964
    %v7036 = vunpack.c.l.b16 %v6965
    %v7037 = vunpack.c.l.b16 %v6966
    %v7038 = vunpack.c.l.b16 %v6967
    %v7039 = vunpack.c.l.b16 %v6968
    %v7040 = vunpack.c.l.b16 %v6969
    %v7041 = vunpack.c.l.b16 %v6970
    %v7042 = vunpack.c.l.b16 %v6971
    %v7043 = vunpack.c.l.b16 %v6972
    %v7044 = vunpack.c.l.b16 %v6973
    %v7045 = vunpack.c.l.b16 %v6974
    %v7046 = vunpack.c.l.b16 %v6975
    %v7047 = vpack.c.b16 %v7016, %v7015
    %v7048 = vpack.c.b16 %v7018, %v7017
    %v7049 = vpack.c.b16 %v7020, %v7019
    %v7050 = vpack.c.b16 %v7022, %v7021
    %v7051 = vpack.c.b16 %v7024, %v7023
    %v7052 = vpack.c.b16 %v7026, %v7025
    %v7053 = vpack.c.b16 %v7028, %v7027
    %v7054 = vpack.c.b16 %v7030, %v7029
    %v7055 = vpack.c.b16 %v7032, %v7031
    %v7056 = vpack.c.b16 %v7034, %v7033
    %v7057 = vpack.c.b16 %v7036, %v7035
    %v7058 = vpack.c.b16 %v7038, %v7037
    %v7059 = vpack.c.b16 %v7040, %v7039
    %v7060 = vpack.c.b16 %v7042, %v7041
    %v7061 = vpack.c.b16 %v7044, %v7043
    %v7062 = vpack.c.b16 %v7046, %v7045
    %7079 = vmatprep.subr.bf16.mxu0 0
    %7080 = vmatpush1.bf16.msra.mxu0 %v7047
    %7081 = vmatprep.subr.bf16.mxu0 0
    %7082 = vmatpush1.bf16.msra.mxu0 %v7048
    %7083 = vmatprep.subr.bf16.mxu0 0
    %7084 = vmatpush1.bf16.msra.mxu0 %v7049
    %7085 = vmatprep.subr.bf16.mxu0 0
    %7086 = vmatpush1.bf16.msra.mxu0 %v7050
    %7087 = vmatprep.subr.bf16.mxu0 0
    %7088 = vmatpush1.bf16.msra.mxu0 %v7051
    %7089 = vmatprep.subr.bf16.mxu0 0
    %7090 = vmatpush1.bf16.msra.mxu0 %v7052
    %7091 = vmatprep.subr.bf16.mxu0 0
    %7092 = vmatpush1.bf16.msra.mxu0 %v7053
    %7093 = vmatprep.subr.bf16.mxu0 0
    %7094 = vmatpush1.bf16.msra.mxu0 %v7054
    %7095 = vmatprep.subr.bf16.mxu0 0
    %7096 = vmatpush1.bf16.msra.mxu0 %v7055
    %7097 = vmatprep.subr.bf16.mxu0 0
    %7098 = vmatpush1.bf16.msra.mxu0 %v7056
    %7099 = vmatprep.subr.bf16.mxu0 0
    %7100 = vmatpush1.bf16.msra.mxu0 %v7057
    %7101 = vmatprep.subr.bf16.mxu0 0
    %7102 = vmatpush1.bf16.msra.mxu0 %v7058
    %7103 = vmatprep.subr.bf16.mxu0 0
    %7104 = vmatpush1.bf16.msra.mxu0 %v7059
    %7105 = vmatprep.subr.bf16.mxu0 0
    %7106 = vmatpush1.bf16.msra.mxu0 %v7060
    %7107 = vmatprep.subr.bf16.mxu0 0
    %7108 = vmatpush1.bf16.msra.mxu0 %v7061
    %7109 = vmatprep.subr.bf16.mxu0 0
    %7110 = vmatpush1.bf16.msra.mxu0 %v7062
    %7111 = vmatprep.mubr.bf16.mxu0 %v6943
    %7112 = vmatmul.mubr.bf16.gmra.mrb[0].mxu0 %v6942
    %v7113 = vpop.f32.mrb[0].mxu0
    %v7114 = vadd.f32 %v6981, %v7113
    %v7115 = vpop.f32.mrb[0].mxu0
    %v7116 = vpop.f32.mrb[0].mxu0
    %v7117 = vpop.f32.mrb[0].mxu0
    %7118 = vdwg.mxu0
    %v7119 = vmax.f32 %v7114, 0.0
    %v7120 = vpack.c.bf16 %v7119, %v7119
    %v7121 = vld [vmem:[%s9] sm:$0xf]
    %v7122 = vld [vmem:[%s9 + $0x4] sm:$0xf]
    %v7123 = vld [vmem:[%s9 + $0x8] sm:$0xf]
    %v7124 = vld [vmem:[%s9 + $0xc] sm:$0xf]
    %v7125 = vld [vmem:[%s9 + $0x10] sm:$0xf]
    %v7126 = vld [vmem:[%s9 + $0x14] sm:$0xf]
    %v7127 = vld [vmem:[%s9 + $0x18] sm:$0xf]
    %v7128 = vld [vmem:[%s9 + $0x1c] sm:$0xf]
    %v7129 = vld [vmem:[%s9 + $0x20] sm:$0xf]
    %v7130 = vld [vmem:[%s9 + $0x24] sm:$0xf]
    %v7131 = vld [vmem:[%s9 + $0x28] sm:$0xf]
    %v7132 = vld [vmem:[%s9 + $0x2c] sm:$0xf]
    %v7133 = vld [vmem:[%s9 + $0x30] sm:$0xf]
    %v7134 = vld [vmem:[%s9 + $0x34] sm:$0xf]
    %v7135 = vld [vmem:[%s9 + $0x38] sm:$0xf]
    %v7136 = vld [vmem:[%s9 + $0x3c] sm:$0xf]
    %v7137 = vld [vmem:[%s10] sm:$0x1]
    %v7139 = vlaneseq
    %v7140 = vshrl.u32 %v7139, 7
    %v7141 = vsub.s32 0, %v7140
    %v7142 = vrot.slane %v7137, %v7141
    %v7160 = vunpack.c.l.b16 %v7121
    %v7161 = vunpack.c.l.b16 %v7122
    %v7162 = vunpack.c.l.b16 %v7123
    %v7163 = vunpack.c.l.b16 %v7124
    %v7164 = vunpack.c.l.b16 %v7125
    %v7165 = vunpack.c.l.b16 %v7126
    %v7166 = vunpack.c.l.b16 %v7127
    %v7167 = vunpack.c.l.b16 %v7128
    %v7168 = vunpack.c.l.b16 %v7129
    %v7169 = vunpack.c.l.b16 %v7130
    %v7170 = vunpack.c.l.b16 %v7131
    %v7171 = vunpack.c.l.b16 %v7132
    %v7172 = vunpack.c.l.b16 %v7133
    %v7173 = vunpack.c.l.b16 %v7134
    %v7174 = vunpack.c.l.b16 %v7135
    %v7175 = vunpack.c.l.b16 %v7136
    %v7176 = vpack.c.b16 %v7161, %v7160
    %v7177 = vpack.c.b16 %v7163, %v7162
    %v7178 = vpack.c.b16 %v7165, %v7164
    %v7179 = vpack.c.b16 %v7167, %v7166
    %v7180 = vpack.c.b16 %v7169, %v7168
    %v7181 = vpack.c.b16 %v7171, %v7170
    %v7182 = vpack.c.b16 %v7173, %v7172
    %v7183 = vpack.c.b16 %v7175, %v7174
    %7192 = vmatprep.subr.bf16.mxu0 0
    %7193 = vmatpush1.bf16.msra.mxu0 %v7176
    %7194 = vmatprep.subr.bf16.mxu0 0
    %7195 = vmatpush1.bf16.msra.mxu0 %v7177
    %7196 = vmatprep.subr.bf16.mxu0 0
    %7197 = vmatpush1.bf16.msra.mxu0 %v7178
    %7198 = vmatprep.subr.bf16.mxu0 0
    %7199 = vmatpush1.bf16.msra.mxu0 %v7179
    %7200 = vmatprep.subr.bf16.mxu0 0
    %7201 = vmatpush1.bf16.msra.mxu0 %v7180
    %7202 = vmatprep.subr.bf16.mxu0 0
    %7203 = vmatpush1.bf16.msra.mxu0 %v7181
    %7204 = vmatprep.subr.bf16.mxu0 0
    %7205 = vmatpush1.bf16.msra.mxu0 %v7182
    %7206 = vmatprep.subr.bf16.mxu0 0
    %7207 = vmatpush1.bf16.msra.mxu0 %v7183
    %7208 = vmatprep.subr.bf16.mxu0 0
    %7209 = vmatpush1.bf16.msra.mxu0 0
    %7210 = vmatprep.subr.bf16.mxu0 0
    %7211 = vmatpush1.bf16.msra.mxu0 0
    %7212 = vmatprep.subr.bf16.mxu0 0
    %7213 = vmatpush1.bf16.msra.mxu0 0
    %7214 = vmatprep.subr.bf16.mxu0 0
    %7215 = vmatpush1.bf16.msra.mxu0 0
    %7216 = vmatprep.subr.bf16.mxu0 0
    %7217 = vmatpush1.bf16.msra.mxu0 0
    %7218 = vmatprep.subr.bf16.mxu0 0
    %7219 = vmatpush1.bf16.msra.mxu0 0
    %7220 = vmatprep.subr.bf16.mxu0 0
    %7221 = vmatpush1.bf16.msra.mxu0 0
    %7222 = vmatprep.subr.bf16.mxu0 0
    %7223 = vmatpush1.bf16.msra.mxu0 0
    %7224 = vmatprep.mubr.bf16.mxu0 0
    %7225 = vmatmul.mubr.bf16.gmra.mrb[0].mxu0 %v7120
    %v7226 = vpop.f32.mrb[0].mxu0
    %v7227 = vadd.f32 %v7142, %v7226
    %v7228 = vpop.f32.mrb[0].mxu0
    %v7229 = vpop.f32.mrb[0].mxu0
    %v7230 = vpop.f32.mrb[0].mxu0
    %7231 = vdwg.mxu0
    %vm7232 = vcmask 17408
    %v7233 = vsel %vm7232, %v7227, -inf
    %7234 = vmax.xlane.f32.xlu0 %v7233
    %v7235 = vpop.xlane.xlu0 %7234
    %v7236 = vsub.f32 %v7227, %v7235
    %v7237 = vmul.f32 %v7236, 1.442695
    %v7238 = vpow.pop %v7237
    %v7239 = vsel %vm7232, %v7238, 0.0
    %7240 = vadd.xlane.f32.xlu0 %v7239
    %v7241 = vpop.xlane.xlu0 %7240
    %v7242 = vrcp.pop %v7241
    %v7243 = vmul.f32 %v7238, %v7242
    %7244 = vst.msk [vmem:[#allocation12] sm:$0x3] %vm7232, %v7243
    // Predicated region
    $region46: #{oracle_forward.1} parent=1 // pred_check
      _
    $region47: #{oracle_forward.1} parent=1 // pred_check_branch
      %7246 = sbr.rel (0) target = $region49
    $region48: #{oracle_forward.1} parent=1 // pred_region
      %s7248 = ssub.s32 32, 32
      %7249 = vsyncadd [#allocation11], %s7248
      %s7251 = sshll.u32 [#allocation12], 4
      %s7252 = int_to_ptr.vmem [resolvable:$true] %s7251
      %7254 = dma.vmem_to_hbm [thread:$0]  %s7252, 32, %s11, [#allocation11]
    $region49: #{oracle_forward.1} parent=1 // pred_fallthru
      _
    // Predicated region
    $region50: #{oracle_forward.1} parent=1 // pred_check
      _
    $region51: #{oracle_forward.1} parent=1 // pred_check_branch
      %7256 = sbr.rel (0) target = $region53
    $region52: #{oracle_forward.1} parent=1 // pred_region
      %7257 = dma.done [#allocation11], 32
    $region53: #{oracle_forward.1} parent=1 // pred_fallthru
      _
    %7258 = vsyncpa [#allocation10], 1
    %7259 = vsyncpa [#allocation11], 1
  %7260 = vsyncmov [#allocation8]
  %s7261 = vpop.sfrf %7260
  %p7262 = scmp.eq.s32.totalorder %s7261, 0
  %p7263 = pneg %p7262
  %7265 = shalt.err (%p7263)
  %s7266 = scalar_lea.sflag [#allocation8], 1
  %7267 = vsyncmov %s7266
  %s7268 = vpop.sfrf %7267
  %p7269 = scmp.eq.s32.totalorder %s7268, 0
  %p7270 = pneg %p7269
  %7272 = shalt.err (%p7270)

</llo_original>
